<compile_context>
chip_gen: v5e
topology: v5e:2x2
jax: 0.10.0
libtpu: 0.0.40
codegen_flags: <defaults>
</compile_context>

<pallas_src>
import functools

import jax
import jax.numpy as jnp
from jax import lax
from jax.experimental import pallas as pl
from jax.experimental.pallas import tpu as pltpu

EPS = 1e-5  # nn.InstanceNorm2d default eps (affine=False, no running stats)


def _resnet_block_kernel(x_ref, w1_ref, w2_ref, o_ref, xp_ref, acc_ref,
                         *, H, W, C):
    """Fused ReflPad->Conv->IN->ReLU->ReflPad->Conv->IN->(+x) for one image.

    x_ref : (1, H*W, C) f32     input image (also the residual)
    w*_ref: (9, C, C)   bf16    conv taps, tap t = ky*3 + kx, (C_in, C_out)
    o_ref : (1, H*W, C) f32     output
    xp_ref: ((H+2)*(W+2)+8, C) f32  flattened reflection-padded image scratch
    acc_ref: (H*(W+2), C) f32       conv accumulator in "extended" layout
    """
    Wp = W + 2
    HW = H * W
    HWe = H * Wp                      # extended spatial extent (with garbage)

    # Zero the slack tail rows once (the last tap's shifted view reads 2 rows
    # past the logical padded image -- only into garbage output rows, never
    # read downstream; zeroing keeps everything deterministic / NaN-free).
    xp_ref[pl.ds((H + 2) * Wp, 8), :] = jnp.zeros((8, C), xp_ref.dtype)

    # ---------------------------------------------------------------- helpers
    def write_padded(row_fn):
        """Fill xp_ref with the reflection-padded image whose valid row-group
        i is given by row_fn(i) -> (W, C) f32.  Left/right reflection columns
        are taken from the in-register row value (no VMEM read-back)."""
        for i in range(H):
            row = row_fn(i)                                   # (W, C)
            base = (i + 1) * Wp
            xp_ref[pl.ds(base + 1, W), :] = row               # interior
            xp_ref[pl.ds(base, 1), :] = row[1:2]              # left  = col 1
            xp_ref[pl.ds(base + W + 1, 1), :] = row[W - 2:W - 1]  # right = col W-2
        # top / bottom reflection row groups (copied whole, incl. their L/R pad)
        xp_ref[pl.ds(0, Wp), :] = xp_ref[pl.ds(2 * Wp, Wp), :]
        xp_ref[pl.ds((H + 1) * Wp, Wp), :] = xp_ref[pl.ds((H - 1) * Wp, Wp), :]

    def conv3x3(w_ref):
        """9 accumulating (HWe, C) x (C, C) bf16 MXU matmuls over shifted
        contiguous views of the flattened padded image."""
        for t in range(9):
            ky, kx = divmod(t, 3)
            tap = xp_ref[pl.ds(ky * Wp + kx, HWe), :].astype(jnp.bfloat16)
            contrib = jnp.dot(tap, w_ref[t], preferred_element_type=jnp.float32)
            if t == 0:
                acc_ref[...] = contrib
            else:
                acc_ref[...] += contrib

    def instance_stats():
        """Fused single-pass per-channel mean / inv-std over the VALID rows.
        Conv bias is omitted: it is constant over (H, W) per channel, so
        InstanceNorm (affine=False) cancels it exactly."""
        s = jnp.zeros((1, C), jnp.float32)
        ss = jnp.zeros((1, C), jnp.float32)
        for i in range(H):
            blk = acc_ref[pl.ds(i * Wp, W), :]                 # (W, C)
            s = s + jnp.sum(blk, axis=0, keepdims=True)
            ss = ss + jnp.sum(blk * blk, axis=0, keepdims=True)
        mean = s / HW
        var = jnp.maximum(ss / HW - mean * mean, 0.0)          # biased var (PyTorch IN)
        return mean, lax.rsqrt(var + EPS)

    # ------------------------- stage 1: pad(x) -> conv1 -> IN -> ReLU -------
    write_padded(lambda i: x_ref[0, pl.ds(i * W, W), :])
    conv3x3(w1_ref)
    mean1, inv1 = instance_stats()
    # Write padded(ReLU(IN(conv1))) straight back into xp_ref for stage 2
    # (normalize/ReLU fused into the padded-buffer build, per row group).
    write_padded(lambda i: jnp.maximum(
        (acc_ref[pl.ds(i * Wp, W), :] - mean1) * inv1, 0.0))

    # ------------------------- stage 2: pad(h1) -> conv2 -> IN -> +x --------
    conv3x3(w2_ref)
    mean2, inv2 = instance_stats()
    for i in range(H):
        blk = (acc_ref[pl.ds(i * Wp, W), :] - mean2) * inv2
        o_ref[0, pl.ds(i * W, W), :] = blk + x_ref[0, pl.ds(i * W, W), :]


def _make_block_fn(N, H, W, C):
    HW = H * W
    Wp = W + 2
    # +8 slack rows: the last tap's shifted view reads 2 rows past the logical
    # padded image (only into garbage output rows, never used downstream).
    P = (H + 2) * Wp + 8

    kernel = functools.partial(_resnet_block_kernel, H=H, W=W, C=C)
    flops = 2 * 2 * 9 * N * H * Wp * C * C                 # two conv stages
    bytes_accessed = 2 * N * HW * C * 4 + 2 * 9 * C * C * 2

    return pl.pallas_call(
        kernel,
        out_shape=jax.ShapeDtypeStruct((N, HW, C), jnp.float32),
        grid=(N,),
        in_specs=[
            pl.BlockSpec((1, HW, C), lambda n: (n, 0, 0)),   # x (also residual)
            pl.BlockSpec((9, C, C), lambda n: (0, 0, 0)),    # w1 (bf16)
            pl.BlockSpec((9, C, C), lambda n: (0, 0, 0)),    # w2 (bf16)
        ],
        out_specs=pl.BlockSpec((1, HW, C), lambda n: (n, 0, 0)),
        scratch_shapes=[
            pltpu.VMEM((P, C), jnp.float32),                 # padded image / h1
            pltpu.VMEM((H * Wp, C), jnp.float32),            # conv accumulator
        ],
        compiler_params=pltpu.CompilerParams(
            dimension_semantics=("parallel",),
            vmem_limit_bytes=64 * 1024 * 1024,
        ),
        cost_estimate=pl.CostEstimate(
            flops=flops, transcendentals=0, bytes_accessed=bytes_accessed),
    )


@jax.jit
def resnet_block_forward(x_nchw, w1, b1, w2, b2):
    """x_nchw: (N, C, H, W) f32.  w*: (3, 3, C_in, C_out) HWIO.  b*: (C,).

    Note: b1/b2 are accepted for interface parity with the PyTorch module but
    are NOT used -- a per-channel conv bias is exactly cancelled by the
    following InstanceNorm2d (affine=False), so it has no effect on the output.
    """
    del b1, b2
    x = jnp.transpose(x_nchw, (0, 2, 3, 1)).astype(jnp.float32)   # NCHW -> NHWC
    n, h, w, c = x.shape
    x_flat = x.reshape(n, h * w, c)

    w1f = w1.reshape(9, c, c).astype(jnp.bfloat16)
    w2f = w2.reshape(9, c, c).astype(jnp.bfloat16)

    out_flat = _make_block_fn(n, h, w, c)(x_flat, w1f, w2f)
    out = out_flat.reshape(n, h, w, c)
    return jnp.transpose(out, (0, 3, 1, 2))                       # NHWC -> NCHW


def _reference(x_nchw, w1, b1, w2, b2):
    """Pure-JAX f32 reference (NHWC conv via lax), biases INCLUDED."""
    x = jnp.transpose(x_nchw, (0, 2, 3, 1)).astype(jnp.float32)

    def conv_in(inp, w, b):
        xp = jnp.pad(inp, ((0, 0), (1, 1), (1, 1), (0, 0)), mode="reflect")
        y = lax.conv_general_dilated(
            xp, w, window_strides=(1, 1), padding="VALID",
            dimension_numbers=("NHWC", "HWIO", "NHWC"))
        y = y + b[None, None, None, :]
        mean = jnp.mean(y, axis=(1, 2), keepdims=True)
        var = jnp.mean((y - mean) ** 2, axis=(1, 2), keepdims=True)
        return (y - mean) * lax.rsqrt(var + EPS)

    h1 = jnp.maximum(conv_in(x, w1, b1), 0.0)
    y = x + conv_in(h1, w2, b2)
    return jnp.transpose(y, (0, 3, 1, 2))


if __name__ == "__main__":
    N, C, H, W = 2, 4, 16, 16
    key = jax.random.PRNGKey(0)
    kx, kw1, kb1, kw2, kb2 = jax.random.split(key, 5)

    x = jax.random.normal(kx, (N, C, H, W), dtype=jnp.float32)
    # Synthetic parameters stored directly as HWIO (3, 3, C_in, C_out).
    w1 = jax.random.normal(kw1, (3, 3, C, C), dtype=jnp.float32) * 0.1
    b1 = jax.random.normal(kb1, (C,), dtype=jnp.float32) * 0.1
    w2 = jax.random.normal(kw2, (3, 3, C, C), dtype=jnp.float32) * 0.1
    b2 = jax.random.normal(kb2, (C,), dtype=jnp.float32) * 0.1

    out = jax.block_until_ready(resnet_block_forward(x, w1, b1, w2, b2))
    ref = jax.block_until_ready(_reference(x, w1, b1, w2, b2))

    assert out.shape == (N, C, H, W), out.shape
    # bf16 matmul operands (f32 accumulation) => loosened tolerance vs f32 ref.
    if not jnp.allclose(out, ref, atol=4e-2, rtol=4e-2):
        raise AssertionError("Pallas ResNetBlock output mismatch vs reference")

    print("KERNEL_OK")
</pallas_src>

<mosaic_0001>
module attributes {stable_mosaic.version = 11 : i64} {
  func.func @_resnet_block_kernel(%arg0: i32, %arg1: memref<1x256x4xf32, #tpu.memory_space<vmem>>, %arg2: memref<9x4x4xbf16, #tpu.memory_space<vmem>>, %arg3: memref<9x4x4xbf16, #tpu.memory_space<vmem>>, %arg4: memref<1x256x4xf32, #tpu.memory_space<vmem>>, %arg5: memref<332x4xf32, #tpu.memory_space<vmem>>, %arg6: memref<288x4xf32, #tpu.memory_space<vmem>>) attributes {dimension_semantics = [#tpu.dimension_semantics<parallel>], iteration_bounds = array<i64: 2>, scalar_prefetch = 0 : i64, scratch_operands = 2 : i64, tpu.core_type = #tpu.core_type<tc>, window_params = [{transform_indices = @transform_0, window_bounds = array<i64: 1, 256, 4>}, {pipeline_mode = #tpu.pipeline_mode<synchronous>, transform_indices = @transform_1, window_bounds = array<i64: 9, 4, 4>}, {pipeline_mode = #tpu.pipeline_mode<synchronous>, transform_indices = @transform_2, window_bounds = array<i64: 9, 4, 4>}, {transform_indices = @transform_3, window_bounds = array<i64: 1, 256, 4>}]} {
    %cst = arith.constant 0.000000e+00 : f32
    %0 = vector.broadcast %cst : f32 to vector<8x4xf32>
    %c324 = arith.constant 324 : index
    %c0 = arith.constant 0 : index
    %1 = vector.load %arg5[%c324, %c0] : memref<332x4xf32, #tpu.memory_space<vmem>>, vector<8x4xf32>
    tpu.vector_store %arg5[%c324, %c0], %0 {strides = array<i32>} : memref<332x4xf32, #tpu.memory_space<vmem>>, vector<8x4xf32>,
    %c0_0 = arith.constant 0 : index
    %c0_1 = arith.constant 0 : index
    %c0_2 = arith.constant 0 : index
    %2 = vector.load %arg1[%c0_0, %c0_1, %c0_2] : memref<1x256x4xf32, #tpu.memory_space<vmem>>, vector<1x16x4xf32>
    %3 = vector.shape_cast %2 : vector<1x16x4xf32> to vector<16x4xf32>
    %c19 = arith.constant 19 : index
    %c0_3 = arith.constant 0 : index
    %4 = vector.load %arg5[%c19, %c0_3] : memref<332x4xf32, #tpu.memory_space<vmem>>, vector<16x4xf32>
    tpu.vector_store %arg5[%c19, %c0_3], %3 {strides = array<i32>} : memref<332x4xf32, #tpu.memory_space<vmem>>, vector<16x4xf32>,
    %5 = vector.extract_strided_slice %3 {offsets = [1, 0], sizes = [1, 4], strides = [1, 1]} : vector<16x4xf32> to vector<1x4xf32>
    %c18 = arith.constant 18 : index
    %c0_4 = arith.constant 0 : index
    %6 = vector.load %arg5[%c18, %c0_4] : memref<332x4xf32, #tpu.memory_space<vmem>>, vector<1x4xf32>
    tpu.vector_store %arg5[%c18, %c0_4], %5 {strides = array<i32>} : memref<332x4xf32, #tpu.memory_space<vmem>>, vector<1x4xf32>,
    %7 = vector.extract_strided_slice %3 {offsets = [14, 0], sizes = [1, 4], strides = [1, 1]} : vector<16x4xf32> to vector<1x4xf32>
    %c35 = arith.constant 35 : index
    %c0_5 = arith.constant 0 : index
    %8 = vector.load %arg5[%c35, %c0_5] : memref<332x4xf32, #tpu.memory_space<vmem>>, vector<1x4xf32>
    tpu.vector_store %arg5[%c35, %c0_5], %7 {strides = array<i32>} : memref<332x4xf32, #tpu.memory_space<vmem>>, vector<1x4xf32>,
    %c0_6 = arith.constant 0 : index
    %c16 = arith.constant 16 : index
    %c0_7 = arith.constant 0 : index
    %9 = vector.load %arg1[%c0_6, %c16, %c0_7] : memref<1x256x4xf32, #tpu.memory_space<vmem>>, vector<1x16x4xf32>
    %10 = vector.shape_cast %9 : vector<1x16x4xf32> to vector<16x4xf32>
    %c37 = arith.constant 37 : index
    %c0_8 = arith.constant 0 : index
    %11 = vector.load %arg5[%c37, %c0_8] : memref<332x4xf32, #tpu.memory_space<vmem>>, vector<16x4xf32>
    tpu.vector_store %arg5[%c37, %c0_8], %10 {strides = array<i32>} : memref<332x4xf32, #tpu.memory_space<vmem>>, vector<16x4xf32>,
    %12 = vector.extract_strided_slice %10 {offsets = [1, 0], sizes = [1, 4], strides = [1, 1]} : vector<16x4xf32> to vector<1x4xf32>
    %c36 = arith.constant 36 : index
    %c0_9 = arith.constant 0 : index
    %13 = vector.load %arg5[%c36, %c0_9] : memref<332x4xf32, #tpu.memory_space<vmem>>, vector<1x4xf32>
    tpu.vector_store %arg5[%c36, %c0_9], %12 {strides = array<i32>} : memref<332x4xf32, #tpu.memory_space<vmem>>, vector<1x4xf32>,
    %14 = vector.extract_strided_slice %10 {offsets = [14, 0], sizes = [1, 4], strides = [1, 1]} : vector<16x4xf32> to vector<1x4xf32>
    %c53 = arith.constant 53 : index
    %c0_10 = arith.constant 0 : index
    %15 = vector.load %arg5[%c53, %c0_10] : memref<332x4xf32, #tpu.memory_space<vmem>>, vector<1x4xf32>
    tpu.vector_store %arg5[%c53, %c0_10], %14 {strides = array<i32>} : memref<332x4xf32, #tpu.memory_space<vmem>>, vector<1x4xf32>,
    %c0_11 = arith.constant 0 : index
    %c32 = arith.constant 32 : index
    %c0_12 = arith.constant 0 : index
    %16 = vector.load %arg1[%c0_11, %c32, %c0_12] : memref<1x256x4xf32, #tpu.memory_space<vmem>>, vector<1x16x4xf32>
    %17 = vector.shape_cast %16 : vector<1x16x4xf32> to vector<16x4xf32>
    %c55 = arith.constant 55 : index
    %c0_13 = arith.constant 0 : index
    %18 = vector.load %arg5[%c55, %c0_13] : memref<332x4xf32, #tpu.memory_space<vmem>>, vector<16x4xf32>
    tpu.vector_store %arg5[%c55, %c0_13], %17 {strides = array<i32>} : memref<332x4xf32, #tpu.memory_space<vmem>>, vector<16x4xf32>,
    %19 = vector.extract_strided_slice %17 {offsets = [1, 0], sizes = [1, 4], strides = [1, 1]} : vector<16x4xf32> to vector<1x4xf32>
    %c54 = arith.constant 54 : index
    %c0_14 = arith.constant 0 : index
    %20 = vector.load %arg5[%c54, %c0_14] : memref<332x4xf32, #tpu.memory_space<vmem>>, vector<1x4xf32>
    tpu.vector_store %arg5[%c54, %c0_14], %19 {strides = array<i32>} : memref<332x4xf32, #tpu.memory_space<vmem>>, vector<1x4xf32>,
    %21 = vector.extract_strided_slice %17 {offsets = [14, 0], sizes = [1, 4], strides = [1, 1]} : vector<16x4xf32> to vector<1x4xf32>
    %c71 = arith.constant 71 : index
    %c0_15 = arith.constant 0 : index
    %22 = vector.load %arg5[%c71, %c0_15] : memref<332x4xf32, #tpu.memory_space<vmem>>, vector<1x4xf32>
    tpu.vector_store %arg5[%c71, %c0_15], %21 {strides = array<i32>} : memref<332x4xf32, #tpu.memory_space<vmem>>, vector<1x4xf32>,
    %c0_16 = arith.constant 0 : index
    %c48 = arith.constant 48 : index
    %c0_17 = arith.constant 0 : index
    %23 = vector.load %arg1[%c0_16, %c48, %c0_17] : memref<1x256x4xf32, #tpu.memory_space<vmem>>, vector<1x16x4xf32>
    %24 = vector.shape_cast %23 : vector<1x16x4xf32> to vector<16x4xf32>
    %c73 = arith.constant 73 : index
    %c0_18 = arith.constant 0 : index
    %25 = vector.load %arg5[%c73, %c0_18] : memref<332x4xf32, #tpu.memory_space<vmem>>, vector<16x4xf32>
    tpu.vector_store %arg5[%c73, %c0_18], %24 {strides = array<i32>} : memref<332x4xf32, #tpu.memory_space<vmem>>, vector<16x4xf32>,
    %26 = vector.extract_strided_slice %24 {offsets = [1, 0], sizes = [1, 4], strides = [1, 1]} : vector<16x4xf32> to vector<1x4xf32>
    %c72 = arith.constant 72 : index
    %c0_19 = arith.constant 0 : index
    %27 = vector.load %arg5[%c72, %c0_19] : memref<332x4xf32, #tpu.memory_space<vmem>>, vector<1x4xf32>
    tpu.vector_store %arg5[%c72, %c0_19], %26 {strides = array<i32>} : memref<332x4xf32, #tpu.memory_space<vmem>>, vector<1x4xf32>,
    %28 = vector.extract_strided_slice %24 {offsets = [14, 0], sizes = [1, 4], strides = [1, 1]} : vector<16x4xf32> to vector<1x4xf32>
    %c89 = arith.constant 89 : index
    %c0_20 = arith.constant 0 : index
    %29 = vector.load %arg5[%c89, %c0_20] : memref<332x4xf32, #tpu.memory_space<vmem>>, vector<1x4xf32>
    tpu.vector_store %arg5[%c89, %c0_20], %28 {strides = array<i32>} : memref<332x4xf32, #tpu.memory_space<vmem>>, vector<1x4xf32>,
    %c0_21 = arith.constant 0 : index
    %c64 = arith.constant 64 : index
    %c0_22 = arith.constant 0 : index
    %30 = vector.load %arg1[%c0_21, %c64, %c0_22] : memref<1x256x4xf32, #tpu.memory_space<vmem>>, vector<1x16x4xf32>
    %31 = vector.shape_cast %30 : vector<1x16x4xf32> to vector<16x4xf32>
    %c91 = arith.constant 91 : index
    %c0_23 = arith.constant 0 : index
    %32 = vector.load %arg5[%c91, %c0_23] : memref<332x4xf32, #tpu.memory_space<vmem>>, vector<16x4xf32>
    tpu.vector_store %arg5[%c91, %c0_23], %31 {strides = array<i32>} : memref<332x4xf32, #tpu.memory_space<vmem>>, vector<16x4xf32>,
    %33 = vector.extract_strided_slice %31 {offsets = [1, 0], sizes = [1, 4], strides = [1, 1]} : vector<16x4xf32> to vector<1x4xf32>
    %c90 = arith.constant 90 : index
    %c0_24 = arith.constant 0 : index
    %34 = vector.load %arg5[%c90, %c0_24] : memref<332x4xf32, #tpu.memory_space<vmem>>, vector<1x4xf32>
    tpu.vector_store %arg5[%c90, %c0_24], %33 {strides = array<i32>} : memref<332x4xf32, #tpu.memory_space<vmem>>, vector<1x4xf32>,
    %35 = vector.extract_strided_slice %31 {offsets = [14, 0], sizes = [1, 4], strides = [1, 1]} : vector<16x4xf32> to vector<1x4xf32>
    %c107 = arith.constant 107 : index
    %c0_25 = arith.constant 0 : index
    %36 = vector.load %arg5[%c107, %c0_25] : memref<332x4xf32, #tpu.memory_space<vmem>>, vector<1x4xf32>
    tpu.vector_store %arg5[%c107, %c0_25], %35 {strides = array<i32>} : memref<332x4xf32, #tpu.memory_space<vmem>>, vector<1x4xf32>,
    %c0_26 = arith.constant 0 : index
    %c80 = arith.constant 80 : index
    %c0_27 = arith.constant 0 : index
    %37 = vector.load %arg1[%c0_26, %c80, %c0_27] : memref<1x256x4xf32, #tpu.memory_space<vmem>>, vector<1x16x4xf32>
    %38 = vector.shape_cast %37 : vector<1x16x4xf32> to vector<16x4xf32>
    %c109 = arith.constant 109 : index
    %c0_28 = arith.constant 0 : index
    %39 = vector.load %arg5[%c109, %c0_28] : memref<332x4xf32, #tpu.memory_space<vmem>>, vector<16x4xf32>
    tpu.vector_store %arg5[%c109, %c0_28], %38 {strides = array<i32>} : memref<332x4xf32, #tpu.memory_space<vmem>>, vector<16x4xf32>,
    %40 = vector.extract_strided_slice %38 {offsets = [1, 0], sizes = [1, 4], strides = [1, 1]} : vector<16x4xf32> to vector<1x4xf32>
    %c108 = arith.constant 108 : index
    %c0_29 = arith.constant 0 : index
    %41 = vector.load %arg5[%c108, %c0_29] : memref<332x4xf32, #tpu.memory_space<vmem>>, vector<1x4xf32>
    tpu.vector_store %arg5[%c108, %c0_29], %40 {strides = array<i32>} : memref<332x4xf32, #tpu.memory_space<vmem>>, vector<1x4xf32>,
    %42 = vector.extract_strided_slice %38 {offsets = [14, 0], sizes = [1, 4], strides = [1, 1]} : vector<16x4xf32> to vector<1x4xf32>
    %c125 = arith.constant 125 : index
    %c0_30 = arith.constant 0 : index
    %43 = vector.load %arg5[%c125, %c0_30] : memref<332x4xf32, #tpu.memory_space<vmem>>, vector<1x4xf32>
    tpu.vector_store %arg5[%c125, %c0_30], %42 {strides = array<i32>} : memref<332x4xf32, #tpu.memory_space<vmem>>, vector<1x4xf32>,
    %c0_31 = arith.constant 0 : index
    %c96 = arith.constant 96 : index
    %c0_32 = arith.constant 0 : index
    %44 = vector.load %arg1[%c0_31, %c96, %c0_32] : memref<1x256x4xf32, #tpu.memory_space<vmem>>, vector<1x16x4xf32>
    %45 = vector.shape_cast %44 : vector<1x16x4xf32> to vector<16x4xf32>
    %c127 = arith.constant 127 : index
    %c0_33 = arith.constant 0 : index
    %46 = vector.load %arg5[%c127, %c0_33] : memref<332x4xf32, #tpu.memory_space<vmem>>, vector<16x4xf32>
    tpu.vector_store %arg5[%c127, %c0_33], %45 {strides = array<i32>} : memref<332x4xf32, #tpu.memory_space<vmem>>, vector<16x4xf32>,
    %47 = vector.extract_strided_slice %45 {offsets = [1, 0], sizes = [1, 4], strides = [1, 1]} : vector<16x4xf32> to vector<1x4xf32>
    %c126 = arith.constant 126 : index
    %c0_34 = arith.constant 0 : index
    %48 = vector.load %arg5[%c126, %c0_34] : memref<332x4xf32, #tpu.memory_space<vmem>>, vector<1x4xf32>
    tpu.vector_store %arg5[%c126, %c0_34], %47 {strides = array<i32>} : memref<332x4xf32, #tpu.memory_space<vmem>>, vector<1x4xf32>,
    %49 = vector.extract_strided_slice %45 {offsets = [14, 0], sizes = [1, 4], strides = [1, 1]} : vector<16x4xf32> to vector<1x4xf32>
    %c143 = arith.constant 143 : index
    %c0_35 = arith.constant 0 : index
    %50 = vector.load %arg5[%c143, %c0_35] : memref<332x4xf32, #tpu.memory_space<vmem>>, vector<1x4xf32>
    tpu.vector_store %arg5[%c143, %c0_35], %49 {strides = array<i32>} : memref<332x4xf32, #tpu.memory_space<vmem>>, vector<1x4xf32>,
    %c0_36 = arith.constant 0 : index
    %c112 = arith.constant 112 : index
    %c0_37 = arith.constant 0 : index
    %51 = vector.load %arg1[%c0_36, %c112, %c0_37] : memref<1x256x4xf32, #tpu.memory_space<vmem>>, vector<1x16x4xf32>
    %52 = vector.shape_cast %51 : vector<1x16x4xf32> to vector<16x4xf32>
    %c145 = arith.constant 145 : index
    %c0_38 = arith.constant 0 : index
    %53 = vector.load %arg5[%c145, %c0_38] : memref<332x4xf32, #tpu.memory_space<vmem>>, vector<16x4xf32>
    tpu.vector_store %arg5[%c145, %c0_38], %52 {strides = array<i32>} : memref<332x4xf32, #tpu.memory_space<vmem>>, vector<16x4xf32>,
    %54 = vector.extract_strided_slice %52 {offsets = [1, 0], sizes = [1, 4], strides = [1, 1]} : vector<16x4xf32> to vector<1x4xf32>
    %c144 = arith.constant 144 : index
    %c0_39 = arith.constant 0 : index
    %55 = vector.load %arg5[%c144, %c0_39] : memref<332x4xf32, #tpu.memory_space<vmem>>, vector<1x4xf32>
    tpu.vector_store %arg5[%c144, %c0_39], %54 {strides = array<i32>} : memref<332x4xf32, #tpu.memory_space<vmem>>, vector<1x4xf32>,
    %56 = vector.extract_strided_slice %52 {offsets = [14, 0], sizes = [1, 4], strides = [1, 1]} : vector<16x4xf32> to vector<1x4xf32>
    %c161 = arith.constant 161 : index
    %c0_40 = arith.constant 0 : index
    %57 = vector.load %arg5[%c161, %c0_40] : memref<332x4xf32, #tpu.memory_space<vmem>>, vector<1x4xf32>
    tpu.vector_store %arg5[%c161, %c0_40], %56 {strides = array<i32>} : memref<332x4xf32, #tpu.memory_space<vmem>>, vector<1x4xf32>,
    %c0_41 = arith.constant 0 : index
    %c128 = arith.constant 128 : index
    %c0_42 = arith.constant 0 : index
    %58 = vector.load %arg1[%c0_41, %c128, %c0_42] : memref<1x256x4xf32, #tpu.memory_space<vmem>>, vector<1x16x4xf32>
    %59 = vector.shape_cast %58 : vector<1x16x4xf32> to vector<16x4xf32>
    %c163 = arith.constant 163 : index
    %c0_43 = arith.constant 0 : index
    %60 = vector.load %arg5[%c163, %c0_43] : memref<332x4xf32, #tpu.memory_space<vmem>>, vector<16x4xf32>
    tpu.vector_store %arg5[%c163, %c0_43], %59 {strides = array<i32>} : memref<332x4xf32, #tpu.memory_space<vmem>>, vector<16x4xf32>,
    %61 = vector.extract_strided_slice %59 {offsets = [1, 0], sizes = [1, 4], strides = [1, 1]} : vector<16x4xf32> to vector<1x4xf32>
    %c162 = arith.constant 162 : index
    %c0_44 = arith.constant 0 : index
    %62 = vector.load %arg5[%c162, %c0_44] : memref<332x4xf32, #tpu.memory_space<vmem>>, vector<1x4xf32>
    tpu.vector_store %arg5[%c162, %c0_44], %61 {strides = array<i32>} : memref<332x4xf32, #tpu.memory_space<vmem>>, vector<1x4xf32>,
    %63 = vector.extract_strided_slice %59 {offsets = [14, 0], sizes = [1, 4], strides = [1, 1]} : vector<16x4xf32> to vector<1x4xf32>
    %c179 = arith.constant 179 : index
    %c0_45 = arith.constant 0 : index
    %64 = vector.load %arg5[%c179, %c0_45] : memref<332x4xf32, #tpu.memory_space<vmem>>, vector<1x4xf32>
    tpu.vector_store %arg5[%c179, %c0_45], %63 {strides = array<i32>} : memref<332x4xf32, #tpu.memory_space<vmem>>, vector<1x4xf32>,
    %c0_46 = arith.constant 0 : index
    %c144_47 = arith.constant 144 : index
    %c0_48 = arith.constant 0 : index
    %65 = vector.load %arg1[%c0_46, %c144_47, %c0_48] : memref<1x256x4xf32, #tpu.memory_space<vmem>>, vector<1x16x4xf32>
    %66 = vector.shape_cast %65 : vector<1x16x4xf32> to vector<16x4xf32>
    %c181 = arith.constant 181 : index
    %c0_49 = arith.constant 0 : index
    %67 = vector.load %arg5[%c181, %c0_49] : memref<332x4xf32, #tpu.memory_space<vmem>>, vector<16x4xf32>
    tpu.vector_store %arg5[%c181, %c0_49], %66 {strides = array<i32>} : memref<332x4xf32, #tpu.memory_space<vmem>>, vector<16x4xf32>,
    %68 = vector.extract_strided_slice %66 {offsets = [1, 0], sizes = [1, 4], strides = [1, 1]} : vector<16x4xf32> to vector<1x4xf32>
    %c180 = arith.constant 180 : index
    %c0_50 = arith.constant 0 : index
    %69 = vector.load %arg5[%c180, %c0_50] : memref<332x4xf32, #tpu.memory_space<vmem>>, vector<1x4xf32>
    tpu.vector_store %arg5[%c180, %c0_50], %68 {strides = array<i32>} : memref<332x4xf32, #tpu.memory_space<vmem>>, vector<1x4xf32>,
    %70 = vector.extract_strided_slice %66 {offsets = [14, 0], sizes = [1, 4], strides = [1, 1]} : vector<16x4xf32> to vector<1x4xf32>
    %c197 = arith.constant 197 : index
    %c0_51 = arith.constant 0 : index
    %71 = vector.load %arg5[%c197, %c0_51] : memref<332x4xf32, #tpu.memory_space<vmem>>, vector<1x4xf32>
    tpu.vector_store %arg5[%c197, %c0_51], %70 {strides = array<i32>} : memref<332x4xf32, #tpu.memory_space<vmem>>, vector<1x4xf32>,
    %c0_52 = arith.constant 0 : index
    %c160 = arith.constant 160 : index
    %c0_53 = arith.constant 0 : index
    %72 = vector.load %arg1[%c0_52, %c160, %c0_53] : memref<1x256x4xf32, #tpu.memory_space<vmem>>, vector<1x16x4xf32>
    %73 = vector.shape_cast %72 : vector<1x16x4xf32> to vector<16x4xf32>
    %c199 = arith.constant 199 : index
    %c0_54 = arith.constant 0 : index
    %74 = vector.load %arg5[%c199, %c0_54] : memref<332x4xf32, #tpu.memory_space<vmem>>, vector<16x4xf32>
    tpu.vector_store %arg5[%c199, %c0_54], %73 {strides = array<i32>} : memref<332x4xf32, #tpu.memory_space<vmem>>, vector<16x4xf32>,
    %75 = vector.extract_strided_slice %73 {offsets = [1, 0], sizes = [1, 4], strides = [1, 1]} : vector<16x4xf32> to vector<1x4xf32>
    %c198 = arith.constant 198 : index
    %c0_55 = arith.constant 0 : index
    %76 = vector.load %arg5[%c198, %c0_55] : memref<332x4xf32, #tpu.memory_space<vmem>>, vector<1x4xf32>
    tpu.vector_store %arg5[%c198, %c0_55], %75 {strides = array<i32>} : memref<332x4xf32, #tpu.memory_space<vmem>>, vector<1x4xf32>,
    %77 = vector.extract_strided_slice %73 {offsets = [14, 0], sizes = [1, 4], strides = [1, 1]} : vector<16x4xf32> to vector<1x4xf32>
    %c215 = arith.constant 215 : index
    %c0_56 = arith.constant 0 : index
    %78 = vector.load %arg5[%c215, %c0_56] : memref<332x4xf32, #tpu.memory_space<vmem>>, vector<1x4xf32>
    tpu.vector_store %arg5[%c215, %c0_56], %77 {strides = array<i32>} : memref<332x4xf32, #tpu.memory_space<vmem>>, vector<1x4xf32>,
    %c0_57 = arith.constant 0 : index
    %c176 = arith.constant 176 : index
    %c0_58 = arith.constant 0 : index
    %79 = vector.load %arg1[%c0_57, %c176, %c0_58] : memref<1x256x4xf32, #tpu.memory_space<vmem>>, vector<1x16x4xf32>
    %80 = vector.shape_cast %79 : vector<1x16x4xf32> to vector<16x4xf32>
    %c217 = arith.constant 217 : index
    %c0_59 = arith.constant 0 : index
    %81 = vector.load %arg5[%c217, %c0_59] : memref<332x4xf32, #tpu.memory_space<vmem>>, vector<16x4xf32>
    tpu.vector_store %arg5[%c217, %c0_59], %80 {strides = array<i32>} : memref<332x4xf32, #tpu.memory_space<vmem>>, vector<16x4xf32>,
    %82 = vector.extract_strided_slice %80 {offsets = [1, 0], sizes = [1, 4], strides = [1, 1]} : vector<16x4xf32> to vector<1x4xf32>
    %c216 = arith.constant 216 : index
    %c0_60 = arith.constant 0 : index
    %83 = vector.load %arg5[%c216, %c0_60] : memref<332x4xf32, #tpu.memory_space<vmem>>, vector<1x4xf32>
    tpu.vector_store %arg5[%c216, %c0_60], %82 {strides = array<i32>} : memref<332x4xf32, #tpu.memory_space<vmem>>, vector<1x4xf32>,
    %84 = vector.extract_strided_slice %80 {offsets = [14, 0], sizes = [1, 4], strides = [1, 1]} : vector<16x4xf32> to vector<1x4xf32>
    %c233 = arith.constant 233 : index
    %c0_61 = arith.constant 0 : index
    %85 = vector.load %arg5[%c233, %c0_61] : memref<332x4xf32, #tpu.memory_space<vmem>>, vector<1x4xf32>
    tpu.vector_store %arg5[%c233, %c0_61], %84 {strides = array<i32>} : memref<332x4xf32, #tpu.memory_space<vmem>>, vector<1x4xf32>,
    %c0_62 = arith.constant 0 : index
    %c192 = arith.constant 192 : index
    %c0_63 = arith.constant 0 : index
    %86 = vector.load %arg1[%c0_62, %c192, %c0_63] : memref<1x256x4xf32, #tpu.memory_space<vmem>>, vector<1x16x4xf32>
    %87 = vector.shape_cast %86 : vector<1x16x4xf32> to vector<16x4xf32>
    %c235 = arith.constant 235 : index
    %c0_64 = arith.constant 0 : index
    %88 = vector.load %arg5[%c235, %c0_64] : memref<332x4xf32, #tpu.memory_space<vmem>>, vector<16x4xf32>
    tpu.vector_store %arg5[%c235, %c0_64], %87 {strides = array<i32>} : memref<332x4xf32, #tpu.memory_space<vmem>>, vector<16x4xf32>,
    %89 = vector.extract_strided_slice %87 {offsets = [1, 0], sizes = [1, 4], strides = [1, 1]} : vector<16x4xf32> to vector<1x4xf32>
    %c234 = arith.constant 234 : index
    %c0_65 = arith.constant 0 : index
    %90 = vector.load %arg5[%c234, %c0_65] : memref<332x4xf32, #tpu.memory_space<vmem>>, vector<1x4xf32>
    tpu.vector_store %arg5[%c234, %c0_65], %89 {strides = array<i32>} : memref<332x4xf32, #tpu.memory_space<vmem>>, vector<1x4xf32>,
    %91 = vector.extract_strided_slice %87 {offsets = [14, 0], sizes = [1, 4], strides = [1, 1]} : vector<16x4xf32> to vector<1x4xf32>
    %c251 = arith.constant 251 : index
    %c0_66 = arith.constant 0 : index
    %92 = vector.load %arg5[%c251, %c0_66] : memref<332x4xf32, #tpu.memory_space<vmem>>, vector<1x4xf32>
    tpu.vector_store %arg5[%c251, %c0_66], %91 {strides = array<i32>} : memref<332x4xf32, #tpu.memory_space<vmem>>, vector<1x4xf32>,
    %c0_67 = arith.constant 0 : index
    %c208 = arith.constant 208 : index
    %c0_68 = arith.constant 0 : index
    %93 = vector.load %arg1[%c0_67, %c208, %c0_68] : memref<1x256x4xf32, #tpu.memory_space<vmem>>, vector<1x16x4xf32>
    %94 = vector.shape_cast %93 : vector<1x16x4xf32> to vector<16x4xf32>
    %c253 = arith.constant 253 : index
    %c0_69 = arith.constant 0 : index
    %95 = vector.load %arg5[%c253, %c0_69] : memref<332x4xf32, #tpu.memory_space<vmem>>, vector<16x4xf32>
    tpu.vector_store %arg5[%c253, %c0_69], %94 {strides = array<i32>} : memref<332x4xf32, #tpu.memory_space<vmem>>, vector<16x4xf32>,
    %96 = vector.extract_strided_slice %94 {offsets = [1, 0], sizes = [1, 4], strides = [1, 1]} : vector<16x4xf32> to vector<1x4xf32>
    %c252 = arith.constant 252 : index
    %c0_70 = arith.constant 0 : index
    %97 = vector.load %arg5[%c252, %c0_70] : memref<332x4xf32, #tpu.memory_space<vmem>>, vector<1x4xf32>
    tpu.vector_store %arg5[%c252, %c0_70], %96 {strides = array<i32>} : memref<332x4xf32, #tpu.memory_space<vmem>>, vector<1x4xf32>,
    %98 = vector.extract_strided_slice %94 {offsets = [14, 0], sizes = [1, 4], strides = [1, 1]} : vector<16x4xf32> to vector<1x4xf32>
    %c269 = arith.constant 269 : index
    %c0_71 = arith.constant 0 : index
    %99 = vector.load %arg5[%c269, %c0_71] : memref<332x4xf32, #tpu.memory_space<vmem>>, vector<1x4xf32>
    tpu.vector_store %arg5[%c269, %c0_71], %98 {strides = array<i32>} : memref<332x4xf32, #tpu.memory_space<vmem>>, vector<1x4xf32>,
    %c0_72 = arith.constant 0 : index
    %c224 = arith.constant 224 : index
    %c0_73 = arith.constant 0 : index
    %100 = vector.load %arg1[%c0_72, %c224, %c0_73] : memref<1x256x4xf32, #tpu.memory_space<vmem>>, vector<1x16x4xf32>
    %101 = vector.shape_cast %100 : vector<1x16x4xf32> to vector<16x4xf32>
    %c271 = arith.constant 271 : index
    %c0_74 = arith.constant 0 : index
    %102 = vector.load %arg5[%c271, %c0_74] : memref<332x4xf32, #tpu.memory_space<vmem>>, vector<16x4xf32>
    tpu.vector_store %arg5[%c271, %c0_74], %101 {strides = array<i32>} : memref<332x4xf32, #tpu.memory_space<vmem>>, vector<16x4xf32>,
    %103 = vector.extract_strided_slice %101 {offsets = [1, 0], sizes = [1, 4], strides = [1, 1]} : vector<16x4xf32> to vector<1x4xf32>
    %c270 = arith.constant 270 : index
    %c0_75 = arith.constant 0 : index
    %104 = vector.load %arg5[%c270, %c0_75] : memref<332x4xf32, #tpu.memory_space<vmem>>, vector<1x4xf32>
    tpu.vector_store %arg5[%c270, %c0_75], %103 {strides = array<i32>} : memref<332x4xf32, #tpu.memory_space<vmem>>, vector<1x4xf32>,
    %105 = vector.extract_strided_slice %101 {offsets = [14, 0], sizes = [1, 4], strides = [1, 1]} : vector<16x4xf32> to vector<1x4xf32>
    %c287 = arith.constant 287 : index
    %c0_76 = arith.constant 0 : index
    %106 = vector.load %arg5[%c287, %c0_76] : memref<332x4xf32, #tpu.memory_space<vmem>>, vector<1x4xf32>
    tpu.vector_store %arg5[%c287, %c0_76], %105 {strides = array<i32>} : memref<332x4xf32, #tpu.memory_space<vmem>>, vector<1x4xf32>,
    %c0_77 = arith.constant 0 : index
    %c240 = arith.constant 240 : index
    %c0_78 = arith.constant 0 : index
    %107 = vector.load %arg1[%c0_77, %c240, %c0_78] : memref<1x256x4xf32, #tpu.memory_space<vmem>>, vector<1x16x4xf32>
    %108 = vector.shape_cast %107 : vector<1x16x4xf32> to vector<16x4xf32>
    %c289 = arith.constant 289 : index
    %c0_79 = arith.constant 0 : index
    %109 = vector.load %arg5[%c289, %c0_79] : memref<332x4xf32, #tpu.memory_space<vmem>>, vector<16x4xf32>
    tpu.vector_store %arg5[%c289, %c0_79], %108 {strides = array<i32>} : memref<332x4xf32, #tpu.memory_space<vmem>>, vector<16x4xf32>,
    %110 = vector.extract_strided_slice %108 {offsets = [1, 0], sizes = [1, 4], strides = [1, 1]} : vector<16x4xf32> to vector<1x4xf32>
    %c288 = arith.constant 288 : index
    %c0_80 = arith.constant 0 : index
    %111 = vector.load %arg5[%c288, %c0_80] : memref<332x4xf32, #tpu.memory_space<vmem>>, vector<1x4xf32>
    tpu.vector_store %arg5[%c288, %c0_80], %110 {strides = array<i32>} : memref<332x4xf32, #tpu.memory_space<vmem>>, vector<1x4xf32>,
    %112 = vector.extract_strided_slice %108 {offsets = [14, 0], sizes = [1, 4], strides = [1, 1]} : vector<16x4xf32> to vector<1x4xf32>
    %c305 = arith.constant 305 : index
    %c0_81 = arith.constant 0 : index
    %113 = vector.load %arg5[%c305, %c0_81] : memref<332x4xf32, #tpu.memory_space<vmem>>, vector<1x4xf32>
    tpu.vector_store %arg5[%c305, %c0_81], %112 {strides = array<i32>} : memref<332x4xf32, #tpu.memory_space<vmem>>, vector<1x4xf32>,
    %c36_82 = arith.constant 36 : index
    %c0_83 = arith.constant 0 : index
    %114 = vector.load %arg5[%c36_82, %c0_83] : memref<332x4xf32, #tpu.memory_space<vmem>>, vector<18x4xf32>
    %c0_84 = arith.constant 0 : index
    %c0_85 = arith.constant 0 : index
    %115 = vector.load %arg5[%c0_84, %c0_85] : memref<332x4xf32, #tpu.memory_space<vmem>>, vector<18x4xf32>
    tpu.vector_store %arg5[%c0_84, %c0_85], %114 {strides = array<i32>} : memref<332x4xf32, #tpu.memory_space<vmem>>, vector<18x4xf32>,
    %c270_86 = arith.constant 270 : index
    %c0_87 = arith.constant 0 : index
    %116 = vector.load %arg5[%c270_86, %c0_87] : memref<332x4xf32, #tpu.memory_space<vmem>>, vector<18x4xf32>
    %c306 = arith.constant 306 : index
    %c0_88 = arith.constant 0 : index
    %117 = vector.load %arg5[%c306, %c0_88] : memref<332x4xf32, #tpu.memory_space<vmem>>, vector<18x4xf32>
    tpu.vector_store %arg5[%c306, %c0_88], %116 {strides = array<i32>} : memref<332x4xf32, #tpu.memory_space<vmem>>, vector<18x4xf32>,
    %c0_89 = arith.constant 0 : index
    %c0_90 = arith.constant 0 : index
    %118 = vector.load %arg5[%c0_89, %c0_90] : memref<332x4xf32, #tpu.memory_space<vmem>>, vector<288x4xf32>
    %119 = arith.truncf %118 : vector<288x4xf32> to vector<288x4xbf16>
    %c0_91 = arith.constant 0 : index
    %c0_92 = arith.constant 0 : index
    %c0_93 = arith.constant 0 : index
    %120 = vector.load %arg2[%c0_91, %c0_92, %c0_93] : memref<9x4x4xbf16, #tpu.memory_space<vmem>>, vector<1x4x4xbf16>
    %121 = vector.shape_cast %120 : vector<1x4x4xbf16> to vector<4x4xbf16>
    %cst_94 = arith.constant dense<0.000000e+00> : vector<288x4xf32>
    %122 = tpu.matmul %119, %121, %cst_94 {dimension_numbers = #tpu.dot_dimension_numbers<[1], [0], [0], [1], [0, 0, 1, 1], [], []>} : vector<288x4xbf16>, vector<4x4xbf16>, vector<288x4xf32> -> vector<288x4xf32>
    %c0_95 = arith.constant 0 : index
    %c0_96 = arith.constant 0 : index
    %123 = vector.load %arg6[%c0_95, %c0_96] : memref<288x4xf32, #tpu.memory_space<vmem>>, vector<288x4xf32>
    tpu.vector_store %arg6[%c0_95, %c0_96], %122 {strides = array<i32>} : memref<288x4xf32, #tpu.memory_space<vmem>>, vector<288x4xf32>,
    %c1 = arith.constant 1 : index
    %c0_97 = arith.constant 0 : index
    %124 = vector.load %arg5[%c1, %c0_97] : memref<332x4xf32, #tpu.memory_space<vmem>>, vector<288x4xf32>
    %125 = arith.truncf %124 : vector<288x4xf32> to vector<288x4xbf16>
    %c1_98 = arith.constant 1 : index
    %c0_99 = arith.constant 0 : index
    %c0_100 = arith.constant 0 : index
    %126 = vector.load %arg2[%c1_98, %c0_99, %c0_100] : memref<9x4x4xbf16, #tpu.memory_space<vmem>>, vector<1x4x4xbf16>
    %127 = vector.shape_cast %126 : vector<1x4x4xbf16> to vector<4x4xbf16>
    %cst_101 = arith.constant dense<0.000000e+00> : vector<288x4xf32>
    %128 = tpu.matmul %125, %127, %cst_101 {dimension_numbers = #tpu.dot_dimension_numbers<[1], [0], [0], [1], [0, 0, 1, 1], [], []>} : vector<288x4xbf16>, vector<4x4xbf16>, vector<288x4xf32> -> vector<288x4xf32>
    %c0_102 = arith.constant 0 : index
    %c0_103 = arith.constant 0 : index
    %129 = vector.load %arg6[%c0_102, %c0_103] : memref<288x4xf32, #tpu.memory_space<vmem>>, vector<288x4xf32>
    %130 = arith.addf %129, %128 : vector<288x4xf32>
    %c0_104 = arith.constant 0 : index
    %c0_105 = arith.constant 0 : index
    %131 = vector.load %arg6[%c0_104, %c0_105] : memref<288x4xf32, #tpu.memory_space<vmem>>, vector<288x4xf32>
    tpu.vector_store %arg6[%c0_104, %c0_105], %130 {strides = array<i32>} : memref<288x4xf32, #tpu.memory_space<vmem>>, vector<288x4xf32>,
    %c2 = arith.constant 2 : index
    %c0_106 = arith.constant 0 : index
    %132 = vector.load %arg5[%c2, %c0_106] : memref<332x4xf32, #tpu.memory_space<vmem>>, vector<288x4xf32>
    %133 = arith.truncf %132 : vector<288x4xf32> to vector<288x4xbf16>
    %c2_107 = arith.constant 2 : index
    %c0_108 = arith.constant 0 : index
    %c0_109 = arith.constant 0 : index
    %134 = vector.load %arg2[%c2_107, %c0_108, %c0_109] : memref<9x4x4xbf16, #tpu.memory_space<vmem>>, vector<1x4x4xbf16>
    %135 = vector.shape_cast %134 : vector<1x4x4xbf16> to vector<4x4xbf16>
    %cst_110 = arith.constant dense<0.000000e+00> : vector<288x4xf32>
    %136 = tpu.matmul %133, %135, %cst_110 {dimension_numbers = #tpu.dot_dimension_numbers<[1], [0], [0], [1], [0, 0, 1, 1], [], []>} : vector<288x4xbf16>, vector<4x4xbf16>, vector<288x4xf32> -> vector<288x4xf32>
    %c0_111 = arith.constant 0 : index
    %c0_112 = arith.constant 0 : index
    %137 = vector.load %arg6[%c0_111, %c0_112] : memref<288x4xf32, #tpu.memory_space<vmem>>, vector<288x4xf32>
    %138 = arith.addf %137, %136 : vector<288x4xf32>
    %c0_113 = arith.constant 0 : index
    %c0_114 = arith.constant 0 : index
    %139 = vector.load %arg6[%c0_113, %c0_114] : memref<288x4xf32, #tpu.memory_space<vmem>>, vector<288x4xf32>
    tpu.vector_store %arg6[%c0_113, %c0_114], %138 {strides = array<i32>} : memref<288x4xf32, #tpu.memory_space<vmem>>, vector<288x4xf32>,
    %c18_115 = arith.constant 18 : index
    %c0_116 = arith.constant 0 : index
    %140 = vector.load %arg5[%c18_115, %c0_116] : memref<332x4xf32, #tpu.memory_space<vmem>>, vector<288x4xf32>
    %141 = arith.truncf %140 : vector<288x4xf32> to vector<288x4xbf16>
    %c3 = arith.constant 3 : index
    %c0_117 = arith.constant 0 : index
    %c0_118 = arith.constant 0 : index
    %142 = vector.load %arg2[%c3, %c0_117, %c0_118] : memref<9x4x4xbf16, #tpu.memory_space<vmem>>, vector<1x4x4xbf16>
    %143 = vector.shape_cast %142 : vector<1x4x4xbf16> to vector<4x4xbf16>
    %cst_119 = arith.constant dense<0.000000e+00> : vector<288x4xf32>
    %144 = tpu.matmul %141, %143, %cst_119 {dimension_numbers = #tpu.dot_dimension_numbers<[1], [0], [0], [1], [0, 0, 1, 1], [], []>} : vector<288x4xbf16>, vector<4x4xbf16>, vector<288x4xf32> -> vector<288x4xf32>
    %c0_120 = arith.constant 0 : index
    %c0_121 = arith.constant 0 : index
    %145 = vector.load %arg6[%c0_120, %c0_121] : memref<288x4xf32, #tpu.memory_space<vmem>>, vector<288x4xf32>
    %146 = arith.addf %145, %144 : vector<288x4xf32>
    %c0_122 = arith.constant 0 : index
    %c0_123 = arith.constant 0 : index
    %147 = vector.load %arg6[%c0_122, %c0_123] : memref<288x4xf32, #tpu.memory_space<vmem>>, vector<288x4xf32>
    tpu.vector_store %arg6[%c0_122, %c0_123], %146 {strides = array<i32>} : memref<288x4xf32, #tpu.memory_space<vmem>>, vector<288x4xf32>,
    %c19_124 = arith.constant 19 : index
    %c0_125 = arith.constant 0 : index
    %148 = vector.load %arg5[%c19_124, %c0_125] : memref<332x4xf32, #tpu.memory_space<vmem>>, vector<288x4xf32>
    %149 = arith.truncf %148 : vector<288x4xf32> to vector<288x4xbf16>
    %c4 = arith.constant 4 : index
    %c0_126 = arith.constant 0 : index
    %c0_127 = arith.constant 0 : index
    %150 = vector.load %arg2[%c4, %c0_126, %c0_127] : memref<9x4x4xbf16, #tpu.memory_space<vmem>>, vector<1x4x4xbf16>
    %151 = vector.shape_cast %150 : vector<1x4x4xbf16> to vector<4x4xbf16>
    %cst_128 = arith.constant dense<0.000000e+00> : vector<288x4xf32>
    %152 = tpu.matmul %149, %151, %cst_128 {dimension_numbers = #tpu.dot_dimension_numbers<[1], [0], [0], [1], [0, 0, 1, 1], [], []>} : vector<288x4xbf16>, vector<4x4xbf16>, vector<288x4xf32> -> vector<288x4xf32>
    %c0_129 = arith.constant 0 : index
    %c0_130 = arith.constant 0 : index
    %153 = vector.load %arg6[%c0_129, %c0_130] : memref<288x4xf32, #tpu.memory_space<vmem>>, vector<288x4xf32>
    %154 = arith.addf %153, %152 : vector<288x4xf32>
    %c0_131 = arith.constant 0 : index
    %c0_132 = arith.constant 0 : index
    %155 = vector.load %arg6[%c0_131, %c0_132] : memref<288x4xf32, #tpu.memory_space<vmem>>, vector<288x4xf32>
    tpu.vector_store %arg6[%c0_131, %c0_132], %154 {strides = array<i32>} : memref<288x4xf32, #tpu.memory_space<vmem>>, vector<288x4xf32>,
    %c20 = arith.constant 20 : index
    %c0_133 = arith.constant 0 : index
    %156 = vector.load %arg5[%c20, %c0_133] : memref<332x4xf32, #tpu.memory_space<vmem>>, vector<288x4xf32>
    %157 = arith.truncf %156 : vector<288x4xf32> to vector<288x4xbf16>
    %c5 = arith.constant 5 : index
    %c0_134 = arith.constant 0 : index
    %c0_135 = arith.constant 0 : index
    %158 = vector.load %arg2[%c5, %c0_134, %c0_135] : memref<9x4x4xbf16, #tpu.memory_space<vmem>>, vector<1x4x4xbf16>
    %159 = vector.shape_cast %158 : vector<1x4x4xbf16> to vector<4x4xbf16>
    %cst_136 = arith.constant dense<0.000000e+00> : vector<288x4xf32>
    %160 = tpu.matmul %157, %159, %cst_136 {dimension_numbers = #tpu.dot_dimension_numbers<[1], [0], [0], [1], [0, 0, 1, 1], [], []>} : vector<288x4xbf16>, vector<4x4xbf16>, vector<288x4xf32> -> vector<288x4xf32>
    %c0_137 = arith.constant 0 : index
    %c0_138 = arith.constant 0 : index
    %161 = vector.load %arg6[%c0_137, %c0_138] : memref<288x4xf32, #tpu.memory_space<vmem>>, vector<288x4xf32>
    %162 = arith.addf %161, %160 : vector<288x4xf32>
    %c0_139 = arith.constant 0 : index
    %c0_140 = arith.constant 0 : index
    %163 = vector.load %arg6[%c0_139, %c0_140] : memref<288x4xf32, #tpu.memory_space<vmem>>, vector<288x4xf32>
    tpu.vector_store %arg6[%c0_139, %c0_140], %162 {strides = array<i32>} : memref<288x4xf32, #tpu.memory_space<vmem>>, vector<288x4xf32>,
    %c36_141 = arith.constant 36 : index
    %c0_142 = arith.constant 0 : index
    %164 = vector.load %arg5[%c36_141, %c0_142] : memref<332x4xf32, #tpu.memory_space<vmem>>, vector<288x4xf32>
    %165 = arith.truncf %164 : vector<288x4xf32> to vector<288x4xbf16>
    %c6 = arith.constant 6 : index
    %c0_143 = arith.constant 0 : index
    %c0_144 = arith.constant 0 : index
    %166 = vector.load %arg2[%c6, %c0_143, %c0_144] : memref<9x4x4xbf16, #tpu.memory_space<vmem>>, vector<1x4x4xbf16>
    %167 = vector.shape_cast %166 : vector<1x4x4xbf16> to vector<4x4xbf16>
    %cst_145 = arith.constant dense<0.000000e+00> : vector<288x4xf32>
    %168 = tpu.matmul %165, %167, %cst_145 {dimension_numbers = #tpu.dot_dimension_numbers<[1], [0], [0], [1], [0, 0, 1, 1], [], []>} : vector<288x4xbf16>, vector<4x4xbf16>, vector<288x4xf32> -> vector<288x4xf32>
    %c0_146 = arith.constant 0 : index
    %c0_147 = arith.constant 0 : index
    %169 = vector.load %arg6[%c0_146, %c0_147] : memref<288x4xf32, #tpu.memory_space<vmem>>, vector<288x4xf32>
    %170 = arith.addf %169, %168 : vector<288x4xf32>
    %c0_148 = arith.constant 0 : index
    %c0_149 = arith.constant 0 : index
    %171 = vector.load %arg6[%c0_148, %c0_149] : memref<288x4xf32, #tpu.memory_space<vmem>>, vector<288x4xf32>
    tpu.vector_store %arg6[%c0_148, %c0_149], %170 {strides = array<i32>} : memref<288x4xf32, #tpu.memory_space<vmem>>, vector<288x4xf32>,
    %c37_150 = arith.constant 37 : index
    %c0_151 = arith.constant 0 : index
    %172 = vector.load %arg5[%c37_150, %c0_151] : memref<332x4xf32, #tpu.memory_space<vmem>>, vector<288x4xf32>
    %173 = arith.truncf %172 : vector<288x4xf32> to vector<288x4xbf16>
    %c7 = arith.constant 7 : index
    %c0_152 = arith.constant 0 : index
    %c0_153 = arith.constant 0 : index
    %174 = vector.load %arg2[%c7, %c0_152, %c0_153] : memref<9x4x4xbf16, #tpu.memory_space<vmem>>, vector<1x4x4xbf16>
    %175 = vector.shape_cast %174 : vector<1x4x4xbf16> to vector<4x4xbf16>
    %cst_154 = arith.constant dense<0.000000e+00> : vector<288x4xf32>
    %176 = tpu.matmul %173, %175, %cst_154 {dimension_numbers = #tpu.dot_dimension_numbers<[1], [0], [0], [1], [0, 0, 1, 1], [], []>} : vector<288x4xbf16>, vector<4x4xbf16>, vector<288x4xf32> -> vector<288x4xf32>
    %c0_155 = arith.constant 0 : index
    %c0_156 = arith.constant 0 : index
    %177 = vector.load %arg6[%c0_155, %c0_156] : memref<288x4xf32, #tpu.memory_space<vmem>>, vector<288x4xf32>
    %178 = arith.addf %177, %176 : vector<288x4xf32>
    %c0_157 = arith.constant 0 : index
    %c0_158 = arith.constant 0 : index
    %179 = vector.load %arg6[%c0_157, %c0_158] : memref<288x4xf32, #tpu.memory_space<vmem>>, vector<288x4xf32>
    tpu.vector_store %arg6[%c0_157, %c0_158], %178 {strides = array<i32>} : memref<288x4xf32, #tpu.memory_space<vmem>>, vector<288x4xf32>,
    %c38 = arith.constant 38 : index
    %c0_159 = arith.constant 0 : index
    %180 = vector.load %arg5[%c38, %c0_159] : memref<332x4xf32, #tpu.memory_space<vmem>>, vector<288x4xf32>
    %181 = arith.truncf %180 : vector<288x4xf32> to vector<288x4xbf16>
    %c8 = arith.constant 8 : index
    %c0_160 = arith.constant 0 : index
    %c0_161 = arith.constant 0 : index
    %182 = vector.load %arg2[%c8, %c0_160, %c0_161] : memref<9x4x4xbf16, #tpu.memory_space<vmem>>, vector<1x4x4xbf16>
    %183 = vector.shape_cast %182 : vector<1x4x4xbf16> to vector<4x4xbf16>
    %cst_162 = arith.constant dense<0.000000e+00> : vector<288x4xf32>
    %184 = tpu.matmul %181, %183, %cst_162 {dimension_numbers = #tpu.dot_dimension_numbers<[1], [0], [0], [1], [0, 0, 1, 1], [], []>} : vector<288x4xbf16>, vector<4x4xbf16>, vector<288x4xf32> -> vector<288x4xf32>
    %c0_163 = arith.constant 0 : index
    %c0_164 = arith.constant 0 : index
    %185 = vector.load %arg6[%c0_163, %c0_164] : memref<288x4xf32, #tpu.memory_space<vmem>>, vector<288x4xf32>
    %186 = arith.addf %185, %184 : vector<288x4xf32>
    %c0_165 = arith.constant 0 : index
    %c0_166 = arith.constant 0 : index
    %187 = vector.load %arg6[%c0_165, %c0_166] : memref<288x4xf32, #tpu.memory_space<vmem>>, vector<288x4xf32>
    tpu.vector_store %arg6[%c0_165, %c0_166], %186 {strides = array<i32>} : memref<288x4xf32, #tpu.memory_space<vmem>>, vector<288x4xf32>,
    %cst_167 = arith.constant 0.000000e+00 : f32
    %188 = vector.broadcast %cst_167 : f32 to vector<1x4xf32>
    %cst_168 = arith.constant 0.000000e+00 : f32
    %189 = vector.broadcast %cst_168 : f32 to vector<1x4xf32>
    %c0_169 = arith.constant 0 : index
    %c0_170 = arith.constant 0 : index
    %190 = vector.load %arg6[%c0_169, %c0_170] : memref<288x4xf32, #tpu.memory_space<vmem>>, vector<16x4xf32>
    %cst_171 = arith.constant dense<0.000000e+00> : vector<4xf32>
    %191 = vector.multi_reduction <add>, %190, %cst_171 [0] : vector<16x4xf32> to vector<4xf32>
    %192 = vector.shape_cast %191 : vector<4xf32> to vector<1x4xf32>
    %193 = arith.addf %188, %192 : vector<1x4xf32>
    %194 = arith.mulf %190, %190 : vector<16x4xf32>
    %cst_172 = arith.constant dense<0.000000e+00> : vector<4xf32>
    %195 = vector.multi_reduction <add>, %194, %cst_172 [0] : vector<16x4xf32> to vector<4xf32>
    %196 = vector.shape_cast %195 : vector<4xf32> to vector<1x4xf32>
    %197 = arith.addf %189, %196 : vector<1x4xf32>
    %c18_173 = arith.constant 18 : index
    %c0_174 = arith.constant 0 : index
    %198 = vector.load %arg6[%c18_173, %c0_174] : memref<288x4xf32, #tpu.memory_space<vmem>>, vector<16x4xf32>
    %cst_175 = arith.constant dense<0.000000e+00> : vector<4xf32>
    %199 = vector.multi_reduction <add>, %198, %cst_175 [0] : vector<16x4xf32> to vector<4xf32>
    %200 = vector.shape_cast %199 : vector<4xf32> to vector<1x4xf32>
    %201 = arith.addf %193, %200 : vector<1x4xf32>
    %202 = arith.mulf %198, %198 : vector<16x4xf32>
    %cst_176 = arith.constant dense<0.000000e+00> : vector<4xf32>
    %203 = vector.multi_reduction <add>, %202, %cst_176 [0] : vector<16x4xf32> to vector<4xf32>
    %204 = vector.shape_cast %203 : vector<4xf32> to vector<1x4xf32>
    %205 = arith.addf %197, %204 : vector<1x4xf32>
    %c36_177 = arith.constant 36 : index
    %c0_178 = arith.constant 0 : index
    %206 = vector.load %arg6[%c36_177, %c0_178] : memref<288x4xf32, #tpu.memory_space<vmem>>, vector<16x4xf32>
    %cst_179 = arith.constant dense<0.000000e+00> : vector<4xf32>
    %207 = vector.multi_reduction <add>, %206, %cst_179 [0] : vector<16x4xf32> to vector<4xf32>
    %208 = vector.shape_cast %207 : vector<4xf32> to vector<1x4xf32>
    %209 = arith.addf %201, %208 : vector<1x4xf32>
    %210 = arith.mulf %206, %206 : vector<16x4xf32>
    %cst_180 = arith.constant dense<0.000000e+00> : vector<4xf32>
    %211 = vector.multi_reduction <add>, %210, %cst_180 [0] : vector<16x4xf32> to vector<4xf32>
    %212 = vector.shape_cast %211 : vector<4xf32> to vector<1x4xf32>
    %213 = arith.addf %205, %212 : vector<1x4xf32>
    %c54_181 = arith.constant 54 : index
    %c0_182 = arith.constant 0 : index
    %214 = vector.load %arg6[%c54_181, %c0_182] : memref<288x4xf32, #tpu.memory_space<vmem>>, vector<16x4xf32>
    %cst_183 = arith.constant dense<0.000000e+00> : vector<4xf32>
    %215 = vector.multi_reduction <add>, %214, %cst_183 [0] : vector<16x4xf32> to vector<4xf32>
    %216 = vector.shape_cast %215 : vector<4xf32> to vector<1x4xf32>
    %217 = arith.addf %209, %216 : vector<1x4xf32>
    %218 = arith.mulf %214, %214 : vector<16x4xf32>
    %cst_184 = arith.constant dense<0.000000e+00> : vector<4xf32>
    %219 = vector.multi_reduction <add>, %218, %cst_184 [0] : vector<16x4xf32> to vector<4xf32>
    %220 = vector.shape_cast %219 : vector<4xf32> to vector<1x4xf32>
    %221 = arith.addf %213, %220 : vector<1x4xf32>
    %c72_185 = arith.constant 72 : index
    %c0_186 = arith.constant 0 : index
    %222 = vector.load %arg6[%c72_185, %c0_186] : memref<288x4xf32, #tpu.memory_space<vmem>>, vector<16x4xf32>
    %cst_187 = arith.constant dense<0.000000e+00> : vector<4xf32>
    %223 = vector.multi_reduction <add>, %222, %cst_187 [0] : vector<16x4xf32> to vector<4xf32>
    %224 = vector.shape_cast %223 : vector<4xf32> to vector<1x4xf32>
    %225 = arith.addf %217, %224 : vector<1x4xf32>
    %226 = arith.mulf %222, %222 : vector<16x4xf32>
    %cst_188 = arith.constant dense<0.000000e+00> : vector<4xf32>
    %227 = vector.multi_reduction <add>, %226, %cst_188 [0] : vector<16x4xf32> to vector<4xf32>
    %228 = vector.shape_cast %227 : vector<4xf32> to vector<1x4xf32>
    %229 = arith.addf %221, %228 : vector<1x4xf32>
    %c90_189 = arith.constant 90 : index
    %c0_190 = arith.constant 0 : index
    %230 = vector.load %arg6[%c90_189, %c0_190] : memref<288x4xf32, #tpu.memory_space<vmem>>, vector<16x4xf32>
    %cst_191 = arith.constant dense<0.000000e+00> : vector<4xf32>
    %231 = vector.multi_reduction <add>, %230, %cst_191 [0] : vector<16x4xf32> to vector<4xf32>
    %232 = vector.shape_cast %231 : vector<4xf32> to vector<1x4xf32>
    %233 = arith.addf %225, %232 : vector<1x4xf32>
    %234 = arith.mulf %230, %230 : vector<16x4xf32>
    %cst_192 = arith.constant dense<0.000000e+00> : vector<4xf32>
    %235 = vector.multi_reduction <add>, %234, %cst_192 [0] : vector<16x4xf32> to vector<4xf32>
    %236 = vector.shape_cast %235 : vector<4xf32> to vector<1x4xf32>
    %237 = arith.addf %229, %236 : vector<1x4xf32>
    %c108_193 = arith.constant 108 : index
    %c0_194 = arith.constant 0 : index
    %238 = vector.load %arg6[%c108_193, %c0_194] : memref<288x4xf32, #tpu.memory_space<vmem>>, vector<16x4xf32>
    %cst_195 = arith.constant dense<0.000000e+00> : vector<4xf32>
    %239 = vector.multi_reduction <add>, %238, %cst_195 [0] : vector<16x4xf32> to vector<4xf32>
    %240 = vector.shape_cast %239 : vector<4xf32> to vector<1x4xf32>
    %241 = arith.addf %233, %240 : vector<1x4xf32>
    %242 = arith.mulf %238, %238 : vector<16x4xf32>
    %cst_196 = arith.constant dense<0.000000e+00> : vector<4xf32>
    %243 = vector.multi_reduction <add>, %242, %cst_196 [0] : vector<16x4xf32> to vector<4xf32>
    %244 = vector.shape_cast %243 : vector<4xf32> to vector<1x4xf32>
    %245 = arith.addf %237, %244 : vector<1x4xf32>
    %c126_197 = arith.constant 126 : index
    %c0_198 = arith.constant 0 : index
    %246 = vector.load %arg6[%c126_197, %c0_198] : memref<288x4xf32, #tpu.memory_space<vmem>>, vector<16x4xf32>
    %cst_199 = arith.constant dense<0.000000e+00> : vector<4xf32>
    %247 = vector.multi_reduction <add>, %246, %cst_199 [0] : vector<16x4xf32> to vector<4xf32>
    %248 = vector.shape_cast %247 : vector<4xf32> to vector<1x4xf32>
    %249 = arith.addf %241, %248 : vector<1x4xf32>
    %250 = arith.mulf %246, %246 : vector<16x4xf32>
    %cst_200 = arith.constant dense<0.000000e+00> : vector<4xf32>
    %251 = vector.multi_reduction <add>, %250, %cst_200 [0] : vector<16x4xf32> to vector<4xf32>
    %252 = vector.shape_cast %251 : vector<4xf32> to vector<1x4xf32>
    %253 = arith.addf %245, %252 : vector<1x4xf32>
    %c144_201 = arith.constant 144 : index
    %c0_202 = arith.constant 0 : index
    %254 = vector.load %arg6[%c144_201, %c0_202] : memref<288x4xf32, #tpu.memory_space<vmem>>, vector<16x4xf32>
    %cst_203 = arith.constant dense<0.000000e+00> : vector<4xf32>
    %255 = vector.multi_reduction <add>, %254, %cst_203 [0] : vector<16x4xf32> to vector<4xf32>
    %256 = vector.shape_cast %255 : vector<4xf32> to vector<1x4xf32>
    %257 = arith.addf %249, %256 : vector<1x4xf32>
    %258 = arith.mulf %254, %254 : vector<16x4xf32>
    %cst_204 = arith.constant dense<0.000000e+00> : vector<4xf32>
    %259 = vector.multi_reduction <add>, %258, %cst_204 [0] : vector<16x4xf32> to vector<4xf32>
    %260 = vector.shape_cast %259 : vector<4xf32> to vector<1x4xf32>
    %261 = arith.addf %253, %260 : vector<1x4xf32>
    %c162_205 = arith.constant 162 : index
    %c0_206 = arith.constant 0 : index
    %262 = vector.load %arg6[%c162_205, %c0_206] : memref<288x4xf32, #tpu.memory_space<vmem>>, vector<16x4xf32>
    %cst_207 = arith.constant dense<0.000000e+00> : vector<4xf32>
    %263 = vector.multi_reduction <add>, %262, %cst_207 [0] : vector<16x4xf32> to vector<4xf32>
    %264 = vector.shape_cast %263 : vector<4xf32> to vector<1x4xf32>
    %265 = arith.addf %257, %264 : vector<1x4xf32>
    %266 = arith.mulf %262, %262 : vector<16x4xf32>
    %cst_208 = arith.constant dense<0.000000e+00> : vector<4xf32>
    %267 = vector.multi_reduction <add>, %266, %cst_208 [0] : vector<16x4xf32> to vector<4xf32>
    %268 = vector.shape_cast %267 : vector<4xf32> to vector<1x4xf32>
    %269 = arith.addf %261, %268 : vector<1x4xf32>
    %c180_209 = arith.constant 180 : index
    %c0_210 = arith.constant 0 : index
    %270 = vector.load %arg6[%c180_209, %c0_210] : memref<288x4xf32, #tpu.memory_space<vmem>>, vector<16x4xf32>
    %cst_211 = arith.constant dense<0.000000e+00> : vector<4xf32>
    %271 = vector.multi_reduction <add>, %270, %cst_211 [0] : vector<16x4xf32> to vector<4xf32>
    %272 = vector.shape_cast %271 : vector<4xf32> to vector<1x4xf32>
    %273 = arith.addf %265, %272 : vector<1x4xf32>
    %274 = arith.mulf %270, %270 : vector<16x4xf32>
    %cst_212 = arith.constant dense<0.000000e+00> : vector<4xf32>
    %275 = vector.multi_reduction <add>, %274, %cst_212 [0] : vector<16x4xf32> to vector<4xf32>
    %276 = vector.shape_cast %275 : vector<4xf32> to vector<1x4xf32>
    %277 = arith.addf %269, %276 : vector<1x4xf32>
    %c198_213 = arith.constant 198 : index
    %c0_214 = arith.constant 0 : index
    %278 = vector.load %arg6[%c198_213, %c0_214] : memref<288x4xf32, #tpu.memory_space<vmem>>, vector<16x4xf32>
    %cst_215 = arith.constant dense<0.000000e+00> : vector<4xf32>
    %279 = vector.multi_reduction <add>, %278, %cst_215 [0] : vector<16x4xf32> to vector<4xf32>
    %280 = vector.shape_cast %279 : vector<4xf32> to vector<1x4xf32>
    %281 = arith.addf %273, %280 : vector<1x4xf32>
    %282 = arith.mulf %278, %278 : vector<16x4xf32>
    %cst_216 = arith.constant dense<0.000000e+00> : vector<4xf32>
    %283 = vector.multi_reduction <add>, %282, %cst_216 [0] : vector<16x4xf32> to vector<4xf32>
    %284 = vector.shape_cast %283 : vector<4xf32> to vector<1x4xf32>
    %285 = arith.addf %277, %284 : vector<1x4xf32>
    %c216_217 = arith.constant 216 : index
    %c0_218 = arith.constant 0 : index
    %286 = vector.load %arg6[%c216_217, %c0_218] : memref<288x4xf32, #tpu.memory_space<vmem>>, vector<16x4xf32>
    %cst_219 = arith.constant dense<0.000000e+00> : vector<4xf32>
    %287 = vector.multi_reduction <add>, %286, %cst_219 [0] : vector<16x4xf32> to vector<4xf32>
    %288 = vector.shape_cast %287 : vector<4xf32> to vector<1x4xf32>
    %289 = arith.addf %281, %288 : vector<1x4xf32>
    %290 = arith.mulf %286, %286 : vector<16x4xf32>
    %cst_220 = arith.constant dense<0.000000e+00> : vector<4xf32>
    %291 = vector.multi_reduction <add>, %290, %cst_220 [0] : vector<16x4xf32> to vector<4xf32>
    %292 = vector.shape_cast %291 : vector<4xf32> to vector<1x4xf32>
    %293 = arith.addf %285, %292 : vector<1x4xf32>
    %c234_221 = arith.constant 234 : index
    %c0_222 = arith.constant 0 : index
    %294 = vector.load %arg6[%c234_221, %c0_222] : memref<288x4xf32, #tpu.memory_space<vmem>>, vector<16x4xf32>
    %cst_223 = arith.constant dense<0.000000e+00> : vector<4xf32>
    %295 = vector.multi_reduction <add>, %294, %cst_223 [0] : vector<16x4xf32> to vector<4xf32>
    %296 = vector.shape_cast %295 : vector<4xf32> to vector<1x4xf32>
    %297 = arith.addf %289, %296 : vector<1x4xf32>
    %298 = arith.mulf %294, %294 : vector<16x4xf32>
    %cst_224 = arith.constant dense<0.000000e+00> : vector<4xf32>
    %299 = vector.multi_reduction <add>, %298, %cst_224 [0] : vector<16x4xf32> to vector<4xf32>
    %300 = vector.shape_cast %299 : vector<4xf32> to vector<1x4xf32>
    %301 = arith.addf %293, %300 : vector<1x4xf32>
    %c252_225 = arith.constant 252 : index
    %c0_226 = arith.constant 0 : index
    %302 = vector.load %arg6[%c252_225, %c0_226] : memref<288x4xf32, #tpu.memory_space<vmem>>, vector<16x4xf32>
    %cst_227 = arith.constant dense<0.000000e+00> : vector<4xf32>
    %303 = vector.multi_reduction <add>, %302, %cst_227 [0] : vector<16x4xf32> to vector<4xf32>
    %304 = vector.shape_cast %303 : vector<4xf32> to vector<1x4xf32>
    %305 = arith.addf %297, %304 : vector<1x4xf32>
    %306 = arith.mulf %302, %302 : vector<16x4xf32>
    %cst_228 = arith.constant dense<0.000000e+00> : vector<4xf32>
    %307 = vector.multi_reduction <add>, %306, %cst_228 [0] : vector<16x4xf32> to vector<4xf32>
    %308 = vector.shape_cast %307 : vector<4xf32> to vector<1x4xf32>
    %309 = arith.addf %301, %308 : vector<1x4xf32>
    %c270_229 = arith.constant 270 : index
    %c0_230 = arith.constant 0 : index
    %310 = vector.load %arg6[%c270_229, %c0_230] : memref<288x4xf32, #tpu.memory_space<vmem>>, vector<16x4xf32>
    %cst_231 = arith.constant dense<0.000000e+00> : vector<4xf32>
    %311 = vector.multi_reduction <add>, %310, %cst_231 [0] : vector<16x4xf32> to vector<4xf32>
    %312 = vector.shape_cast %311 : vector<4xf32> to vector<1x4xf32>
    %313 = arith.addf %305, %312 : vector<1x4xf32>
    %314 = arith.mulf %310, %310 : vector<16x4xf32>
    %cst_232 = arith.constant dense<0.000000e+00> : vector<4xf32>
    %315 = vector.multi_reduction <add>, %314, %cst_232 [0] : vector<16x4xf32> to vector<4xf32>
    %316 = vector.shape_cast %315 : vector<4xf32> to vector<1x4xf32>
    %317 = arith.addf %309, %316 : vector<1x4xf32>
    %cst_233 = arith.constant 2.560000e+02 : f32
    %318 = vector.broadcast %cst_233 : f32 to vector<1x4xf32>
    %319 = arith.divf %313, %318 : vector<1x4xf32>
    %cst_234 = arith.constant 2.560000e+02 : f32
    %320 = vector.broadcast %cst_234 : f32 to vector<1x4xf32>
    %321 = arith.divf %317, %320 : vector<1x4xf32>
    %322 = arith.mulf %319, %319 : vector<1x4xf32>
    %323 = arith.subf %321, %322 : vector<1x4xf32>
    %cst_235 = arith.constant 0.000000e+00 : f32
    %324 = vector.broadcast %cst_235 : f32 to vector<1x4xf32>
    %325 = arith.maximumf %323, %324 : vector<1x4xf32>
    %cst_236 = arith.constant 9.99999974E-6 : f32
    %326 = vector.broadcast %cst_236 : f32 to vector<1x4xf32>
    %327 = arith.addf %325, %326 : vector<1x4xf32>
    %328 = math.rsqrt %327 : vector<1x4xf32>
    %c0_237 = arith.constant 0 : index
    %c0_238 = arith.constant 0 : index
    %329 = vector.load %arg6[%c0_237, %c0_238] : memref<288x4xf32, #tpu.memory_space<vmem>>, vector<16x4xf32>
    %330 = vector.broadcast %319 : vector<1x4xf32> to vector<16x4xf32>
    %331 = arith.subf %329, %330 : vector<16x4xf32>
    %332 = vector.broadcast %328 : vector<1x4xf32> to vector<16x4xf32>
    %333 = arith.mulf %331, %332 : vector<16x4xf32>
    %cst_239 = arith.constant 0.000000e+00 : f32
    %334 = vector.broadcast %cst_239 : f32 to vector<16x4xf32>
    %335 = arith.maximumf %333, %334 : vector<16x4xf32>
    %c19_240 = arith.constant 19 : index
    %c0_241 = arith.constant 0 : index
    %336 = vector.load %arg5[%c19_240, %c0_241] : memref<332x4xf32, #tpu.memory_space<vmem>>, vector<16x4xf32>
    tpu.vector_store %arg5[%c19_240, %c0_241], %335 {strides = array<i32>} : memref<332x4xf32, #tpu.memory_space<vmem>>, vector<16x4xf32>,
    %337 = vector.extract_strided_slice %335 {offsets = [1, 0], sizes = [1, 4], strides = [1, 1]} : vector<16x4xf32> to vector<1x4xf32>
    %c18_242 = arith.constant 18 : index
    %c0_243 = arith.constant 0 : index
    %338 = vector.load %arg5[%c18_242, %c0_243] : memref<332x4xf32, #tpu.memory_space<vmem>>, vector<1x4xf32>
    tpu.vector_store %arg5[%c18_242, %c0_243], %337 {strides = array<i32>} : memref<332x4xf32, #tpu.memory_space<vmem>>, vector<1x4xf32>,
    %339 = vector.extract_strided_slice %335 {offsets = [14, 0], sizes = [1, 4], strides = [1, 1]} : vector<16x4xf32> to vector<1x4xf32>
    %c35_244 = arith.constant 35 : index
    %c0_245 = arith.constant 0 : index
    %340 = vector.load %arg5[%c35_244, %c0_245] : memref<332x4xf32, #tpu.memory_space<vmem>>, vector<1x4xf32>
    tpu.vector_store %arg5[%c35_244, %c0_245], %339 {strides = array<i32>} : memref<332x4xf32, #tpu.memory_space<vmem>>, vector<1x4xf32>,
    %c18_246 = arith.constant 18 : index
    %c0_247 = arith.constant 0 : index
    %341 = vector.load %arg6[%c18_246, %c0_247] : memref<288x4xf32, #tpu.memory_space<vmem>>, vector<16x4xf32>
    %342 = vector.broadcast %319 : vector<1x4xf32> to vector<16x4xf32>
    %343 = arith.subf %341, %342 : vector<16x4xf32>
    %344 = vector.broadcast %328 : vector<1x4xf32> to vector<16x4xf32>
    %345 = arith.mulf %343, %344 : vector<16x4xf32>
    %cst_248 = arith.constant 0.000000e+00 : f32
    %346 = vector.broadcast %cst_248 : f32 to vector<16x4xf32>
    %347 = arith.maximumf %345, %346 : vector<16x4xf32>
    %c37_249 = arith.constant 37 : index
    %c0_250 = arith.constant 0 : index
    %348 = vector.load %arg5[%c37_249, %c0_250] : memref<332x4xf32, #tpu.memory_space<vmem>>, vector<16x4xf32>
    tpu.vector_store %arg5[%c37_249, %c0_250], %347 {strides = array<i32>} : memref<332x4xf32, #tpu.memory_space<vmem>>, vector<16x4xf32>,
    %349 = vector.extract_strided_slice %347 {offsets = [1, 0], sizes = [1, 4], strides = [1, 1]} : vector<16x4xf32> to vector<1x4xf32>
    %c36_251 = arith.constant 36 : index
    %c0_252 = arith.constant 0 : index
    %350 = vector.load %arg5[%c36_251, %c0_252] : memref<332x4xf32, #tpu.memory_space<vmem>>, vector<1x4xf32>
    tpu.vector_store %arg5[%c36_251, %c0_252], %349 {strides = array<i32>} : memref<332x4xf32, #tpu.memory_space<vmem>>, vector<1x4xf32>,
    %351 = vector.extract_strided_slice %347 {offsets = [14, 0], sizes = [1, 4], strides = [1, 1]} : vector<16x4xf32> to vector<1x4xf32>
    %c53_253 = arith.constant 53 : index
    %c0_254 = arith.constant 0 : index
    %352 = vector.load %arg5[%c53_253, %c0_254] : memref<332x4xf32, #tpu.memory_space<vmem>>, vector<1x4xf32>
    tpu.vector_store %arg5[%c53_253, %c0_254], %351 {strides = array<i32>} : memref<332x4xf32, #tpu.memory_space<vmem>>, vector<1x4xf32>,
    %c36_255 = arith.constant 36 : index
    %c0_256 = arith.constant 0 : index
    %353 = vector.load %arg6[%c36_255, %c0_256] : memref<288x4xf32, #tpu.memory_space<vmem>>, vector<16x4xf32>
    %354 = vector.broadcast %319 : vector<1x4xf32> to vector<16x4xf32>
    %355 = arith.subf %353, %354 : vector<16x4xf32>
    %356 = vector.broadcast %328 : vector<1x4xf32> to vector<16x4xf32>
    %357 = arith.mulf %355, %356 : vector<16x4xf32>
    %cst_257 = arith.constant 0.000000e+00 : f32
    %358 = vector.broadcast %cst_257 : f32 to vector<16x4xf32>
    %359 = arith.maximumf %357, %358 : vector<16x4xf32>
    %c55_258 = arith.constant 55 : index
    %c0_259 = arith.constant 0 : index
    %360 = vector.load %arg5[%c55_258, %c0_259] : memref<332x4xf32, #tpu.memory_space<vmem>>, vector<16x4xf32>
    tpu.vector_store %arg5[%c55_258, %c0_259], %359 {strides = array<i32>} : memref<332x4xf32, #tpu.memory_space<vmem>>, vector<16x4xf32>,
    %361 = vector.extract_strided_slice %359 {offsets = [1, 0], sizes = [1, 4], strides = [1, 1]} : vector<16x4xf32> to vector<1x4xf32>
    %c54_260 = arith.constant 54 : index
    %c0_261 = arith.constant 0 : index
    %362 = vector.load %arg5[%c54_260, %c0_261] : memref<332x4xf32, #tpu.memory_space<vmem>>, vector<1x4xf32>
    tpu.vector_store %arg5[%c54_260, %c0_261], %361 {strides = array<i32>} : memref<332x4xf32, #tpu.memory_space<vmem>>, vector<1x4xf32>,
    %363 = vector.extract_strided_slice %359 {offsets = [14, 0], sizes = [1, 4], strides = [1, 1]} : vector<16x4xf32> to vector<1x4xf32>
    %c71_262 = arith.constant 71 : index
    %c0_263 = arith.constant 0 : index
    %364 = vector.load %arg5[%c71_262, %c0_263] : memref<332x4xf32, #tpu.memory_space<vmem>>, vector<1x4xf32>
    tpu.vector_store %arg5[%c71_262, %c0_263], %363 {strides = array<i32>} : memref<332x4xf32, #tpu.memory_space<vmem>>, vector<1x4xf32>,
    %c54_264 = arith.constant 54 : index
    %c0_265 = arith.constant 0 : index
    %365 = vector.load %arg6[%c54_264, %c0_265] : memref<288x4xf32, #tpu.memory_space<vmem>>, vector<16x4xf32>
    %366 = vector.broadcast %319 : vector<1x4xf32> to vector<16x4xf32>
    %367 = arith.subf %365, %366 : vector<16x4xf32>
    %368 = vector.broadcast %328 : vector<1x4xf32> to vector<16x4xf32>
    %369 = arith.mulf %367, %368 : vector<16x4xf32>
    %cst_266 = arith.constant 0.000000e+00 : f32
    %370 = vector.broadcast %cst_266 : f32 to vector<16x4xf32>
    %371 = arith.maximumf %369, %370 : vector<16x4xf32>
    %c73_267 = arith.constant 73 : index
    %c0_268 = arith.constant 0 : index
    %372 = vector.load %arg5[%c73_267, %c0_268] : memref<332x4xf32, #tpu.memory_space<vmem>>, vector<16x4xf32>
    tpu.vector_store %arg5[%c73_267, %c0_268], %371 {strides = array<i32>} : memref<332x4xf32, #tpu.memory_space<vmem>>, vector<16x4xf32>,
    %373 = vector.extract_strided_slice %371 {offsets = [1, 0], sizes = [1, 4], strides = [1, 1]} : vector<16x4xf32> to vector<1x4xf32>
    %c72_269 = arith.constant 72 : index
    %c0_270 = arith.constant 0 : index
    %374 = vector.load %arg5[%c72_269, %c0_270] : memref<332x4xf32, #tpu.memory_space<vmem>>, vector<1x4xf32>
    tpu.vector_store %arg5[%c72_269, %c0_270], %373 {strides = array<i32>} : memref<332x4xf32, #tpu.memory_space<vmem>>, vector<1x4xf32>,
    %375 = vector.extract_strided_slice %371 {offsets = [14, 0], sizes = [1, 4], strides = [1, 1]} : vector<16x4xf32> to vector<1x4xf32>
    %c89_271 = arith.constant 89 : index
    %c0_272 = arith.constant 0 : index
    %376 = vector.load %arg5[%c89_271, %c0_272] : memref<332x4xf32, #tpu.memory_space<vmem>>, vector<1x4xf32>
    tpu.vector_store %arg5[%c89_271, %c0_272], %375 {strides = array<i32>} : memref<332x4xf32, #tpu.memory_space<vmem>>, vector<1x4xf32>,
    %c72_273 = arith.constant 72 : index
    %c0_274 = arith.constant 0 : index
    %377 = vector.load %arg6[%c72_273, %c0_274] : memref<288x4xf32, #tpu.memory_space<vmem>>, vector<16x4xf32>
    %378 = vector.broadcast %319 : vector<1x4xf32> to vector<16x4xf32>
    %379 = arith.subf %377, %378 : vector<16x4xf32>
    %380 = vector.broadcast %328 : vector<1x4xf32> to vector<16x4xf32>
    %381 = arith.mulf %379, %380 : vector<16x4xf32>
    %cst_275 = arith.constant 0.000000e+00 : f32
    %382 = vector.broadcast %cst_275 : f32 to vector<16x4xf32>
    %383 = arith.maximumf %381, %382 : vector<16x4xf32>
    %c91_276 = arith.constant 91 : index
    %c0_277 = arith.constant 0 : index
    %384 = vector.load %arg5[%c91_276, %c0_277] : memref<332x4xf32, #tpu.memory_space<vmem>>, vector<16x4xf32>
    tpu.vector_store %arg5[%c91_276, %c0_277], %383 {strides = array<i32>} : memref<332x4xf32, #tpu.memory_space<vmem>>, vector<16x4xf32>,
    %385 = vector.extract_strided_slice %383 {offsets = [1, 0], sizes = [1, 4], strides = [1, 1]} : vector<16x4xf32> to vector<1x4xf32>
    %c90_278 = arith.constant 90 : index
    %c0_279 = arith.constant 0 : index
    %386 = vector.load %arg5[%c90_278, %c0_279] : memref<332x4xf32, #tpu.memory_space<vmem>>, vector<1x4xf32>
    tpu.vector_store %arg5[%c90_278, %c0_279], %385 {strides = array<i32>} : memref<332x4xf32, #tpu.memory_space<vmem>>, vector<1x4xf32>,
    %387 = vector.extract_strided_slice %383 {offsets = [14, 0], sizes = [1, 4], strides = [1, 1]} : vector<16x4xf32> to vector<1x4xf32>
    %c107_280 = arith.constant 107 : index
    %c0_281 = arith.constant 0 : index
    %388 = vector.load %arg5[%c107_280, %c0_281] : memref<332x4xf32, #tpu.memory_space<vmem>>, vector<1x4xf32>
    tpu.vector_store %arg5[%c107_280, %c0_281], %387 {strides = array<i32>} : memref<332x4xf32, #tpu.memory_space<vmem>>, vector<1x4xf32>,
    %c90_282 = arith.constant 90 : index
    %c0_283 = arith.constant 0 : index
    %389 = vector.load %arg6[%c90_282, %c0_283] : memref<288x4xf32, #tpu.memory_space<vmem>>, vector<16x4xf32>
    %390 = vector.broadcast %319 : vector<1x4xf32> to vector<16x4xf32>
    %391 = arith.subf %389, %390 : vector<16x4xf32>
    %392 = vector.broadcast %328 : vector<1x4xf32> to vector<16x4xf32>
    %393 = arith.mulf %391, %392 : vector<16x4xf32>
    %cst_284 = arith.constant 0.000000e+00 : f32
    %394 = vector.broadcast %cst_284 : f32 to vector<16x4xf32>
    %395 = arith.maximumf %393, %394 : vector<16x4xf32>
    %c109_285 = arith.constant 109 : index
    %c0_286 = arith.constant 0 : index
    %396 = vector.load %arg5[%c109_285, %c0_286] : memref<332x4xf32, #tpu.memory_space<vmem>>, vector<16x4xf32>
    tpu.vector_store %arg5[%c109_285, %c0_286], %395 {strides = array<i32>} : memref<332x4xf32, #tpu.memory_space<vmem>>, vector<16x4xf32>,
    %397 = vector.extract_strided_slice %395 {offsets = [1, 0], sizes = [1, 4], strides = [1, 1]} : vector<16x4xf32> to vector<1x4xf32>
    %c108_287 = arith.constant 108 : index
    %c0_288 = arith.constant 0 : index
    %398 = vector.load %arg5[%c108_287, %c0_288] : memref<332x4xf32, #tpu.memory_space<vmem>>, vector<1x4xf32>
    tpu.vector_store %arg5[%c108_287, %c0_288], %397 {strides = array<i32>} : memref<332x4xf32, #tpu.memory_space<vmem>>, vector<1x4xf32>,
    %399 = vector.extract_strided_slice %395 {offsets = [14, 0], sizes = [1, 4], strides = [1, 1]} : vector<16x4xf32> to vector<1x4xf32>
    %c125_289 = arith.constant 125 : index
    %c0_290 = arith.constant 0 : index
    %400 = vector.load %arg5[%c125_289, %c0_290] : memref<332x4xf32, #tpu.memory_space<vmem>>, vector<1x4xf32>
    tpu.vector_store %arg5[%c125_289, %c0_290], %399 {strides = array<i32>} : memref<332x4xf32, #tpu.memory_space<vmem>>, vector<1x4xf32>,
    %c108_291 = arith.constant 108 : index
    %c0_292 = arith.constant 0 : index
    %401 = vector.load %arg6[%c108_291, %c0_292] : memref<288x4xf32, #tpu.memory_space<vmem>>, vector<16x4xf32>
    %402 = vector.broadcast %319 : vector<1x4xf32> to vector<16x4xf32>
    %403 = arith.subf %401, %402 : vector<16x4xf32>
    %404 = vector.broadcast %328 : vector<1x4xf32> to vector<16x4xf32>
    %405 = arith.mulf %403, %404 : vector<16x4xf32>
    %cst_293 = arith.constant 0.000000e+00 : f32
    %406 = vector.broadcast %cst_293 : f32 to vector<16x4xf32>
    %407 = arith.maximumf %405, %406 : vector<16x4xf32>
    %c127_294 = arith.constant 127 : index
    %c0_295 = arith.constant 0 : index
    %408 = vector.load %arg5[%c127_294, %c0_295] : memref<332x4xf32, #tpu.memory_space<vmem>>, vector<16x4xf32>
    tpu.vector_store %arg5[%c127_294, %c0_295], %407 {strides = array<i32>} : memref<332x4xf32, #tpu.memory_space<vmem>>, vector<16x4xf32>,
    %409 = vector.extract_strided_slice %407 {offsets = [1, 0], sizes = [1, 4], strides = [1, 1]} : vector<16x4xf32> to vector<1x4xf32>
    %c126_296 = arith.constant 126 : index
    %c0_297 = arith.constant 0 : index
    %410 = vector.load %arg5[%c126_296, %c0_297] : memref<332x4xf32, #tpu.memory_space<vmem>>, vector<1x4xf32>
    tpu.vector_store %arg5[%c126_296, %c0_297], %409 {strides = array<i32>} : memref<332x4xf32, #tpu.memory_space<vmem>>, vector<1x4xf32>,
    %411 = vector.extract_strided_slice %407 {offsets = [14, 0], sizes = [1, 4], strides = [1, 1]} : vector<16x4xf32> to vector<1x4xf32>
    %c143_298 = arith.constant 143 : index
    %c0_299 = arith.constant 0 : index
    %412 = vector.load %arg5[%c143_298, %c0_299] : memref<332x4xf32, #tpu.memory_space<vmem>>, vector<1x4xf32>
    tpu.vector_store %arg5[%c143_298, %c0_299], %411 {strides = array<i32>} : memref<332x4xf32, #tpu.memory_space<vmem>>, vector<1x4xf32>,
    %c126_300 = arith.constant 126 : index
    %c0_301 = arith.constant 0 : index
    %413 = vector.load %arg6[%c126_300, %c0_301] : memref<288x4xf32, #tpu.memory_space<vmem>>, vector<16x4xf32>
    %414 = vector.broadcast %319 : vector<1x4xf32> to vector<16x4xf32>
    %415 = arith.subf %413, %414 : vector<16x4xf32>
    %416 = vector.broadcast %328 : vector<1x4xf32> to vector<16x4xf32>
    %417 = arith.mulf %415, %416 : vector<16x4xf32>
    %cst_302 = arith.constant 0.000000e+00 : f32
    %418 = vector.broadcast %cst_302 : f32 to vector<16x4xf32>
    %419 = arith.maximumf %417, %418 : vector<16x4xf32>
    %c145_303 = arith.constant 145 : index
    %c0_304 = arith.constant 0 : index
    %420 = vector.load %arg5[%c145_303, %c0_304] : memref<332x4xf32, #tpu.memory_space<vmem>>, vector<16x4xf32>
    tpu.vector_store %arg5[%c145_303, %c0_304], %419 {strides = array<i32>} : memref<332x4xf32, #tpu.memory_space<vmem>>, vector<16x4xf32>,
    %421 = vector.extract_strided_slice %419 {offsets = [1, 0], sizes = [1, 4], strides = [1, 1]} : vector<16x4xf32> to vector<1x4xf32>
    %c144_305 = arith.constant 144 : index
    %c0_306 = arith.constant 0 : index
    %422 = vector.load %arg5[%c144_305, %c0_306] : memref<332x4xf32, #tpu.memory_space<vmem>>, vector<1x4xf32>
    tpu.vector_store %arg5[%c144_305, %c0_306], %421 {strides = array<i32>} : memref<332x4xf32, #tpu.memory_space<vmem>>, vector<1x4xf32>,
    %423 = vector.extract_strided_slice %419 {offsets = [14, 0], sizes = [1, 4], strides = [1, 1]} : vector<16x4xf32> to vector<1x4xf32>
    %c161_307 = arith.constant 161 : index
    %c0_308 = arith.constant 0 : index
    %424 = vector.load %arg5[%c161_307, %c0_308] : memref<332x4xf32, #tpu.memory_space<vmem>>, vector<1x4xf32>
    tpu.vector_store %arg5[%c161_307, %c0_308], %423 {strides = array<i32>} : memref<332x4xf32, #tpu.memory_space<vmem>>, vector<1x4xf32>,
    %c144_309 = arith.constant 144 : index
    %c0_310 = arith.constant 0 : index
    %425 = vector.load %arg6[%c144_309, %c0_310] : memref<288x4xf32, #tpu.memory_space<vmem>>, vector<16x4xf32>
    %426 = vector.broadcast %319 : vector<1x4xf32> to vector<16x4xf32>
    %427 = arith.subf %425, %426 : vector<16x4xf32>
    %428 = vector.broadcast %328 : vector<1x4xf32> to vector<16x4xf32>
    %429 = arith.mulf %427, %428 : vector<16x4xf32>
    %cst_311 = arith.constant 0.000000e+00 : f32
    %430 = vector.broadcast %cst_311 : f32 to vector<16x4xf32>
    %431 = arith.maximumf %429, %430 : vector<16x4xf32>
    %c163_312 = arith.constant 163 : index
    %c0_313 = arith.constant 0 : index
    %432 = vector.load %arg5[%c163_312, %c0_313] : memref<332x4xf32, #tpu.memory_space<vmem>>, vector<16x4xf32>
    tpu.vector_store %arg5[%c163_312, %c0_313], %431 {strides = array<i32>} : memref<332x4xf32, #tpu.memory_space<vmem>>, vector<16x4xf32>,
    %433 = vector.extract_strided_slice %431 {offsets = [1, 0], sizes = [1, 4], strides = [1, 1]} : vector<16x4xf32> to vector<1x4xf32>
    %c162_314 = arith.constant 162 : index
    %c0_315 = arith.constant 0 : index
    %434 = vector.load %arg5[%c162_314, %c0_315] : memref<332x4xf32, #tpu.memory_space<vmem>>, vector<1x4xf32>
    tpu.vector_store %arg5[%c162_314, %c0_315], %433 {strides = array<i32>} : memref<332x4xf32, #tpu.memory_space<vmem>>, vector<1x4xf32>,
    %435 = vector.extract_strided_slice %431 {offsets = [14, 0], sizes = [1, 4], strides = [1, 1]} : vector<16x4xf32> to vector<1x4xf32>
    %c179_316 = arith.constant 179 : index
    %c0_317 = arith.constant 0 : index
    %436 = vector.load %arg5[%c179_316, %c0_317] : memref<332x4xf32, #tpu.memory_space<vmem>>, vector<1x4xf32>
    tpu.vector_store %arg5[%c179_316, %c0_317], %435 {strides = array<i32>} : memref<332x4xf32, #tpu.memory_space<vmem>>, vector<1x4xf32>,
    %c162_318 = arith.constant 162 : index
    %c0_319 = arith.constant 0 : index
    %437 = vector.load %arg6[%c162_318, %c0_319] : memref<288x4xf32, #tpu.memory_space<vmem>>, vector<16x4xf32>
    %438 = vector.broadcast %319 : vector<1x4xf32> to vector<16x4xf32>
    %439 = arith.subf %437, %438 : vector<16x4xf32>
    %440 = vector.broadcast %328 : vector<1x4xf32> to vector<16x4xf32>
    %441 = arith.mulf %439, %440 : vector<16x4xf32>
    %cst_320 = arith.constant 0.000000e+00 : f32
    %442 = vector.broadcast %cst_320 : f32 to vector<16x4xf32>
    %443 = arith.maximumf %441, %442 : vector<16x4xf32>
    %c181_321 = arith.constant 181 : index
    %c0_322 = arith.constant 0 : index
    %444 = vector.load %arg5[%c181_321, %c0_322] : memref<332x4xf32, #tpu.memory_space<vmem>>, vector<16x4xf32>
    tpu.vector_store %arg5[%c181_321, %c0_322], %443 {strides = array<i32>} : memref<332x4xf32, #tpu.memory_space<vmem>>, vector<16x4xf32>,
    %445 = vector.extract_strided_slice %443 {offsets = [1, 0], sizes = [1, 4], strides = [1, 1]} : vector<16x4xf32> to vector<1x4xf32>
    %c180_323 = arith.constant 180 : index
    %c0_324 = arith.constant 0 : index
    %446 = vector.load %arg5[%c180_323, %c0_324] : memref<332x4xf32, #tpu.memory_space<vmem>>, vector<1x4xf32>
    tpu.vector_store %arg5[%c180_323, %c0_324], %445 {strides = array<i32>} : memref<332x4xf32, #tpu.memory_space<vmem>>, vector<1x4xf32>,
    %447 = vector.extract_strided_slice %443 {offsets = [14, 0], sizes = [1, 4], strides = [1, 1]} : vector<16x4xf32> to vector<1x4xf32>
    %c197_325 = arith.constant 197 : index
    %c0_326 = arith.constant 0 : index
    %448 = vector.load %arg5[%c197_325, %c0_326] : memref<332x4xf32, #tpu.memory_space<vmem>>, vector<1x4xf32>
    tpu.vector_store %arg5[%c197_325, %c0_326], %447 {strides = array<i32>} : memref<332x4xf32, #tpu.memory_space<vmem>>, vector<1x4xf32>,
    %c180_327 = arith.constant 180 : index
    %c0_328 = arith.constant 0 : index
    %449 = vector.load %arg6[%c180_327, %c0_328] : memref<288x4xf32, #tpu.memory_space<vmem>>, vector<16x4xf32>
    %450 = vector.broadcast %319 : vector<1x4xf32> to vector<16x4xf32>
    %451 = arith.subf %449, %450 : vector<16x4xf32>
    %452 = vector.broadcast %328 : vector<1x4xf32> to vector<16x4xf32>
    %453 = arith.mulf %451, %452 : vector<16x4xf32>
    %cst_329 = arith.constant 0.000000e+00 : f32
    %454 = vector.broadcast %cst_329 : f32 to vector<16x4xf32>
    %455 = arith.maximumf %453, %454 : vector<16x4xf32>
    %c199_330 = arith.constant 199 : index
    %c0_331 = arith.constant 0 : index
    %456 = vector.load %arg5[%c199_330, %c0_331] : memref<332x4xf32, #tpu.memory_space<vmem>>, vector<16x4xf32>
    tpu.vector_store %arg5[%c199_330, %c0_331], %455 {strides = array<i32>} : memref<332x4xf32, #tpu.memory_space<vmem>>, vector<16x4xf32>,
    %457 = vector.extract_strided_slice %455 {offsets = [1, 0], sizes = [1, 4], strides = [1, 1]} : vector<16x4xf32> to vector<1x4xf32>
    %c198_332 = arith.constant 198 : index
    %c0_333 = arith.constant 0 : index
    %458 = vector.load %arg5[%c198_332, %c0_333] : memref<332x4xf32, #tpu.memory_space<vmem>>, vector<1x4xf32>
    tpu.vector_store %arg5[%c198_332, %c0_333], %457 {strides = array<i32>} : memref<332x4xf32, #tpu.memory_space<vmem>>, vector<1x4xf32>,
    %459 = vector.extract_strided_slice %455 {offsets = [14, 0], sizes = [1, 4], strides = [1, 1]} : vector<16x4xf32> to vector<1x4xf32>
    %c215_334 = arith.constant 215 : index
    %c0_335 = arith.constant 0 : index
    %460 = vector.load %arg5[%c215_334, %c0_335] : memref<332x4xf32, #tpu.memory_space<vmem>>, vector<1x4xf32>
    tpu.vector_store %arg5[%c215_334, %c0_335], %459 {strides = array<i32>} : memref<332x4xf32, #tpu.memory_space<vmem>>, vector<1x4xf32>,
    %c198_336 = arith.constant 198 : index
    %c0_337 = arith.constant 0 : index
    %461 = vector.load %arg6[%c198_336, %c0_337] : memref<288x4xf32, #tpu.memory_space<vmem>>, vector<16x4xf32>
    %462 = vector.broadcast %319 : vector<1x4xf32> to vector<16x4xf32>
    %463 = arith.subf %461, %462 : vector<16x4xf32>
    %464 = vector.broadcast %328 : vector<1x4xf32> to vector<16x4xf32>
    %465 = arith.mulf %463, %464 : vector<16x4xf32>
    %cst_338 = arith.constant 0.000000e+00 : f32
    %466 = vector.broadcast %cst_338 : f32 to vector<16x4xf32>
    %467 = arith.maximumf %465, %466 : vector<16x4xf32>
    %c217_339 = arith.constant 217 : index
    %c0_340 = arith.constant 0 : index
    %468 = vector.load %arg5[%c217_339, %c0_340] : memref<332x4xf32, #tpu.memory_space<vmem>>, vector<16x4xf32>
    tpu.vector_store %arg5[%c217_339, %c0_340], %467 {strides = array<i32>} : memref<332x4xf32, #tpu.memory_space<vmem>>, vector<16x4xf32>,
    %469 = vector.extract_strided_slice %467 {offsets = [1, 0], sizes = [1, 4], strides = [1, 1]} : vector<16x4xf32> to vector<1x4xf32>
    %c216_341 = arith.constant 216 : index
    %c0_342 = arith.constant 0 : index
    %470 = vector.load %arg5[%c216_341, %c0_342] : memref<332x4xf32, #tpu.memory_space<vmem>>, vector<1x4xf32>
    tpu.vector_store %arg5[%c216_341, %c0_342], %469 {strides = array<i32>} : memref<332x4xf32, #tpu.memory_space<vmem>>, vector<1x4xf32>,
    %471 = vector.extract_strided_slice %467 {offsets = [14, 0], sizes = [1, 4], strides = [1, 1]} : vector<16x4xf32> to vector<1x4xf32>
    %c233_343 = arith.constant 233 : index
    %c0_344 = arith.constant 0 : index
    %472 = vector.load %arg5[%c233_343, %c0_344] : memref<332x4xf32, #tpu.memory_space<vmem>>, vector<1x4xf32>
    tpu.vector_store %arg5[%c233_343, %c0_344], %471 {strides = array<i32>} : memref<332x4xf32, #tpu.memory_space<vmem>>, vector<1x4xf32>,
    %c216_345 = arith.constant 216 : index
    %c0_346 = arith.constant 0 : index
    %473 = vector.load %arg6[%c216_345, %c0_346] : memref<288x4xf32, #tpu.memory_space<vmem>>, vector<16x4xf32>
    %474 = vector.broadcast %319 : vector<1x4xf32> to vector<16x4xf32>
    %475 = arith.subf %473, %474 : vector<16x4xf32>
    %476 = vector.broadcast %328 : vector<1x4xf32> to vector<16x4xf32>
    %477 = arith.mulf %475, %476 : vector<16x4xf32>
    %cst_347 = arith.constant 0.000000e+00 : f32
    %478 = vector.broadcast %cst_347 : f32 to vector<16x4xf32>
    %479 = arith.maximumf %477, %478 : vector<16x4xf32>
    %c235_348 = arith.constant 235 : index
    %c0_349 = arith.constant 0 : index
    %480 = vector.load %arg5[%c235_348, %c0_349] : memref<332x4xf32, #tpu.memory_space<vmem>>, vector<16x4xf32>
    tpu.vector_store %arg5[%c235_348, %c0_349], %479 {strides = array<i32>} : memref<332x4xf32, #tpu.memory_space<vmem>>, vector<16x4xf32>,
    %481 = vector.extract_strided_slice %479 {offsets = [1, 0], sizes = [1, 4], strides = [1, 1]} : vector<16x4xf32> to vector<1x4xf32>
    %c234_350 = arith.constant 234 : index
    %c0_351 = arith.constant 0 : index
    %482 = vector.load %arg5[%c234_350, %c0_351] : memref<332x4xf32, #tpu.memory_space<vmem>>, vector<1x4xf32>
    tpu.vector_store %arg5[%c234_350, %c0_351], %481 {strides = array<i32>} : memref<332x4xf32, #tpu.memory_space<vmem>>, vector<1x4xf32>,
    %483 = vector.extract_strided_slice %479 {offsets = [14, 0], sizes = [1, 4], strides = [1, 1]} : vector<16x4xf32> to vector<1x4xf32>
    %c251_352 = arith.constant 251 : index
    %c0_353 = arith.constant 0 : index
    %484 = vector.load %arg5[%c251_352, %c0_353] : memref<332x4xf32, #tpu.memory_space<vmem>>, vector<1x4xf32>
    tpu.vector_store %arg5[%c251_352, %c0_353], %483 {strides = array<i32>} : memref<332x4xf32, #tpu.memory_space<vmem>>, vector<1x4xf32>,
    %c234_354 = arith.constant 234 : index
    %c0_355 = arith.constant 0 : index
    %485 = vector.load %arg6[%c234_354, %c0_355] : memref<288x4xf32, #tpu.memory_space<vmem>>, vector<16x4xf32>
    %486 = vector.broadcast %319 : vector<1x4xf32> to vector<16x4xf32>
    %487 = arith.subf %485, %486 : vector<16x4xf32>
    %488 = vector.broadcast %328 : vector<1x4xf32> to vector<16x4xf32>
    %489 = arith.mulf %487, %488 : vector<16x4xf32>
    %cst_356 = arith.constant 0.000000e+00 : f32
    %490 = vector.broadcast %cst_356 : f32 to vector<16x4xf32>
    %491 = arith.maximumf %489, %490 : vector<16x4xf32>
    %c253_357 = arith.constant 253 : index
    %c0_358 = arith.constant 0 : index
    %492 = vector.load %arg5[%c253_357, %c0_358] : memref<332x4xf32, #tpu.memory_space<vmem>>, vector<16x4xf32>
    tpu.vector_store %arg5[%c253_357, %c0_358], %491 {strides = array<i32>} : memref<332x4xf32, #tpu.memory_space<vmem>>, vector<16x4xf32>,
    %493 = vector.extract_strided_slice %491 {offsets = [1, 0], sizes = [1, 4], strides = [1, 1]} : vector<16x4xf32> to vector<1x4xf32>
    %c252_359 = arith.constant 252 : index
    %c0_360 = arith.constant 0 : index
    %494 = vector.load %arg5[%c252_359, %c0_360] : memref<332x4xf32, #tpu.memory_space<vmem>>, vector<1x4xf32>
    tpu.vector_store %arg5[%c252_359, %c0_360], %493 {strides = array<i32>} : memref<332x4xf32, #tpu.memory_space<vmem>>, vector<1x4xf32>,
    %495 = vector.extract_strided_slice %491 {offsets = [14, 0], sizes = [1, 4], strides = [1, 1]} : vector<16x4xf32> to vector<1x4xf32>
    %c269_361 = arith.constant 269 : index
    %c0_362 = arith.constant 0 : index
    %496 = vector.load %arg5[%c269_361, %c0_362] : memref<332x4xf32, #tpu.memory_space<vmem>>, vector<1x4xf32>
    tpu.vector_store %arg5[%c269_361, %c0_362], %495 {strides = array<i32>} : memref<332x4xf32, #tpu.memory_space<vmem>>, vector<1x4xf32>,
    %c252_363 = arith.constant 252 : index
    %c0_364 = arith.constant 0 : index
    %497 = vector.load %arg6[%c252_363, %c0_364] : memref<288x4xf32, #tpu.memory_space<vmem>>, vector<16x4xf32>
    %498 = vector.broadcast %319 : vector<1x4xf32> to vector<16x4xf32>
    %499 = arith.subf %497, %498 : vector<16x4xf32>
    %500 = vector.broadcast %328 : vector<1x4xf32> to vector<16x4xf32>
    %501 = arith.mulf %499, %500 : vector<16x4xf32>
    %cst_365 = arith.constant 0.000000e+00 : f32
    %502 = vector.broadcast %cst_365 : f32 to vector<16x4xf32>
    %503 = arith.maximumf %501, %502 : vector<16x4xf32>
    %c271_366 = arith.constant 271 : index
    %c0_367 = arith.constant 0 : index
    %504 = vector.load %arg5[%c271_366, %c0_367] : memref<332x4xf32, #tpu.memory_space<vmem>>, vector<16x4xf32>
    tpu.vector_store %arg5[%c271_366, %c0_367], %503 {strides = array<i32>} : memref<332x4xf32, #tpu.memory_space<vmem>>, vector<16x4xf32>,
    %505 = vector.extract_strided_slice %503 {offsets = [1, 0], sizes = [1, 4], strides = [1, 1]} : vector<16x4xf32> to vector<1x4xf32>
    %c270_368 = arith.constant 270 : index
    %c0_369 = arith.constant 0 : index
    %506 = vector.load %arg5[%c270_368, %c0_369] : memref<332x4xf32, #tpu.memory_space<vmem>>, vector<1x4xf32>
    tpu.vector_store %arg5[%c270_368, %c0_369], %505 {strides = array<i32>} : memref<332x4xf32, #tpu.memory_space<vmem>>, vector<1x4xf32>,
    %507 = vector.extract_strided_slice %503 {offsets = [14, 0], sizes = [1, 4], strides = [1, 1]} : vector<16x4xf32> to vector<1x4xf32>
    %c287_370 = arith.constant 287 : index
    %c0_371 = arith.constant 0 : index
    %508 = vector.load %arg5[%c287_370, %c0_371] : memref<332x4xf32, #tpu.memory_space<vmem>>, vector<1x4xf32>
    tpu.vector_store %arg5[%c287_370, %c0_371], %507 {strides = array<i32>} : memref<332x4xf32, #tpu.memory_space<vmem>>, vector<1x4xf32>,
    %c270_372 = arith.constant 270 : index
    %c0_373 = arith.constant 0 : index
    %509 = vector.load %arg6[%c270_372, %c0_373] : memref<288x4xf32, #tpu.memory_space<vmem>>, vector<16x4xf32>
    %510 = vector.broadcast %319 : vector<1x4xf32> to vector<16x4xf32>
    %511 = arith.subf %509, %510 : vector<16x4xf32>
    %512 = vector.broadcast %328 : vector<1x4xf32> to vector<16x4xf32>
    %513 = arith.mulf %511, %512 : vector<16x4xf32>
    %cst_374 = arith.constant 0.000000e+00 : f32
    %514 = vector.broadcast %cst_374 : f32 to vector<16x4xf32>
    %515 = arith.maximumf %513, %514 : vector<16x4xf32>
    %c289_375 = arith.constant 289 : index
    %c0_376 = arith.constant 0 : index
    %516 = vector.load %arg5[%c289_375, %c0_376] : memref<332x4xf32, #tpu.memory_space<vmem>>, vector<16x4xf32>
    tpu.vector_store %arg5[%c289_375, %c0_376], %515 {strides = array<i32>} : memref<332x4xf32, #tpu.memory_space<vmem>>, vector<16x4xf32>,
    %517 = vector.extract_strided_slice %515 {offsets = [1, 0], sizes = [1, 4], strides = [1, 1]} : vector<16x4xf32> to vector<1x4xf32>
    %c288_377 = arith.constant 288 : index
    %c0_378 = arith.constant 0 : index
    %518 = vector.load %arg5[%c288_377, %c0_378] : memref<332x4xf32, #tpu.memory_space<vmem>>, vector<1x4xf32>
    tpu.vector_store %arg5[%c288_377, %c0_378], %517 {strides = array<i32>} : memref<332x4xf32, #tpu.memory_space<vmem>>, vector<1x4xf32>,
    %519 = vector.extract_strided_slice %515 {offsets = [14, 0], sizes = [1, 4], strides = [1, 1]} : vector<16x4xf32> to vector<1x4xf32>
    %c305_379 = arith.constant 305 : index
    %c0_380 = arith.constant 0 : index
    %520 = vector.load %arg5[%c305_379, %c0_380] : memref<332x4xf32, #tpu.memory_space<vmem>>, vector<1x4xf32>
    tpu.vector_store %arg5[%c305_379, %c0_380], %519 {strides = array<i32>} : memref<332x4xf32, #tpu.memory_space<vmem>>, vector<1x4xf32>,
    %c36_381 = arith.constant 36 : index
    %c0_382 = arith.constant 0 : index
    %521 = vector.load %arg5[%c36_381, %c0_382] : memref<332x4xf32, #tpu.memory_space<vmem>>, vector<18x4xf32>
    %c0_383 = arith.constant 0 : index
    %c0_384 = arith.constant 0 : index
    %522 = vector.load %arg5[%c0_383, %c0_384] : memref<332x4xf32, #tpu.memory_space<vmem>>, vector<18x4xf32>
    tpu.vector_store %arg5[%c0_383, %c0_384], %521 {strides = array<i32>} : memref<332x4xf32, #tpu.memory_space<vmem>>, vector<18x4xf32>,
    %c270_385 = arith.constant 270 : index
    %c0_386 = arith.constant 0 : index
    %523 = vector.load %arg5[%c270_385, %c0_386] : memref<332x4xf32, #tpu.memory_space<vmem>>, vector<18x4xf32>
    %c306_387 = arith.constant 306 : index
    %c0_388 = arith.constant 0 : index
    %524 = vector.load %arg5[%c306_387, %c0_388] : memref<332x4xf32, #tpu.memory_space<vmem>>, vector<18x4xf32>
    tpu.vector_store %arg5[%c306_387, %c0_388], %523 {strides = array<i32>} : memref<332x4xf32, #tpu.memory_space<vmem>>, vector<18x4xf32>,
    %c0_389 = arith.constant 0 : index
    %c0_390 = arith.constant 0 : index
    %525 = vector.load %arg5[%c0_389, %c0_390] : memref<332x4xf32, #tpu.memory_space<vmem>>, vector<288x4xf32>
    %526 = arith.truncf %525 : vector<288x4xf32> to vector<288x4xbf16>
    %c0_391 = arith.constant 0 : index
    %c0_392 = arith.constant 0 : index
    %c0_393 = arith.constant 0 : index
    %527 = vector.load %arg3[%c0_391, %c0_392, %c0_393] : memref<9x4x4xbf16, #tpu.memory_space<vmem>>, vector<1x4x4xbf16>
    %528 = vector.shape_cast %527 : vector<1x4x4xbf16> to vector<4x4xbf16>
    %cst_394 = arith.constant dense<0.000000e+00> : vector<288x4xf32>
    %529 = tpu.matmul %526, %528, %cst_394 {dimension_numbers = #tpu.dot_dimension_numbers<[1], [0], [0], [1], [0, 0, 1, 1], [], []>} : vector<288x4xbf16>, vector<4x4xbf16>, vector<288x4xf32> -> vector<288x4xf32>
    %c0_395 = arith.constant 0 : index
    %c0_396 = arith.constant 0 : index
    %530 = vector.load %arg6[%c0_395, %c0_396] : memref<288x4xf32, #tpu.memory_space<vmem>>, vector<288x4xf32>
    tpu.vector_store %arg6[%c0_395, %c0_396], %529 {strides = array<i32>} : memref<288x4xf32, #tpu.memory_space<vmem>>, vector<288x4xf32>,
    %c1_397 = arith.constant 1 : index
    %c0_398 = arith.constant 0 : index
    %531 = vector.load %arg5[%c1_397, %c0_398] : memref<332x4xf32, #tpu.memory_space<vmem>>, vector<288x4xf32>
    %532 = arith.truncf %531 : vector<288x4xf32> to vector<288x4xbf16>
    %c1_399 = arith.constant 1 : index
    %c0_400 = arith.constant 0 : index
    %c0_401 = arith.constant 0 : index
    %533 = vector.load %arg3[%c1_399, %c0_400, %c0_401] : memref<9x4x4xbf16, #tpu.memory_space<vmem>>, vector<1x4x4xbf16>
    %534 = vector.shape_cast %533 : vector<1x4x4xbf16> to vector<4x4xbf16>
    %cst_402 = arith.constant dense<0.000000e+00> : vector<288x4xf32>
    %535 = tpu.matmul %532, %534, %cst_402 {dimension_numbers = #tpu.dot_dimension_numbers<[1], [0], [0], [1], [0, 0, 1, 1], [], []>} : vector<288x4xbf16>, vector<4x4xbf16>, vector<288x4xf32> -> vector<288x4xf32>
    %c0_403 = arith.constant 0 : index
    %c0_404 = arith.constant 0 : index
    %536 = vector.load %arg6[%c0_403, %c0_404] : memref<288x4xf32, #tpu.memory_space<vmem>>, vector<288x4xf32>
    %537 = arith.addf %536, %535 : vector<288x4xf32>
    %c0_405 = arith.constant 0 : index
    %c0_406 = arith.constant 0 : index
    %538 = vector.load %arg6[%c0_405, %c0_406] : memref<288x4xf32, #tpu.memory_space<vmem>>, vector<288x4xf32>
    tpu.vector_store %arg6[%c0_405, %c0_406], %537 {strides = array<i32>} : memref<288x4xf32, #tpu.memory_space<vmem>>, vector<288x4xf32>,
    %c2_407 = arith.constant 2 : index
    %c0_408 = arith.constant 0 : index
    %539 = vector.load %arg5[%c2_407, %c0_408] : memref<332x4xf32, #tpu.memory_space<vmem>>, vector<288x4xf32>
    %540 = arith.truncf %539 : vector<288x4xf32> to vector<288x4xbf16>
    %c2_409 = arith.constant 2 : index
    %c0_410 = arith.constant 0 : index
    %c0_411 = arith.constant 0 : index
    %541 = vector.load %arg3[%c2_409, %c0_410, %c0_411] : memref<9x4x4xbf16, #tpu.memory_space<vmem>>, vector<1x4x4xbf16>
    %542 = vector.shape_cast %541 : vector<1x4x4xbf16> to vector<4x4xbf16>
    %cst_412 = arith.constant dense<0.000000e+00> : vector<288x4xf32>
    %543 = tpu.matmul %540, %542, %cst_412 {dimension_numbers = #tpu.dot_dimension_numbers<[1], [0], [0], [1], [0, 0, 1, 1], [], []>} : vector<288x4xbf16>, vector<4x4xbf16>, vector<288x4xf32> -> vector<288x4xf32>
    %c0_413 = arith.constant 0 : index
    %c0_414 = arith.constant 0 : index
    %544 = vector.load %arg6[%c0_413, %c0_414] : memref<288x4xf32, #tpu.memory_space<vmem>>, vector<288x4xf32>
    %545 = arith.addf %544, %543 : vector<288x4xf32>
    %c0_415 = arith.constant 0 : index
    %c0_416 = arith.constant 0 : index
    %546 = vector.load %arg6[%c0_415, %c0_416] : memref<288x4xf32, #tpu.memory_space<vmem>>, vector<288x4xf32>
    tpu.vector_store %arg6[%c0_415, %c0_416], %545 {strides = array<i32>} : memref<288x4xf32, #tpu.memory_space<vmem>>, vector<288x4xf32>,
    %c18_417 = arith.constant 18 : index
    %c0_418 = arith.constant 0 : index
    %547 = vector.load %arg5[%c18_417, %c0_418] : memref<332x4xf32, #tpu.memory_space<vmem>>, vector<288x4xf32>
    %548 = arith.truncf %547 : vector<288x4xf32> to vector<288x4xbf16>
    %c3_419 = arith.constant 3 : index
    %c0_420 = arith.constant 0 : index
    %c0_421 = arith.constant 0 : index
    %549 = vector.load %arg3[%c3_419, %c0_420, %c0_421] : memref<9x4x4xbf16, #tpu.memory_space<vmem>>, vector<1x4x4xbf16>
    %550 = vector.shape_cast %549 : vector<1x4x4xbf16> to vector<4x4xbf16>
    %cst_422 = arith.constant dense<0.000000e+00> : vector<288x4xf32>
    %551 = tpu.matmul %548, %550, %cst_422 {dimension_numbers = #tpu.dot_dimension_numbers<[1], [0], [0], [1], [0, 0, 1, 1], [], []>} : vector<288x4xbf16>, vector<4x4xbf16>, vector<288x4xf32> -> vector<288x4xf32>
    %c0_423 = arith.constant 0 : index
    %c0_424 = arith.constant 0 : index
    %552 = vector.load %arg6[%c0_423, %c0_424] : memref<288x4xf32, #tpu.memory_space<vmem>>, vector<288x4xf32>
    %553 = arith.addf %552, %551 : vector<288x4xf32>
    %c0_425 = arith.constant 0 : index
    %c0_426 = arith.constant 0 : index
    %554 = vector.load %arg6[%c0_425, %c0_426] : memref<288x4xf32, #tpu.memory_space<vmem>>, vector<288x4xf32>
    tpu.vector_store %arg6[%c0_425, %c0_426], %553 {strides = array<i32>} : memref<288x4xf32, #tpu.memory_space<vmem>>, vector<288x4xf32>,
    %c19_427 = arith.constant 19 : index
    %c0_428 = arith.constant 0 : index
    %555 = vector.load %arg5[%c19_427, %c0_428] : memref<332x4xf32, #tpu.memory_space<vmem>>, vector<288x4xf32>
    %556 = arith.truncf %555 : vector<288x4xf32> to vector<288x4xbf16>
    %c4_429 = arith.constant 4 : index
    %c0_430 = arith.constant 0 : index
    %c0_431 = arith.constant 0 : index
    %557 = vector.load %arg3[%c4_429, %c0_430, %c0_431] : memref<9x4x4xbf16, #tpu.memory_space<vmem>>, vector<1x4x4xbf16>
    %558 = vector.shape_cast %557 : vector<1x4x4xbf16> to vector<4x4xbf16>
    %cst_432 = arith.constant dense<0.000000e+00> : vector<288x4xf32>
    %559 = tpu.matmul %556, %558, %cst_432 {dimension_numbers = #tpu.dot_dimension_numbers<[1], [0], [0], [1], [0, 0, 1, 1], [], []>} : vector<288x4xbf16>, vector<4x4xbf16>, vector<288x4xf32> -> vector<288x4xf32>
    %c0_433 = arith.constant 0 : index
    %c0_434 = arith.constant 0 : index
    %560 = vector.load %arg6[%c0_433, %c0_434] : memref<288x4xf32, #tpu.memory_space<vmem>>, vector<288x4xf32>
    %561 = arith.addf %560, %559 : vector<288x4xf32>
    %c0_435 = arith.constant 0 : index
    %c0_436 = arith.constant 0 : index
    %562 = vector.load %arg6[%c0_435, %c0_436] : memref<288x4xf32, #tpu.memory_space<vmem>>, vector<288x4xf32>
    tpu.vector_store %arg6[%c0_435, %c0_436], %561 {strides = array<i32>} : memref<288x4xf32, #tpu.memory_space<vmem>>, vector<288x4xf32>,
    %c20_437 = arith.constant 20 : index
    %c0_438 = arith.constant 0 : index
    %563 = vector.load %arg5[%c20_437, %c0_438] : memref<332x4xf32, #tpu.memory_space<vmem>>, vector<288x4xf32>
    %564 = arith.truncf %563 : vector<288x4xf32> to vector<288x4xbf16>
    %c5_439 = arith.constant 5 : index
    %c0_440 = arith.constant 0 : index
    %c0_441 = arith.constant 0 : index
    %565 = vector.load %arg3[%c5_439, %c0_440, %c0_441] : memref<9x4x4xbf16, #tpu.memory_space<vmem>>, vector<1x4x4xbf16>
    %566 = vector.shape_cast %565 : vector<1x4x4xbf16> to vector<4x4xbf16>
    %cst_442 = arith.constant dense<0.000000e+00> : vector<288x4xf32>
    %567 = tpu.matmul %564, %566, %cst_442 {dimension_numbers = #tpu.dot_dimension_numbers<[1], [0], [0], [1], [0, 0, 1, 1], [], []>} : vector<288x4xbf16>, vector<4x4xbf16>, vector<288x4xf32> -> vector<288x4xf32>
    %c0_443 = arith.constant 0 : index
    %c0_444 = arith.constant 0 : index
    %568 = vector.load %arg6[%c0_443, %c0_444] : memref<288x4xf32, #tpu.memory_space<vmem>>, vector<288x4xf32>
    %569 = arith.addf %568, %567 : vector<288x4xf32>
    %c0_445 = arith.constant 0 : index
    %c0_446 = arith.constant 0 : index
    %570 = vector.load %arg6[%c0_445, %c0_446] : memref<288x4xf32, #tpu.memory_space<vmem>>, vector<288x4xf32>
    tpu.vector_store %arg6[%c0_445, %c0_446], %569 {strides = array<i32>} : memref<288x4xf32, #tpu.memory_space<vmem>>, vector<288x4xf32>,
    %c36_447 = arith.constant 36 : index
    %c0_448 = arith.constant 0 : index
    %571 = vector.load %arg5[%c36_447, %c0_448] : memref<332x4xf32, #tpu.memory_space<vmem>>, vector<288x4xf32>
    %572 = arith.truncf %571 : vector<288x4xf32> to vector<288x4xbf16>
    %c6_449 = arith.constant 6 : index
    %c0_450 = arith.constant 0 : index
    %c0_451 = arith.constant 0 : index
    %573 = vector.load %arg3[%c6_449, %c0_450, %c0_451] : memref<9x4x4xbf16, #tpu.memory_space<vmem>>, vector<1x4x4xbf16>
    %574 = vector.shape_cast %573 : vector<1x4x4xbf16> to vector<4x4xbf16>
    %cst_452 = arith.constant dense<0.000000e+00> : vector<288x4xf32>
    %575 = tpu.matmul %572, %574, %cst_452 {dimension_numbers = #tpu.dot_dimension_numbers<[1], [0], [0], [1], [0, 0, 1, 1], [], []>} : vector<288x4xbf16>, vector<4x4xbf16>, vector<288x4xf32> -> vector<288x4xf32>
    %c0_453 = arith.constant 0 : index
    %c0_454 = arith.constant 0 : index
    %576 = vector.load %arg6[%c0_453, %c0_454] : memref<288x4xf32, #tpu.memory_space<vmem>>, vector<288x4xf32>
    %577 = arith.addf %576, %575 : vector<288x4xf32>
    %c0_455 = arith.constant 0 : index
    %c0_456 = arith.constant 0 : index
    %578 = vector.load %arg6[%c0_455, %c0_456] : memref<288x4xf32, #tpu.memory_space<vmem>>, vector<288x4xf32>
    tpu.vector_store %arg6[%c0_455, %c0_456], %577 {strides = array<i32>} : memref<288x4xf32, #tpu.memory_space<vmem>>, vector<288x4xf32>,
    %c37_457 = arith.constant 37 : index
    %c0_458 = arith.constant 0 : index
    %579 = vector.load %arg5[%c37_457, %c0_458] : memref<332x4xf32, #tpu.memory_space<vmem>>, vector<288x4xf32>
    %580 = arith.truncf %579 : vector<288x4xf32> to vector<288x4xbf16>
    %c7_459 = arith.constant 7 : index
    %c0_460 = arith.constant 0 : index
    %c0_461 = arith.constant 0 : index
    %581 = vector.load %arg3[%c7_459, %c0_460, %c0_461] : memref<9x4x4xbf16, #tpu.memory_space<vmem>>, vector<1x4x4xbf16>
    %582 = vector.shape_cast %581 : vector<1x4x4xbf16> to vector<4x4xbf16>
    %cst_462 = arith.constant dense<0.000000e+00> : vector<288x4xf32>
    %583 = tpu.matmul %580, %582, %cst_462 {dimension_numbers = #tpu.dot_dimension_numbers<[1], [0], [0], [1], [0, 0, 1, 1], [], []>} : vector<288x4xbf16>, vector<4x4xbf16>, vector<288x4xf32> -> vector<288x4xf32>
    %c0_463 = arith.constant 0 : index
    %c0_464 = arith.constant 0 : index
    %584 = vector.load %arg6[%c0_463, %c0_464] : memref<288x4xf32, #tpu.memory_space<vmem>>, vector<288x4xf32>
    %585 = arith.addf %584, %583 : vector<288x4xf32>
    %c0_465 = arith.constant 0 : index
    %c0_466 = arith.constant 0 : index
    %586 = vector.load %arg6[%c0_465, %c0_466] : memref<288x4xf32, #tpu.memory_space<vmem>>, vector<288x4xf32>
    tpu.vector_store %arg6[%c0_465, %c0_466], %585 {strides = array<i32>} : memref<288x4xf32, #tpu.memory_space<vmem>>, vector<288x4xf32>,
    %c38_467 = arith.constant 38 : index
    %c0_468 = arith.constant 0 : index
    %587 = vector.load %arg5[%c38_467, %c0_468] : memref<332x4xf32, #tpu.memory_space<vmem>>, vector<288x4xf32>
    %588 = arith.truncf %587 : vector<288x4xf32> to vector<288x4xbf16>
    %c8_469 = arith.constant 8 : index
    %c0_470 = arith.constant 0 : index
    %c0_471 = arith.constant 0 : index
    %589 = vector.load %arg3[%c8_469, %c0_470, %c0_471] : memref<9x4x4xbf16, #tpu.memory_space<vmem>>, vector<1x4x4xbf16>
    %590 = vector.shape_cast %589 : vector<1x4x4xbf16> to vector<4x4xbf16>
    %cst_472 = arith.constant dense<0.000000e+00> : vector<288x4xf32>
    %591 = tpu.matmul %588, %590, %cst_472 {dimension_numbers = #tpu.dot_dimension_numbers<[1], [0], [0], [1], [0, 0, 1, 1], [], []>} : vector<288x4xbf16>, vector<4x4xbf16>, vector<288x4xf32> -> vector<288x4xf32>
    %c0_473 = arith.constant 0 : index
    %c0_474 = arith.constant 0 : index
    %592 = vector.load %arg6[%c0_473, %c0_474] : memref<288x4xf32, #tpu.memory_space<vmem>>, vector<288x4xf32>
    %593 = arith.addf %592, %591 : vector<288x4xf32>
    %c0_475 = arith.constant 0 : index
    %c0_476 = arith.constant 0 : index
    %594 = vector.load %arg6[%c0_475, %c0_476] : memref<288x4xf32, #tpu.memory_space<vmem>>, vector<288x4xf32>
    tpu.vector_store %arg6[%c0_475, %c0_476], %593 {strides = array<i32>} : memref<288x4xf32, #tpu.memory_space<vmem>>, vector<288x4xf32>,
    %cst_477 = arith.constant 0.000000e+00 : f32
    %595 = vector.broadcast %cst_477 : f32 to vector<1x4xf32>
    %cst_478 = arith.constant 0.000000e+00 : f32
    %596 = vector.broadcast %cst_478 : f32 to vector<1x4xf32>
    %c0_479 = arith.constant 0 : index
    %c0_480 = arith.constant 0 : index
    %597 = vector.load %arg6[%c0_479, %c0_480] : memref<288x4xf32, #tpu.memory_space<vmem>>, vector<16x4xf32>
    %cst_481 = arith.constant dense<0.000000e+00> : vector<4xf32>
    %598 = vector.multi_reduction <add>, %597, %cst_481 [0] : vector<16x4xf32> to vector<4xf32>
    %599 = vector.shape_cast %598 : vector<4xf32> to vector<1x4xf32>
    %600 = arith.addf %595, %599 : vector<1x4xf32>
    %601 = arith.mulf %597, %597 : vector<16x4xf32>
    %cst_482 = arith.constant dense<0.000000e+00> : vector<4xf32>
    %602 = vector.multi_reduction <add>, %601, %cst_482 [0] : vector<16x4xf32> to vector<4xf32>
    %603 = vector.shape_cast %602 : vector<4xf32> to vector<1x4xf32>
    %604 = arith.addf %596, %603 : vector<1x4xf32>
    %c18_483 = arith.constant 18 : index
    %c0_484 = arith.constant 0 : index
    %605 = vector.load %arg6[%c18_483, %c0_484] : memref<288x4xf32, #tpu.memory_space<vmem>>, vector<16x4xf32>
    %cst_485 = arith.constant dense<0.000000e+00> : vector<4xf32>
    %606 = vector.multi_reduction <add>, %605, %cst_485 [0] : vector<16x4xf32> to vector<4xf32>
    %607 = vector.shape_cast %606 : vector<4xf32> to vector<1x4xf32>
    %608 = arith.addf %600, %607 : vector<1x4xf32>
    %609 = arith.mulf %605, %605 : vector<16x4xf32>
    %cst_486 = arith.constant dense<0.000000e+00> : vector<4xf32>
    %610 = vector.multi_reduction <add>, %609, %cst_486 [0] : vector<16x4xf32> to vector<4xf32>
    %611 = vector.shape_cast %610 : vector<4xf32> to vector<1x4xf32>
    %612 = arith.addf %604, %611 : vector<1x4xf32>
    %c36_487 = arith.constant 36 : index
    %c0_488 = arith.constant 0 : index
    %613 = vector.load %arg6[%c36_487, %c0_488] : memref<288x4xf32, #tpu.memory_space<vmem>>, vector<16x4xf32>
    %cst_489 = arith.constant dense<0.000000e+00> : vector<4xf32>
    %614 = vector.multi_reduction <add>, %613, %cst_489 [0] : vector<16x4xf32> to vector<4xf32>
    %615 = vector.shape_cast %614 : vector<4xf32> to vector<1x4xf32>
    %616 = arith.addf %608, %615 : vector<1x4xf32>
    %617 = arith.mulf %613, %613 : vector<16x4xf32>
    %cst_490 = arith.constant dense<0.000000e+00> : vector<4xf32>
    %618 = vector.multi_reduction <add>, %617, %cst_490 [0] : vector<16x4xf32> to vector<4xf32>
    %619 = vector.shape_cast %618 : vector<4xf32> to vector<1x4xf32>
    %620 = arith.addf %612, %619 : vector<1x4xf32>
    %c54_491 = arith.constant 54 : index
    %c0_492 = arith.constant 0 : index
    %621 = vector.load %arg6[%c54_491, %c0_492] : memref<288x4xf32, #tpu.memory_space<vmem>>, vector<16x4xf32>
    %cst_493 = arith.constant dense<0.000000e+00> : vector<4xf32>
    %622 = vector.multi_reduction <add>, %621, %cst_493 [0] : vector<16x4xf32> to vector<4xf32>
    %623 = vector.shape_cast %622 : vector<4xf32> to vector<1x4xf32>
    %624 = arith.addf %616, %623 : vector<1x4xf32>
    %625 = arith.mulf %621, %621 : vector<16x4xf32>
    %cst_494 = arith.constant dense<0.000000e+00> : vector<4xf32>
    %626 = vector.multi_reduction <add>, %625, %cst_494 [0] : vector<16x4xf32> to vector<4xf32>
    %627 = vector.shape_cast %626 : vector<4xf32> to vector<1x4xf32>
    %628 = arith.addf %620, %627 : vector<1x4xf32>
    %c72_495 = arith.constant 72 : index
    %c0_496 = arith.constant 0 : index
    %629 = vector.load %arg6[%c72_495, %c0_496] : memref<288x4xf32, #tpu.memory_space<vmem>>, vector<16x4xf32>
    %cst_497 = arith.constant dense<0.000000e+00> : vector<4xf32>
    %630 = vector.multi_reduction <add>, %629, %cst_497 [0] : vector<16x4xf32> to vector<4xf32>
    %631 = vector.shape_cast %630 : vector<4xf32> to vector<1x4xf32>
    %632 = arith.addf %624, %631 : vector<1x4xf32>
    %633 = arith.mulf %629, %629 : vector<16x4xf32>
    %cst_498 = arith.constant dense<0.000000e+00> : vector<4xf32>
    %634 = vector.multi_reduction <add>, %633, %cst_498 [0] : vector<16x4xf32> to vector<4xf32>
    %635 = vector.shape_cast %634 : vector<4xf32> to vector<1x4xf32>
    %636 = arith.addf %628, %635 : vector<1x4xf32>
    %c90_499 = arith.constant 90 : index
    %c0_500 = arith.constant 0 : index
    %637 = vector.load %arg6[%c90_499, %c0_500] : memref<288x4xf32, #tpu.memory_space<vmem>>, vector<16x4xf32>
    %cst_501 = arith.constant dense<0.000000e+00> : vector<4xf32>
    %638 = vector.multi_reduction <add>, %637, %cst_501 [0] : vector<16x4xf32> to vector<4xf32>
    %639 = vector.shape_cast %638 : vector<4xf32> to vector<1x4xf32>
    %640 = arith.addf %632, %639 : vector<1x4xf32>
    %641 = arith.mulf %637, %637 : vector<16x4xf32>
    %cst_502 = arith.constant dense<0.000000e+00> : vector<4xf32>
    %642 = vector.multi_reduction <add>, %641, %cst_502 [0] : vector<16x4xf32> to vector<4xf32>
    %643 = vector.shape_cast %642 : vector<4xf32> to vector<1x4xf32>
    %644 = arith.addf %636, %643 : vector<1x4xf32>
    %c108_503 = arith.constant 108 : index
    %c0_504 = arith.constant 0 : index
    %645 = vector.load %arg6[%c108_503, %c0_504] : memref<288x4xf32, #tpu.memory_space<vmem>>, vector<16x4xf32>
    %cst_505 = arith.constant dense<0.000000e+00> : vector<4xf32>
    %646 = vector.multi_reduction <add>, %645, %cst_505 [0] : vector<16x4xf32> to vector<4xf32>
    %647 = vector.shape_cast %646 : vector<4xf32> to vector<1x4xf32>
    %648 = arith.addf %640, %647 : vector<1x4xf32>
    %649 = arith.mulf %645, %645 : vector<16x4xf32>
    %cst_506 = arith.constant dense<0.000000e+00> : vector<4xf32>
    %650 = vector.multi_reduction <add>, %649, %cst_506 [0] : vector<16x4xf32> to vector<4xf32>
    %651 = vector.shape_cast %650 : vector<4xf32> to vector<1x4xf32>
    %652 = arith.addf %644, %651 : vector<1x4xf32>
    %c126_507 = arith.constant 126 : index
    %c0_508 = arith.constant 0 : index
    %653 = vector.load %arg6[%c126_507, %c0_508] : memref<288x4xf32, #tpu.memory_space<vmem>>, vector<16x4xf32>
    %cst_509 = arith.constant dense<0.000000e+00> : vector<4xf32>
    %654 = vector.multi_reduction <add>, %653, %cst_509 [0] : vector<16x4xf32> to vector<4xf32>
    %655 = vector.shape_cast %654 : vector<4xf32> to vector<1x4xf32>
    %656 = arith.addf %648, %655 : vector<1x4xf32>
    %657 = arith.mulf %653, %653 : vector<16x4xf32>
    %cst_510 = arith.constant dense<0.000000e+00> : vector<4xf32>
    %658 = vector.multi_reduction <add>, %657, %cst_510 [0] : vector<16x4xf32> to vector<4xf32>
    %659 = vector.shape_cast %658 : vector<4xf32> to vector<1x4xf32>
    %660 = arith.addf %652, %659 : vector<1x4xf32>
    %c144_511 = arith.constant 144 : index
    %c0_512 = arith.constant 0 : index
    %661 = vector.load %arg6[%c144_511, %c0_512] : memref<288x4xf32, #tpu.memory_space<vmem>>, vector<16x4xf32>
    %cst_513 = arith.constant dense<0.000000e+00> : vector<4xf32>
    %662 = vector.multi_reduction <add>, %661, %cst_513 [0] : vector<16x4xf32> to vector<4xf32>
    %663 = vector.shape_cast %662 : vector<4xf32> to vector<1x4xf32>
    %664 = arith.addf %656, %663 : vector<1x4xf32>
    %665 = arith.mulf %661, %661 : vector<16x4xf32>
    %cst_514 = arith.constant dense<0.000000e+00> : vector<4xf32>
    %666 = vector.multi_reduction <add>, %665, %cst_514 [0] : vector<16x4xf32> to vector<4xf32>
    %667 = vector.shape_cast %666 : vector<4xf32> to vector<1x4xf32>
    %668 = arith.addf %660, %667 : vector<1x4xf32>
    %c162_515 = arith.constant 162 : index
    %c0_516 = arith.constant 0 : index
    %669 = vector.load %arg6[%c162_515, %c0_516] : memref<288x4xf32, #tpu.memory_space<vmem>>, vector<16x4xf32>
    %cst_517 = arith.constant dense<0.000000e+00> : vector<4xf32>
    %670 = vector.multi_reduction <add>, %669, %cst_517 [0] : vector<16x4xf32> to vector<4xf32>
    %671 = vector.shape_cast %670 : vector<4xf32> to vector<1x4xf32>
    %672 = arith.addf %664, %671 : vector<1x4xf32>
    %673 = arith.mulf %669, %669 : vector<16x4xf32>
    %cst_518 = arith.constant dense<0.000000e+00> : vector<4xf32>
    %674 = vector.multi_reduction <add>, %673, %cst_518 [0] : vector<16x4xf32> to vector<4xf32>
    %675 = vector.shape_cast %674 : vector<4xf32> to vector<1x4xf32>
    %676 = arith.addf %668, %675 : vector<1x4xf32>
    %c180_519 = arith.constant 180 : index
    %c0_520 = arith.constant 0 : index
    %677 = vector.load %arg6[%c180_519, %c0_520] : memref<288x4xf32, #tpu.memory_space<vmem>>, vector<16x4xf32>
    %cst_521 = arith.constant dense<0.000000e+00> : vector<4xf32>
    %678 = vector.multi_reduction <add>, %677, %cst_521 [0] : vector<16x4xf32> to vector<4xf32>
    %679 = vector.shape_cast %678 : vector<4xf32> to vector<1x4xf32>
    %680 = arith.addf %672, %679 : vector<1x4xf32>
    %681 = arith.mulf %677, %677 : vector<16x4xf32>
    %cst_522 = arith.constant dense<0.000000e+00> : vector<4xf32>
    %682 = vector.multi_reduction <add>, %681, %cst_522 [0] : vector<16x4xf32> to vector<4xf32>
    %683 = vector.shape_cast %682 : vector<4xf32> to vector<1x4xf32>
    %684 = arith.addf %676, %683 : vector<1x4xf32>
    %c198_523 = arith.constant 198 : index
    %c0_524 = arith.constant 0 : index
    %685 = vector.load %arg6[%c198_523, %c0_524] : memref<288x4xf32, #tpu.memory_space<vmem>>, vector<16x4xf32>
    %cst_525 = arith.constant dense<0.000000e+00> : vector<4xf32>
    %686 = vector.multi_reduction <add>, %685, %cst_525 [0] : vector<16x4xf32> to vector<4xf32>
    %687 = vector.shape_cast %686 : vector<4xf32> to vector<1x4xf32>
    %688 = arith.addf %680, %687 : vector<1x4xf32>
    %689 = arith.mulf %685, %685 : vector<16x4xf32>
    %cst_526 = arith.constant dense<0.000000e+00> : vector<4xf32>
    %690 = vector.multi_reduction <add>, %689, %cst_526 [0] : vector<16x4xf32> to vector<4xf32>
    %691 = vector.shape_cast %690 : vector<4xf32> to vector<1x4xf32>
    %692 = arith.addf %684, %691 : vector<1x4xf32>
    %c216_527 = arith.constant 216 : index
    %c0_528 = arith.constant 0 : index
    %693 = vector.load %arg6[%c216_527, %c0_528] : memref<288x4xf32, #tpu.memory_space<vmem>>, vector<16x4xf32>
    %cst_529 = arith.constant dense<0.000000e+00> : vector<4xf32>
    %694 = vector.multi_reduction <add>, %693, %cst_529 [0] : vector<16x4xf32> to vector<4xf32>
    %695 = vector.shape_cast %694 : vector<4xf32> to vector<1x4xf32>
    %696 = arith.addf %688, %695 : vector<1x4xf32>
    %697 = arith.mulf %693, %693 : vector<16x4xf32>
    %cst_530 = arith.constant dense<0.000000e+00> : vector<4xf32>
    %698 = vector.multi_reduction <add>, %697, %cst_530 [0] : vector<16x4xf32> to vector<4xf32>
    %699 = vector.shape_cast %698 : vector<4xf32> to vector<1x4xf32>
    %700 = arith.addf %692, %699 : vector<1x4xf32>
    %c234_531 = arith.constant 234 : index
    %c0_532 = arith.constant 0 : index
    %701 = vector.load %arg6[%c234_531, %c0_532] : memref<288x4xf32, #tpu.memory_space<vmem>>, vector<16x4xf32>
    %cst_533 = arith.constant dense<0.000000e+00> : vector<4xf32>
    %702 = vector.multi_reduction <add>, %701, %cst_533 [0] : vector<16x4xf32> to vector<4xf32>
    %703 = vector.shape_cast %702 : vector<4xf32> to vector<1x4xf32>
    %704 = arith.addf %696, %703 : vector<1x4xf32>
    %705 = arith.mulf %701, %701 : vector<16x4xf32>
    %cst_534 = arith.constant dense<0.000000e+00> : vector<4xf32>
    %706 = vector.multi_reduction <add>, %705, %cst_534 [0] : vector<16x4xf32> to vector<4xf32>
    %707 = vector.shape_cast %706 : vector<4xf32> to vector<1x4xf32>
    %708 = arith.addf %700, %707 : vector<1x4xf32>
    %c252_535 = arith.constant 252 : index
    %c0_536 = arith.constant 0 : index
    %709 = vector.load %arg6[%c252_535, %c0_536] : memref<288x4xf32, #tpu.memory_space<vmem>>, vector<16x4xf32>
    %cst_537 = arith.constant dense<0.000000e+00> : vector<4xf32>
    %710 = vector.multi_reduction <add>, %709, %cst_537 [0] : vector<16x4xf32> to vector<4xf32>
    %711 = vector.shape_cast %710 : vector<4xf32> to vector<1x4xf32>
    %712 = arith.addf %704, %711 : vector<1x4xf32>
    %713 = arith.mulf %709, %709 : vector<16x4xf32>
    %cst_538 = arith.constant dense<0.000000e+00> : vector<4xf32>
    %714 = vector.multi_reduction <add>, %713, %cst_538 [0] : vector<16x4xf32> to vector<4xf32>
    %715 = vector.shape_cast %714 : vector<4xf32> to vector<1x4xf32>
    %716 = arith.addf %708, %715 : vector<1x4xf32>
    %c270_539 = arith.constant 270 : index
    %c0_540 = arith.constant 0 : index
    %717 = vector.load %arg6[%c270_539, %c0_540] : memref<288x4xf32, #tpu.memory_space<vmem>>, vector<16x4xf32>
    %cst_541 = arith.constant dense<0.000000e+00> : vector<4xf32>
    %718 = vector.multi_reduction <add>, %717, %cst_541 [0] : vector<16x4xf32> to vector<4xf32>
    %719 = vector.shape_cast %718 : vector<4xf32> to vector<1x4xf32>
    %720 = arith.addf %712, %719 : vector<1x4xf32>
    %721 = arith.mulf %717, %717 : vector<16x4xf32>
    %cst_542 = arith.constant dense<0.000000e+00> : vector<4xf32>
    %722 = vector.multi_reduction <add>, %721, %cst_542 [0] : vector<16x4xf32> to vector<4xf32>
    %723 = vector.shape_cast %722 : vector<4xf32> to vector<1x4xf32>
    %724 = arith.addf %716, %723 : vector<1x4xf32>
    %cst_543 = arith.constant 2.560000e+02 : f32
    %725 = vector.broadcast %cst_543 : f32 to vector<1x4xf32>
    %726 = arith.divf %720, %725 : vector<1x4xf32>
    %cst_544 = arith.constant 2.560000e+02 : f32
    %727 = vector.broadcast %cst_544 : f32 to vector<1x4xf32>
    %728 = arith.divf %724, %727 : vector<1x4xf32>
    %729 = arith.mulf %726, %726 : vector<1x4xf32>
    %730 = arith.subf %728, %729 : vector<1x4xf32>
    %cst_545 = arith.constant 0.000000e+00 : f32
    %731 = vector.broadcast %cst_545 : f32 to vector<1x4xf32>
    %732 = arith.maximumf %730, %731 : vector<1x4xf32>
    %cst_546 = arith.constant 9.99999974E-6 : f32
    %733 = vector.broadcast %cst_546 : f32 to vector<1x4xf32>
    %734 = arith.addf %732, %733 : vector<1x4xf32>
    %735 = math.rsqrt %734 : vector<1x4xf32>
    %c0_547 = arith.constant 0 : index
    %c0_548 = arith.constant 0 : index
    %736 = vector.load %arg6[%c0_547, %c0_548] : memref<288x4xf32, #tpu.memory_space<vmem>>, vector<16x4xf32>
    %737 = vector.broadcast %726 : vector<1x4xf32> to vector<16x4xf32>
    %738 = arith.subf %736, %737 : vector<16x4xf32>
    %739 = vector.broadcast %735 : vector<1x4xf32> to vector<16x4xf32>
    %740 = arith.mulf %738, %739 : vector<16x4xf32>
    %c0_549 = arith.constant 0 : index
    %c0_550 = arith.constant 0 : index
    %c0_551 = arith.constant 0 : index
    %741 = vector.load %arg1[%c0_549, %c0_550, %c0_551] : memref<1x256x4xf32, #tpu.memory_space<vmem>>, vector<1x16x4xf32>
    %742 = vector.shape_cast %741 : vector<1x16x4xf32> to vector<16x4xf32>
    %743 = arith.addf %740, %742 : vector<16x4xf32>
    %c0_552 = arith.constant 0 : index
    %c0_553 = arith.constant 0 : index
    %c0_554 = arith.constant 0 : index
    %744 = vector.load %arg4[%c0_552, %c0_553, %c0_554] : memref<1x256x4xf32, #tpu.memory_space<vmem>>, vector<1x16x4xf32>
    %745 = vector.shape_cast %744 : vector<1x16x4xf32> to vector<16x4xf32>
    %746 = vector.shape_cast %743 : vector<16x4xf32> to vector<1x16x4xf32>
    tpu.vector_store %arg4[%c0_552, %c0_553, %c0_554], %746 {strides = array<i32>} : memref<1x256x4xf32, #tpu.memory_space<vmem>>, vector<1x16x4xf32>,
    %c18_555 = arith.constant 18 : index
    %c0_556 = arith.constant 0 : index
    %747 = vector.load %arg6[%c18_555, %c0_556] : memref<288x4xf32, #tpu.memory_space<vmem>>, vector<16x4xf32>
    %748 = vector.broadcast %726 : vector<1x4xf32> to vector<16x4xf32>
    %749 = arith.subf %747, %748 : vector<16x4xf32>
    %750 = vector.broadcast %735 : vector<1x4xf32> to vector<16x4xf32>
    %751 = arith.mulf %749, %750 : vector<16x4xf32>
    %c0_557 = arith.constant 0 : index
    %c16_558 = arith.constant 16 : index
    %c0_559 = arith.constant 0 : index
    %752 = vector.load %arg1[%c0_557, %c16_558, %c0_559] : memref<1x256x4xf32, #tpu.memory_space<vmem>>, vector<1x16x4xf32>
    %753 = vector.shape_cast %752 : vector<1x16x4xf32> to vector<16x4xf32>
    %754 = arith.addf %751, %753 : vector<16x4xf32>
    %c0_560 = arith.constant 0 : index
    %c16_561 = arith.constant 16 : index
    %c0_562 = arith.constant 0 : index
    %755 = vector.load %arg4[%c0_560, %c16_561, %c0_562] : memref<1x256x4xf32, #tpu.memory_space<vmem>>, vector<1x16x4xf32>
    %756 = vector.shape_cast %755 : vector<1x16x4xf32> to vector<16x4xf32>
    %757 = vector.shape_cast %754 : vector<16x4xf32> to vector<1x16x4xf32>
    tpu.vector_store %arg4[%c0_560, %c16_561, %c0_562], %757 {strides = array<i32>} : memref<1x256x4xf32, #tpu.memory_space<vmem>>, vector<1x16x4xf32>,
    %c36_563 = arith.constant 36 : index
    %c0_564 = arith.constant 0 : index
    %758 = vector.load %arg6[%c36_563, %c0_564] : memref<288x4xf32, #tpu.memory_space<vmem>>, vector<16x4xf32>
    %759 = vector.broadcast %726 : vector<1x4xf32> to vector<16x4xf32>
    %760 = arith.subf %758, %759 : vector<16x4xf32>
    %761 = vector.broadcast %735 : vector<1x4xf32> to vector<16x4xf32>
    %762 = arith.mulf %760, %761 : vector<16x4xf32>
    %c0_565 = arith.constant 0 : index
    %c32_566 = arith.constant 32 : index
    %c0_567 = arith.constant 0 : index
    %763 = vector.load %arg1[%c0_565, %c32_566, %c0_567] : memref<1x256x4xf32, #tpu.memory_space<vmem>>, vector<1x16x4xf32>
    %764 = vector.shape_cast %763 : vector<1x16x4xf32> to vector<16x4xf32>
    %765 = arith.addf %762, %764 : vector<16x4xf32>
    %c0_568 = arith.constant 0 : index
    %c32_569 = arith.constant 32 : index
    %c0_570 = arith.constant 0 : index
    %766 = vector.load %arg4[%c0_568, %c32_569, %c0_570] : memref<1x256x4xf32, #tpu.memory_space<vmem>>, vector<1x16x4xf32>
    %767 = vector.shape_cast %766 : vector<1x16x4xf32> to vector<16x4xf32>
    %768 = vector.shape_cast %765 : vector<16x4xf32> to vector<1x16x4xf32>
    tpu.vector_store %arg4[%c0_568, %c32_569, %c0_570], %768 {strides = array<i32>} : memref<1x256x4xf32, #tpu.memory_space<vmem>>, vector<1x16x4xf32>,
    %c54_571 = arith.constant 54 : index
    %c0_572 = arith.constant 0 : index
    %769 = vector.load %arg6[%c54_571, %c0_572] : memref<288x4xf32, #tpu.memory_space<vmem>>, vector<16x4xf32>
    %770 = vector.broadcast %726 : vector<1x4xf32> to vector<16x4xf32>
    %771 = arith.subf %769, %770 : vector<16x4xf32>
    %772 = vector.broadcast %735 : vector<1x4xf32> to vector<16x4xf32>
    %773 = arith.mulf %771, %772 : vector<16x4xf32>
    %c0_573 = arith.constant 0 : index
    %c48_574 = arith.constant 48 : index
    %c0_575 = arith.constant 0 : index
    %774 = vector.load %arg1[%c0_573, %c48_574, %c0_575] : memref<1x256x4xf32, #tpu.memory_space<vmem>>, vector<1x16x4xf32>
    %775 = vector.shape_cast %774 : vector<1x16x4xf32> to vector<16x4xf32>
    %776 = arith.addf %773, %775 : vector<16x4xf32>
    %c0_576 = arith.constant 0 : index
    %c48_577 = arith.constant 48 : index
    %c0_578 = arith.constant 0 : index
    %777 = vector.load %arg4[%c0_576, %c48_577, %c0_578] : memref<1x256x4xf32, #tpu.memory_space<vmem>>, vector<1x16x4xf32>
    %778 = vector.shape_cast %777 : vector<1x16x4xf32> to vector<16x4xf32>
    %779 = vector.shape_cast %776 : vector<16x4xf32> to vector<1x16x4xf32>
    tpu.vector_store %arg4[%c0_576, %c48_577, %c0_578], %779 {strides = array<i32>} : memref<1x256x4xf32, #tpu.memory_space<vmem>>, vector<1x16x4xf32>,
    %c72_579 = arith.constant 72 : index
    %c0_580 = arith.constant 0 : index
    %780 = vector.load %arg6[%c72_579, %c0_580] : memref<288x4xf32, #tpu.memory_space<vmem>>, vector<16x4xf32>
    %781 = vector.broadcast %726 : vector<1x4xf32> to vector<16x4xf32>
    %782 = arith.subf %780, %781 : vector<16x4xf32>
    %783 = vector.broadcast %735 : vector<1x4xf32> to vector<16x4xf32>
    %784 = arith.mulf %782, %783 : vector<16x4xf32>
    %c0_581 = arith.constant 0 : index
    %c64_582 = arith.constant 64 : index
    %c0_583 = arith.constant 0 : index
    %785 = vector.load %arg1[%c0_581, %c64_582, %c0_583] : memref<1x256x4xf32, #tpu.memory_space<vmem>>, vector<1x16x4xf32>
    %786 = vector.shape_cast %785 : vector<1x16x4xf32> to vector<16x4xf32>
    %787 = arith.addf %784, %786 : vector<16x4xf32>
    %c0_584 = arith.constant 0 : index
    %c64_585 = arith.constant 64 : index
    %c0_586 = arith.constant 0 : index
    %788 = vector.load %arg4[%c0_584, %c64_585, %c0_586] : memref<1x256x4xf32, #tpu.memory_space<vmem>>, vector<1x16x4xf32>
    %789 = vector.shape_cast %788 : vector<1x16x4xf32> to vector<16x4xf32>
    %790 = vector.shape_cast %787 : vector<16x4xf32> to vector<1x16x4xf32>
    tpu.vector_store %arg4[%c0_584, %c64_585, %c0_586], %790 {strides = array<i32>} : memref<1x256x4xf32, #tpu.memory_space<vmem>>, vector<1x16x4xf32>,
    %c90_587 = arith.constant 90 : index
    %c0_588 = arith.constant 0 : index
    %791 = vector.load %arg6[%c90_587, %c0_588] : memref<288x4xf32, #tpu.memory_space<vmem>>, vector<16x4xf32>
    %792 = vector.broadcast %726 : vector<1x4xf32> to vector<16x4xf32>
    %793 = arith.subf %791, %792 : vector<16x4xf32>
    %794 = vector.broadcast %735 : vector<1x4xf32> to vector<16x4xf32>
    %795 = arith.mulf %793, %794 : vector<16x4xf32>
    %c0_589 = arith.constant 0 : index
    %c80_590 = arith.constant 80 : index
    %c0_591 = arith.constant 0 : index
    %796 = vector.load %arg1[%c0_589, %c80_590, %c0_591] : memref<1x256x4xf32, #tpu.memory_space<vmem>>, vector<1x16x4xf32>
    %797 = vector.shape_cast %796 : vector<1x16x4xf32> to vector<16x4xf32>
    %798 = arith.addf %795, %797 : vector<16x4xf32>
    %c0_592 = arith.constant 0 : index
    %c80_593 = arith.constant 80 : index
    %c0_594 = arith.constant 0 : index
    %799 = vector.load %arg4[%c0_592, %c80_593, %c0_594] : memref<1x256x4xf32, #tpu.memory_space<vmem>>, vector<1x16x4xf32>
    %800 = vector.shape_cast %799 : vector<1x16x4xf32> to vector<16x4xf32>
    %801 = vector.shape_cast %798 : vector<16x4xf32> to vector<1x16x4xf32>
    tpu.vector_store %arg4[%c0_592, %c80_593, %c0_594], %801 {strides = array<i32>} : memref<1x256x4xf32, #tpu.memory_space<vmem>>, vector<1x16x4xf32>,
    %c108_595 = arith.constant 108 : index
    %c0_596 = arith.constant 0 : index
    %802 = vector.load %arg6[%c108_595, %c0_596] : memref<288x4xf32, #tpu.memory_space<vmem>>, vector<16x4xf32>
    %803 = vector.broadcast %726 : vector<1x4xf32> to vector<16x4xf32>
    %804 = arith.subf %802, %803 : vector<16x4xf32>
    %805 = vector.broadcast %735 : vector<1x4xf32> to vector<16x4xf32>
    %806 = arith.mulf %804, %805 : vector<16x4xf32>
    %c0_597 = arith.constant 0 : index
    %c96_598 = arith.constant 96 : index
    %c0_599 = arith.constant 0 : index
    %807 = vector.load %arg1[%c0_597, %c96_598, %c0_599] : memref<1x256x4xf32, #tpu.memory_space<vmem>>, vector<1x16x4xf32>
    %808 = vector.shape_cast %807 : vector<1x16x4xf32> to vector<16x4xf32>
    %809 = arith.addf %806, %808 : vector<16x4xf32>
    %c0_600 = arith.constant 0 : index
    %c96_601 = arith.constant 96 : index
    %c0_602 = arith.constant 0 : index
    %810 = vector.load %arg4[%c0_600, %c96_601, %c0_602] : memref<1x256x4xf32, #tpu.memory_space<vmem>>, vector<1x16x4xf32>
    %811 = vector.shape_cast %810 : vector<1x16x4xf32> to vector<16x4xf32>
    %812 = vector.shape_cast %809 : vector<16x4xf32> to vector<1x16x4xf32>
    tpu.vector_store %arg4[%c0_600, %c96_601, %c0_602], %812 {strides = array<i32>} : memref<1x256x4xf32, #tpu.memory_space<vmem>>, vector<1x16x4xf32>,
    %c126_603 = arith.constant 126 : index
    %c0_604 = arith.constant 0 : index
    %813 = vector.load %arg6[%c126_603, %c0_604] : memref<288x4xf32, #tpu.memory_space<vmem>>, vector<16x4xf32>
    %814 = vector.broadcast %726 : vector<1x4xf32> to vector<16x4xf32>
    %815 = arith.subf %813, %814 : vector<16x4xf32>
    %816 = vector.broadcast %735 : vector<1x4xf32> to vector<16x4xf32>
    %817 = arith.mulf %815, %816 : vector<16x4xf32>
    %c0_605 = arith.constant 0 : index
    %c112_606 = arith.constant 112 : index
    %c0_607 = arith.constant 0 : index
    %818 = vector.load %arg1[%c0_605, %c112_606, %c0_607] : memref<1x256x4xf32, #tpu.memory_space<vmem>>, vector<1x16x4xf32>
    %819 = vector.shape_cast %818 : vector<1x16x4xf32> to vector<16x4xf32>
    %820 = arith.addf %817, %819 : vector<16x4xf32>
    %c0_608 = arith.constant 0 : index
    %c112_609 = arith.constant 112 : index
    %c0_610 = arith.constant 0 : index
    %821 = vector.load %arg4[%c0_608, %c112_609, %c0_610] : memref<1x256x4xf32, #tpu.memory_space<vmem>>, vector<1x16x4xf32>
    %822 = vector.shape_cast %821 : vector<1x16x4xf32> to vector<16x4xf32>
    %823 = vector.shape_cast %820 : vector<16x4xf32> to vector<1x16x4xf32>
    tpu.vector_store %arg4[%c0_608, %c112_609, %c0_610], %823 {strides = array<i32>} : memref<1x256x4xf32, #tpu.memory_space<vmem>>, vector<1x16x4xf32>,
    %c144_611 = arith.constant 144 : index
    %c0_612 = arith.constant 0 : index
    %824 = vector.load %arg6[%c144_611, %c0_612] : memref<288x4xf32, #tpu.memory_space<vmem>>, vector<16x4xf32>
    %825 = vector.broadcast %726 : vector<1x4xf32> to vector<16x4xf32>
    %826 = arith.subf %824, %825 : vector<16x4xf32>
    %827 = vector.broadcast %735 : vector<1x4xf32> to vector<16x4xf32>
    %828 = arith.mulf %826, %827 : vector<16x4xf32>
    %c0_613 = arith.constant 0 : index
    %c128_614 = arith.constant 128 : index
    %c0_615 = arith.constant 0 : index
    %829 = vector.load %arg1[%c0_613, %c128_614, %c0_615] : memref<1x256x4xf32, #tpu.memory_space<vmem>>, vector<1x16x4xf32>
    %830 = vector.shape_cast %829 : vector<1x16x4xf32> to vector<16x4xf32>
    %831 = arith.addf %828, %830 : vector<16x4xf32>
    %c0_616 = arith.constant 0 : index
    %c128_617 = arith.constant 128 : index
    %c0_618 = arith.constant 0 : index
    %832 = vector.load %arg4[%c0_616, %c128_617, %c0_618] : memref<1x256x4xf32, #tpu.memory_space<vmem>>, vector<1x16x4xf32>
    %833 = vector.shape_cast %832 : vector<1x16x4xf32> to vector<16x4xf32>
    %834 = vector.shape_cast %831 : vector<16x4xf32> to vector<1x16x4xf32>
    tpu.vector_store %arg4[%c0_616, %c128_617, %c0_618], %834 {strides = array<i32>} : memref<1x256x4xf32, #tpu.memory_space<vmem>>, vector<1x16x4xf32>,
    %c162_619 = arith.constant 162 : index
    %c0_620 = arith.constant 0 : index
    %835 = vector.load %arg6[%c162_619, %c0_620] : memref<288x4xf32, #tpu.memory_space<vmem>>, vector<16x4xf32>
    %836 = vector.broadcast %726 : vector<1x4xf32> to vector<16x4xf32>
    %837 = arith.subf %835, %836 : vector<16x4xf32>
    %838 = vector.broadcast %735 : vector<1x4xf32> to vector<16x4xf32>
    %839 = arith.mulf %837, %838 : vector<16x4xf32>
    %c0_621 = arith.constant 0 : index
    %c144_622 = arith.constant 144 : index
    %c0_623 = arith.constant 0 : index
    %840 = vector.load %arg1[%c0_621, %c144_622, %c0_623] : memref<1x256x4xf32, #tpu.memory_space<vmem>>, vector<1x16x4xf32>
    %841 = vector.shape_cast %840 : vector<1x16x4xf32> to vector<16x4xf32>
    %842 = arith.addf %839, %841 : vector<16x4xf32>
    %c0_624 = arith.constant 0 : index
    %c144_625 = arith.constant 144 : index
    %c0_626 = arith.constant 0 : index
    %843 = vector.load %arg4[%c0_624, %c144_625, %c0_626] : memref<1x256x4xf32, #tpu.memory_space<vmem>>, vector<1x16x4xf32>
    %844 = vector.shape_cast %843 : vector<1x16x4xf32> to vector<16x4xf32>
    %845 = vector.shape_cast %842 : vector<16x4xf32> to vector<1x16x4xf32>
    tpu.vector_store %arg4[%c0_624, %c144_625, %c0_626], %845 {strides = array<i32>} : memref<1x256x4xf32, #tpu.memory_space<vmem>>, vector<1x16x4xf32>,
    %c180_627 = arith.constant 180 : index
    %c0_628 = arith.constant 0 : index
    %846 = vector.load %arg6[%c180_627, %c0_628] : memref<288x4xf32, #tpu.memory_space<vmem>>, vector<16x4xf32>
    %847 = vector.broadcast %726 : vector<1x4xf32> to vector<16x4xf32>
    %848 = arith.subf %846, %847 : vector<16x4xf32>
    %849 = vector.broadcast %735 : vector<1x4xf32> to vector<16x4xf32>
    %850 = arith.mulf %848, %849 : vector<16x4xf32>
    %c0_629 = arith.constant 0 : index
    %c160_630 = arith.constant 160 : index
    %c0_631 = arith.constant 0 : index
    %851 = vector.load %arg1[%c0_629, %c160_630, %c0_631] : memref<1x256x4xf32, #tpu.memory_space<vmem>>, vector<1x16x4xf32>
    %852 = vector.shape_cast %851 : vector<1x16x4xf32> to vector<16x4xf32>
    %853 = arith.addf %850, %852 : vector<16x4xf32>
    %c0_632 = arith.constant 0 : index
    %c160_633 = arith.constant 160 : index
    %c0_634 = arith.constant 0 : index
    %854 = vector.load %arg4[%c0_632, %c160_633, %c0_634] : memref<1x256x4xf32, #tpu.memory_space<vmem>>, vector<1x16x4xf32>
    %855 = vector.shape_cast %854 : vector<1x16x4xf32> to vector<16x4xf32>
    %856 = vector.shape_cast %853 : vector<16x4xf32> to vector<1x16x4xf32>
    tpu.vector_store %arg4[%c0_632, %c160_633, %c0_634], %856 {strides = array<i32>} : memref<1x256x4xf32, #tpu.memory_space<vmem>>, vector<1x16x4xf32>,
    %c198_635 = arith.constant 198 : index
    %c0_636 = arith.constant 0 : index
    %857 = vector.load %arg6[%c198_635, %c0_636] : memref<288x4xf32, #tpu.memory_space<vmem>>, vector<16x4xf32>
    %858 = vector.broadcast %726 : vector<1x4xf32> to vector<16x4xf32>
    %859 = arith.subf %857, %858 : vector<16x4xf32>
    %860 = vector.broadcast %735 : vector<1x4xf32> to vector<16x4xf32>
    %861 = arith.mulf %859, %860 : vector<16x4xf32>
    %c0_637 = arith.constant 0 : index
    %c176_638 = arith.constant 176 : index
    %c0_639 = arith.constant 0 : index
    %862 = vector.load %arg1[%c0_637, %c176_638, %c0_639] : memref<1x256x4xf32, #tpu.memory_space<vmem>>, vector<1x16x4xf32>
    %863 = vector.shape_cast %862 : vector<1x16x4xf32> to vector<16x4xf32>
    %864 = arith.addf %861, %863 : vector<16x4xf32>
    %c0_640 = arith.constant 0 : index
    %c176_641 = arith.constant 176 : index
    %c0_642 = arith.constant 0 : index
    %865 = vector.load %arg4[%c0_640, %c176_641, %c0_642] : memref<1x256x4xf32, #tpu.memory_space<vmem>>, vector<1x16x4xf32>
    %866 = vector.shape_cast %865 : vector<1x16x4xf32> to vector<16x4xf32>
    %867 = vector.shape_cast %864 : vector<16x4xf32> to vector<1x16x4xf32>
    tpu.vector_store %arg4[%c0_640, %c176_641, %c0_642], %867 {strides = array<i32>} : memref<1x256x4xf32, #tpu.memory_space<vmem>>, vector<1x16x4xf32>,
    %c216_643 = arith.constant 216 : index
    %c0_644 = arith.constant 0 : index
    %868 = vector.load %arg6[%c216_643, %c0_644] : memref<288x4xf32, #tpu.memory_space<vmem>>, vector<16x4xf32>
    %869 = vector.broadcast %726 : vector<1x4xf32> to vector<16x4xf32>
    %870 = arith.subf %868, %869 : vector<16x4xf32>
    %871 = vector.broadcast %735 : vector<1x4xf32> to vector<16x4xf32>
    %872 = arith.mulf %870, %871 : vector<16x4xf32>
    %c0_645 = arith.constant 0 : index
    %c192_646 = arith.constant 192 : index
    %c0_647 = arith.constant 0 : index
    %873 = vector.load %arg1[%c0_645, %c192_646, %c0_647] : memref<1x256x4xf32, #tpu.memory_space<vmem>>, vector<1x16x4xf32>
    %874 = vector.shape_cast %873 : vector<1x16x4xf32> to vector<16x4xf32>
    %875 = arith.addf %872, %874 : vector<16x4xf32>
    %c0_648 = arith.constant 0 : index
    %c192_649 = arith.constant 192 : index
    %c0_650 = arith.constant 0 : index
    %876 = vector.load %arg4[%c0_648, %c192_649, %c0_650] : memref<1x256x4xf32, #tpu.memory_space<vmem>>, vector<1x16x4xf32>
    %877 = vector.shape_cast %876 : vector<1x16x4xf32> to vector<16x4xf32>
    %878 = vector.shape_cast %875 : vector<16x4xf32> to vector<1x16x4xf32>
    tpu.vector_store %arg4[%c0_648, %c192_649, %c0_650], %878 {strides = array<i32>} : memref<1x256x4xf32, #tpu.memory_space<vmem>>, vector<1x16x4xf32>,
    %c234_651 = arith.constant 234 : index
    %c0_652 = arith.constant 0 : index
    %879 = vector.load %arg6[%c234_651, %c0_652] : memref<288x4xf32, #tpu.memory_space<vmem>>, vector<16x4xf32>
    %880 = vector.broadcast %726 : vector<1x4xf32> to vector<16x4xf32>
    %881 = arith.subf %879, %880 : vector<16x4xf32>
    %882 = vector.broadcast %735 : vector<1x4xf32> to vector<16x4xf32>
    %883 = arith.mulf %881, %882 : vector<16x4xf32>
    %c0_653 = arith.constant 0 : index
    %c208_654 = arith.constant 208 : index
    %c0_655 = arith.constant 0 : index
    %884 = vector.load %arg1[%c0_653, %c208_654, %c0_655] : memref<1x256x4xf32, #tpu.memory_space<vmem>>, vector<1x16x4xf32>
    %885 = vector.shape_cast %884 : vector<1x16x4xf32> to vector<16x4xf32>
    %886 = arith.addf %883, %885 : vector<16x4xf32>
    %c0_656 = arith.constant 0 : index
    %c208_657 = arith.constant 208 : index
    %c0_658 = arith.constant 0 : index
    %887 = vector.load %arg4[%c0_656, %c208_657, %c0_658] : memref<1x256x4xf32, #tpu.memory_space<vmem>>, vector<1x16x4xf32>
    %888 = vector.shape_cast %887 : vector<1x16x4xf32> to vector<16x4xf32>
    %889 = vector.shape_cast %886 : vector<16x4xf32> to vector<1x16x4xf32>
    tpu.vector_store %arg4[%c0_656, %c208_657, %c0_658], %889 {strides = array<i32>} : memref<1x256x4xf32, #tpu.memory_space<vmem>>, vector<1x16x4xf32>,
    %c252_659 = arith.constant 252 : index
    %c0_660 = arith.constant 0 : index
    %890 = vector.load %arg6[%c252_659, %c0_660] : memref<288x4xf32, #tpu.memory_space<vmem>>, vector<16x4xf32>
    %891 = vector.broadcast %726 : vector<1x4xf32> to vector<16x4xf32>
    %892 = arith.subf %890, %891 : vector<16x4xf32>
    %893 = vector.broadcast %735 : vector<1x4xf32> to vector<16x4xf32>
    %894 = arith.mulf %892, %893 : vector<16x4xf32>
    %c0_661 = arith.constant 0 : index
    %c224_662 = arith.constant 224 : index
    %c0_663 = arith.constant 0 : index
    %895 = vector.load %arg1[%c0_661, %c224_662, %c0_663] : memref<1x256x4xf32, #tpu.memory_space<vmem>>, vector<1x16x4xf32>
    %896 = vector.shape_cast %895 : vector<1x16x4xf32> to vector<16x4xf32>
    %897 = arith.addf %894, %896 : vector<16x4xf32>
    %c0_664 = arith.constant 0 : index
    %c224_665 = arith.constant 224 : index
    %c0_666 = arith.constant 0 : index
    %898 = vector.load %arg4[%c0_664, %c224_665, %c0_666] : memref<1x256x4xf32, #tpu.memory_space<vmem>>, vector<1x16x4xf32>
    %899 = vector.shape_cast %898 : vector<1x16x4xf32> to vector<16x4xf32>
    %900 = vector.shape_cast %897 : vector<16x4xf32> to vector<1x16x4xf32>
    tpu.vector_store %arg4[%c0_664, %c224_665, %c0_666], %900 {strides = array<i32>} : memref<1x256x4xf32, #tpu.memory_space<vmem>>, vector<1x16x4xf32>,
    %c270_667 = arith.constant 270 : index
    %c0_668 = arith.constant 0 : index
    %901 = vector.load %arg6[%c270_667, %c0_668] : memref<288x4xf32, #tpu.memory_space<vmem>>, vector<16x4xf32>
    %902 = vector.broadcast %726 : vector<1x4xf32> to vector<16x4xf32>
    %903 = arith.subf %901, %902 : vector<16x4xf32>
    %904 = vector.broadcast %735 : vector<1x4xf32> to vector<16x4xf32>
    %905 = arith.mulf %903, %904 : vector<16x4xf32>
    %c0_669 = arith.constant 0 : index
    %c240_670 = arith.constant 240 : index
    %c0_671 = arith.constant 0 : index
    %906 = vector.load %arg1[%c0_669, %c240_670, %c0_671] : memref<1x256x4xf32, #tpu.memory_space<vmem>>, vector<1x16x4xf32>
    %907 = vector.shape_cast %906 : vector<1x16x4xf32> to vector<16x4xf32>
    %908 = arith.addf %905, %907 : vector<16x4xf32>
    %c0_672 = arith.constant 0 : index
    %c240_673 = arith.constant 240 : index
    %c0_674 = arith.constant 0 : index
    %909 = vector.load %arg4[%c0_672, %c240_673, %c0_674] : memref<1x256x4xf32, #tpu.memory_space<vmem>>, vector<1x16x4xf32>
    %910 = vector.shape_cast %909 : vector<1x16x4xf32> to vector<16x4xf32>
    %911 = vector.shape_cast %908 : vector<16x4xf32> to vector<1x16x4xf32>
    tpu.vector_store %arg4[%c0_672, %c240_673, %c0_674], %911 {strides = array<i32>} : memref<1x256x4xf32, #tpu.memory_space<vmem>>, vector<1x16x4xf32>,
    return
  }
  func.func @transform_0(%arg0: i32) -> (i32, i32, i32) {
    %c0_i32 = arith.constant 0 : i32
    %c0_i32_0 = arith.constant 0 : i32
    %c0_i32_1 = arith.constant 0 : i32
    return %arg0, %c0_i32, %c0_i32_0 : i32, i32, i32
  }
  func.func @transform_1(%arg0: i32) -> (i32, i32, i32) {
    %c0_i32 = arith.constant 0 : i32
    %c0_i32_0 = arith.constant 0 : i32
    %c0_i32_1 = arith.constant 0 : i32
    %c0_i32_2 = arith.constant 0 : i32
    return %c0_i32, %c0_i32_0, %c0_i32_1 : i32, i32, i32
  }
  func.func @transform_2(%arg0: i32) -> (i32, i32, i32) {
    %c0_i32 = arith.constant 0 : i32
    %c0_i32_0 = arith.constant 0 : i32
    %c0_i32_1 = arith.constant 0 : i32
    %c0_i32_2 = arith.constant 0 : i32
    return %c0_i32, %c0_i32_0, %c0_i32_1 : i32, i32, i32
  }
  func.func @transform_3(%arg0: i32) -> (i32, i32, i32) {
    %c0_i32 = arith.constant 0 : i32
    %c0_i32_0 = arith.constant 0 : i32
    %c0_i32_1 = arith.constant 0 : i32
    return %arg0, %c0_i32, %c0_i32_0 : i32, i32, i32
  }
}

</mosaic_0001>

<llo_original>
// kernel: resnet_block_forward.1
$region0: #{resnet_block_forward.1}
  #allocation0 [shape = 'u32[]', space=smem, size = 0x4, offset = 0x4, fixed_abs, tag = 'smem constant byte address 0x4 - core index']
  #allocation1 [shape = 'u32[72,128]{1,0:T(1,128)}', space=vmem, size = 0x9000, scoped, tag = 'internal scratch']
  #allocation2 [shape = 'f32[332,4]{1,0:T(8,128)}', space=vmem, size = 0x2a000, scoped, tag = 'scratch operand']
  #allocation3 [shape = 'f32[288,4]{1,0:T(8,128)}', space=vmem, size = 0x24000, scoped, tag = 'scratch operand']
  %s0 = inlined_call_operand.vmem [shape: f32[2,256,4], index: 0, kind: input, shape index: {}]
  %s1 = inlined_call_operand.vmem [shape: bf16[9,4,4], index: 1, kind: input, shape index: {}]
  %s2 = inlined_call_operand.vmem [shape: bf16[9,4,4], index: 2, kind: input, shape index: {}]
  %s3 = inlined_call_operand.vmem [shape: f32[2,256,4], index: 3, kind: output, shape index: {}]
  %s4 = sld [smem:[#allocation0]]
  $region45: #{resnet_block_forward.1} parent=0
    _
  %s6 = ssub.s32 1, %s4
  %s7 = scalar_select 0, %s6, %s4
  loop: start=0, step=1, limit=4
  $region2: #{resnet_block_forward.1} parent=0 // loop_pre_header
    _
  $region3: #{resnet_block_forward.1} parent=0 // loop_header
    %s9 = sphi 0, %s13
    %p10 = scmp.ge.s32.totalorder %s9, 4
    %s19 = sphi 0, %s21
    %s22 = sphi 0, %s19
    %s23 = sphi 0, %s22
    %s39 = sphi 0, %s23
    %s43 = sphi 0, %s43
    %s45 = sphi 0, %s43
    %s46 = sphi 0, %s45
    %s60 = sphi 0, %s46
    %s64 = sphi 0, %s64
    %s66 = sphi 0, %s64
    %s67 = sphi 0, %s66
    %s81 = sphi 0, %s67
    %s87 = sphi 0, %s89
    %s90 = sphi 0, %s87
    %s91 = sphi 0, %s90
    %s107 = sphi 0, %s91
  $region4: #{resnet_block_forward.1} parent=0 // loop_header_branch
    %12 = sbr.rel (%p10) target = $region8
  $region5: #{resnet_block_forward.1} parent=0 // loop_body
    %s14 = ssub.s32 %s9, 1
    %s15 = ssub.s32 %s9, 2
    %s16 = sadd.s32 %s9, 1
    %s17 = ssub.s32 %s9, %s16
    %p18 = scmp.eq.s32.totalorder %s17, 0
    %s20 = sadd.s32 %s19, 1
    %s21 = scalar_select %p18, %s19, %s20
    %p24 = pneg %p18
    %p25 = scmp.eq.s32.totalorder %s9, 1
    %p26 = por %p24, %p25
    %p27 = scmp.ne.s32.totalorder %s19, %s22
    %p28 = scmp.eq.s32.totalorder %s9, 0
    %p29 = por %p27, %p28
    %p30 = scmp.ne.s32.totalorder %s19, %s22
    %p31 = scmp.eq.s32.totalorder %s14, 1
    %p32 = por %p30, %p31
    %p33 = scmp.ne.s32.totalorder %s22, %s23
    %p34 = scmp.eq.s32.totalorder %s14, 0
    %p35 = por %p33, %p34
    %p36 = scmp.ne.s32.totalorder %s22, %s23
    %p37 = scmp.eq.s32.totalorder %s15, 1
    %p38 = por %p36, %p37
    %p40 = scmp.ne.s32.totalorder %s23, %s39
    %p41 = scmp.eq.s32.totalorder %s15, 0
    %p42 = por %p40, %p41
    %s44 = sadd.s32 %s43, 1
    %p47 = scmp.eq.s32.totalorder %s9, 1
    %p48 = scmp.ne.s32.totalorder %s43, %s45
    %p49 = scmp.eq.s32.totalorder %s9, 0
    %p50 = por %p48, %p49
    %p51 = scmp.ne.s32.totalorder %s43, %s45
    %p52 = scmp.eq.s32.totalorder %s14, 1
    %p53 = por %p51, %p52
    %p54 = scmp.ne.s32.totalorder %s45, %s46
    %p55 = scmp.eq.s32.totalorder %s14, 0
    %p56 = por %p54, %p55
    %p57 = scmp.ne.s32.totalorder %s45, %s46
    %p58 = scmp.eq.s32.totalorder %s15, 1
    %p59 = por %p57, %p58
    %p61 = scmp.ne.s32.totalorder %s46, %s60
    %p62 = scmp.eq.s32.totalorder %s15, 0
    %p63 = por %p61, %p62
    %s65 = sadd.s32 %s64, 1
    %p68 = scmp.eq.s32.totalorder %s9, 1
    %p69 = scmp.ne.s32.totalorder %s64, %s66
    %p70 = scmp.eq.s32.totalorder %s9, 0
    %p71 = por %p69, %p70
    %p72 = scmp.ne.s32.totalorder %s64, %s66
    %p73 = scmp.eq.s32.totalorder %s14, 1
    %p74 = por %p72, %p73
    %p75 = scmp.ne.s32.totalorder %s66, %s67
    %p76 = scmp.eq.s32.totalorder %s14, 0
    %p77 = por %p75, %p76
    %p78 = scmp.ne.s32.totalorder %s66, %s67
    %p79 = scmp.eq.s32.totalorder %s15, 1
    %p80 = por %p78, %p79
    %p82 = scmp.ne.s32.totalorder %s67, %s81
    %p83 = scmp.eq.s32.totalorder %s15, 0
    %p84 = por %p82, %p83
    %s85 = ssub.s32 %s9, %s16
    %p86 = scmp.eq.s32.totalorder %s85, 0
    %s88 = sadd.s32 %s87, 1
    %s89 = scalar_select %p86, %s87, %s88
    %p92 = pneg %p86
    %p93 = scmp.eq.s32.totalorder %s9, 1
    %p94 = por %p92, %p93
    %p95 = scmp.ne.s32.totalorder %s87, %s90
    %p96 = scmp.eq.s32.totalorder %s9, 0
    %p97 = por %p95, %p96
    %p98 = scmp.ne.s32.totalorder %s87, %s90
    %p99 = scmp.eq.s32.totalorder %s14, 1
    %p100 = por %p98, %p99
    %p101 = scmp.ne.s32.totalorder %s90, %s91
    %p102 = scmp.eq.s32.totalorder %s14, 0
    %p103 = por %p101, %p102
    %p104 = scmp.ne.s32.totalorder %s90, %s91
    %p105 = scmp.eq.s32.totalorder %s15, 1
    %p106 = por %p104, %p105
    %p108 = scmp.ne.s32.totalorder %s91, %s107
    %p109 = scmp.eq.s32.totalorder %s15, 0
    %p110 = por %p108, %p109
    %p111 = scmp.le.s32.totalorder 1, %s9
    %p112 = scmp.lt.s32.totalorder %s9, 3
    %p113 = pnand %p111, %p112
    %p114 = pneg %p113
    // Predicated region
    $region9: #{resnet_block_forward.1} parent=5 // pred_check
      _
    $region10: #{resnet_block_forward.1} parent=5 // pred_check_branch
      %116 = sbr.rel (%p113) target = $region12
    $region11: #{resnet_block_forward.1} parent=5 // pred_region
      %s117 = ssub.s32 %s9, 1
      // Predicated region
      $region13: #{resnet_block_forward.1} parent=11 // pred_check
        %p118 = pneg %p56
      $region14: #{resnet_block_forward.1} parent=11 // pred_check_branch
        %120 = sbr.rel (%p118) target = $region16
      $region15: #{resnet_block_forward.1} parent=11 // pred_region
        _
      $region16: #{resnet_block_forward.1} parent=11 // pred_fallthru
        _
      // Predicated region
      $region17: #{resnet_block_forward.1} parent=11 // pred_check
        %p121 = pneg %p77
      $region18: #{resnet_block_forward.1} parent=11 // pred_check_branch
        %123 = sbr.rel (%p121) target = $region20
      $region19: #{resnet_block_forward.1} parent=11 // pred_region
        _
      $region20: #{resnet_block_forward.1} parent=11 // pred_fallthru
        _
    $region12: #{resnet_block_forward.1} parent=5 // pred_fallthru
      _
    %p124 = scmp.lt.s32.totalorder %s9, 2
    // Predicated region
    $region21: #{resnet_block_forward.1} parent=5 // pred_check
      %p125 = pneg %p124
    $region22: #{resnet_block_forward.1} parent=5 // pred_check_branch
      %127 = sbr.rel (%p125) target = $region24
    $region23: #{resnet_block_forward.1} parent=5 // pred_region
      // Predicated region
      $region25: #{resnet_block_forward.1} parent=23 // pred_check
        %p128 = pneg %p29
      $region26: #{resnet_block_forward.1} parent=23 // pred_check_branch
        %130 = sbr.rel (%p128) target = $region28
      $region27: #{resnet_block_forward.1} parent=23 // pred_region
        %p131 = scmp.lt.s32.totalorder %s9, 1
        %s132 = scalar_select %p131, %s9, 1
        %s133 = smul.addr %s132, 32
        %s134 = smul.addr %s133, 8
        %s135 = scalar_lea.vmem %s0, %s134
      $region28: #{resnet_block_forward.1} parent=23 // pred_fallthru
        _
    $region24: #{resnet_block_forward.1} parent=5 // pred_fallthru
      _
    %p136 = scmp.le.s32.totalorder 1, %s9
    %p137 = scmp.lt.s32.totalorder %s9, 3
    %p138 = pnand %p136, %p137
    %p139 = pneg %p138
    // Predicated region
    $region29: #{resnet_block_forward.1} parent=5 // pred_check
      _
    $region30: #{resnet_block_forward.1} parent=5 // pred_check_branch
      %141 = sbr.rel (%p138) target = $region32
    $region31: #{resnet_block_forward.1} parent=5 // pred_region
      %s142 = ssub.s32 %s9, 1
      %p143 = scmp.lt.s32.totalorder %s14, 1
      %s144 = scalar_select %p143, %s14, 1
      %s145 = smul.addr %s144, 32
      %s146 = smul.addr %s145, 8
      %s147 = scalar_lea.vmem %s0, %s146
      %p148 = pneg %p35
      %p149 = pneg %p32
      %p150 = pneg %p56
      %p151 = pneg %p53
      %p152 = pneg %p77
      %p153 = pneg %p74
      %p154 = pneg %p103
      %p155 = pneg %p100
      %p156 = scmp.lt.s32.totalorder %s14, 1
      %s157 = scalar_select %p156, %s14, 1
      %s158 = smul.addr %s157, 32
      %s159 = smul.addr %s158, 8
      %s160 = scalar_lea.vmem %s3, %s159
      %p161 = scmp.lt.s32.totalorder %s14, 1
      %s162 = scalar_select %p161, %s14, 1
      %s163 = smul.addr %s162, 32
      %s164 = smul.addr %s163, 8
      %s165 = scalar_lea.vmem %s0, %s164
      %p166 = scmp.lt.s32.totalorder %s14, 1
      %s167 = scalar_select %p166, %s14, 1
      %s168 = smul.addr %s167, 32
      %s169 = smul.addr %s168, 8
      %s170 = scalar_lea.vmem %s3, %s169
      %vm172 = vcmask 31744
      %173 = vst.msk [vmem:[#allocation2 + $0x144] sm:$0xff] %vm172, 0.0
      %v174 = vld [vmem:[%s165] sm:$0xff]
      %v175 = vld [vmem:[%s165 + $0x8] sm:$0xff]
      %176 = vst.msk [vmem:[#allocation2 + $0x13] sm:$0xff] %vm172, %v174
      %177 = vst.msk [vmem:[#allocation2 + $0x1b] sm:$0xff] %vm172, %v175
      %vm178 = vcmask 25601
      %179 = vst.msk [vmem:[#allocation2 + $0x11] sm:$0x2] %vm178, %v174
      %vm180 = vcmask 30726
      %181 = vst.msk [vmem:[#allocation2 + $0x1d] sm:$0x40] %vm180, %v175
      %v182 = vld [vmem:[%s165 + $0x10] sm:$0xff]
      %v183 = vld [vmem:[%s165 + $0x18] sm:$0xff]
      %184 = vst.msk [vmem:[#allocation2 + $0x25] sm:$0xff] %vm172, %v182
      %185 = vst.msk [vmem:[#allocation2 + $0x2d] sm:$0xff] %vm172, %v183
      %186 = vst.msk [vmem:[#allocation2 + $0x23] sm:$0x2] %vm178, %v182
      %187 = vst.msk [vmem:[#allocation2 + $0x2f] sm:$0x40] %vm180, %v183
      %v188 = vld [vmem:[%s165 + $0x20] sm:$0xff]
      %v189 = vld [vmem:[%s165 + $0x28] sm:$0xff]
      %190 = vst.msk [vmem:[#allocation2 + $0x37] sm:$0xff] %vm172, %v188
      %191 = vst.msk [vmem:[#allocation2 + $0x3f] sm:$0xff] %vm172, %v189
      %192 = vst.msk [vmem:[#allocation2 + $0x35] sm:$0x2] %vm178, %v188
      %193 = vst.msk [vmem:[#allocation2 + $0x41] sm:$0x40] %vm180, %v189
      %v194 = vld [vmem:[%s165 + $0x30] sm:$0xff]
      %v195 = vld [vmem:[%s165 + $0x38] sm:$0xff]
      %196 = vst.msk [vmem:[#allocation2 + $0x49] sm:$0xff] %vm172, %v194
      %197 = vst.msk [vmem:[#allocation2 + $0x51] sm:$0xff] %vm172, %v195
      %198 = vst.msk [vmem:[#allocation2 + $0x47] sm:$0x2] %vm178, %v194
      %199 = vst.msk [vmem:[#allocation2 + $0x53] sm:$0x40] %vm180, %v195
      %v200 = vld [vmem:[%s165 + $0x40] sm:$0xff]
      %v201 = vld [vmem:[%s165 + $0x48] sm:$0xff]
      %202 = vst.msk [vmem:[#allocation2 + $0x5b] sm:$0xff] %vm172, %v200
      %203 = vst.msk [vmem:[#allocation2 + $0x63] sm:$0xff] %vm172, %v201
      %204 = vst.msk [vmem:[#allocation2 + $0x59] sm:$0x2] %vm178, %v200
      %205 = vst.msk [vmem:[#allocation2 + $0x65] sm:$0x40] %vm180, %v201
      %v206 = vld [vmem:[%s165 + $0x50] sm:$0xff]
      %v207 = vld [vmem:[%s165 + $0x58] sm:$0xff]
      %208 = vst.msk [vmem:[#allocation2 + $0x6d] sm:$0xff] %vm172, %v206
      %209 = vst.msk [vmem:[#allocation2 + $0x75] sm:$0xff] %vm172, %v207
      %210 = vst.msk [vmem:[#allocation2 + $0x6b] sm:$0x2] %vm178, %v206
      %211 = vst.msk [vmem:[#allocation2 + $0x77] sm:$0x40] %vm180, %v207
      %v212 = vld [vmem:[%s165 + $0x60] sm:$0xff]
      %v213 = vld [vmem:[%s165 + $0x68] sm:$0xff]
      %214 = vst.msk [vmem:[#allocation2 + $0x7f] sm:$0xff] %vm172, %v212
      %215 = vst.msk [vmem:[#allocation2 + $0x87] sm:$0xff] %vm172, %v213
      %216 = vst.msk [vmem:[#allocation2 + $0x7d] sm:$0x2] %vm178, %v212
      %217 = vst.msk [vmem:[#allocation2 + $0x89] sm:$0x40] %vm180, %v213
      %v218 = vld [vmem:[%s165 + $0x70] sm:$0xff]
      %v219 = vld [vmem:[%s165 + $0x78] sm:$0xff]
      %220 = vst.msk [vmem:[#allocation2 + $0x91] sm:$0xff] %vm172, %v218
      %221 = vst.msk [vmem:[#allocation2 + $0x99] sm:$0xff] %vm172, %v219
      %222 = vst.msk [vmem:[#allocation2 + $0x8f] sm:$0x2] %vm178, %v218
      %223 = vst.msk [vmem:[#allocation2 + $0x9b] sm:$0x40] %vm180, %v219
      %v224 = vld [vmem:[%s165 + $0x80] sm:$0xff]
      %v225 = vld [vmem:[%s165 + $0x88] sm:$0xff]
      %226 = vst.msk [vmem:[#allocation2 + $0xa3] sm:$0xff] %vm172, %v224
      %227 = vst.msk [vmem:[#allocation2 + $0xab] sm:$0xff] %vm172, %v225
      %228 = vst.msk [vmem:[#allocation2 + $0xa1] sm:$0x2] %vm178, %v224
      %229 = vst.msk [vmem:[#allocation2 + $0xad] sm:$0x40] %vm180, %v225
      %v230 = vld [vmem:[%s165 + $0x90] sm:$0xff]
      %v231 = vld [vmem:[%s165 + $0x98] sm:$0xff]
      %232 = vst.msk [vmem:[#allocation2 + $0xb5] sm:$0xff] %vm172, %v230
      %233 = vst.msk [vmem:[#allocation2 + $0xbd] sm:$0xff] %vm172, %v231
      %234 = vst.msk [vmem:[#allocation2 + $0xb3] sm:$0x2] %vm178, %v230
      %235 = vst.msk [vmem:[#allocation2 + $0xbf] sm:$0x40] %vm180, %v231
      %v236 = vld [vmem:[%s165 + $0xa0] sm:$0xff]
      %v237 = vld [vmem:[%s165 + $0xa8] sm:$0xff]
      %238 = vst.msk [vmem:[#allocation2 + $0xc7] sm:$0xff] %vm172, %v236
      %239 = vst.msk [vmem:[#allocation2 + $0xcf] sm:$0xff] %vm172, %v237
      %240 = vst.msk [vmem:[#allocation2 + $0xc5] sm:$0x2] %vm178, %v236
      %241 = vst.msk [vmem:[#allocation2 + $0xd1] sm:$0x40] %vm180, %v237
      %v242 = vld [vmem:[%s165 + $0xb0] sm:$0xff]
      %v243 = vld [vmem:[%s165 + $0xb8] sm:$0xff]
      %244 = vst.msk [vmem:[#allocation2 + $0xd9] sm:$0xff] %vm172, %v242
      %245 = vst.msk [vmem:[#allocation2 + $0xe1] sm:$0xff] %vm172, %v243
      %246 = vst.msk [vmem:[#allocation2 + $0xd7] sm:$0x2] %vm178, %v242
      %247 = vst.msk [vmem:[#allocation2 + $0xe3] sm:$0x40] %vm180, %v243
      %v248 = vld [vmem:[%s165 + $0xc0] sm:$0xff]
      %v249 = vld [vmem:[%s165 + $0xc8] sm:$0xff]
      %250 = vst.msk [vmem:[#allocation2 + $0xeb] sm:$0xff] %vm172, %v248
      %251 = vst.msk [vmem:[#allocation2 + $0xf3] sm:$0xff] %vm172, %v249
      %252 = vst.msk [vmem:[#allocation2 + $0xe9] sm:$0x2] %vm178, %v248
      %253 = vst.msk [vmem:[#allocation2 + $0xf5] sm:$0x40] %vm180, %v249
      %v254 = vld [vmem:[%s165 + $0xd0] sm:$0xff]
      %v255 = vld [vmem:[%s165 + $0xd8] sm:$0xff]
      %256 = vst.msk [vmem:[#allocation2 + $0xfd] sm:$0xff] %vm172, %v254
      %257 = vst.msk [vmem:[#allocation2 + $0x105] sm:$0xff] %vm172, %v255
      %258 = vst.msk [vmem:[#allocation2 + $0xfb] sm:$0x2] %vm178, %v254
      %259 = vst.msk [vmem:[#allocation2 + $0x107] sm:$0x40] %vm180, %v255
      %v260 = vld [vmem:[%s165 + $0xe0] sm:$0xff]
      %v261 = vld [vmem:[%s165 + $0xe8] sm:$0xff]
      %262 = vst.msk [vmem:[#allocation2 + $0x10f] sm:$0xff] %vm172, %v260
      %263 = vst.msk [vmem:[#allocation2 + $0x117] sm:$0xff] %vm172, %v261
      %264 = vst.msk [vmem:[#allocation2 + $0x10d] sm:$0x2] %vm178, %v260
      %265 = vst.msk [vmem:[#allocation2 + $0x119] sm:$0x40] %vm180, %v261
      %v266 = vld [vmem:[%s165 + $0xf0] sm:$0xff]
      %v267 = vld [vmem:[%s165 + $0xf8] sm:$0xff]
      %268 = vst.msk [vmem:[#allocation2 + $0x121] sm:$0xff] %vm172, %v266
      %269 = vst.msk [vmem:[#allocation2 + $0x129] sm:$0xff] %vm172, %v267
      %270 = vst.msk [vmem:[#allocation2 + $0x11f] sm:$0x2] %vm178, %v266
      %271 = vst.msk [vmem:[#allocation2 + $0x12b] sm:$0x40] %vm180, %v267
      %v272 = vld [vmem:[#allocation2 + $0x24] sm:$0xff]
      %v273 = vld [vmem:[#allocation2 + $0x2c] sm:$0xff]
      %v274 = vld [vmem:[#allocation2 + $0x34] sm:$0x3]
      %275 = vst.msk [vmem:[#allocation2] sm:$0xff] %vm172, %v272
      %276 = vst.msk [vmem:[#allocation2 + $0x8] sm:$0xff] %vm172, %v273
      %vm277 = vcmask 25600
      %278 = vst.msk [vmem:[#allocation2 + $0x10] sm:$0x3] %vm277, %v274
      %v279 = vld [vmem:[#allocation2 + $0x10e] sm:$0xff]
      %v280 = vld [vmem:[#allocation2 + $0x116] sm:$0xff]
      %v281 = vld [vmem:[#allocation2 + $0x11e] sm:$0x3]
      %282 = vst.msk [vmem:[#allocation2 + $0x132] sm:$0xff] %vm172, %v279
      %283 = vst.msk [vmem:[#allocation2 + $0x13a] sm:$0xff] %vm172, %v280
      %284 = vst.msk [vmem:[#allocation2 + $0x142] sm:$0x3] %vm277, %v281
      %v285 = vld [vmem:[#allocation2] sm:$0xff]
      %v286 = vld [vmem:[#allocation2 + $0x8] sm:$0xff]
      %v287 = vld [vmem:[#allocation2 + $0x10] sm:$0xff]
      %v288 = vld [vmem:[#allocation2 + $0x18] sm:$0xff]
      %v289 = vld [vmem:[#allocation2 + $0x20] sm:$0xff]
      %v290 = vld [vmem:[#allocation2 + $0x28] sm:$0xff]
      %v291 = vld [vmem:[#allocation2 + $0x30] sm:$0xff]
      %v292 = vld [vmem:[#allocation2 + $0x38] sm:$0xff]
      %v293 = vld [vmem:[#allocation2 + $0x40] sm:$0xff]
      %v294 = vld [vmem:[#allocation2 + $0x48] sm:$0xff]
      %v295 = vld [vmem:[#allocation2 + $0x50] sm:$0xff]
      %v296 = vld [vmem:[#allocation2 + $0x58] sm:$0xff]
      %v297 = vld [vmem:[#allocation2 + $0x60] sm:$0xff]
      %v298 = vld [vmem:[#allocation2 + $0x68] sm:$0xff]
      %v299 = vld [vmem:[#allocation2 + $0x70] sm:$0xff]
      %v300 = vld [vmem:[#allocation2 + $0x78] sm:$0xff]
      %v301 = vld [vmem:[#allocation2 + $0x80] sm:$0xff]
      %v302 = vld [vmem:[#allocation2 + $0x88] sm:$0xff]
      %v303 = vld [vmem:[#allocation2 + $0x90] sm:$0xff]
      %v304 = vld [vmem:[#allocation2 + $0x98] sm:$0xff]
      %v305 = vld [vmem:[#allocation2 + $0xa0] sm:$0xff]
      %v306 = vld [vmem:[#allocation2 + $0xa8] sm:$0xff]
      %v307 = vld [vmem:[#allocation2 + $0xb0] sm:$0xff]
      %v308 = vld [vmem:[#allocation2 + $0xb8] sm:$0xff]
      %v309 = vld [vmem:[#allocation2 + $0xc0] sm:$0xff]
      %v310 = vld [vmem:[#allocation2 + $0xc8] sm:$0xff]
      %v311 = vld [vmem:[#allocation2 + $0xd0] sm:$0xff]
      %v312 = vld [vmem:[#allocation2 + $0xd8] sm:$0xff]
      %v313 = vld [vmem:[#allocation2 + $0xe0] sm:$0xff]
      %v314 = vld [vmem:[#allocation2 + $0xe8] sm:$0xff]
      %v315 = vld [vmem:[#allocation2 + $0xf0] sm:$0xff]
      %v316 = vld [vmem:[#allocation2 + $0xf8] sm:$0xff]
      %v317 = vld [vmem:[#allocation2 + $0x100] sm:$0xff]
      %v318 = vld [vmem:[#allocation2 + $0x108] sm:$0xff]
      %v319 = vld [vmem:[#allocation2 + $0x110] sm:$0xff]
      %v320 = vld [vmem:[#allocation2 + $0x118] sm:$0xff]
      %v321 = vpack.c.bf16 %v286, %v285
      %v322 = vpack.c.bf16 %v288, %v287
      %v323 = vpack.c.bf16 %v290, %v289
      %v324 = vpack.c.bf16 %v292, %v291
      %v325 = vpack.c.bf16 %v294, %v293
      %v326 = vpack.c.bf16 %v296, %v295
      %v327 = vpack.c.bf16 %v298, %v297
      %v328 = vpack.c.bf16 %v300, %v299
      %v329 = vpack.c.bf16 %v302, %v301
      %v330 = vpack.c.bf16 %v304, %v303
      %v331 = vpack.c.bf16 %v306, %v305
      %v332 = vpack.c.bf16 %v308, %v307
      %v333 = vpack.c.bf16 %v310, %v309
      %v334 = vpack.c.bf16 %v312, %v311
      %v335 = vpack.c.bf16 %v314, %v313
      %v336 = vpack.c.bf16 %v316, %v315
      %v337 = vpack.c.bf16 %v318, %v317
      %v338 = vpack.c.bf16 %v320, %v319
      %v339 = vld [vmem:[%s1] sm:$0x3]
      %v341 = vsel %vm172, %v321, 0
      %v344 = vsel %vm172, %v322, 0
      %v347 = vsel %vm172, %v323, 0
      %v350 = vsel %vm172, %v324, 0
      %v353 = vsel %vm172, %v325, 0
      %v356 = vsel %vm172, %v326, 0
      %v359 = vsel %vm172, %v327, 0
      %v362 = vsel %vm172, %v328, 0
      %v365 = vsel %vm172, %v329, 0
      %v368 = vsel %vm172, %v330, 0
      %v371 = vsel %vm172, %v331, 0
      %v374 = vsel %vm172, %v332, 0
      %v377 = vsel %vm172, %v333, 0
      %v380 = vsel %vm172, %v334, 0
      %v383 = vsel %vm172, %v335, 0
      %v386 = vsel %vm172, %v336, 0
      %v389 = vsel %vm172, %v337, 0
      %v392 = vsel %vm172, %v338, 0
      %vm394 = vcmask 1041408
      %v396 = vsel %vm394, %v339, 0
      %398 = vmatpush.bf16.msra.mxu0 0
      %399 = vmatpush.bf16.msra.mxu0 0
      %400 = vmatpush.bf16.msra.mxu0 0
      %401 = vmatpush.bf16.msra.mxu0 0
      %402 = vmatpush.bf16.msra.mxu0 0
      %403 = vmatpush.bf16.msra.mxu0 0
      %404 = vmatpush.bf16.msra.mxu0 0
      %405 = vmatpush.bf16.msra.mxu0 %v396
      %406 = vmatmul.bf16.gmra.mxu0 %v341
      %v407 = vpop.f32.mrf.mxu0
      %v408 = vadd.f32 0.0, %v407
      %v409 = vpop.f32.mrf.mxu0
      %v410 = vadd.f32 0.0, %v409
      %411 = vmatmul.bf16.gmra.mxu0 %v344
      %v412 = vpop.f32.mrf.mxu0
      %v413 = vadd.f32 0.0, %v412
      %v414 = vpop.f32.mrf.mxu0
      %v415 = vadd.f32 0.0, %v414
      %416 = vmatmul.bf16.gmra.mxu0 %v347
      %v417 = vpop.f32.mrf.mxu0
      %v418 = vadd.f32 0.0, %v417
      %v419 = vpop.f32.mrf.mxu0
      %v420 = vadd.f32 0.0, %v419
      %421 = vmatmul.bf16.gmra.mxu0 %v350
      %v422 = vpop.f32.mrf.mxu0
      %v423 = vadd.f32 0.0, %v422
      %v424 = vpop.f32.mrf.mxu0
      %v425 = vadd.f32 0.0, %v424
      %426 = vmatmul.bf16.gmra.mxu0 %v353
      %v427 = vpop.f32.mrf.mxu0
      %v428 = vadd.f32 0.0, %v427
      %v429 = vpop.f32.mrf.mxu0
      %v430 = vadd.f32 0.0, %v429
      %431 = vmatmul.bf16.gmra.mxu0 %v356
      %v432 = vpop.f32.mrf.mxu0
      %v433 = vadd.f32 0.0, %v432
      %v434 = vpop.f32.mrf.mxu0
      %v435 = vadd.f32 0.0, %v434
      %436 = vmatmul.bf16.gmra.mxu0 %v359
      %v437 = vpop.f32.mrf.mxu0
      %v438 = vadd.f32 0.0, %v437
      %v439 = vpop.f32.mrf.mxu0
      %v440 = vadd.f32 0.0, %v439
      %441 = vmatmul.bf16.gmra.mxu0 %v362
      %v442 = vpop.f32.mrf.mxu0
      %v443 = vadd.f32 0.0, %v442
      %v444 = vpop.f32.mrf.mxu0
      %v445 = vadd.f32 0.0, %v444
      %446 = vmatmul.bf16.gmra.mxu0 %v365
      %v447 = vpop.f32.mrf.mxu0
      %v448 = vadd.f32 0.0, %v447
      %v449 = vpop.f32.mrf.mxu0
      %v450 = vadd.f32 0.0, %v449
      %451 = vmatmul.bf16.gmra.mxu0 %v368
      %v452 = vpop.f32.mrf.mxu0
      %v453 = vadd.f32 0.0, %v452
      %v454 = vpop.f32.mrf.mxu0
      %v455 = vadd.f32 0.0, %v454
      %456 = vmatmul.bf16.gmra.mxu0 %v371
      %v457 = vpop.f32.mrf.mxu0
      %v458 = vadd.f32 0.0, %v457
      %v459 = vpop.f32.mrf.mxu0
      %v460 = vadd.f32 0.0, %v459
      %461 = vmatmul.bf16.gmra.mxu0 %v374
      %v462 = vpop.f32.mrf.mxu0
      %v463 = vadd.f32 0.0, %v462
      %v464 = vpop.f32.mrf.mxu0
      %v465 = vadd.f32 0.0, %v464
      %466 = vmatmul.bf16.gmra.mxu0 %v377
      %v467 = vpop.f32.mrf.mxu0
      %v468 = vadd.f32 0.0, %v467
      %v469 = vpop.f32.mrf.mxu0
      %v470 = vadd.f32 0.0, %v469
      %471 = vmatmul.bf16.gmra.mxu0 %v380
      %v472 = vpop.f32.mrf.mxu0
      %v473 = vadd.f32 0.0, %v472
      %v474 = vpop.f32.mrf.mxu0
      %v475 = vadd.f32 0.0, %v474
      %476 = vmatmul.bf16.gmra.mxu0 %v383
      %v477 = vpop.f32.mrf.mxu0
      %v478 = vadd.f32 0.0, %v477
      %v479 = vpop.f32.mrf.mxu0
      %v480 = vadd.f32 0.0, %v479
      %481 = vmatmul.bf16.gmra.mxu0 %v386
      %v482 = vpop.f32.mrf.mxu0
      %v483 = vadd.f32 0.0, %v482
      %v484 = vpop.f32.mrf.mxu0
      %v485 = vadd.f32 0.0, %v484
      %486 = vmatmul.bf16.gmra.mxu0 %v389
      %v487 = vpop.f32.mrf.mxu0
      %v488 = vadd.f32 0.0, %v487
      %v489 = vpop.f32.mrf.mxu0
      %v490 = vadd.f32 0.0, %v489
      %491 = vmatmul.bf16.gmra.mxu0 %v392
      %v492 = vpop.f32.mrf.mxu0
      %v493 = vadd.f32 0.0, %v492
      %v494 = vpop.f32.mrf.mxu0
      %v495 = vadd.f32 0.0, %v494
      %496 = vdwg.mxu0
      %497 = vst.msk [vmem:[#allocation3] sm:$0xff] %vm172, %v408
      %498 = vst.msk [vmem:[#allocation3 + $0x8] sm:$0xff] %vm172, %v410
      %499 = vst.msk [vmem:[#allocation3 + $0x10] sm:$0xff] %vm172, %v413
      %500 = vst.msk [vmem:[#allocation3 + $0x18] sm:$0xff] %vm172, %v415
      %501 = vst.msk [vmem:[#allocation3 + $0x20] sm:$0xff] %vm172, %v418
      %502 = vst.msk [vmem:[#allocation3 + $0x28] sm:$0xff] %vm172, %v420
      %503 = vst.msk [vmem:[#allocation3 + $0x30] sm:$0xff] %vm172, %v423
      %504 = vst.msk [vmem:[#allocation3 + $0x38] sm:$0xff] %vm172, %v425
      %505 = vst.msk [vmem:[#allocation3 + $0x40] sm:$0xff] %vm172, %v428
      %506 = vst.msk [vmem:[#allocation3 + $0x48] sm:$0xff] %vm172, %v430
      %507 = vst.msk [vmem:[#allocation3 + $0x50] sm:$0xff] %vm172, %v433
      %508 = vst.msk [vmem:[#allocation3 + $0x58] sm:$0xff] %vm172, %v435
      %509 = vst.msk [vmem:[#allocation3 + $0x60] sm:$0xff] %vm172, %v438
      %510 = vst.msk [vmem:[#allocation3 + $0x68] sm:$0xff] %vm172, %v440
      %511 = vst.msk [vmem:[#allocation3 + $0x70] sm:$0xff] %vm172, %v443
      %512 = vst.msk [vmem:[#allocation3 + $0x78] sm:$0xff] %vm172, %v445
      %513 = vst.msk [vmem:[#allocation3 + $0x80] sm:$0xff] %vm172, %v448
      %514 = vst.msk [vmem:[#allocation3 + $0x88] sm:$0xff] %vm172, %v450
      %515 = vst.msk [vmem:[#allocation3 + $0x90] sm:$0xff] %vm172, %v453
      %516 = vst.msk [vmem:[#allocation3 + $0x98] sm:$0xff] %vm172, %v455
      %517 = vst.msk [vmem:[#allocation3 + $0xa0] sm:$0xff] %vm172, %v458
      %518 = vst.msk [vmem:[#allocation3 + $0xa8] sm:$0xff] %vm172, %v460
      %519 = vst.msk [vmem:[#allocation3 + $0xb0] sm:$0xff] %vm172, %v463
      %520 = vst.msk [vmem:[#allocation3 + $0xb8] sm:$0xff] %vm172, %v465
      %521 = vst.msk [vmem:[#allocation3 + $0xc0] sm:$0xff] %vm172, %v468
      %522 = vst.msk [vmem:[#allocation3 + $0xc8] sm:$0xff] %vm172, %v470
      %523 = vst.msk [vmem:[#allocation3 + $0xd0] sm:$0xff] %vm172, %v473
      %524 = vst.msk [vmem:[#allocation3 + $0xd8] sm:$0xff] %vm172, %v475
      %525 = vst.msk [vmem:[#allocation3 + $0xe0] sm:$0xff] %vm172, %v478
      %526 = vst.msk [vmem:[#allocation3 + $0xe8] sm:$0xff] %vm172, %v480
      %527 = vst.msk [vmem:[#allocation3 + $0xf0] sm:$0xff] %vm172, %v483
      %528 = vst.msk [vmem:[#allocation3 + $0xf8] sm:$0xff] %vm172, %v485
      %529 = vst.msk [vmem:[#allocation3 + $0x100] sm:$0xff] %vm172, %v488
      %530 = vst.msk [vmem:[#allocation3 + $0x108] sm:$0xff] %vm172, %v490
      %531 = vst.msk [vmem:[#allocation3 + $0x110] sm:$0xff] %vm172, %v493
      %532 = vst.msk [vmem:[#allocation3 + $0x118] sm:$0xff] %vm172, %v495
      %v533 = vld [vmem:[#allocation2 + $0x1] sm:$0xff]
      %v534 = vld [vmem:[#allocation2 + $0x9] sm:$0xff]
      %v535 = vld [vmem:[#allocation2 + $0x11] sm:$0xff]
      %v536 = vld [vmem:[#allocation2 + $0x19] sm:$0xff]
      %v537 = vld [vmem:[#allocation2 + $0x21] sm:$0xff]
      %v538 = vld [vmem:[#allocation2 + $0x29] sm:$0xff]
      %v539 = vld [vmem:[#allocation2 + $0x31] sm:$0xff]
      %v540 = vld [vmem:[#allocation2 + $0x39] sm:$0xff]
      %v541 = vld [vmem:[#allocation2 + $0x41] sm:$0xff]
      %v542 = vld [vmem:[#allocation2 + $0x49] sm:$0xff]
      %v543 = vld [vmem:[#allocation2 + $0x51] sm:$0xff]
      %v544 = vld [vmem:[#allocation2 + $0x59] sm:$0xff]
      %v545 = vld [vmem:[#allocation2 + $0x61] sm:$0xff]
      %v546 = vld [vmem:[#allocation2 + $0x69] sm:$0xff]
      %v547 = vld [vmem:[#allocation2 + $0x71] sm:$0xff]
      %v548 = vld [vmem:[#allocation2 + $0x79] sm:$0xff]
      %v549 = vld [vmem:[#allocation2 + $0x81] sm:$0xff]
      %v550 = vld [vmem:[#allocation2 + $0x89] sm:$0xff]
      %v551 = vld [vmem:[#allocation2 + $0x91] sm:$0xff]
      %v552 = vld [vmem:[#allocation2 + $0x99] sm:$0xff]
      %v553 = vld [vmem:[#allocation2 + $0xa1] sm:$0xff]
      %v554 = vld [vmem:[#allocation2 + $0xa9] sm:$0xff]
      %v555 = vld [vmem:[#allocation2 + $0xb1] sm:$0xff]
      %v556 = vld [vmem:[#allocation2 + $0xb9] sm:$0xff]
      %v557 = vld [vmem:[#allocation2 + $0xc1] sm:$0xff]
      %v558 = vld [vmem:[#allocation2 + $0xc9] sm:$0xff]
      %v559 = vld [vmem:[#allocation2 + $0xd1] sm:$0xff]
      %v560 = vld [vmem:[#allocation2 + $0xd9] sm:$0xff]
      %v561 = vld [vmem:[#allocation2 + $0xe1] sm:$0xff]
      %v562 = vld [vmem:[#allocation2 + $0xe9] sm:$0xff]
      %v563 = vld [vmem:[#allocation2 + $0xf1] sm:$0xff]
      %v564 = vld [vmem:[#allocation2 + $0xf9] sm:$0xff]
      %v565 = vld [vmem:[#allocation2 + $0x101] sm:$0xff]
      %v566 = vld [vmem:[#allocation2 + $0x109] sm:$0xff]
      %v567 = vld [vmem:[#allocation2 + $0x111] sm:$0xff]
      %v568 = vld [vmem:[#allocation2 + $0x119] sm:$0xff]
      %v569 = vpack.c.bf16 %v534, %v533
      %v570 = vpack.c.bf16 %v536, %v535
      %v571 = vpack.c.bf16 %v538, %v537
      %v572 = vpack.c.bf16 %v540, %v539
      %v573 = vpack.c.bf16 %v542, %v541
      %v574 = vpack.c.bf16 %v544, %v543
      %v575 = vpack.c.bf16 %v546, %v545
      %v576 = vpack.c.bf16 %v548, %v547
      %v577 = vpack.c.bf16 %v550, %v549
      %v578 = vpack.c.bf16 %v552, %v551
      %v579 = vpack.c.bf16 %v554, %v553
      %v580 = vpack.c.bf16 %v556, %v555
      %v581 = vpack.c.bf16 %v558, %v557
      %v582 = vpack.c.bf16 %v560, %v559
      %v583 = vpack.c.bf16 %v562, %v561
      %v584 = vpack.c.bf16 %v564, %v563
      %v585 = vpack.c.bf16 %v566, %v565
      %v586 = vpack.c.bf16 %v568, %v567
      %s587 = scalar_lea.vmem %s1, 2
      %v588 = vld [vmem:[%s587] sm:$0x3]
      %v590 = vsel %vm172, %v569, 0
      %v593 = vsel %vm172, %v570, 0
      %v596 = vsel %vm172, %v571, 0
      %v599 = vsel %vm172, %v572, 0
      %v602 = vsel %vm172, %v573, 0
      %v605 = vsel %vm172, %v574, 0
      %v608 = vsel %vm172, %v575, 0
      %v611 = vsel %vm172, %v576, 0
      %v614 = vsel %vm172, %v577, 0
      %v617 = vsel %vm172, %v578, 0
      %v620 = vsel %vm172, %v579, 0
      %v623 = vsel %vm172, %v580, 0
      %v626 = vsel %vm172, %v581, 0
      %v629 = vsel %vm172, %v582, 0
      %v632 = vsel %vm172, %v583, 0
      %v635 = vsel %vm172, %v584, 0
      %v638 = vsel %vm172, %v585, 0
      %v641 = vsel %vm172, %v586, 0
      %v644 = vsel %vm394, %v588, 0
      %646 = vmatpush.bf16.msra.mxu0 0
      %647 = vmatpush.bf16.msra.mxu0 0
      %648 = vmatpush.bf16.msra.mxu0 0
      %649 = vmatpush.bf16.msra.mxu0 0
      %650 = vmatpush.bf16.msra.mxu0 0
      %651 = vmatpush.bf16.msra.mxu0 0
      %652 = vmatpush.bf16.msra.mxu0 0
      %653 = vmatpush.bf16.msra.mxu0 %v644
      %654 = vmatmul.bf16.gmra.mxu0 %v590
      %v655 = vpop.f32.mrf.mxu0
      %v656 = vadd.f32 0.0, %v655
      %v657 = vpop.f32.mrf.mxu0
      %v658 = vadd.f32 0.0, %v657
      %659 = vmatmul.bf16.gmra.mxu0 %v593
      %v660 = vpop.f32.mrf.mxu0
      %v661 = vadd.f32 0.0, %v660
      %v662 = vpop.f32.mrf.mxu0
      %v663 = vadd.f32 0.0, %v662
      %664 = vmatmul.bf16.gmra.mxu0 %v596
      %v665 = vpop.f32.mrf.mxu0
      %v666 = vadd.f32 0.0, %v665
      %v667 = vpop.f32.mrf.mxu0
      %v668 = vadd.f32 0.0, %v667
      %669 = vmatmul.bf16.gmra.mxu0 %v599
      %v670 = vpop.f32.mrf.mxu0
      %v671 = vadd.f32 0.0, %v670
      %v672 = vpop.f32.mrf.mxu0
      %v673 = vadd.f32 0.0, %v672
      %674 = vmatmul.bf16.gmra.mxu0 %v602
      %v675 = vpop.f32.mrf.mxu0
      %v676 = vadd.f32 0.0, %v675
      %v677 = vpop.f32.mrf.mxu0
      %v678 = vadd.f32 0.0, %v677
      %679 = vmatmul.bf16.gmra.mxu0 %v605
      %v680 = vpop.f32.mrf.mxu0
      %v681 = vadd.f32 0.0, %v680
      %v682 = vpop.f32.mrf.mxu0
      %v683 = vadd.f32 0.0, %v682
      %684 = vmatmul.bf16.gmra.mxu0 %v608
      %v685 = vpop.f32.mrf.mxu0
      %v686 = vadd.f32 0.0, %v685
      %v687 = vpop.f32.mrf.mxu0
      %v688 = vadd.f32 0.0, %v687
      %689 = vmatmul.bf16.gmra.mxu0 %v611
      %v690 = vpop.f32.mrf.mxu0
      %v691 = vadd.f32 0.0, %v690
      %v692 = vpop.f32.mrf.mxu0
      %v693 = vadd.f32 0.0, %v692
      %694 = vmatmul.bf16.gmra.mxu0 %v614
      %v695 = vpop.f32.mrf.mxu0
      %v696 = vadd.f32 0.0, %v695
      %v697 = vpop.f32.mrf.mxu0
      %v698 = vadd.f32 0.0, %v697
      %699 = vmatmul.bf16.gmra.mxu0 %v617
      %v700 = vpop.f32.mrf.mxu0
      %v701 = vadd.f32 0.0, %v700
      %v702 = vpop.f32.mrf.mxu0
      %v703 = vadd.f32 0.0, %v702
      %704 = vmatmul.bf16.gmra.mxu0 %v620
      %v705 = vpop.f32.mrf.mxu0
      %v706 = vadd.f32 0.0, %v705
      %v707 = vpop.f32.mrf.mxu0
      %v708 = vadd.f32 0.0, %v707
      %709 = vmatmul.bf16.gmra.mxu0 %v623
      %v710 = vpop.f32.mrf.mxu0
      %v711 = vadd.f32 0.0, %v710
      %v712 = vpop.f32.mrf.mxu0
      %v713 = vadd.f32 0.0, %v712
      %714 = vmatmul.bf16.gmra.mxu0 %v626
      %v715 = vpop.f32.mrf.mxu0
      %v716 = vadd.f32 0.0, %v715
      %v717 = vpop.f32.mrf.mxu0
      %v718 = vadd.f32 0.0, %v717
      %719 = vmatmul.bf16.gmra.mxu0 %v629
      %v720 = vpop.f32.mrf.mxu0
      %v721 = vadd.f32 0.0, %v720
      %v722 = vpop.f32.mrf.mxu0
      %v723 = vadd.f32 0.0, %v722
      %724 = vmatmul.bf16.gmra.mxu0 %v632
      %v725 = vpop.f32.mrf.mxu0
      %v726 = vadd.f32 0.0, %v725
      %v727 = vpop.f32.mrf.mxu0
      %v728 = vadd.f32 0.0, %v727
      %729 = vmatmul.bf16.gmra.mxu0 %v635
      %v730 = vpop.f32.mrf.mxu0
      %v731 = vadd.f32 0.0, %v730
      %v732 = vpop.f32.mrf.mxu0
      %v733 = vadd.f32 0.0, %v732
      %734 = vmatmul.bf16.gmra.mxu0 %v638
      %v735 = vpop.f32.mrf.mxu0
      %v736 = vadd.f32 0.0, %v735
      %v737 = vpop.f32.mrf.mxu0
      %v738 = vadd.f32 0.0, %v737
      %739 = vmatmul.bf16.gmra.mxu0 %v641
      %v740 = vpop.f32.mrf.mxu0
      %v741 = vadd.f32 0.0, %v740
      %v742 = vpop.f32.mrf.mxu0
      %v743 = vadd.f32 0.0, %v742
      %744 = vdwg.mxu0
      %v745 = vld [vmem:[#allocation3] sm:$0xff]
      %v746 = vld [vmem:[#allocation3 + $0x8] sm:$0xff]
      %v747 = vld [vmem:[#allocation3 + $0x10] sm:$0xff]
      %v748 = vld [vmem:[#allocation3 + $0x18] sm:$0xff]
      %v749 = vld [vmem:[#allocation3 + $0x20] sm:$0xff]
      %v750 = vld [vmem:[#allocation3 + $0x28] sm:$0xff]
      %v751 = vld [vmem:[#allocation3 + $0x30] sm:$0xff]
      %v752 = vld [vmem:[#allocation3 + $0x38] sm:$0xff]
      %v753 = vld [vmem:[#allocation3 + $0x40] sm:$0xff]
      %v754 = vld [vmem:[#allocation3 + $0x48] sm:$0xff]
      %v755 = vld [vmem:[#allocation3 + $0x50] sm:$0xff]
      %v756 = vld [vmem:[#allocation3 + $0x58] sm:$0xff]
      %v757 = vld [vmem:[#allocation3 + $0x60] sm:$0xff]
      %v758 = vld [vmem:[#allocation3 + $0x68] sm:$0xff]
      %v759 = vld [vmem:[#allocation3 + $0x70] sm:$0xff]
      %v760 = vld [vmem:[#allocation3 + $0x78] sm:$0xff]
      %v761 = vld [vmem:[#allocation3 + $0x80] sm:$0xff]
      %v762 = vld [vmem:[#allocation3 + $0x88] sm:$0xff]
      %v763 = vld [vmem:[#allocation3 + $0x90] sm:$0xff]
      %v764 = vld [vmem:[#allocation3 + $0x98] sm:$0xff]
      %v765 = vld [vmem:[#allocation3 + $0xa0] sm:$0xff]
      %v766 = vld [vmem:[#allocation3 + $0xa8] sm:$0xff]
      %v767 = vld [vmem:[#allocation3 + $0xb0] sm:$0xff]
      %v768 = vld [vmem:[#allocation3 + $0xb8] sm:$0xff]
      %v769 = vld [vmem:[#allocation3 + $0xc0] sm:$0xff]
      %v770 = vld [vmem:[#allocation3 + $0xc8] sm:$0xff]
      %v771 = vld [vmem:[#allocation3 + $0xd0] sm:$0xff]
      %v772 = vld [vmem:[#allocation3 + $0xd8] sm:$0xff]
      %v773 = vld [vmem:[#allocation3 + $0xe0] sm:$0xff]
      %v774 = vld [vmem:[#allocation3 + $0xe8] sm:$0xff]
      %v775 = vld [vmem:[#allocation3 + $0xf0] sm:$0xff]
      %v776 = vld [vmem:[#allocation3 + $0xf8] sm:$0xff]
      %v777 = vld [vmem:[#allocation3 + $0x100] sm:$0xff]
      %v778 = vld [vmem:[#allocation3 + $0x108] sm:$0xff]
      %v779 = vld [vmem:[#allocation3 + $0x110] sm:$0xff]
      %v780 = vld [vmem:[#allocation3 + $0x118] sm:$0xff]
      %v781 = vadd.f32 %v745, %v656
      %v782 = vadd.f32 %v746, %v658
      %v783 = vadd.f32 %v747, %v661
      %v784 = vadd.f32 %v748, %v663
      %v785 = vadd.f32 %v749, %v666
      %v786 = vadd.f32 %v750, %v668
      %v787 = vadd.f32 %v751, %v671
      %v788 = vadd.f32 %v752, %v673
      %v789 = vadd.f32 %v753, %v676
      %v790 = vadd.f32 %v754, %v678
      %v791 = vadd.f32 %v755, %v681
      %v792 = vadd.f32 %v756, %v683
      %v793 = vadd.f32 %v757, %v686
      %v794 = vadd.f32 %v758, %v688
      %v795 = vadd.f32 %v759, %v691
      %v796 = vadd.f32 %v760, %v693
      %v797 = vadd.f32 %v761, %v696
      %v798 = vadd.f32 %v762, %v698
      %v799 = vadd.f32 %v763, %v701
      %v800 = vadd.f32 %v764, %v703
      %v801 = vadd.f32 %v765, %v706
      %v802 = vadd.f32 %v766, %v708
      %v803 = vadd.f32 %v767, %v711
      %v804 = vadd.f32 %v768, %v713
      %v805 = vadd.f32 %v769, %v716
      %v806 = vadd.f32 %v770, %v718
      %v807 = vadd.f32 %v771, %v721
      %v808 = vadd.f32 %v772, %v723
      %v809 = vadd.f32 %v773, %v726
      %v810 = vadd.f32 %v774, %v728
      %v811 = vadd.f32 %v775, %v731
      %v812 = vadd.f32 %v776, %v733
      %v813 = vadd.f32 %v777, %v736
      %v814 = vadd.f32 %v778, %v738
      %v815 = vadd.f32 %v779, %v741
      %v816 = vadd.f32 %v780, %v743
      %817 = vst.msk [vmem:[#allocation3] sm:$0xff] %vm172, %v781
      %818 = vst.msk [vmem:[#allocation3 + $0x8] sm:$0xff] %vm172, %v782
      %819 = vst.msk [vmem:[#allocation3 + $0x10] sm:$0xff] %vm172, %v783
      %820 = vst.msk [vmem:[#allocation3 + $0x18] sm:$0xff] %vm172, %v784
      %821 = vst.msk [vmem:[#allocation3 + $0x20] sm:$0xff] %vm172, %v785
      %822 = vst.msk [vmem:[#allocation3 + $0x28] sm:$0xff] %vm172, %v786
      %823 = vst.msk [vmem:[#allocation3 + $0x30] sm:$0xff] %vm172, %v787
      %824 = vst.msk [vmem:[#allocation3 + $0x38] sm:$0xff] %vm172, %v788
      %825 = vst.msk [vmem:[#allocation3 + $0x40] sm:$0xff] %vm172, %v789
      %826 = vst.msk [vmem:[#allocation3 + $0x48] sm:$0xff] %vm172, %v790
      %827 = vst.msk [vmem:[#allocation3 + $0x50] sm:$0xff] %vm172, %v791
      %828 = vst.msk [vmem:[#allocation3 + $0x58] sm:$0xff] %vm172, %v792
      %829 = vst.msk [vmem:[#allocation3 + $0x60] sm:$0xff] %vm172, %v793
      %830 = vst.msk [vmem:[#allocation3 + $0x68] sm:$0xff] %vm172, %v794
      %831 = vst.msk [vmem:[#allocation3 + $0x70] sm:$0xff] %vm172, %v795
      %832 = vst.msk [vmem:[#allocation3 + $0x78] sm:$0xff] %vm172, %v796
      %833 = vst.msk [vmem:[#allocation3 + $0x80] sm:$0xff] %vm172, %v797
      %834 = vst.msk [vmem:[#allocation3 + $0x88] sm:$0xff] %vm172, %v798
      %835 = vst.msk [vmem:[#allocation3 + $0x90] sm:$0xff] %vm172, %v799
      %836 = vst.msk [vmem:[#allocation3 + $0x98] sm:$0xff] %vm172, %v800
      %837 = vst.msk [vmem:[#allocation3 + $0xa0] sm:$0xff] %vm172, %v801
      %838 = vst.msk [vmem:[#allocation3 + $0xa8] sm:$0xff] %vm172, %v802
      %839 = vst.msk [vmem:[#allocation3 + $0xb0] sm:$0xff] %vm172, %v803
      %840 = vst.msk [vmem:[#allocation3 + $0xb8] sm:$0xff] %vm172, %v804
      %841 = vst.msk [vmem:[#allocation3 + $0xc0] sm:$0xff] %vm172, %v805
      %842 = vst.msk [vmem:[#allocation3 + $0xc8] sm:$0xff] %vm172, %v806
      %843 = vst.msk [vmem:[#allocation3 + $0xd0] sm:$0xff] %vm172, %v807
      %844 = vst.msk [vmem:[#allocation3 + $0xd8] sm:$0xff] %vm172, %v808
      %845 = vst.msk [vmem:[#allocation3 + $0xe0] sm:$0xff] %vm172, %v809
      %846 = vst.msk [vmem:[#allocation3 + $0xe8] sm:$0xff] %vm172, %v810
      %847 = vst.msk [vmem:[#allocation3 + $0xf0] sm:$0xff] %vm172, %v811
      %848 = vst.msk [vmem:[#allocation3 + $0xf8] sm:$0xff] %vm172, %v812
      %849 = vst.msk [vmem:[#allocation3 + $0x100] sm:$0xff] %vm172, %v813
      %850 = vst.msk [vmem:[#allocation3 + $0x108] sm:$0xff] %vm172, %v814
      %851 = vst.msk [vmem:[#allocation3 + $0x110] sm:$0xff] %vm172, %v815
      %852 = vst.msk [vmem:[#allocation3 + $0x118] sm:$0xff] %vm172, %v816
      %v853 = vld [vmem:[#allocation2 + $0x2] sm:$0xff]
      %v854 = vld [vmem:[#allocation2 + $0xa] sm:$0xff]
      %v855 = vld [vmem:[#allocation2 + $0x12] sm:$0xff]
      %v856 = vld [vmem:[#allocation2 + $0x1a] sm:$0xff]
      %v857 = vld [vmem:[#allocation2 + $0x22] sm:$0xff]
      %v858 = vld [vmem:[#allocation2 + $0x2a] sm:$0xff]
      %v859 = vld [vmem:[#allocation2 + $0x32] sm:$0xff]
      %v860 = vld [vmem:[#allocation2 + $0x3a] sm:$0xff]
      %v861 = vld [vmem:[#allocation2 + $0x42] sm:$0xff]
      %v862 = vld [vmem:[#allocation2 + $0x4a] sm:$0xff]
      %v863 = vld [vmem:[#allocation2 + $0x52] sm:$0xff]
      %v864 = vld [vmem:[#allocation2 + $0x5a] sm:$0xff]
      %v865 = vld [vmem:[#allocation2 + $0x62] sm:$0xff]
      %v866 = vld [vmem:[#allocation2 + $0x6a] sm:$0xff]
      %v867 = vld [vmem:[#allocation2 + $0x72] sm:$0xff]
      %v868 = vld [vmem:[#allocation2 + $0x7a] sm:$0xff]
      %v869 = vld [vmem:[#allocation2 + $0x82] sm:$0xff]
      %v870 = vld [vmem:[#allocation2 + $0x8a] sm:$0xff]
      %v871 = vld [vmem:[#allocation2 + $0x92] sm:$0xff]
      %v872 = vld [vmem:[#allocation2 + $0x9a] sm:$0xff]
      %v873 = vld [vmem:[#allocation2 + $0xa2] sm:$0xff]
      %v874 = vld [vmem:[#allocation2 + $0xaa] sm:$0xff]
      %v875 = vld [vmem:[#allocation2 + $0xb2] sm:$0xff]
      %v876 = vld [vmem:[#allocation2 + $0xba] sm:$0xff]
      %v877 = vld [vmem:[#allocation2 + $0xc2] sm:$0xff]
      %v878 = vld [vmem:[#allocation2 + $0xca] sm:$0xff]
      %v879 = vld [vmem:[#allocation2 + $0xd2] sm:$0xff]
      %v880 = vld [vmem:[#allocation2 + $0xda] sm:$0xff]
      %v881 = vld [vmem:[#allocation2 + $0xe2] sm:$0xff]
      %v882 = vld [vmem:[#allocation2 + $0xea] sm:$0xff]
      %v883 = vld [vmem:[#allocation2 + $0xf2] sm:$0xff]
      %v884 = vld [vmem:[#allocation2 + $0xfa] sm:$0xff]
      %v885 = vld [vmem:[#allocation2 + $0x102] sm:$0xff]
      %v886 = vld [vmem:[#allocation2 + $0x10a] sm:$0xff]
      %v887 = vld [vmem:[#allocation2 + $0x112] sm:$0xff]
      %v888 = vld [vmem:[#allocation2 + $0x11a] sm:$0xff]
      %v889 = vpack.c.bf16 %v854, %v853
      %v890 = vpack.c.bf16 %v856, %v855
      %v891 = vpack.c.bf16 %v858, %v857
      %v892 = vpack.c.bf16 %v860, %v859
      %v893 = vpack.c.bf16 %v862, %v861
      %v894 = vpack.c.bf16 %v864, %v863
      %v895 = vpack.c.bf16 %v866, %v865
      %v896 = vpack.c.bf16 %v868, %v867
      %v897 = vpack.c.bf16 %v870, %v869
      %v898 = vpack.c.bf16 %v872, %v871
      %v899 = vpack.c.bf16 %v874, %v873
      %v900 = vpack.c.bf16 %v876, %v875
      %v901 = vpack.c.bf16 %v878, %v877
      %v902 = vpack.c.bf16 %v880, %v879
      %v903 = vpack.c.bf16 %v882, %v881
      %v904 = vpack.c.bf16 %v884, %v883
      %v905 = vpack.c.bf16 %v886, %v885
      %v906 = vpack.c.bf16 %v888, %v887
      %s907 = scalar_lea.vmem %s1, 4
      %v908 = vld [vmem:[%s907] sm:$0x3]
      %v910 = vsel %vm172, %v889, 0
      %v913 = vsel %vm172, %v890, 0
      %v916 = vsel %vm172, %v891, 0
      %v919 = vsel %vm172, %v892, 0
      %v922 = vsel %vm172, %v893, 0
      %v925 = vsel %vm172, %v894, 0
      %v928 = vsel %vm172, %v895, 0
      %v931 = vsel %vm172, %v896, 0
      %v934 = vsel %vm172, %v897, 0
      %v937 = vsel %vm172, %v898, 0
      %v940 = vsel %vm172, %v899, 0
      %v943 = vsel %vm172, %v900, 0
      %v946 = vsel %vm172, %v901, 0
      %v949 = vsel %vm172, %v902, 0
      %v952 = vsel %vm172, %v903, 0
      %v955 = vsel %vm172, %v904, 0
      %v958 = vsel %vm172, %v905, 0
      %v961 = vsel %vm172, %v906, 0
      %v964 = vsel %vm394, %v908, 0
      %966 = vmatpush.bf16.msra.mxu0 0
      %967 = vmatpush.bf16.msra.mxu0 0
      %968 = vmatpush.bf16.msra.mxu0 0
      %969 = vmatpush.bf16.msra.mxu0 0
      %970 = vmatpush.bf16.msra.mxu0 0
      %971 = vmatpush.bf16.msra.mxu0 0
      %972 = vmatpush.bf16.msra.mxu0 0
      %973 = vmatpush.bf16.msra.mxu0 %v964
      %974 = vmatmul.bf16.gmra.mxu0 %v910
      %v975 = vpop.f32.mrf.mxu0
      %v976 = vadd.f32 0.0, %v975
      %v977 = vpop.f32.mrf.mxu0
      %v978 = vadd.f32 0.0, %v977
      %979 = vmatmul.bf16.gmra.mxu0 %v913
      %v980 = vpop.f32.mrf.mxu0
      %v981 = vadd.f32 0.0, %v980
      %v982 = vpop.f32.mrf.mxu0
      %v983 = vadd.f32 0.0, %v982
      %984 = vmatmul.bf16.gmra.mxu0 %v916
      %v985 = vpop.f32.mrf.mxu0
      %v986 = vadd.f32 0.0, %v985
      %v987 = vpop.f32.mrf.mxu0
      %v988 = vadd.f32 0.0, %v987
      %989 = vmatmul.bf16.gmra.mxu0 %v919
      %v990 = vpop.f32.mrf.mxu0
      %v991 = vadd.f32 0.0, %v990
      %v992 = vpop.f32.mrf.mxu0
      %v993 = vadd.f32 0.0, %v992
      %994 = vmatmul.bf16.gmra.mxu0 %v922
      %v995 = vpop.f32.mrf.mxu0
      %v996 = vadd.f32 0.0, %v995
      %v997 = vpop.f32.mrf.mxu0
      %v998 = vadd.f32 0.0, %v997
      %999 = vmatmul.bf16.gmra.mxu0 %v925
      %v1000 = vpop.f32.mrf.mxu0
      %v1001 = vadd.f32 0.0, %v1000
      %v1002 = vpop.f32.mrf.mxu0
      %v1003 = vadd.f32 0.0, %v1002
      %1004 = vmatmul.bf16.gmra.mxu0 %v928
      %v1005 = vpop.f32.mrf.mxu0
      %v1006 = vadd.f32 0.0, %v1005
      %v1007 = vpop.f32.mrf.mxu0
      %v1008 = vadd.f32 0.0, %v1007
      %1009 = vmatmul.bf16.gmra.mxu0 %v931
      %v1010 = vpop.f32.mrf.mxu0
      %v1011 = vadd.f32 0.0, %v1010
      %v1012 = vpop.f32.mrf.mxu0
      %v1013 = vadd.f32 0.0, %v1012
      %1014 = vmatmul.bf16.gmra.mxu0 %v934
      %v1015 = vpop.f32.mrf.mxu0
      %v1016 = vadd.f32 0.0, %v1015
      %v1017 = vpop.f32.mrf.mxu0
      %v1018 = vadd.f32 0.0, %v1017
      %1019 = vmatmul.bf16.gmra.mxu0 %v937
      %v1020 = vpop.f32.mrf.mxu0
      %v1021 = vadd.f32 0.0, %v1020
      %v1022 = vpop.f32.mrf.mxu0
      %v1023 = vadd.f32 0.0, %v1022
      %1024 = vmatmul.bf16.gmra.mxu0 %v940
      %v1025 = vpop.f32.mrf.mxu0
      %v1026 = vadd.f32 0.0, %v1025
      %v1027 = vpop.f32.mrf.mxu0
      %v1028 = vadd.f32 0.0, %v1027
      %1029 = vmatmul.bf16.gmra.mxu0 %v943
      %v1030 = vpop.f32.mrf.mxu0
      %v1031 = vadd.f32 0.0, %v1030
      %v1032 = vpop.f32.mrf.mxu0
      %v1033 = vadd.f32 0.0, %v1032
      %1034 = vmatmul.bf16.gmra.mxu0 %v946
      %v1035 = vpop.f32.mrf.mxu0
      %v1036 = vadd.f32 0.0, %v1035
      %v1037 = vpop.f32.mrf.mxu0
      %v1038 = vadd.f32 0.0, %v1037
      %1039 = vmatmul.bf16.gmra.mxu0 %v949
      %v1040 = vpop.f32.mrf.mxu0
      %v1041 = vadd.f32 0.0, %v1040
      %v1042 = vpop.f32.mrf.mxu0
      %v1043 = vadd.f32 0.0, %v1042
      %1044 = vmatmul.bf16.gmra.mxu0 %v952
      %v1045 = vpop.f32.mrf.mxu0
      %v1046 = vadd.f32 0.0, %v1045
      %v1047 = vpop.f32.mrf.mxu0
      %v1048 = vadd.f32 0.0, %v1047
      %1049 = vmatmul.bf16.gmra.mxu0 %v955
      %v1050 = vpop.f32.mrf.mxu0
      %v1051 = vadd.f32 0.0, %v1050
      %v1052 = vpop.f32.mrf.mxu0
      %v1053 = vadd.f32 0.0, %v1052
      %1054 = vmatmul.bf16.gmra.mxu0 %v958
      %v1055 = vpop.f32.mrf.mxu0
      %v1056 = vadd.f32 0.0, %v1055
      %v1057 = vpop.f32.mrf.mxu0
      %v1058 = vadd.f32 0.0, %v1057
      %1059 = vmatmul.bf16.gmra.mxu0 %v961
      %v1060 = vpop.f32.mrf.mxu0
      %v1061 = vadd.f32 0.0, %v1060
      %v1062 = vpop.f32.mrf.mxu0
      %v1063 = vadd.f32 0.0, %v1062
      %1064 = vdwg.mxu0
      %v1065 = vld [vmem:[#allocation3] sm:$0xff]
      %v1066 = vld [vmem:[#allocation3 + $0x8] sm:$0xff]
      %v1067 = vld [vmem:[#allocation3 + $0x10] sm:$0xff]
      %v1068 = vld [vmem:[#allocation3 + $0x18] sm:$0xff]
      %v1069 = vld [vmem:[#allocation3 + $0x20] sm:$0xff]
      %v1070 = vld [vmem:[#allocation3 + $0x28] sm:$0xff]
      %v1071 = vld [vmem:[#allocation3 + $0x30] sm:$0xff]
      %v1072 = vld [vmem:[#allocation3 + $0x38] sm:$0xff]
      %v1073 = vld [vmem:[#allocation3 + $0x40] sm:$0xff]
      %v1074 = vld [vmem:[#allocation3 + $0x48] sm:$0xff]
      %v1075 = vld [vmem:[#allocation3 + $0x50] sm:$0xff]
      %v1076 = vld [vmem:[#allocation3 + $0x58] sm:$0xff]
      %v1077 = vld [vmem:[#allocation3 + $0x60] sm:$0xff]
      %v1078 = vld [vmem:[#allocation3 + $0x68] sm:$0xff]
      %v1079 = vld [vmem:[#allocation3 + $0x70] sm:$0xff]
      %v1080 = vld [vmem:[#allocation3 + $0x78] sm:$0xff]
      %v1081 = vld [vmem:[#allocation3 + $0x80] sm:$0xff]
      %v1082 = vld [vmem:[#allocation3 + $0x88] sm:$0xff]
      %v1083 = vld [vmem:[#allocation3 + $0x90] sm:$0xff]
      %v1084 = vld [vmem:[#allocation3 + $0x98] sm:$0xff]
      %v1085 = vld [vmem:[#allocation3 + $0xa0] sm:$0xff]
      %v1086 = vld [vmem:[#allocation3 + $0xa8] sm:$0xff]
      %v1087 = vld [vmem:[#allocation3 + $0xb0] sm:$0xff]
      %v1088 = vld [vmem:[#allocation3 + $0xb8] sm:$0xff]
      %v1089 = vld [vmem:[#allocation3 + $0xc0] sm:$0xff]
      %v1090 = vld [vmem:[#allocation3 + $0xc8] sm:$0xff]
      %v1091 = vld [vmem:[#allocation3 + $0xd0] sm:$0xff]
      %v1092 = vld [vmem:[#allocation3 + $0xd8] sm:$0xff]
      %v1093 = vld [vmem:[#allocation3 + $0xe0] sm:$0xff]
      %v1094 = vld [vmem:[#allocation3 + $0xe8] sm:$0xff]
      %v1095 = vld [vmem:[#allocation3 + $0xf0] sm:$0xff]
      %v1096 = vld [vmem:[#allocation3 + $0xf8] sm:$0xff]
      %v1097 = vld [vmem:[#allocation3 + $0x100] sm:$0xff]
      %v1098 = vld [vmem:[#allocation3 + $0x108] sm:$0xff]
      %v1099 = vld [vmem:[#allocation3 + $0x110] sm:$0xff]
      %v1100 = vld [vmem:[#allocation3 + $0x118] sm:$0xff]
      %v1101 = vadd.f32 %v1065, %v976
      %v1102 = vadd.f32 %v1066, %v978
      %v1103 = vadd.f32 %v1067, %v981
      %v1104 = vadd.f32 %v1068, %v983
      %v1105 = vadd.f32 %v1069, %v986
      %v1106 = vadd.f32 %v1070, %v988
      %v1107 = vadd.f32 %v1071, %v991
      %v1108 = vadd.f32 %v1072, %v993
      %v1109 = vadd.f32 %v1073, %v996
      %v1110 = vadd.f32 %v1074, %v998
      %v1111 = vadd.f32 %v1075, %v1001
      %v1112 = vadd.f32 %v1076, %v1003
      %v1113 = vadd.f32 %v1077, %v1006
      %v1114 = vadd.f32 %v1078, %v1008
      %v1115 = vadd.f32 %v1079, %v1011
      %v1116 = vadd.f32 %v1080, %v1013
      %v1117 = vadd.f32 %v1081, %v1016
      %v1118 = vadd.f32 %v1082, %v1018
      %v1119 = vadd.f32 %v1083, %v1021
      %v1120 = vadd.f32 %v1084, %v1023
      %v1121 = vadd.f32 %v1085, %v1026
      %v1122 = vadd.f32 %v1086, %v1028
      %v1123 = vadd.f32 %v1087, %v1031
      %v1124 = vadd.f32 %v1088, %v1033
      %v1125 = vadd.f32 %v1089, %v1036
      %v1126 = vadd.f32 %v1090, %v1038
      %v1127 = vadd.f32 %v1091, %v1041
      %v1128 = vadd.f32 %v1092, %v1043
      %v1129 = vadd.f32 %v1093, %v1046
      %v1130 = vadd.f32 %v1094, %v1048
      %v1131 = vadd.f32 %v1095, %v1051
      %v1132 = vadd.f32 %v1096, %v1053
      %v1133 = vadd.f32 %v1097, %v1056
      %v1134 = vadd.f32 %v1098, %v1058
      %v1135 = vadd.f32 %v1099, %v1061
      %v1136 = vadd.f32 %v1100, %v1063
      %1137 = vst.msk [vmem:[#allocation3] sm:$0xff] %vm172, %v1101
      %1138 = vst.msk [vmem:[#allocation3 + $0x8] sm:$0xff] %vm172, %v1102
      %1139 = vst.msk [vmem:[#allocation3 + $0x10] sm:$0xff] %vm172, %v1103
      %1140 = vst.msk [vmem:[#allocation3 + $0x18] sm:$0xff] %vm172, %v1104
      %1141 = vst.msk [vmem:[#allocation3 + $0x20] sm:$0xff] %vm172, %v1105
      %1142 = vst.msk [vmem:[#allocation3 + $0x28] sm:$0xff] %vm172, %v1106
      %1143 = vst.msk [vmem:[#allocation3 + $0x30] sm:$0xff] %vm172, %v1107
      %1144 = vst.msk [vmem:[#allocation3 + $0x38] sm:$0xff] %vm172, %v1108
      %1145 = vst.msk [vmem:[#allocation3 + $0x40] sm:$0xff] %vm172, %v1109
      %1146 = vst.msk [vmem:[#allocation3 + $0x48] sm:$0xff] %vm172, %v1110
      %1147 = vst.msk [vmem:[#allocation3 + $0x50] sm:$0xff] %vm172, %v1111
      %1148 = vst.msk [vmem:[#allocation3 + $0x58] sm:$0xff] %vm172, %v1112
      %1149 = vst.msk [vmem:[#allocation3 + $0x60] sm:$0xff] %vm172, %v1113
      %1150 = vst.msk [vmem:[#allocation3 + $0x68] sm:$0xff] %vm172, %v1114
      %1151 = vst.msk [vmem:[#allocation3 + $0x70] sm:$0xff] %vm172, %v1115
      %1152 = vst.msk [vmem:[#allocation3 + $0x78] sm:$0xff] %vm172, %v1116
      %1153 = vst.msk [vmem:[#allocation3 + $0x80] sm:$0xff] %vm172, %v1117
      %1154 = vst.msk [vmem:[#allocation3 + $0x88] sm:$0xff] %vm172, %v1118
      %1155 = vst.msk [vmem:[#allocation3 + $0x90] sm:$0xff] %vm172, %v1119
      %1156 = vst.msk [vmem:[#allocation3 + $0x98] sm:$0xff] %vm172, %v1120
      %1157 = vst.msk [vmem:[#allocation3 + $0xa0] sm:$0xff] %vm172, %v1121
      %1158 = vst.msk [vmem:[#allocation3 + $0xa8] sm:$0xff] %vm172, %v1122
      %1159 = vst.msk [vmem:[#allocation3 + $0xb0] sm:$0xff] %vm172, %v1123
      %1160 = vst.msk [vmem:[#allocation3 + $0xb8] sm:$0xff] %vm172, %v1124
      %1161 = vst.msk [vmem:[#allocation3 + $0xc0] sm:$0xff] %vm172, %v1125
      %1162 = vst.msk [vmem:[#allocation3 + $0xc8] sm:$0xff] %vm172, %v1126
      %1163 = vst.msk [vmem:[#allocation3 + $0xd0] sm:$0xff] %vm172, %v1127
      %1164 = vst.msk [vmem:[#allocation3 + $0xd8] sm:$0xff] %vm172, %v1128
      %1165 = vst.msk [vmem:[#allocation3 + $0xe0] sm:$0xff] %vm172, %v1129
      %1166 = vst.msk [vmem:[#allocation3 + $0xe8] sm:$0xff] %vm172, %v1130
      %1167 = vst.msk [vmem:[#allocation3 + $0xf0] sm:$0xff] %vm172, %v1131
      %1168 = vst.msk [vmem:[#allocation3 + $0xf8] sm:$0xff] %vm172, %v1132
      %1169 = vst.msk [vmem:[#allocation3 + $0x100] sm:$0xff] %vm172, %v1133
      %1170 = vst.msk [vmem:[#allocation3 + $0x108] sm:$0xff] %vm172, %v1134
      %1171 = vst.msk [vmem:[#allocation3 + $0x110] sm:$0xff] %vm172, %v1135
      %1172 = vst.msk [vmem:[#allocation3 + $0x118] sm:$0xff] %vm172, %v1136
      %v1173 = vld [vmem:[#allocation2 + $0x12] sm:$0xff]
      %v1174 = vld [vmem:[#allocation2 + $0x1a] sm:$0xff]
      %v1175 = vld [vmem:[#allocation2 + $0x22] sm:$0xff]
      %v1176 = vld [vmem:[#allocation2 + $0x2a] sm:$0xff]
      %v1177 = vld [vmem:[#allocation2 + $0x32] sm:$0xff]
      %v1178 = vld [vmem:[#allocation2 + $0x3a] sm:$0xff]
      %v1179 = vld [vmem:[#allocation2 + $0x42] sm:$0xff]
      %v1180 = vld [vmem:[#allocation2 + $0x4a] sm:$0xff]
      %v1181 = vld [vmem:[#allocation2 + $0x52] sm:$0xff]
      %v1182 = vld [vmem:[#allocation2 + $0x5a] sm:$0xff]
      %v1183 = vld [vmem:[#allocation2 + $0x62] sm:$0xff]
      %v1184 = vld [vmem:[#allocation2 + $0x6a] sm:$0xff]
      %v1185 = vld [vmem:[#allocation2 + $0x72] sm:$0xff]
      %v1186 = vld [vmem:[#allocation2 + $0x7a] sm:$0xff]
      %v1187 = vld [vmem:[#allocation2 + $0x82] sm:$0xff]
      %v1188 = vld [vmem:[#allocation2 + $0x8a] sm:$0xff]
      %v1189 = vld [vmem:[#allocation2 + $0x92] sm:$0xff]
      %v1190 = vld [vmem:[#allocation2 + $0x9a] sm:$0xff]
      %v1191 = vld [vmem:[#allocation2 + $0xa2] sm:$0xff]
      %v1192 = vld [vmem:[#allocation2 + $0xaa] sm:$0xff]
      %v1193 = vld [vmem:[#allocation2 + $0xb2] sm:$0xff]
      %v1194 = vld [vmem:[#allocation2 + $0xba] sm:$0xff]
      %v1195 = vld [vmem:[#allocation2 + $0xc2] sm:$0xff]
      %v1196 = vld [vmem:[#allocation2 + $0xca] sm:$0xff]
      %v1197 = vld [vmem:[#allocation2 + $0xd2] sm:$0xff]
      %v1198 = vld [vmem:[#allocation2 + $0xda] sm:$0xff]
      %v1199 = vld [vmem:[#allocation2 + $0xe2] sm:$0xff]
      %v1200 = vld [vmem:[#allocation2 + $0xea] sm:$0xff]
      %v1201 = vld [vmem:[#allocation2 + $0xf2] sm:$0xff]
      %v1202 = vld [vmem:[#allocation2 + $0xfa] sm:$0xff]
      %v1203 = vld [vmem:[#allocation2 + $0x102] sm:$0xff]
      %v1204 = vld [vmem:[#allocation2 + $0x10a] sm:$0xff]
      %v1205 = vld [vmem:[#allocation2 + $0x112] sm:$0xff]
      %v1206 = vld [vmem:[#allocation2 + $0x11a] sm:$0xff]
      %v1207 = vld [vmem:[#allocation2 + $0x122] sm:$0xff]
      %v1208 = vld [vmem:[#allocation2 + $0x12a] sm:$0xff]
      %v1209 = vpack.c.bf16 %v1174, %v1173
      %v1210 = vpack.c.bf16 %v1176, %v1175
      %v1211 = vpack.c.bf16 %v1178, %v1177
      %v1212 = vpack.c.bf16 %v1180, %v1179
      %v1213 = vpack.c.bf16 %v1182, %v1181
      %v1214 = vpack.c.bf16 %v1184, %v1183
      %v1215 = vpack.c.bf16 %v1186, %v1185
      %v1216 = vpack.c.bf16 %v1188, %v1187
      %v1217 = vpack.c.bf16 %v1190, %v1189
      %v1218 = vpack.c.bf16 %v1192, %v1191
      %v1219 = vpack.c.bf16 %v1194, %v1193
      %v1220 = vpack.c.bf16 %v1196, %v1195
      %v1221 = vpack.c.bf16 %v1198, %v1197
      %v1222 = vpack.c.bf16 %v1200, %v1199
      %v1223 = vpack.c.bf16 %v1202, %v1201
      %v1224 = vpack.c.bf16 %v1204, %v1203
      %v1225 = vpack.c.bf16 %v1206, %v1205
      %v1226 = vpack.c.bf16 %v1208, %v1207
      %s1227 = scalar_lea.vmem %s1, 6
      %v1228 = vld [vmem:[%s1227] sm:$0x3]
      %v1230 = vsel %vm172, %v1209, 0
      %v1233 = vsel %vm172, %v1210, 0
      %v1236 = vsel %vm172, %v1211, 0
      %v1239 = vsel %vm172, %v1212, 0
      %v1242 = vsel %vm172, %v1213, 0
      %v1245 = vsel %vm172, %v1214, 0
      %v1248 = vsel %vm172, %v1215, 0
      %v1251 = vsel %vm172, %v1216, 0
      %v1254 = vsel %vm172, %v1217, 0
      %v1257 = vsel %vm172, %v1218, 0
      %v1260 = vsel %vm172, %v1219, 0
      %v1263 = vsel %vm172, %v1220, 0
      %v1266 = vsel %vm172, %v1221, 0
      %v1269 = vsel %vm172, %v1222, 0
      %v1272 = vsel %vm172, %v1223, 0
      %v1275 = vsel %vm172, %v1224, 0
      %v1278 = vsel %vm172, %v1225, 0
      %v1281 = vsel %vm172, %v1226, 0
      %v1284 = vsel %vm394, %v1228, 0
      %1286 = vmatpush.bf16.msra.mxu0 0
      %1287 = vmatpush.bf16.msra.mxu0 0
      %1288 = vmatpush.bf16.msra.mxu0 0
      %1289 = vmatpush.bf16.msra.mxu0 0
      %1290 = vmatpush.bf16.msra.mxu0 0
      %1291 = vmatpush.bf16.msra.mxu0 0
      %1292 = vmatpush.bf16.msra.mxu0 0
      %1293 = vmatpush.bf16.msra.mxu0 %v1284
      %1294 = vmatmul.bf16.gmra.mxu0 %v1230
      %v1295 = vpop.f32.mrf.mxu0
      %v1296 = vadd.f32 0.0, %v1295
      %v1297 = vpop.f32.mrf.mxu0
      %v1298 = vadd.f32 0.0, %v1297
      %1299 = vmatmul.bf16.gmra.mxu0 %v1233
      %v1300 = vpop.f32.mrf.mxu0
      %v1301 = vadd.f32 0.0, %v1300
      %v1302 = vpop.f32.mrf.mxu0
      %v1303 = vadd.f32 0.0, %v1302
      %1304 = vmatmul.bf16.gmra.mxu0 %v1236
      %v1305 = vpop.f32.mrf.mxu0
      %v1306 = vadd.f32 0.0, %v1305
      %v1307 = vpop.f32.mrf.mxu0
      %v1308 = vadd.f32 0.0, %v1307
      %1309 = vmatmul.bf16.gmra.mxu0 %v1239
      %v1310 = vpop.f32.mrf.mxu0
      %v1311 = vadd.f32 0.0, %v1310
      %v1312 = vpop.f32.mrf.mxu0
      %v1313 = vadd.f32 0.0, %v1312
      %1314 = vmatmul.bf16.gmra.mxu0 %v1242
      %v1315 = vpop.f32.mrf.mxu0
      %v1316 = vadd.f32 0.0, %v1315
      %v1317 = vpop.f32.mrf.mxu0
      %v1318 = vadd.f32 0.0, %v1317
      %1319 = vmatmul.bf16.gmra.mxu0 %v1245
      %v1320 = vpop.f32.mrf.mxu0
      %v1321 = vadd.f32 0.0, %v1320
      %v1322 = vpop.f32.mrf.mxu0
      %v1323 = vadd.f32 0.0, %v1322
      %1324 = vmatmul.bf16.gmra.mxu0 %v1248
      %v1325 = vpop.f32.mrf.mxu0
      %v1326 = vadd.f32 0.0, %v1325
      %v1327 = vpop.f32.mrf.mxu0
      %v1328 = vadd.f32 0.0, %v1327
      %1329 = vmatmul.bf16.gmra.mxu0 %v1251
      %v1330 = vpop.f32.mrf.mxu0
      %v1331 = vadd.f32 0.0, %v1330
      %v1332 = vpop.f32.mrf.mxu0
      %v1333 = vadd.f32 0.0, %v1332
      %1334 = vmatmul.bf16.gmra.mxu0 %v1254
      %v1335 = vpop.f32.mrf.mxu0
      %v1336 = vadd.f32 0.0, %v1335
      %v1337 = vpop.f32.mrf.mxu0
      %v1338 = vadd.f32 0.0, %v1337
      %1339 = vmatmul.bf16.gmra.mxu0 %v1257
      %v1340 = vpop.f32.mrf.mxu0
      %v1341 = vadd.f32 0.0, %v1340
      %v1342 = vpop.f32.mrf.mxu0
      %v1343 = vadd.f32 0.0, %v1342
      %1344 = vmatmul.bf16.gmra.mxu0 %v1260
      %v1345 = vpop.f32.mrf.mxu0
      %v1346 = vadd.f32 0.0, %v1345
      %v1347 = vpop.f32.mrf.mxu0
      %v1348 = vadd.f32 0.0, %v1347
      %1349 = vmatmul.bf16.gmra.mxu0 %v1263
      %v1350 = vpop.f32.mrf.mxu0
      %v1351 = vadd.f32 0.0, %v1350
      %v1352 = vpop.f32.mrf.mxu0
      %v1353 = vadd.f32 0.0, %v1352
      %1354 = vmatmul.bf16.gmra.mxu0 %v1266
      %v1355 = vpop.f32.mrf.mxu0
      %v1356 = vadd.f32 0.0, %v1355
      %v1357 = vpop.f32.mrf.mxu0
      %v1358 = vadd.f32 0.0, %v1357
      %1359 = vmatmul.bf16.gmra.mxu0 %v1269
      %v1360 = vpop.f32.mrf.mxu0
      %v1361 = vadd.f32 0.0, %v1360
      %v1362 = vpop.f32.mrf.mxu0
      %v1363 = vadd.f32 0.0, %v1362
      %1364 = vmatmul.bf16.gmra.mxu0 %v1272
      %v1365 = vpop.f32.mrf.mxu0
      %v1366 = vadd.f32 0.0, %v1365
      %v1367 = vpop.f32.mrf.mxu0
      %v1368 = vadd.f32 0.0, %v1367
      %1369 = vmatmul.bf16.gmra.mxu0 %v1275
      %v1370 = vpop.f32.mrf.mxu0
      %v1371 = vadd.f32 0.0, %v1370
      %v1372 = vpop.f32.mrf.mxu0
      %v1373 = vadd.f32 0.0, %v1372
      %1374 = vmatmul.bf16.gmra.mxu0 %v1278
      %v1375 = vpop.f32.mrf.mxu0
      %v1376 = vadd.f32 0.0, %v1375
      %v1377 = vpop.f32.mrf.mxu0
      %v1378 = vadd.f32 0.0, %v1377
      %1379 = vmatmul.bf16.gmra.mxu0 %v1281
      %v1380 = vpop.f32.mrf.mxu0
      %v1381 = vadd.f32 0.0, %v1380
      %v1382 = vpop.f32.mrf.mxu0
      %v1383 = vadd.f32 0.0, %v1382
      %1384 = vdwg.mxu0
      %v1385 = vld [vmem:[#allocation3] sm:$0xff]
      %v1386 = vld [vmem:[#allocation3 + $0x8] sm:$0xff]
      %v1387 = vld [vmem:[#allocation3 + $0x10] sm:$0xff]
      %v1388 = vld [vmem:[#allocation3 + $0x18] sm:$0xff]
      %v1389 = vld [vmem:[#allocation3 + $0x20] sm:$0xff]
      %v1390 = vld [vmem:[#allocation3 + $0x28] sm:$0xff]
      %v1391 = vld [vmem:[#allocation3 + $0x30] sm:$0xff]
      %v1392 = vld [vmem:[#allocation3 + $0x38] sm:$0xff]
      %v1393 = vld [vmem:[#allocation3 + $0x40] sm:$0xff]
      %v1394 = vld [vmem:[#allocation3 + $0x48] sm:$0xff]
      %v1395 = vld [vmem:[#allocation3 + $0x50] sm:$0xff]
      %v1396 = vld [vmem:[#allocation3 + $0x58] sm:$0xff]
      %v1397 = vld [vmem:[#allocation3 + $0x60] sm:$0xff]
      %v1398 = vld [vmem:[#allocation3 + $0x68] sm:$0xff]
      %v1399 = vld [vmem:[#allocation3 + $0x70] sm:$0xff]
      %v1400 = vld [vmem:[#allocation3 + $0x78] sm:$0xff]
      %v1401 = vld [vmem:[#allocation3 + $0x80] sm:$0xff]
      %v1402 = vld [vmem:[#allocation3 + $0x88] sm:$0xff]
      %v1403 = vld [vmem:[#allocation3 + $0x90] sm:$0xff]
      %v1404 = vld [vmem:[#allocation3 + $0x98] sm:$0xff]
      %v1405 = vld [vmem:[#allocation3 + $0xa0] sm:$0xff]
      %v1406 = vld [vmem:[#allocation3 + $0xa8] sm:$0xff]
      %v1407 = vld [vmem:[#allocation3 + $0xb0] sm:$0xff]
      %v1408 = vld [vmem:[#allocation3 + $0xb8] sm:$0xff]
      %v1409 = vld [vmem:[#allocation3 + $0xc0] sm:$0xff]
      %v1410 = vld [vmem:[#allocation3 + $0xc8] sm:$0xff]
      %v1411 = vld [vmem:[#allocation3 + $0xd0] sm:$0xff]
      %v1412 = vld [vmem:[#allocation3 + $0xd8] sm:$0xff]
      %v1413 = vld [vmem:[#allocation3 + $0xe0] sm:$0xff]
      %v1414 = vld [vmem:[#allocation3 + $0xe8] sm:$0xff]
      %v1415 = vld [vmem:[#allocation3 + $0xf0] sm:$0xff]
      %v1416 = vld [vmem:[#allocation3 + $0xf8] sm:$0xff]
      %v1417 = vld [vmem:[#allocation3 + $0x100] sm:$0xff]
      %v1418 = vld [vmem:[#allocation3 + $0x108] sm:$0xff]
      %v1419 = vld [vmem:[#allocation3 + $0x110] sm:$0xff]
      %v1420 = vld [vmem:[#allocation3 + $0x118] sm:$0xff]
      %v1421 = vadd.f32 %v1385, %v1296
      %v1422 = vadd.f32 %v1386, %v1298
      %v1423 = vadd.f32 %v1387, %v1301
      %v1424 = vadd.f32 %v1388, %v1303
      %v1425 = vadd.f32 %v1389, %v1306
      %v1426 = vadd.f32 %v1390, %v1308
      %v1427 = vadd.f32 %v1391, %v1311
      %v1428 = vadd.f32 %v1392, %v1313
      %v1429 = vadd.f32 %v1393, %v1316
      %v1430 = vadd.f32 %v1394, %v1318
      %v1431 = vadd.f32 %v1395, %v1321
      %v1432 = vadd.f32 %v1396, %v1323
      %v1433 = vadd.f32 %v1397, %v1326
      %v1434 = vadd.f32 %v1398, %v1328
      %v1435 = vadd.f32 %v1399, %v1331
      %v1436 = vadd.f32 %v1400, %v1333
      %v1437 = vadd.f32 %v1401, %v1336
      %v1438 = vadd.f32 %v1402, %v1338
      %v1439 = vadd.f32 %v1403, %v1341
      %v1440 = vadd.f32 %v1404, %v1343
      %v1441 = vadd.f32 %v1405, %v1346
      %v1442 = vadd.f32 %v1406, %v1348
      %v1443 = vadd.f32 %v1407, %v1351
      %v1444 = vadd.f32 %v1408, %v1353
      %v1445 = vadd.f32 %v1409, %v1356
      %v1446 = vadd.f32 %v1410, %v1358
      %v1447 = vadd.f32 %v1411, %v1361
      %v1448 = vadd.f32 %v1412, %v1363
      %v1449 = vadd.f32 %v1413, %v1366
      %v1450 = vadd.f32 %v1414, %v1368
      %v1451 = vadd.f32 %v1415, %v1371
      %v1452 = vadd.f32 %v1416, %v1373
      %v1453 = vadd.f32 %v1417, %v1376
      %v1454 = vadd.f32 %v1418, %v1378
      %v1455 = vadd.f32 %v1419, %v1381
      %v1456 = vadd.f32 %v1420, %v1383
      %1457 = vst.msk [vmem:[#allocation3] sm:$0xff] %vm172, %v1421
      %1458 = vst.msk [vmem:[#allocation3 + $0x8] sm:$0xff] %vm172, %v1422
      %1459 = vst.msk [vmem:[#allocation3 + $0x10] sm:$0xff] %vm172, %v1423
      %1460 = vst.msk [vmem:[#allocation3 + $0x18] sm:$0xff] %vm172, %v1424
      %1461 = vst.msk [vmem:[#allocation3 + $0x20] sm:$0xff] %vm172, %v1425
      %1462 = vst.msk [vmem:[#allocation3 + $0x28] sm:$0xff] %vm172, %v1426
      %1463 = vst.msk [vmem:[#allocation3 + $0x30] sm:$0xff] %vm172, %v1427
      %1464 = vst.msk [vmem:[#allocation3 + $0x38] sm:$0xff] %vm172, %v1428
      %1465 = vst.msk [vmem:[#allocation3 + $0x40] sm:$0xff] %vm172, %v1429
      %1466 = vst.msk [vmem:[#allocation3 + $0x48] sm:$0xff] %vm172, %v1430
      %1467 = vst.msk [vmem:[#allocation3 + $0x50] sm:$0xff] %vm172, %v1431
      %1468 = vst.msk [vmem:[#allocation3 + $0x58] sm:$0xff] %vm172, %v1432
      %1469 = vst.msk [vmem:[#allocation3 + $0x60] sm:$0xff] %vm172, %v1433
      %1470 = vst.msk [vmem:[#allocation3 + $0x68] sm:$0xff] %vm172, %v1434
      %1471 = vst.msk [vmem:[#allocation3 + $0x70] sm:$0xff] %vm172, %v1435
      %1472 = vst.msk [vmem:[#allocation3 + $0x78] sm:$0xff] %vm172, %v1436
      %1473 = vst.msk [vmem:[#allocation3 + $0x80] sm:$0xff] %vm172, %v1437
      %1474 = vst.msk [vmem:[#allocation3 + $0x88] sm:$0xff] %vm172, %v1438
      %1475 = vst.msk [vmem:[#allocation3 + $0x90] sm:$0xff] %vm172, %v1439
      %1476 = vst.msk [vmem:[#allocation3 + $0x98] sm:$0xff] %vm172, %v1440
      %1477 = vst.msk [vmem:[#allocation3 + $0xa0] sm:$0xff] %vm172, %v1441
      %1478 = vst.msk [vmem:[#allocation3 + $0xa8] sm:$0xff] %vm172, %v1442
      %1479 = vst.msk [vmem:[#allocation3 + $0xb0] sm:$0xff] %vm172, %v1443
      %1480 = vst.msk [vmem:[#allocation3 + $0xb8] sm:$0xff] %vm172, %v1444
      %1481 = vst.msk [vmem:[#allocation3 + $0xc0] sm:$0xff] %vm172, %v1445
      %1482 = vst.msk [vmem:[#allocation3 + $0xc8] sm:$0xff] %vm172, %v1446
      %1483 = vst.msk [vmem:[#allocation3 + $0xd0] sm:$0xff] %vm172, %v1447
      %1484 = vst.msk [vmem:[#allocation3 + $0xd8] sm:$0xff] %vm172, %v1448
      %1485 = vst.msk [vmem:[#allocation3 + $0xe0] sm:$0xff] %vm172, %v1449
      %1486 = vst.msk [vmem:[#allocation3 + $0xe8] sm:$0xff] %vm172, %v1450
      %1487 = vst.msk [vmem:[#allocation3 + $0xf0] sm:$0xff] %vm172, %v1451
      %1488 = vst.msk [vmem:[#allocation3 + $0xf8] sm:$0xff] %vm172, %v1452
      %1489 = vst.msk [vmem:[#allocation3 + $0x100] sm:$0xff] %vm172, %v1453
      %1490 = vst.msk [vmem:[#allocation3 + $0x108] sm:$0xff] %vm172, %v1454
      %1491 = vst.msk [vmem:[#allocation3 + $0x110] sm:$0xff] %vm172, %v1455
      %1492 = vst.msk [vmem:[#allocation3 + $0x118] sm:$0xff] %vm172, %v1456
      %v1493 = vld [vmem:[#allocation2 + $0x13] sm:$0xff]
      %v1494 = vld [vmem:[#allocation2 + $0x1b] sm:$0xff]
      %v1495 = vld [vmem:[#allocation2 + $0x23] sm:$0xff]
      %v1496 = vld [vmem:[#allocation2 + $0x2b] sm:$0xff]
      %v1497 = vld [vmem:[#allocation2 + $0x33] sm:$0xff]
      %v1498 = vld [vmem:[#allocation2 + $0x3b] sm:$0xff]
      %v1499 = vld [vmem:[#allocation2 + $0x43] sm:$0xff]
      %v1500 = vld [vmem:[#allocation2 + $0x4b] sm:$0xff]
      %v1501 = vld [vmem:[#allocation2 + $0x53] sm:$0xff]
      %v1502 = vld [vmem:[#allocation2 + $0x5b] sm:$0xff]
      %v1503 = vld [vmem:[#allocation2 + $0x63] sm:$0xff]
      %v1504 = vld [vmem:[#allocation2 + $0x6b] sm:$0xff]
      %v1505 = vld [vmem:[#allocation2 + $0x73] sm:$0xff]
      %v1506 = vld [vmem:[#allocation2 + $0x7b] sm:$0xff]
      %v1507 = vld [vmem:[#allocation2 + $0x83] sm:$0xff]
      %v1508 = vld [vmem:[#allocation2 + $0x8b] sm:$0xff]
      %v1509 = vld [vmem:[#allocation2 + $0x93] sm:$0xff]
      %v1510 = vld [vmem:[#allocation2 + $0x9b] sm:$0xff]
      %v1511 = vld [vmem:[#allocation2 + $0xa3] sm:$0xff]
      %v1512 = vld [vmem:[#allocation2 + $0xab] sm:$0xff]
      %v1513 = vld [vmem:[#allocation2 + $0xb3] sm:$0xff]
      %v1514 = vld [vmem:[#allocation2 + $0xbb] sm:$0xff]
      %v1515 = vld [vmem:[#allocation2 + $0xc3] sm:$0xff]
      %v1516 = vld [vmem:[#allocation2 + $0xcb] sm:$0xff]
      %v1517 = vld [vmem:[#allocation2 + $0xd3] sm:$0xff]
      %v1518 = vld [vmem:[#allocation2 + $0xdb] sm:$0xff]
      %v1519 = vld [vmem:[#allocation2 + $0xe3] sm:$0xff]
      %v1520 = vld [vmem:[#allocation2 + $0xeb] sm:$0xff]
      %v1521 = vld [vmem:[#allocation2 + $0xf3] sm:$0xff]
      %v1522 = vld [vmem:[#allocation2 + $0xfb] sm:$0xff]
      %v1523 = vld [vmem:[#allocation2 + $0x103] sm:$0xff]
      %v1524 = vld [vmem:[#allocation2 + $0x10b] sm:$0xff]
      %v1525 = vld [vmem:[#allocation2 + $0x113] sm:$0xff]
      %v1526 = vld [vmem:[#allocation2 + $0x11b] sm:$0xff]
      %v1527 = vld [vmem:[#allocation2 + $0x123] sm:$0xff]
      %v1528 = vld [vmem:[#allocation2 + $0x12b] sm:$0xff]
      %v1529 = vpack.c.bf16 %v1494, %v1493
      %v1530 = vpack.c.bf16 %v1496, %v1495
      %v1531 = vpack.c.bf16 %v1498, %v1497
      %v1532 = vpack.c.bf16 %v1500, %v1499
      %v1533 = vpack.c.bf16 %v1502, %v1501
      %v1534 = vpack.c.bf16 %v1504, %v1503
      %v1535 = vpack.c.bf16 %v1506, %v1505
      %v1536 = vpack.c.bf16 %v1508, %v1507
      %v1537 = vpack.c.bf16 %v1510, %v1509
      %v1538 = vpack.c.bf16 %v1512, %v1511
      %v1539 = vpack.c.bf16 %v1514, %v1513
      %v1540 = vpack.c.bf16 %v1516, %v1515
      %v1541 = vpack.c.bf16 %v1518, %v1517
      %v1542 = vpack.c.bf16 %v1520, %v1519
      %v1543 = vpack.c.bf16 %v1522, %v1521
      %v1544 = vpack.c.bf16 %v1524, %v1523
      %v1545 = vpack.c.bf16 %v1526, %v1525
      %v1546 = vpack.c.bf16 %v1528, %v1527
      %s1547 = scalar_lea.vmem %s1, 8
      %v1548 = vld [vmem:[%s1547] sm:$0x3]
      %v1550 = vsel %vm172, %v1529, 0
      %v1553 = vsel %vm172, %v1530, 0
      %v1556 = vsel %vm172, %v1531, 0
      %v1559 = vsel %vm172, %v1532, 0
      %v1562 = vsel %vm172, %v1533, 0
      %v1565 = vsel %vm172, %v1534, 0
      %v1568 = vsel %vm172, %v1535, 0
      %v1571 = vsel %vm172, %v1536, 0
      %v1574 = vsel %vm172, %v1537, 0
      %v1577 = vsel %vm172, %v1538, 0
      %v1580 = vsel %vm172, %v1539, 0
      %v1583 = vsel %vm172, %v1540, 0
      %v1586 = vsel %vm172, %v1541, 0
      %v1589 = vsel %vm172, %v1542, 0
      %v1592 = vsel %vm172, %v1543, 0
      %v1595 = vsel %vm172, %v1544, 0
      %v1598 = vsel %vm172, %v1545, 0
      %v1601 = vsel %vm172, %v1546, 0
      %v1604 = vsel %vm394, %v1548, 0
      %1606 = vmatpush.bf16.msra.mxu0 0
      %1607 = vmatpush.bf16.msra.mxu0 0
      %1608 = vmatpush.bf16.msra.mxu0 0
      %1609 = vmatpush.bf16.msra.mxu0 0
      %1610 = vmatpush.bf16.msra.mxu0 0
      %1611 = vmatpush.bf16.msra.mxu0 0
      %1612 = vmatpush.bf16.msra.mxu0 0
      %1613 = vmatpush.bf16.msra.mxu0 %v1604
      %1614 = vmatmul.bf16.gmra.mxu0 %v1550
      %v1615 = vpop.f32.mrf.mxu0
      %v1616 = vadd.f32 0.0, %v1615
      %v1617 = vpop.f32.mrf.mxu0
      %v1618 = vadd.f32 0.0, %v1617
      %1619 = vmatmul.bf16.gmra.mxu0 %v1553
      %v1620 = vpop.f32.mrf.mxu0
      %v1621 = vadd.f32 0.0, %v1620
      %v1622 = vpop.f32.mrf.mxu0
      %v1623 = vadd.f32 0.0, %v1622
      %1624 = vmatmul.bf16.gmra.mxu0 %v1556
      %v1625 = vpop.f32.mrf.mxu0
      %v1626 = vadd.f32 0.0, %v1625
      %v1627 = vpop.f32.mrf.mxu0
      %v1628 = vadd.f32 0.0, %v1627
      %1629 = vmatmul.bf16.gmra.mxu0 %v1559
      %v1630 = vpop.f32.mrf.mxu0
      %v1631 = vadd.f32 0.0, %v1630
      %v1632 = vpop.f32.mrf.mxu0
      %v1633 = vadd.f32 0.0, %v1632
      %1634 = vmatmul.bf16.gmra.mxu0 %v1562
      %v1635 = vpop.f32.mrf.mxu0
      %v1636 = vadd.f32 0.0, %v1635
      %v1637 = vpop.f32.mrf.mxu0
      %v1638 = vadd.f32 0.0, %v1637
      %1639 = vmatmul.bf16.gmra.mxu0 %v1565
      %v1640 = vpop.f32.mrf.mxu0
      %v1641 = vadd.f32 0.0, %v1640
      %v1642 = vpop.f32.mrf.mxu0
      %v1643 = vadd.f32 0.0, %v1642
      %1644 = vmatmul.bf16.gmra.mxu0 %v1568
      %v1645 = vpop.f32.mrf.mxu0
      %v1646 = vadd.f32 0.0, %v1645
      %v1647 = vpop.f32.mrf.mxu0
      %v1648 = vadd.f32 0.0, %v1647
      %1649 = vmatmul.bf16.gmra.mxu0 %v1571
      %v1650 = vpop.f32.mrf.mxu0
      %v1651 = vadd.f32 0.0, %v1650
      %v1652 = vpop.f32.mrf.mxu0
      %v1653 = vadd.f32 0.0, %v1652
      %1654 = vmatmul.bf16.gmra.mxu0 %v1574
      %v1655 = vpop.f32.mrf.mxu0
      %v1656 = vadd.f32 0.0, %v1655
      %v1657 = vpop.f32.mrf.mxu0
      %v1658 = vadd.f32 0.0, %v1657
      %1659 = vmatmul.bf16.gmra.mxu0 %v1577
      %v1660 = vpop.f32.mrf.mxu0
      %v1661 = vadd.f32 0.0, %v1660
      %v1662 = vpop.f32.mrf.mxu0
      %v1663 = vadd.f32 0.0, %v1662
      %1664 = vmatmul.bf16.gmra.mxu0 %v1580
      %v1665 = vpop.f32.mrf.mxu0
      %v1666 = vadd.f32 0.0, %v1665
      %v1667 = vpop.f32.mrf.mxu0
      %v1668 = vadd.f32 0.0, %v1667
      %1669 = vmatmul.bf16.gmra.mxu0 %v1583
      %v1670 = vpop.f32.mrf.mxu0
      %v1671 = vadd.f32 0.0, %v1670
      %v1672 = vpop.f32.mrf.mxu0
      %v1673 = vadd.f32 0.0, %v1672
      %1674 = vmatmul.bf16.gmra.mxu0 %v1586
      %v1675 = vpop.f32.mrf.mxu0
      %v1676 = vadd.f32 0.0, %v1675
      %v1677 = vpop.f32.mrf.mxu0
      %v1678 = vadd.f32 0.0, %v1677
      %1679 = vmatmul.bf16.gmra.mxu0 %v1589
      %v1680 = vpop.f32.mrf.mxu0
      %v1681 = vadd.f32 0.0, %v1680
      %v1682 = vpop.f32.mrf.mxu0
      %v1683 = vadd.f32 0.0, %v1682
      %1684 = vmatmul.bf16.gmra.mxu0 %v1592
      %v1685 = vpop.f32.mrf.mxu0
      %v1686 = vadd.f32 0.0, %v1685
      %v1687 = vpop.f32.mrf.mxu0
      %v1688 = vadd.f32 0.0, %v1687
      %1689 = vmatmul.bf16.gmra.mxu0 %v1595
      %v1690 = vpop.f32.mrf.mxu0
      %v1691 = vadd.f32 0.0, %v1690
      %v1692 = vpop.f32.mrf.mxu0
      %v1693 = vadd.f32 0.0, %v1692
      %1694 = vmatmul.bf16.gmra.mxu0 %v1598
      %v1695 = vpop.f32.mrf.mxu0
      %v1696 = vadd.f32 0.0, %v1695
      %v1697 = vpop.f32.mrf.mxu0
      %v1698 = vadd.f32 0.0, %v1697
      %1699 = vmatmul.bf16.gmra.mxu0 %v1601
      %v1700 = vpop.f32.mrf.mxu0
      %v1701 = vadd.f32 0.0, %v1700
      %v1702 = vpop.f32.mrf.mxu0
      %v1703 = vadd.f32 0.0, %v1702
      %1704 = vdwg.mxu0
      %v1705 = vld [vmem:[#allocation3] sm:$0xff]
      %v1706 = vld [vmem:[#allocation3 + $0x8] sm:$0xff]
      %v1707 = vld [vmem:[#allocation3 + $0x10] sm:$0xff]
      %v1708 = vld [vmem:[#allocation3 + $0x18] sm:$0xff]
      %v1709 = vld [vmem:[#allocation3 + $0x20] sm:$0xff]
      %v1710 = vld [vmem:[#allocation3 + $0x28] sm:$0xff]
      %v1711 = vld [vmem:[#allocation3 + $0x30] sm:$0xff]
      %v1712 = vld [vmem:[#allocation3 + $0x38] sm:$0xff]
      %v1713 = vld [vmem:[#allocation3 + $0x40] sm:$0xff]
      %v1714 = vld [vmem:[#allocation3 + $0x48] sm:$0xff]
      %v1715 = vld [vmem:[#allocation3 + $0x50] sm:$0xff]
      %v1716 = vld [vmem:[#allocation3 + $0x58] sm:$0xff]
      %v1717 = vld [vmem:[#allocation3 + $0x60] sm:$0xff]
      %v1718 = vld [vmem:[#allocation3 + $0x68] sm:$0xff]
      %v1719 = vld [vmem:[#allocation3 + $0x70] sm:$0xff]
      %v1720 = vld [vmem:[#allocation3 + $0x78] sm:$0xff]
      %v1721 = vld [vmem:[#allocation3 + $0x80] sm:$0xff]
      %v1722 = vld [vmem:[#allocation3 + $0x88] sm:$0xff]
      %v1723 = vld [vmem:[#allocation3 + $0x90] sm:$0xff]
      %v1724 = vld [vmem:[#allocation3 + $0x98] sm:$0xff]
      %v1725 = vld [vmem:[#allocation3 + $0xa0] sm:$0xff]
      %v1726 = vld [vmem:[#allocation3 + $0xa8] sm:$0xff]
      %v1727 = vld [vmem:[#allocation3 + $0xb0] sm:$0xff]
      %v1728 = vld [vmem:[#allocation3 + $0xb8] sm:$0xff]
      %v1729 = vld [vmem:[#allocation3 + $0xc0] sm:$0xff]
      %v1730 = vld [vmem:[#allocation3 + $0xc8] sm:$0xff]
      %v1731 = vld [vmem:[#allocation3 + $0xd0] sm:$0xff]
      %v1732 = vld [vmem:[#allocation3 + $0xd8] sm:$0xff]
      %v1733 = vld [vmem:[#allocation3 + $0xe0] sm:$0xff]
      %v1734 = vld [vmem:[#allocation3 + $0xe8] sm:$0xff]
      %v1735 = vld [vmem:[#allocation3 + $0xf0] sm:$0xff]
      %v1736 = vld [vmem:[#allocation3 + $0xf8] sm:$0xff]
      %v1737 = vld [vmem:[#allocation3 + $0x100] sm:$0xff]
      %v1738 = vld [vmem:[#allocation3 + $0x108] sm:$0xff]
      %v1739 = vld [vmem:[#allocation3 + $0x110] sm:$0xff]
      %v1740 = vld [vmem:[#allocation3 + $0x118] sm:$0xff]
      %v1741 = vadd.f32 %v1705, %v1616
      %v1742 = vadd.f32 %v1706, %v1618
      %v1743 = vadd.f32 %v1707, %v1621
      %v1744 = vadd.f32 %v1708, %v1623
      %v1745 = vadd.f32 %v1709, %v1626
      %v1746 = vadd.f32 %v1710, %v1628
      %v1747 = vadd.f32 %v1711, %v1631
      %v1748 = vadd.f32 %v1712, %v1633
      %v1749 = vadd.f32 %v1713, %v1636
      %v1750 = vadd.f32 %v1714, %v1638
      %v1751 = vadd.f32 %v1715, %v1641
      %v1752 = vadd.f32 %v1716, %v1643
      %v1753 = vadd.f32 %v1717, %v1646
      %v1754 = vadd.f32 %v1718, %v1648
      %v1755 = vadd.f32 %v1719, %v1651
      %v1756 = vadd.f32 %v1720, %v1653
      %v1757 = vadd.f32 %v1721, %v1656
      %v1758 = vadd.f32 %v1722, %v1658
      %v1759 = vadd.f32 %v1723, %v1661
      %v1760 = vadd.f32 %v1724, %v1663
      %v1761 = vadd.f32 %v1725, %v1666
      %v1762 = vadd.f32 %v1726, %v1668
      %v1763 = vadd.f32 %v1727, %v1671
      %v1764 = vadd.f32 %v1728, %v1673
      %v1765 = vadd.f32 %v1729, %v1676
      %v1766 = vadd.f32 %v1730, %v1678
      %v1767 = vadd.f32 %v1731, %v1681
      %v1768 = vadd.f32 %v1732, %v1683
      %v1769 = vadd.f32 %v1733, %v1686
      %v1770 = vadd.f32 %v1734, %v1688
      %v1771 = vadd.f32 %v1735, %v1691
      %v1772 = vadd.f32 %v1736, %v1693
      %v1773 = vadd.f32 %v1737, %v1696
      %v1774 = vadd.f32 %v1738, %v1698
      %v1775 = vadd.f32 %v1739, %v1701
      %v1776 = vadd.f32 %v1740, %v1703
      %1777 = vst.msk [vmem:[#allocation3] sm:$0xff] %vm172, %v1741
      %1778 = vst.msk [vmem:[#allocation3 + $0x8] sm:$0xff] %vm172, %v1742
      %1779 = vst.msk [vmem:[#allocation3 + $0x10] sm:$0xff] %vm172, %v1743
      %1780 = vst.msk [vmem:[#allocation3 + $0x18] sm:$0xff] %vm172, %v1744
      %1781 = vst.msk [vmem:[#allocation3 + $0x20] sm:$0xff] %vm172, %v1745
      %1782 = vst.msk [vmem:[#allocation3 + $0x28] sm:$0xff] %vm172, %v1746
      %1783 = vst.msk [vmem:[#allocation3 + $0x30] sm:$0xff] %vm172, %v1747
      %1784 = vst.msk [vmem:[#allocation3 + $0x38] sm:$0xff] %vm172, %v1748
      %1785 = vst.msk [vmem:[#allocation3 + $0x40] sm:$0xff] %vm172, %v1749
      %1786 = vst.msk [vmem:[#allocation3 + $0x48] sm:$0xff] %vm172, %v1750
      %1787 = vst.msk [vmem:[#allocation3 + $0x50] sm:$0xff] %vm172, %v1751
      %1788 = vst.msk [vmem:[#allocation3 + $0x58] sm:$0xff] %vm172, %v1752
      %1789 = vst.msk [vmem:[#allocation3 + $0x60] sm:$0xff] %vm172, %v1753
      %1790 = vst.msk [vmem:[#allocation3 + $0x68] sm:$0xff] %vm172, %v1754
      %1791 = vst.msk [vmem:[#allocation3 + $0x70] sm:$0xff] %vm172, %v1755
      %1792 = vst.msk [vmem:[#allocation3 + $0x78] sm:$0xff] %vm172, %v1756
      %1793 = vst.msk [vmem:[#allocation3 + $0x80] sm:$0xff] %vm172, %v1757
      %1794 = vst.msk [vmem:[#allocation3 + $0x88] sm:$0xff] %vm172, %v1758
      %1795 = vst.msk [vmem:[#allocation3 + $0x90] sm:$0xff] %vm172, %v1759
      %1796 = vst.msk [vmem:[#allocation3 + $0x98] sm:$0xff] %vm172, %v1760
      %1797 = vst.msk [vmem:[#allocation3 + $0xa0] sm:$0xff] %vm172, %v1761
      %1798 = vst.msk [vmem:[#allocation3 + $0xa8] sm:$0xff] %vm172, %v1762
      %1799 = vst.msk [vmem:[#allocation3 + $0xb0] sm:$0xff] %vm172, %v1763
      %1800 = vst.msk [vmem:[#allocation3 + $0xb8] sm:$0xff] %vm172, %v1764
      %1801 = vst.msk [vmem:[#allocation3 + $0xc0] sm:$0xff] %vm172, %v1765
      %1802 = vst.msk [vmem:[#allocation3 + $0xc8] sm:$0xff] %vm172, %v1766
      %1803 = vst.msk [vmem:[#allocation3 + $0xd0] sm:$0xff] %vm172, %v1767
      %1804 = vst.msk [vmem:[#allocation3 + $0xd8] sm:$0xff] %vm172, %v1768
      %1805 = vst.msk [vmem:[#allocation3 + $0xe0] sm:$0xff] %vm172, %v1769
      %1806 = vst.msk [vmem:[#allocation3 + $0xe8] sm:$0xff] %vm172, %v1770
      %1807 = vst.msk [vmem:[#allocation3 + $0xf0] sm:$0xff] %vm172, %v1771
      %1808 = vst.msk [vmem:[#allocation3 + $0xf8] sm:$0xff] %vm172, %v1772
      %1809 = vst.msk [vmem:[#allocation3 + $0x100] sm:$0xff] %vm172, %v1773
      %1810 = vst.msk [vmem:[#allocation3 + $0x108] sm:$0xff] %vm172, %v1774
      %1811 = vst.msk [vmem:[#allocation3 + $0x110] sm:$0xff] %vm172, %v1775
      %1812 = vst.msk [vmem:[#allocation3 + $0x118] sm:$0xff] %vm172, %v1776
      %v1813 = vld [vmem:[#allocation2 + $0x14] sm:$0xff]
      %v1814 = vld [vmem:[#allocation2 + $0x1c] sm:$0xff]
      %v1815 = vld [vmem:[#allocation2 + $0x24] sm:$0xff]
      %v1816 = vld [vmem:[#allocation2 + $0x2c] sm:$0xff]
      %v1817 = vld [vmem:[#allocation2 + $0x34] sm:$0xff]
      %v1818 = vld [vmem:[#allocation2 + $0x3c] sm:$0xff]
      %v1819 = vld [vmem:[#allocation2 + $0x44] sm:$0xff]
      %v1820 = vld [vmem:[#allocation2 + $0x4c] sm:$0xff]
      %v1821 = vld [vmem:[#allocation2 + $0x54] sm:$0xff]
      %v1822 = vld [vmem:[#allocation2 + $0x5c] sm:$0xff]
      %v1823 = vld [vmem:[#allocation2 + $0x64] sm:$0xff]
      %v1824 = vld [vmem:[#allocation2 + $0x6c] sm:$0xff]
      %v1825 = vld [vmem:[#allocation2 + $0x74] sm:$0xff]
      %v1826 = vld [vmem:[#allocation2 + $0x7c] sm:$0xff]
      %v1827 = vld [vmem:[#allocation2 + $0x84] sm:$0xff]
      %v1828 = vld [vmem:[#allocation2 + $0x8c] sm:$0xff]
      %v1829 = vld [vmem:[#allocation2 + $0x94] sm:$0xff]
      %v1830 = vld [vmem:[#allocation2 + $0x9c] sm:$0xff]
      %v1831 = vld [vmem:[#allocation2 + $0xa4] sm:$0xff]
      %v1832 = vld [vmem:[#allocation2 + $0xac] sm:$0xff]
      %v1833 = vld [vmem:[#allocation2 + $0xb4] sm:$0xff]
      %v1834 = vld [vmem:[#allocation2 + $0xbc] sm:$0xff]
      %v1835 = vld [vmem:[#allocation2 + $0xc4] sm:$0xff]
      %v1836 = vld [vmem:[#allocation2 + $0xcc] sm:$0xff]
      %v1837 = vld [vmem:[#allocation2 + $0xd4] sm:$0xff]
      %v1838 = vld [vmem:[#allocation2 + $0xdc] sm:$0xff]
      %v1839 = vld [vmem:[#allocation2 + $0xe4] sm:$0xff]
      %v1840 = vld [vmem:[#allocation2 + $0xec] sm:$0xff]
      %v1841 = vld [vmem:[#allocation2 + $0xf4] sm:$0xff]
      %v1842 = vld [vmem:[#allocation2 + $0xfc] sm:$0xff]
      %v1843 = vld [vmem:[#allocation2 + $0x104] sm:$0xff]
      %v1844 = vld [vmem:[#allocation2 + $0x10c] sm:$0xff]
      %v1845 = vld [vmem:[#allocation2 + $0x114] sm:$0xff]
      %v1846 = vld [vmem:[#allocation2 + $0x11c] sm:$0xff]
      %v1847 = vld [vmem:[#allocation2 + $0x124] sm:$0xff]
      %v1848 = vld [vmem:[#allocation2 + $0x12c] sm:$0xff]
      %v1849 = vpack.c.bf16 %v1814, %v1813
      %v1850 = vpack.c.bf16 %v1816, %v1815
      %v1851 = vpack.c.bf16 %v1818, %v1817
      %v1852 = vpack.c.bf16 %v1820, %v1819
      %v1853 = vpack.c.bf16 %v1822, %v1821
      %v1854 = vpack.c.bf16 %v1824, %v1823
      %v1855 = vpack.c.bf16 %v1826, %v1825
      %v1856 = vpack.c.bf16 %v1828, %v1827
      %v1857 = vpack.c.bf16 %v1830, %v1829
      %v1858 = vpack.c.bf16 %v1832, %v1831
      %v1859 = vpack.c.bf16 %v1834, %v1833
      %v1860 = vpack.c.bf16 %v1836, %v1835
      %v1861 = vpack.c.bf16 %v1838, %v1837
      %v1862 = vpack.c.bf16 %v1840, %v1839
      %v1863 = vpack.c.bf16 %v1842, %v1841
      %v1864 = vpack.c.bf16 %v1844, %v1843
      %v1865 = vpack.c.bf16 %v1846, %v1845
      %v1866 = vpack.c.bf16 %v1848, %v1847
      %s1867 = scalar_lea.vmem %s1, 10
      %v1868 = vld [vmem:[%s1867] sm:$0x3]
      %v1870 = vsel %vm172, %v1849, 0
      %v1873 = vsel %vm172, %v1850, 0
      %v1876 = vsel %vm172, %v1851, 0
      %v1879 = vsel %vm172, %v1852, 0
      %v1882 = vsel %vm172, %v1853, 0
      %v1885 = vsel %vm172, %v1854, 0
      %v1888 = vsel %vm172, %v1855, 0
      %v1891 = vsel %vm172, %v1856, 0
      %v1894 = vsel %vm172, %v1857, 0
      %v1897 = vsel %vm172, %v1858, 0
      %v1900 = vsel %vm172, %v1859, 0
      %v1903 = vsel %vm172, %v1860, 0
      %v1906 = vsel %vm172, %v1861, 0
      %v1909 = vsel %vm172, %v1862, 0
      %v1912 = vsel %vm172, %v1863, 0
      %v1915 = vsel %vm172, %v1864, 0
      %v1918 = vsel %vm172, %v1865, 0
      %v1921 = vsel %vm172, %v1866, 0
      %v1924 = vsel %vm394, %v1868, 0
      %1926 = vmatpush.bf16.msra.mxu0 0
      %1927 = vmatpush.bf16.msra.mxu0 0
      %1928 = vmatpush.bf16.msra.mxu0 0
      %1929 = vmatpush.bf16.msra.mxu0 0
      %1930 = vmatpush.bf16.msra.mxu0 0
      %1931 = vmatpush.bf16.msra.mxu0 0
      %1932 = vmatpush.bf16.msra.mxu0 0
      %1933 = vmatpush.bf16.msra.mxu0 %v1924
      %1934 = vmatmul.bf16.gmra.mxu0 %v1870
      %v1935 = vpop.f32.mrf.mxu0
      %v1936 = vadd.f32 0.0, %v1935
      %v1937 = vpop.f32.mrf.mxu0
      %v1938 = vadd.f32 0.0, %v1937
      %1939 = vmatmul.bf16.gmra.mxu0 %v1873
      %v1940 = vpop.f32.mrf.mxu0
      %v1941 = vadd.f32 0.0, %v1940
      %v1942 = vpop.f32.mrf.mxu0
      %v1943 = vadd.f32 0.0, %v1942
      %1944 = vmatmul.bf16.gmra.mxu0 %v1876
      %v1945 = vpop.f32.mrf.mxu0
      %v1946 = vadd.f32 0.0, %v1945
      %v1947 = vpop.f32.mrf.mxu0
      %v1948 = vadd.f32 0.0, %v1947
      %1949 = vmatmul.bf16.gmra.mxu0 %v1879
      %v1950 = vpop.f32.mrf.mxu0
      %v1951 = vadd.f32 0.0, %v1950
      %v1952 = vpop.f32.mrf.mxu0
      %v1953 = vadd.f32 0.0, %v1952
      %1954 = vmatmul.bf16.gmra.mxu0 %v1882
      %v1955 = vpop.f32.mrf.mxu0
      %v1956 = vadd.f32 0.0, %v1955
      %v1957 = vpop.f32.mrf.mxu0
      %v1958 = vadd.f32 0.0, %v1957
      %1959 = vmatmul.bf16.gmra.mxu0 %v1885
      %v1960 = vpop.f32.mrf.mxu0
      %v1961 = vadd.f32 0.0, %v1960
      %v1962 = vpop.f32.mrf.mxu0
      %v1963 = vadd.f32 0.0, %v1962
      %1964 = vmatmul.bf16.gmra.mxu0 %v1888
      %v1965 = vpop.f32.mrf.mxu0
      %v1966 = vadd.f32 0.0, %v1965
      %v1967 = vpop.f32.mrf.mxu0
      %v1968 = vadd.f32 0.0, %v1967
      %1969 = vmatmul.bf16.gmra.mxu0 %v1891
      %v1970 = vpop.f32.mrf.mxu0
      %v1971 = vadd.f32 0.0, %v1970
      %v1972 = vpop.f32.mrf.mxu0
      %v1973 = vadd.f32 0.0, %v1972
      %1974 = vmatmul.bf16.gmra.mxu0 %v1894
      %v1975 = vpop.f32.mrf.mxu0
      %v1976 = vadd.f32 0.0, %v1975
      %v1977 = vpop.f32.mrf.mxu0
      %v1978 = vadd.f32 0.0, %v1977
      %1979 = vmatmul.bf16.gmra.mxu0 %v1897
      %v1980 = vpop.f32.mrf.mxu0
      %v1981 = vadd.f32 0.0, %v1980
      %v1982 = vpop.f32.mrf.mxu0
      %v1983 = vadd.f32 0.0, %v1982
      %1984 = vmatmul.bf16.gmra.mxu0 %v1900
      %v1985 = vpop.f32.mrf.mxu0
      %v1986 = vadd.f32 0.0, %v1985
      %v1987 = vpop.f32.mrf.mxu0
      %v1988 = vadd.f32 0.0, %v1987
      %1989 = vmatmul.bf16.gmra.mxu0 %v1903
      %v1990 = vpop.f32.mrf.mxu0
      %v1991 = vadd.f32 0.0, %v1990
      %v1992 = vpop.f32.mrf.mxu0
      %v1993 = vadd.f32 0.0, %v1992
      %1994 = vmatmul.bf16.gmra.mxu0 %v1906
      %v1995 = vpop.f32.mrf.mxu0
      %v1996 = vadd.f32 0.0, %v1995
      %v1997 = vpop.f32.mrf.mxu0
      %v1998 = vadd.f32 0.0, %v1997
      %1999 = vmatmul.bf16.gmra.mxu0 %v1909
      %v2000 = vpop.f32.mrf.mxu0
      %v2001 = vadd.f32 0.0, %v2000
      %v2002 = vpop.f32.mrf.mxu0
      %v2003 = vadd.f32 0.0, %v2002
      %2004 = vmatmul.bf16.gmra.mxu0 %v1912
      %v2005 = vpop.f32.mrf.mxu0
      %v2006 = vadd.f32 0.0, %v2005
      %v2007 = vpop.f32.mrf.mxu0
      %v2008 = vadd.f32 0.0, %v2007
      %2009 = vmatmul.bf16.gmra.mxu0 %v1915
      %v2010 = vpop.f32.mrf.mxu0
      %v2011 = vadd.f32 0.0, %v2010
      %v2012 = vpop.f32.mrf.mxu0
      %v2013 = vadd.f32 0.0, %v2012
      %2014 = vmatmul.bf16.gmra.mxu0 %v1918
      %v2015 = vpop.f32.mrf.mxu0
      %v2016 = vadd.f32 0.0, %v2015
      %v2017 = vpop.f32.mrf.mxu0
      %v2018 = vadd.f32 0.0, %v2017
      %2019 = vmatmul.bf16.gmra.mxu0 %v1921
      %v2020 = vpop.f32.mrf.mxu0
      %v2021 = vadd.f32 0.0, %v2020
      %v2022 = vpop.f32.mrf.mxu0
      %v2023 = vadd.f32 0.0, %v2022
      %2024 = vdwg.mxu0
      %v2025 = vld [vmem:[#allocation3] sm:$0xff]
      %v2026 = vld [vmem:[#allocation3 + $0x8] sm:$0xff]
      %v2027 = vld [vmem:[#allocation3 + $0x10] sm:$0xff]
      %v2028 = vld [vmem:[#allocation3 + $0x18] sm:$0xff]
      %v2029 = vld [vmem:[#allocation3 + $0x20] sm:$0xff]
      %v2030 = vld [vmem:[#allocation3 + $0x28] sm:$0xff]
      %v2031 = vld [vmem:[#allocation3 + $0x30] sm:$0xff]
      %v2032 = vld [vmem:[#allocation3 + $0x38] sm:$0xff]
      %v2033 = vld [vmem:[#allocation3 + $0x40] sm:$0xff]
      %v2034 = vld [vmem:[#allocation3 + $0x48] sm:$0xff]
      %v2035 = vld [vmem:[#allocation3 + $0x50] sm:$0xff]
      %v2036 = vld [vmem:[#allocation3 + $0x58] sm:$0xff]
      %v2037 = vld [vmem:[#allocation3 + $0x60] sm:$0xff]
      %v2038 = vld [vmem:[#allocation3 + $0x68] sm:$0xff]
      %v2039 = vld [vmem:[#allocation3 + $0x70] sm:$0xff]
      %v2040 = vld [vmem:[#allocation3 + $0x78] sm:$0xff]
      %v2041 = vld [vmem:[#allocation3 + $0x80] sm:$0xff]
      %v2042 = vld [vmem:[#allocation3 + $0x88] sm:$0xff]
      %v2043 = vld [vmem:[#allocation3 + $0x90] sm:$0xff]
      %v2044 = vld [vmem:[#allocation3 + $0x98] sm:$0xff]
      %v2045 = vld [vmem:[#allocation3 + $0xa0] sm:$0xff]
      %v2046 = vld [vmem:[#allocation3 + $0xa8] sm:$0xff]
      %v2047 = vld [vmem:[#allocation3 + $0xb0] sm:$0xff]
      %v2048 = vld [vmem:[#allocation3 + $0xb8] sm:$0xff]
      %v2049 = vld [vmem:[#allocation3 + $0xc0] sm:$0xff]
      %v2050 = vld [vmem:[#allocation3 + $0xc8] sm:$0xff]
      %v2051 = vld [vmem:[#allocation3 + $0xd0] sm:$0xff]
      %v2052 = vld [vmem:[#allocation3 + $0xd8] sm:$0xff]
      %v2053 = vld [vmem:[#allocation3 + $0xe0] sm:$0xff]
      %v2054 = vld [vmem:[#allocation3 + $0xe8] sm:$0xff]
      %v2055 = vld [vmem:[#allocation3 + $0xf0] sm:$0xff]
      %v2056 = vld [vmem:[#allocation3 + $0xf8] sm:$0xff]
      %v2057 = vld [vmem:[#allocation3 + $0x100] sm:$0xff]
      %v2058 = vld [vmem:[#allocation3 + $0x108] sm:$0xff]
      %v2059 = vld [vmem:[#allocation3 + $0x110] sm:$0xff]
      %v2060 = vld [vmem:[#allocation3 + $0x118] sm:$0xff]
      %v2061 = vadd.f32 %v2025, %v1936
      %v2062 = vadd.f32 %v2026, %v1938
      %v2063 = vadd.f32 %v2027, %v1941
      %v2064 = vadd.f32 %v2028, %v1943
      %v2065 = vadd.f32 %v2029, %v1946
      %v2066 = vadd.f32 %v2030, %v1948
      %v2067 = vadd.f32 %v2031, %v1951
      %v2068 = vadd.f32 %v2032, %v1953
      %v2069 = vadd.f32 %v2033, %v1956
      %v2070 = vadd.f32 %v2034, %v1958
      %v2071 = vadd.f32 %v2035, %v1961
      %v2072 = vadd.f32 %v2036, %v1963
      %v2073 = vadd.f32 %v2037, %v1966
      %v2074 = vadd.f32 %v2038, %v1968
      %v2075 = vadd.f32 %v2039, %v1971
      %v2076 = vadd.f32 %v2040, %v1973
      %v2077 = vadd.f32 %v2041, %v1976
      %v2078 = vadd.f32 %v2042, %v1978
      %v2079 = vadd.f32 %v2043, %v1981
      %v2080 = vadd.f32 %v2044, %v1983
      %v2081 = vadd.f32 %v2045, %v1986
      %v2082 = vadd.f32 %v2046, %v1988
      %v2083 = vadd.f32 %v2047, %v1991
      %v2084 = vadd.f32 %v2048, %v1993
      %v2085 = vadd.f32 %v2049, %v1996
      %v2086 = vadd.f32 %v2050, %v1998
      %v2087 = vadd.f32 %v2051, %v2001
      %v2088 = vadd.f32 %v2052, %v2003
      %v2089 = vadd.f32 %v2053, %v2006
      %v2090 = vadd.f32 %v2054, %v2008
      %v2091 = vadd.f32 %v2055, %v2011
      %v2092 = vadd.f32 %v2056, %v2013
      %v2093 = vadd.f32 %v2057, %v2016
      %v2094 = vadd.f32 %v2058, %v2018
      %v2095 = vadd.f32 %v2059, %v2021
      %v2096 = vadd.f32 %v2060, %v2023
      %2097 = vst.msk [vmem:[#allocation3] sm:$0xff] %vm172, %v2061
      %2098 = vst.msk [vmem:[#allocation3 + $0x8] sm:$0xff] %vm172, %v2062
      %2099 = vst.msk [vmem:[#allocation3 + $0x10] sm:$0xff] %vm172, %v2063
      %2100 = vst.msk [vmem:[#allocation3 + $0x18] sm:$0xff] %vm172, %v2064
      %2101 = vst.msk [vmem:[#allocation3 + $0x20] sm:$0xff] %vm172, %v2065
      %2102 = vst.msk [vmem:[#allocation3 + $0x28] sm:$0xff] %vm172, %v2066
      %2103 = vst.msk [vmem:[#allocation3 + $0x30] sm:$0xff] %vm172, %v2067
      %2104 = vst.msk [vmem:[#allocation3 + $0x38] sm:$0xff] %vm172, %v2068
      %2105 = vst.msk [vmem:[#allocation3 + $0x40] sm:$0xff] %vm172, %v2069
      %2106 = vst.msk [vmem:[#allocation3 + $0x48] sm:$0xff] %vm172, %v2070
      %2107 = vst.msk [vmem:[#allocation3 + $0x50] sm:$0xff] %vm172, %v2071
      %2108 = vst.msk [vmem:[#allocation3 + $0x58] sm:$0xff] %vm172, %v2072
      %2109 = vst.msk [vmem:[#allocation3 + $0x60] sm:$0xff] %vm172, %v2073
      %2110 = vst.msk [vmem:[#allocation3 + $0x68] sm:$0xff] %vm172, %v2074
      %2111 = vst.msk [vmem:[#allocation3 + $0x70] sm:$0xff] %vm172, %v2075
      %2112 = vst.msk [vmem:[#allocation3 + $0x78] sm:$0xff] %vm172, %v2076
      %2113 = vst.msk [vmem:[#allocation3 + $0x80] sm:$0xff] %vm172, %v2077
      %2114 = vst.msk [vmem:[#allocation3 + $0x88] sm:$0xff] %vm172, %v2078
      %2115 = vst.msk [vmem:[#allocation3 + $0x90] sm:$0xff] %vm172, %v2079
      %2116 = vst.msk [vmem:[#allocation3 + $0x98] sm:$0xff] %vm172, %v2080
      %2117 = vst.msk [vmem:[#allocation3 + $0xa0] sm:$0xff] %vm172, %v2081
      %2118 = vst.msk [vmem:[#allocation3 + $0xa8] sm:$0xff] %vm172, %v2082
      %2119 = vst.msk [vmem:[#allocation3 + $0xb0] sm:$0xff] %vm172, %v2083
      %2120 = vst.msk [vmem:[#allocation3 + $0xb8] sm:$0xff] %vm172, %v2084
      %2121 = vst.msk [vmem:[#allocation3 + $0xc0] sm:$0xff] %vm172, %v2085
      %2122 = vst.msk [vmem:[#allocation3 + $0xc8] sm:$0xff] %vm172, %v2086
      %2123 = vst.msk [vmem:[#allocation3 + $0xd0] sm:$0xff] %vm172, %v2087
      %2124 = vst.msk [vmem:[#allocation3 + $0xd8] sm:$0xff] %vm172, %v2088
      %2125 = vst.msk [vmem:[#allocation3 + $0xe0] sm:$0xff] %vm172, %v2089
      %2126 = vst.msk [vmem:[#allocation3 + $0xe8] sm:$0xff] %vm172, %v2090
      %2127 = vst.msk [vmem:[#allocation3 + $0xf0] sm:$0xff] %vm172, %v2091
      %2128 = vst.msk [vmem:[#allocation3 + $0xf8] sm:$0xff] %vm172, %v2092
      %2129 = vst.msk [vmem:[#allocation3 + $0x100] sm:$0xff] %vm172, %v2093
      %2130 = vst.msk [vmem:[#allocation3 + $0x108] sm:$0xff] %vm172, %v2094
      %2131 = vst.msk [vmem:[#allocation3 + $0x110] sm:$0xff] %vm172, %v2095
      %2132 = vst.msk [vmem:[#allocation3 + $0x118] sm:$0xff] %vm172, %v2096
      %v2133 = vld [vmem:[#allocation2 + $0x24] sm:$0xff]
      %v2134 = vld [vmem:[#allocation2 + $0x2c] sm:$0xff]
      %v2135 = vld [vmem:[#allocation2 + $0x34] sm:$0xff]
      %v2136 = vld [vmem:[#allocation2 + $0x3c] sm:$0xff]
      %v2137 = vld [vmem:[#allocation2 + $0x44] sm:$0xff]
      %v2138 = vld [vmem:[#allocation2 + $0x4c] sm:$0xff]
      %v2139 = vld [vmem:[#allocation2 + $0x54] sm:$0xff]
      %v2140 = vld [vmem:[#allocation2 + $0x5c] sm:$0xff]
      %v2141 = vld [vmem:[#allocation2 + $0x64] sm:$0xff]
      %v2142 = vld [vmem:[#allocation2 + $0x6c] sm:$0xff]
      %v2143 = vld [vmem:[#allocation2 + $0x74] sm:$0xff]
      %v2144 = vld [vmem:[#allocation2 + $0x7c] sm:$0xff]
      %v2145 = vld [vmem:[#allocation2 + $0x84] sm:$0xff]
      %v2146 = vld [vmem:[#allocation2 + $0x8c] sm:$0xff]
      %v2147 = vld [vmem:[#allocation2 + $0x94] sm:$0xff]
      %v2148 = vld [vmem:[#allocation2 + $0x9c] sm:$0xff]
      %v2149 = vld [vmem:[#allocation2 + $0xa4] sm:$0xff]
      %v2150 = vld [vmem:[#allocation2 + $0xac] sm:$0xff]
      %v2151 = vld [vmem:[#allocation2 + $0xb4] sm:$0xff]
      %v2152 = vld [vmem:[#allocation2 + $0xbc] sm:$0xff]
      %v2153 = vld [vmem:[#allocation2 + $0xc4] sm:$0xff]
      %v2154 = vld [vmem:[#allocation2 + $0xcc] sm:$0xff]
      %v2155 = vld [vmem:[#allocation2 + $0xd4] sm:$0xff]
      %v2156 = vld [vmem:[#allocation2 + $0xdc] sm:$0xff]
      %v2157 = vld [vmem:[#allocation2 + $0xe4] sm:$0xff]
      %v2158 = vld [vmem:[#allocation2 + $0xec] sm:$0xff]
      %v2159 = vld [vmem:[#allocation2 + $0xf4] sm:$0xff]
      %v2160 = vld [vmem:[#allocation2 + $0xfc] sm:$0xff]
      %v2161 = vld [vmem:[#allocation2 + $0x104] sm:$0xff]
      %v2162 = vld [vmem:[#allocation2 + $0x10c] sm:$0xff]
      %v2163 = vld [vmem:[#allocation2 + $0x114] sm:$0xff]
      %v2164 = vld [vmem:[#allocation2 + $0x11c] sm:$0xff]
      %v2165 = vld [vmem:[#allocation2 + $0x124] sm:$0xff]
      %v2166 = vld [vmem:[#allocation2 + $0x12c] sm:$0xff]
      %v2167 = vld [vmem:[#allocation2 + $0x134] sm:$0xff]
      %v2168 = vld [vmem:[#allocation2 + $0x13c] sm:$0xff]
      %v2169 = vpack.c.bf16 %v2134, %v2133
      %v2170 = vpack.c.bf16 %v2136, %v2135
      %v2171 = vpack.c.bf16 %v2138, %v2137
      %v2172 = vpack.c.bf16 %v2140, %v2139
      %v2173 = vpack.c.bf16 %v2142, %v2141
      %v2174 = vpack.c.bf16 %v2144, %v2143
      %v2175 = vpack.c.bf16 %v2146, %v2145
      %v2176 = vpack.c.bf16 %v2148, %v2147
      %v2177 = vpack.c.bf16 %v2150, %v2149
      %v2178 = vpack.c.bf16 %v2152, %v2151
      %v2179 = vpack.c.bf16 %v2154, %v2153
      %v2180 = vpack.c.bf16 %v2156, %v2155
      %v2181 = vpack.c.bf16 %v2158, %v2157
      %v2182 = vpack.c.bf16 %v2160, %v2159
      %v2183 = vpack.c.bf16 %v2162, %v2161
      %v2184 = vpack.c.bf16 %v2164, %v2163
      %v2185 = vpack.c.bf16 %v2166, %v2165
      %v2186 = vpack.c.bf16 %v2168, %v2167
      %s2187 = scalar_lea.vmem %s1, 12
      %v2188 = vld [vmem:[%s2187] sm:$0x3]
      %v2190 = vsel %vm172, %v2169, 0
      %v2193 = vsel %vm172, %v2170, 0
      %v2196 = vsel %vm172, %v2171, 0
      %v2199 = vsel %vm172, %v2172, 0
      %v2202 = vsel %vm172, %v2173, 0
      %v2205 = vsel %vm172, %v2174, 0
      %v2208 = vsel %vm172, %v2175, 0
      %v2211 = vsel %vm172, %v2176, 0
      %v2214 = vsel %vm172, %v2177, 0
      %v2217 = vsel %vm172, %v2178, 0
      %v2220 = vsel %vm172, %v2179, 0
      %v2223 = vsel %vm172, %v2180, 0
      %v2226 = vsel %vm172, %v2181, 0
      %v2229 = vsel %vm172, %v2182, 0
      %v2232 = vsel %vm172, %v2183, 0
      %v2235 = vsel %vm172, %v2184, 0
      %v2238 = vsel %vm172, %v2185, 0
      %v2241 = vsel %vm172, %v2186, 0
      %v2244 = vsel %vm394, %v2188, 0
      %2246 = vmatpush.bf16.msra.mxu0 0
      %2247 = vmatpush.bf16.msra.mxu0 0
      %2248 = vmatpush.bf16.msra.mxu0 0
      %2249 = vmatpush.bf16.msra.mxu0 0
      %2250 = vmatpush.bf16.msra.mxu0 0
      %2251 = vmatpush.bf16.msra.mxu0 0
      %2252 = vmatpush.bf16.msra.mxu0 0
      %2253 = vmatpush.bf16.msra.mxu0 %v2244
      %2254 = vmatmul.bf16.gmra.mxu0 %v2190
      %v2255 = vpop.f32.mrf.mxu0
      %v2256 = vadd.f32 0.0, %v2255
      %v2257 = vpop.f32.mrf.mxu0
      %v2258 = vadd.f32 0.0, %v2257
      %2259 = vmatmul.bf16.gmra.mxu0 %v2193
      %v2260 = vpop.f32.mrf.mxu0
      %v2261 = vadd.f32 0.0, %v2260
      %v2262 = vpop.f32.mrf.mxu0
      %v2263 = vadd.f32 0.0, %v2262
      %2264 = vmatmul.bf16.gmra.mxu0 %v2196
      %v2265 = vpop.f32.mrf.mxu0
      %v2266 = vadd.f32 0.0, %v2265
      %v2267 = vpop.f32.mrf.mxu0
      %v2268 = vadd.f32 0.0, %v2267
      %2269 = vmatmul.bf16.gmra.mxu0 %v2199
      %v2270 = vpop.f32.mrf.mxu0
      %v2271 = vadd.f32 0.0, %v2270
      %v2272 = vpop.f32.mrf.mxu0
      %v2273 = vadd.f32 0.0, %v2272
      %2274 = vmatmul.bf16.gmra.mxu0 %v2202
      %v2275 = vpop.f32.mrf.mxu0
      %v2276 = vadd.f32 0.0, %v2275
      %v2277 = vpop.f32.mrf.mxu0
      %v2278 = vadd.f32 0.0, %v2277
      %2279 = vmatmul.bf16.gmra.mxu0 %v2205
      %v2280 = vpop.f32.mrf.mxu0
      %v2281 = vadd.f32 0.0, %v2280
      %v2282 = vpop.f32.mrf.mxu0
      %v2283 = vadd.f32 0.0, %v2282
      %2284 = vmatmul.bf16.gmra.mxu0 %v2208
      %v2285 = vpop.f32.mrf.mxu0
      %v2286 = vadd.f32 0.0, %v2285
      %v2287 = vpop.f32.mrf.mxu0
      %v2288 = vadd.f32 0.0, %v2287
      %2289 = vmatmul.bf16.gmra.mxu0 %v2211
      %v2290 = vpop.f32.mrf.mxu0
      %v2291 = vadd.f32 0.0, %v2290
      %v2292 = vpop.f32.mrf.mxu0
      %v2293 = vadd.f32 0.0, %v2292
      %2294 = vmatmul.bf16.gmra.mxu0 %v2214
      %v2295 = vpop.f32.mrf.mxu0
      %v2296 = vadd.f32 0.0, %v2295
      %v2297 = vpop.f32.mrf.mxu0
      %v2298 = vadd.f32 0.0, %v2297
      %2299 = vmatmul.bf16.gmra.mxu0 %v2217
      %v2300 = vpop.f32.mrf.mxu0
      %v2301 = vadd.f32 0.0, %v2300
      %v2302 = vpop.f32.mrf.mxu0
      %v2303 = vadd.f32 0.0, %v2302
      %2304 = vmatmul.bf16.gmra.mxu0 %v2220
      %v2305 = vpop.f32.mrf.mxu0
      %v2306 = vadd.f32 0.0, %v2305
      %v2307 = vpop.f32.mrf.mxu0
      %v2308 = vadd.f32 0.0, %v2307
      %2309 = vmatmul.bf16.gmra.mxu0 %v2223
      %v2310 = vpop.f32.mrf.mxu0
      %v2311 = vadd.f32 0.0, %v2310
      %v2312 = vpop.f32.mrf.mxu0
      %v2313 = vadd.f32 0.0, %v2312
      %2314 = vmatmul.bf16.gmra.mxu0 %v2226
      %v2315 = vpop.f32.mrf.mxu0
      %v2316 = vadd.f32 0.0, %v2315
      %v2317 = vpop.f32.mrf.mxu0
      %v2318 = vadd.f32 0.0, %v2317
      %2319 = vmatmul.bf16.gmra.mxu0 %v2229
      %v2320 = vpop.f32.mrf.mxu0
      %v2321 = vadd.f32 0.0, %v2320
      %v2322 = vpop.f32.mrf.mxu0
      %v2323 = vadd.f32 0.0, %v2322
      %2324 = vmatmul.bf16.gmra.mxu0 %v2232
      %v2325 = vpop.f32.mrf.mxu0
      %v2326 = vadd.f32 0.0, %v2325
      %v2327 = vpop.f32.mrf.mxu0
      %v2328 = vadd.f32 0.0, %v2327
      %2329 = vmatmul.bf16.gmra.mxu0 %v2235
      %v2330 = vpop.f32.mrf.mxu0
      %v2331 = vadd.f32 0.0, %v2330
      %v2332 = vpop.f32.mrf.mxu0
      %v2333 = vadd.f32 0.0, %v2332
      %2334 = vmatmul.bf16.gmra.mxu0 %v2238
      %v2335 = vpop.f32.mrf.mxu0
      %v2336 = vadd.f32 0.0, %v2335
      %v2337 = vpop.f32.mrf.mxu0
      %v2338 = vadd.f32 0.0, %v2337
      %2339 = vmatmul.bf16.gmra.mxu0 %v2241
      %v2340 = vpop.f32.mrf.mxu0
      %v2341 = vadd.f32 0.0, %v2340
      %v2342 = vpop.f32.mrf.mxu0
      %v2343 = vadd.f32 0.0, %v2342
      %2344 = vdwg.mxu0
      %v2345 = vld [vmem:[#allocation3] sm:$0xff]
      %v2346 = vld [vmem:[#allocation3 + $0x8] sm:$0xff]
      %v2347 = vld [vmem:[#allocation3 + $0x10] sm:$0xff]
      %v2348 = vld [vmem:[#allocation3 + $0x18] sm:$0xff]
      %v2349 = vld [vmem:[#allocation3 + $0x20] sm:$0xff]
      %v2350 = vld [vmem:[#allocation3 + $0x28] sm:$0xff]
      %v2351 = vld [vmem:[#allocation3 + $0x30] sm:$0xff]
      %v2352 = vld [vmem:[#allocation3 + $0x38] sm:$0xff]
      %v2353 = vld [vmem:[#allocation3 + $0x40] sm:$0xff]
      %v2354 = vld [vmem:[#allocation3 + $0x48] sm:$0xff]
      %v2355 = vld [vmem:[#allocation3 + $0x50] sm:$0xff]
      %v2356 = vld [vmem:[#allocation3 + $0x58] sm:$0xff]
      %v2357 = vld [vmem:[#allocation3 + $0x60] sm:$0xff]
      %v2358 = vld [vmem:[#allocation3 + $0x68] sm:$0xff]
      %v2359 = vld [vmem:[#allocation3 + $0x70] sm:$0xff]
      %v2360 = vld [vmem:[#allocation3 + $0x78] sm:$0xff]
      %v2361 = vld [vmem:[#allocation3 + $0x80] sm:$0xff]
      %v2362 = vld [vmem:[#allocation3 + $0x88] sm:$0xff]
      %v2363 = vld [vmem:[#allocation3 + $0x90] sm:$0xff]
      %v2364 = vld [vmem:[#allocation3 + $0x98] sm:$0xff]
      %v2365 = vld [vmem:[#allocation3 + $0xa0] sm:$0xff]
      %v2366 = vld [vmem:[#allocation3 + $0xa8] sm:$0xff]
      %v2367 = vld [vmem:[#allocation3 + $0xb0] sm:$0xff]
      %v2368 = vld [vmem:[#allocation3 + $0xb8] sm:$0xff]
      %v2369 = vld [vmem:[#allocation3 + $0xc0] sm:$0xff]
      %v2370 = vld [vmem:[#allocation3 + $0xc8] sm:$0xff]
      %v2371 = vld [vmem:[#allocation3 + $0xd0] sm:$0xff]
      %v2372 = vld [vmem:[#allocation3 + $0xd8] sm:$0xff]
      %v2373 = vld [vmem:[#allocation3 + $0xe0] sm:$0xff]
      %v2374 = vld [vmem:[#allocation3 + $0xe8] sm:$0xff]
      %v2375 = vld [vmem:[#allocation3 + $0xf0] sm:$0xff]
      %v2376 = vld [vmem:[#allocation3 + $0xf8] sm:$0xff]
      %v2377 = vld [vmem:[#allocation3 + $0x100] sm:$0xff]
      %v2378 = vld [vmem:[#allocation3 + $0x108] sm:$0xff]
      %v2379 = vld [vmem:[#allocation3 + $0x110] sm:$0xff]
      %v2380 = vld [vmem:[#allocation3 + $0x118] sm:$0xff]
      %v2381 = vadd.f32 %v2345, %v2256
      %v2382 = vadd.f32 %v2346, %v2258
      %v2383 = vadd.f32 %v2347, %v2261
      %v2384 = vadd.f32 %v2348, %v2263
      %v2385 = vadd.f32 %v2349, %v2266
      %v2386 = vadd.f32 %v2350, %v2268
      %v2387 = vadd.f32 %v2351, %v2271
      %v2388 = vadd.f32 %v2352, %v2273
      %v2389 = vadd.f32 %v2353, %v2276
      %v2390 = vadd.f32 %v2354, %v2278
      %v2391 = vadd.f32 %v2355, %v2281
      %v2392 = vadd.f32 %v2356, %v2283
      %v2393 = vadd.f32 %v2357, %v2286
      %v2394 = vadd.f32 %v2358, %v2288
      %v2395 = vadd.f32 %v2359, %v2291
      %v2396 = vadd.f32 %v2360, %v2293
      %v2397 = vadd.f32 %v2361, %v2296
      %v2398 = vadd.f32 %v2362, %v2298
      %v2399 = vadd.f32 %v2363, %v2301
      %v2400 = vadd.f32 %v2364, %v2303
      %v2401 = vadd.f32 %v2365, %v2306
      %v2402 = vadd.f32 %v2366, %v2308
      %v2403 = vadd.f32 %v2367, %v2311
      %v2404 = vadd.f32 %v2368, %v2313
      %v2405 = vadd.f32 %v2369, %v2316
      %v2406 = vadd.f32 %v2370, %v2318
      %v2407 = vadd.f32 %v2371, %v2321
      %v2408 = vadd.f32 %v2372, %v2323
      %v2409 = vadd.f32 %v2373, %v2326
      %v2410 = vadd.f32 %v2374, %v2328
      %v2411 = vadd.f32 %v2375, %v2331
      %v2412 = vadd.f32 %v2376, %v2333
      %v2413 = vadd.f32 %v2377, %v2336
      %v2414 = vadd.f32 %v2378, %v2338
      %v2415 = vadd.f32 %v2379, %v2341
      %v2416 = vadd.f32 %v2380, %v2343
      %2417 = vst.msk [vmem:[#allocation3] sm:$0xff] %vm172, %v2381
      %2418 = vst.msk [vmem:[#allocation3 + $0x8] sm:$0xff] %vm172, %v2382
      %2419 = vst.msk [vmem:[#allocation3 + $0x10] sm:$0xff] %vm172, %v2383
      %2420 = vst.msk [vmem:[#allocation3 + $0x18] sm:$0xff] %vm172, %v2384
      %2421 = vst.msk [vmem:[#allocation3 + $0x20] sm:$0xff] %vm172, %v2385
      %2422 = vst.msk [vmem:[#allocation3 + $0x28] sm:$0xff] %vm172, %v2386
      %2423 = vst.msk [vmem:[#allocation3 + $0x30] sm:$0xff] %vm172, %v2387
      %2424 = vst.msk [vmem:[#allocation3 + $0x38] sm:$0xff] %vm172, %v2388
      %2425 = vst.msk [vmem:[#allocation3 + $0x40] sm:$0xff] %vm172, %v2389
      %2426 = vst.msk [vmem:[#allocation3 + $0x48] sm:$0xff] %vm172, %v2390
      %2427 = vst.msk [vmem:[#allocation3 + $0x50] sm:$0xff] %vm172, %v2391
      %2428 = vst.msk [vmem:[#allocation3 + $0x58] sm:$0xff] %vm172, %v2392
      %2429 = vst.msk [vmem:[#allocation3 + $0x60] sm:$0xff] %vm172, %v2393
      %2430 = vst.msk [vmem:[#allocation3 + $0x68] sm:$0xff] %vm172, %v2394
      %2431 = vst.msk [vmem:[#allocation3 + $0x70] sm:$0xff] %vm172, %v2395
      %2432 = vst.msk [vmem:[#allocation3 + $0x78] sm:$0xff] %vm172, %v2396
      %2433 = vst.msk [vmem:[#allocation3 + $0x80] sm:$0xff] %vm172, %v2397
      %2434 = vst.msk [vmem:[#allocation3 + $0x88] sm:$0xff] %vm172, %v2398
      %2435 = vst.msk [vmem:[#allocation3 + $0x90] sm:$0xff] %vm172, %v2399
      %2436 = vst.msk [vmem:[#allocation3 + $0x98] sm:$0xff] %vm172, %v2400
      %2437 = vst.msk [vmem:[#allocation3 + $0xa0] sm:$0xff] %vm172, %v2401
      %2438 = vst.msk [vmem:[#allocation3 + $0xa8] sm:$0xff] %vm172, %v2402
      %2439 = vst.msk [vmem:[#allocation3 + $0xb0] sm:$0xff] %vm172, %v2403
      %2440 = vst.msk [vmem:[#allocation3 + $0xb8] sm:$0xff] %vm172, %v2404
      %2441 = vst.msk [vmem:[#allocation3 + $0xc0] sm:$0xff] %vm172, %v2405
      %2442 = vst.msk [vmem:[#allocation3 + $0xc8] sm:$0xff] %vm172, %v2406
      %2443 = vst.msk [vmem:[#allocation3 + $0xd0] sm:$0xff] %vm172, %v2407
      %2444 = vst.msk [vmem:[#allocation3 + $0xd8] sm:$0xff] %vm172, %v2408
      %2445 = vst.msk [vmem:[#allocation3 + $0xe0] sm:$0xff] %vm172, %v2409
      %2446 = vst.msk [vmem:[#allocation3 + $0xe8] sm:$0xff] %vm172, %v2410
      %2447 = vst.msk [vmem:[#allocation3 + $0xf0] sm:$0xff] %vm172, %v2411
      %2448 = vst.msk [vmem:[#allocation3 + $0xf8] sm:$0xff] %vm172, %v2412
      %2449 = vst.msk [vmem:[#allocation3 + $0x100] sm:$0xff] %vm172, %v2413
      %2450 = vst.msk [vmem:[#allocation3 + $0x108] sm:$0xff] %vm172, %v2414
      %2451 = vst.msk [vmem:[#allocation3 + $0x110] sm:$0xff] %vm172, %v2415
      %2452 = vst.msk [vmem:[#allocation3 + $0x118] sm:$0xff] %vm172, %v2416
      %v2453 = vld [vmem:[#allocation2 + $0x25] sm:$0xff]
      %v2454 = vld [vmem:[#allocation2 + $0x2d] sm:$0xff]
      %v2455 = vld [vmem:[#allocation2 + $0x35] sm:$0xff]
      %v2456 = vld [vmem:[#allocation2 + $0x3d] sm:$0xff]
      %v2457 = vld [vmem:[#allocation2 + $0x45] sm:$0xff]
      %v2458 = vld [vmem:[#allocation2 + $0x4d] sm:$0xff]
      %v2459 = vld [vmem:[#allocation2 + $0x55] sm:$0xff]
      %v2460 = vld [vmem:[#allocation2 + $0x5d] sm:$0xff]
      %v2461 = vld [vmem:[#allocation2 + $0x65] sm:$0xff]
      %v2462 = vld [vmem:[#allocation2 + $0x6d] sm:$0xff]
      %v2463 = vld [vmem:[#allocation2 + $0x75] sm:$0xff]
      %v2464 = vld [vmem:[#allocation2 + $0x7d] sm:$0xff]
      %v2465 = vld [vmem:[#allocation2 + $0x85] sm:$0xff]
      %v2466 = vld [vmem:[#allocation2 + $0x8d] sm:$0xff]
      %v2467 = vld [vmem:[#allocation2 + $0x95] sm:$0xff]
      %v2468 = vld [vmem:[#allocation2 + $0x9d] sm:$0xff]
      %v2469 = vld [vmem:[#allocation2 + $0xa5] sm:$0xff]
      %v2470 = vld [vmem:[#allocation2 + $0xad] sm:$0xff]
      %v2471 = vld [vmem:[#allocation2 + $0xb5] sm:$0xff]
      %v2472 = vld [vmem:[#allocation2 + $0xbd] sm:$0xff]
      %v2473 = vld [vmem:[#allocation2 + $0xc5] sm:$0xff]
      %v2474 = vld [vmem:[#allocation2 + $0xcd] sm:$0xff]
      %v2475 = vld [vmem:[#allocation2 + $0xd5] sm:$0xff]
      %v2476 = vld [vmem:[#allocation2 + $0xdd] sm:$0xff]
      %v2477 = vld [vmem:[#allocation2 + $0xe5] sm:$0xff]
      %v2478 = vld [vmem:[#allocation2 + $0xed] sm:$0xff]
      %v2479 = vld [vmem:[#allocation2 + $0xf5] sm:$0xff]
      %v2480 = vld [vmem:[#allocation2 + $0xfd] sm:$0xff]
      %v2481 = vld [vmem:[#allocation2 + $0x105] sm:$0xff]
      %v2482 = vld [vmem:[#allocation2 + $0x10d] sm:$0xff]
      %v2483 = vld [vmem:[#allocation2 + $0x115] sm:$0xff]
      %v2484 = vld [vmem:[#allocation2 + $0x11d] sm:$0xff]
      %v2485 = vld [vmem:[#allocation2 + $0x125] sm:$0xff]
      %v2486 = vld [vmem:[#allocation2 + $0x12d] sm:$0xff]
      %v2487 = vld [vmem:[#allocation2 + $0x135] sm:$0xff]
      %v2488 = vld [vmem:[#allocation2 + $0x13d] sm:$0xff]
      %v2489 = vpack.c.bf16 %v2454, %v2453
      %v2490 = vpack.c.bf16 %v2456, %v2455
      %v2491 = vpack.c.bf16 %v2458, %v2457
      %v2492 = vpack.c.bf16 %v2460, %v2459
      %v2493 = vpack.c.bf16 %v2462, %v2461
      %v2494 = vpack.c.bf16 %v2464, %v2463
      %v2495 = vpack.c.bf16 %v2466, %v2465
      %v2496 = vpack.c.bf16 %v2468, %v2467
      %v2497 = vpack.c.bf16 %v2470, %v2469
      %v2498 = vpack.c.bf16 %v2472, %v2471
      %v2499 = vpack.c.bf16 %v2474, %v2473
      %v2500 = vpack.c.bf16 %v2476, %v2475
      %v2501 = vpack.c.bf16 %v2478, %v2477
      %v2502 = vpack.c.bf16 %v2480, %v2479
      %v2503 = vpack.c.bf16 %v2482, %v2481
      %v2504 = vpack.c.bf16 %v2484, %v2483
      %v2505 = vpack.c.bf16 %v2486, %v2485
      %v2506 = vpack.c.bf16 %v2488, %v2487
      %s2507 = scalar_lea.vmem %s1, 14
      %v2508 = vld [vmem:[%s2507] sm:$0x3]
      %v2510 = vsel %vm172, %v2489, 0
      %v2513 = vsel %vm172, %v2490, 0
      %v2516 = vsel %vm172, %v2491, 0
      %v2519 = vsel %vm172, %v2492, 0
      %v2522 = vsel %vm172, %v2493, 0
      %v2525 = vsel %vm172, %v2494, 0
      %v2528 = vsel %vm172, %v2495, 0
      %v2531 = vsel %vm172, %v2496, 0
      %v2534 = vsel %vm172, %v2497, 0
      %v2537 = vsel %vm172, %v2498, 0
      %v2540 = vsel %vm172, %v2499, 0
      %v2543 = vsel %vm172, %v2500, 0
      %v2546 = vsel %vm172, %v2501, 0
      %v2549 = vsel %vm172, %v2502, 0
      %v2552 = vsel %vm172, %v2503, 0
      %v2555 = vsel %vm172, %v2504, 0
      %v2558 = vsel %vm172, %v2505, 0
      %v2561 = vsel %vm172, %v2506, 0
      %v2564 = vsel %vm394, %v2508, 0
      %2566 = vmatpush.bf16.msra.mxu0 0
      %2567 = vmatpush.bf16.msra.mxu0 0
      %2568 = vmatpush.bf16.msra.mxu0 0
      %2569 = vmatpush.bf16.msra.mxu0 0
      %2570 = vmatpush.bf16.msra.mxu0 0
      %2571 = vmatpush.bf16.msra.mxu0 0
      %2572 = vmatpush.bf16.msra.mxu0 0
      %2573 = vmatpush.bf16.msra.mxu0 %v2564
      %2574 = vmatmul.bf16.gmra.mxu0 %v2510
      %v2575 = vpop.f32.mrf.mxu0
      %v2576 = vadd.f32 0.0, %v2575
      %v2577 = vpop.f32.mrf.mxu0
      %v2578 = vadd.f32 0.0, %v2577
      %2579 = vmatmul.bf16.gmra.mxu0 %v2513
      %v2580 = vpop.f32.mrf.mxu0
      %v2581 = vadd.f32 0.0, %v2580
      %v2582 = vpop.f32.mrf.mxu0
      %v2583 = vadd.f32 0.0, %v2582
      %2584 = vmatmul.bf16.gmra.mxu0 %v2516
      %v2585 = vpop.f32.mrf.mxu0
      %v2586 = vadd.f32 0.0, %v2585
      %v2587 = vpop.f32.mrf.mxu0
      %v2588 = vadd.f32 0.0, %v2587
      %2589 = vmatmul.bf16.gmra.mxu0 %v2519
      %v2590 = vpop.f32.mrf.mxu0
      %v2591 = vadd.f32 0.0, %v2590
      %v2592 = vpop.f32.mrf.mxu0
      %v2593 = vadd.f32 0.0, %v2592
      %2594 = vmatmul.bf16.gmra.mxu0 %v2522
      %v2595 = vpop.f32.mrf.mxu0
      %v2596 = vadd.f32 0.0, %v2595
      %v2597 = vpop.f32.mrf.mxu0
      %v2598 = vadd.f32 0.0, %v2597
      %2599 = vmatmul.bf16.gmra.mxu0 %v2525
      %v2600 = vpop.f32.mrf.mxu0
      %v2601 = vadd.f32 0.0, %v2600
      %v2602 = vpop.f32.mrf.mxu0
      %v2603 = vadd.f32 0.0, %v2602
      %2604 = vmatmul.bf16.gmra.mxu0 %v2528
      %v2605 = vpop.f32.mrf.mxu0
      %v2606 = vadd.f32 0.0, %v2605
      %v2607 = vpop.f32.mrf.mxu0
      %v2608 = vadd.f32 0.0, %v2607
      %2609 = vmatmul.bf16.gmra.mxu0 %v2531
      %v2610 = vpop.f32.mrf.mxu0
      %v2611 = vadd.f32 0.0, %v2610
      %v2612 = vpop.f32.mrf.mxu0
      %v2613 = vadd.f32 0.0, %v2612
      %2614 = vmatmul.bf16.gmra.mxu0 %v2534
      %v2615 = vpop.f32.mrf.mxu0
      %v2616 = vadd.f32 0.0, %v2615
      %v2617 = vpop.f32.mrf.mxu0
      %v2618 = vadd.f32 0.0, %v2617
      %2619 = vmatmul.bf16.gmra.mxu0 %v2537
      %v2620 = vpop.f32.mrf.mxu0
      %v2621 = vadd.f32 0.0, %v2620
      %v2622 = vpop.f32.mrf.mxu0
      %v2623 = vadd.f32 0.0, %v2622
      %2624 = vmatmul.bf16.gmra.mxu0 %v2540
      %v2625 = vpop.f32.mrf.mxu0
      %v2626 = vadd.f32 0.0, %v2625
      %v2627 = vpop.f32.mrf.mxu0
      %v2628 = vadd.f32 0.0, %v2627
      %2629 = vmatmul.bf16.gmra.mxu0 %v2543
      %v2630 = vpop.f32.mrf.mxu0
      %v2631 = vadd.f32 0.0, %v2630
      %v2632 = vpop.f32.mrf.mxu0
      %v2633 = vadd.f32 0.0, %v2632
      %2634 = vmatmul.bf16.gmra.mxu0 %v2546
      %v2635 = vpop.f32.mrf.mxu0
      %v2636 = vadd.f32 0.0, %v2635
      %v2637 = vpop.f32.mrf.mxu0
      %v2638 = vadd.f32 0.0, %v2637
      %2639 = vmatmul.bf16.gmra.mxu0 %v2549
      %v2640 = vpop.f32.mrf.mxu0
      %v2641 = vadd.f32 0.0, %v2640
      %v2642 = vpop.f32.mrf.mxu0
      %v2643 = vadd.f32 0.0, %v2642
      %2644 = vmatmul.bf16.gmra.mxu0 %v2552
      %v2645 = vpop.f32.mrf.mxu0
      %v2646 = vadd.f32 0.0, %v2645
      %v2647 = vpop.f32.mrf.mxu0
      %v2648 = vadd.f32 0.0, %v2647
      %2649 = vmatmul.bf16.gmra.mxu0 %v2555
      %v2650 = vpop.f32.mrf.mxu0
      %v2651 = vadd.f32 0.0, %v2650
      %v2652 = vpop.f32.mrf.mxu0
      %v2653 = vadd.f32 0.0, %v2652
      %2654 = vmatmul.bf16.gmra.mxu0 %v2558
      %v2655 = vpop.f32.mrf.mxu0
      %v2656 = vadd.f32 0.0, %v2655
      %v2657 = vpop.f32.mrf.mxu0
      %v2658 = vadd.f32 0.0, %v2657
      %2659 = vmatmul.bf16.gmra.mxu0 %v2561
      %v2660 = vpop.f32.mrf.mxu0
      %v2661 = vadd.f32 0.0, %v2660
      %v2662 = vpop.f32.mrf.mxu0
      %v2663 = vadd.f32 0.0, %v2662
      %2664 = vdwg.mxu0
      %v2665 = vld [vmem:[#allocation3] sm:$0xff]
      %v2666 = vld [vmem:[#allocation3 + $0x8] sm:$0xff]
      %v2667 = vld [vmem:[#allocation3 + $0x10] sm:$0xff]
      %v2668 = vld [vmem:[#allocation3 + $0x18] sm:$0xff]
      %v2669 = vld [vmem:[#allocation3 + $0x20] sm:$0xff]
      %v2670 = vld [vmem:[#allocation3 + $0x28] sm:$0xff]
      %v2671 = vld [vmem:[#allocation3 + $0x30] sm:$0xff]
      %v2672 = vld [vmem:[#allocation3 + $0x38] sm:$0xff]
      %v2673 = vld [vmem:[#allocation3 + $0x40] sm:$0xff]
      %v2674 = vld [vmem:[#allocation3 + $0x48] sm:$0xff]
      %v2675 = vld [vmem:[#allocation3 + $0x50] sm:$0xff]
      %v2676 = vld [vmem:[#allocation3 + $0x58] sm:$0xff]
      %v2677 = vld [vmem:[#allocation3 + $0x60] sm:$0xff]
      %v2678 = vld [vmem:[#allocation3 + $0x68] sm:$0xff]
      %v2679 = vld [vmem:[#allocation3 + $0x70] sm:$0xff]
      %v2680 = vld [vmem:[#allocation3 + $0x78] sm:$0xff]
      %v2681 = vld [vmem:[#allocation3 + $0x80] sm:$0xff]
      %v2682 = vld [vmem:[#allocation3 + $0x88] sm:$0xff]
      %v2683 = vld [vmem:[#allocation3 + $0x90] sm:$0xff]
      %v2684 = vld [vmem:[#allocation3 + $0x98] sm:$0xff]
      %v2685 = vld [vmem:[#allocation3 + $0xa0] sm:$0xff]
      %v2686 = vld [vmem:[#allocation3 + $0xa8] sm:$0xff]
      %v2687 = vld [vmem:[#allocation3 + $0xb0] sm:$0xff]
      %v2688 = vld [vmem:[#allocation3 + $0xb8] sm:$0xff]
      %v2689 = vld [vmem:[#allocation3 + $0xc0] sm:$0xff]
      %v2690 = vld [vmem:[#allocation3 + $0xc8] sm:$0xff]
      %v2691 = vld [vmem:[#allocation3 + $0xd0] sm:$0xff]
      %v2692 = vld [vmem:[#allocation3 + $0xd8] sm:$0xff]
      %v2693 = vld [vmem:[#allocation3 + $0xe0] sm:$0xff]
      %v2694 = vld [vmem:[#allocation3 + $0xe8] sm:$0xff]
      %v2695 = vld [vmem:[#allocation3 + $0xf0] sm:$0xff]
      %v2696 = vld [vmem:[#allocation3 + $0xf8] sm:$0xff]
      %v2697 = vld [vmem:[#allocation3 + $0x100] sm:$0xff]
      %v2698 = vld [vmem:[#allocation3 + $0x108] sm:$0xff]
      %v2699 = vld [vmem:[#allocation3 + $0x110] sm:$0xff]
      %v2700 = vld [vmem:[#allocation3 + $0x118] sm:$0xff]
      %v2701 = vadd.f32 %v2665, %v2576
      %v2702 = vadd.f32 %v2666, %v2578
      %v2703 = vadd.f32 %v2667, %v2581
      %v2704 = vadd.f32 %v2668, %v2583
      %v2705 = vadd.f32 %v2669, %v2586
      %v2706 = vadd.f32 %v2670, %v2588
      %v2707 = vadd.f32 %v2671, %v2591
      %v2708 = vadd.f32 %v2672, %v2593
      %v2709 = vadd.f32 %v2673, %v2596
      %v2710 = vadd.f32 %v2674, %v2598
      %v2711 = vadd.f32 %v2675, %v2601
      %v2712 = vadd.f32 %v2676, %v2603
      %v2713 = vadd.f32 %v2677, %v2606
      %v2714 = vadd.f32 %v2678, %v2608
      %v2715 = vadd.f32 %v2679, %v2611
      %v2716 = vadd.f32 %v2680, %v2613
      %v2717 = vadd.f32 %v2681, %v2616
      %v2718 = vadd.f32 %v2682, %v2618
      %v2719 = vadd.f32 %v2683, %v2621
      %v2720 = vadd.f32 %v2684, %v2623
      %v2721 = vadd.f32 %v2685, %v2626
      %v2722 = vadd.f32 %v2686, %v2628
      %v2723 = vadd.f32 %v2687, %v2631
      %v2724 = vadd.f32 %v2688, %v2633
      %v2725 = vadd.f32 %v2689, %v2636
      %v2726 = vadd.f32 %v2690, %v2638
      %v2727 = vadd.f32 %v2691, %v2641
      %v2728 = vadd.f32 %v2692, %v2643
      %v2729 = vadd.f32 %v2693, %v2646
      %v2730 = vadd.f32 %v2694, %v2648
      %v2731 = vadd.f32 %v2695, %v2651
      %v2732 = vadd.f32 %v2696, %v2653
      %v2733 = vadd.f32 %v2697, %v2656
      %v2734 = vadd.f32 %v2698, %v2658
      %v2735 = vadd.f32 %v2699, %v2661
      %v2736 = vadd.f32 %v2700, %v2663
      %2737 = vst.msk [vmem:[#allocation3] sm:$0xff] %vm172, %v2701
      %2738 = vst.msk [vmem:[#allocation3 + $0x8] sm:$0xff] %vm172, %v2702
      %2739 = vst.msk [vmem:[#allocation3 + $0x10] sm:$0xff] %vm172, %v2703
      %2740 = vst.msk [vmem:[#allocation3 + $0x18] sm:$0xff] %vm172, %v2704
      %2741 = vst.msk [vmem:[#allocation3 + $0x20] sm:$0xff] %vm172, %v2705
      %2742 = vst.msk [vmem:[#allocation3 + $0x28] sm:$0xff] %vm172, %v2706
      %2743 = vst.msk [vmem:[#allocation3 + $0x30] sm:$0xff] %vm172, %v2707
      %2744 = vst.msk [vmem:[#allocation3 + $0x38] sm:$0xff] %vm172, %v2708
      %2745 = vst.msk [vmem:[#allocation3 + $0x40] sm:$0xff] %vm172, %v2709
      %2746 = vst.msk [vmem:[#allocation3 + $0x48] sm:$0xff] %vm172, %v2710
      %2747 = vst.msk [vmem:[#allocation3 + $0x50] sm:$0xff] %vm172, %v2711
      %2748 = vst.msk [vmem:[#allocation3 + $0x58] sm:$0xff] %vm172, %v2712
      %2749 = vst.msk [vmem:[#allocation3 + $0x60] sm:$0xff] %vm172, %v2713
      %2750 = vst.msk [vmem:[#allocation3 + $0x68] sm:$0xff] %vm172, %v2714
      %2751 = vst.msk [vmem:[#allocation3 + $0x70] sm:$0xff] %vm172, %v2715
      %2752 = vst.msk [vmem:[#allocation3 + $0x78] sm:$0xff] %vm172, %v2716
      %2753 = vst.msk [vmem:[#allocation3 + $0x80] sm:$0xff] %vm172, %v2717
      %2754 = vst.msk [vmem:[#allocation3 + $0x88] sm:$0xff] %vm172, %v2718
      %2755 = vst.msk [vmem:[#allocation3 + $0x90] sm:$0xff] %vm172, %v2719
      %2756 = vst.msk [vmem:[#allocation3 + $0x98] sm:$0xff] %vm172, %v2720
      %2757 = vst.msk [vmem:[#allocation3 + $0xa0] sm:$0xff] %vm172, %v2721
      %2758 = vst.msk [vmem:[#allocation3 + $0xa8] sm:$0xff] %vm172, %v2722
      %2759 = vst.msk [vmem:[#allocation3 + $0xb0] sm:$0xff] %vm172, %v2723
      %2760 = vst.msk [vmem:[#allocation3 + $0xb8] sm:$0xff] %vm172, %v2724
      %2761 = vst.msk [vmem:[#allocation3 + $0xc0] sm:$0xff] %vm172, %v2725
      %2762 = vst.msk [vmem:[#allocation3 + $0xc8] sm:$0xff] %vm172, %v2726
      %2763 = vst.msk [vmem:[#allocation3 + $0xd0] sm:$0xff] %vm172, %v2727
      %2764 = vst.msk [vmem:[#allocation3 + $0xd8] sm:$0xff] %vm172, %v2728
      %2765 = vst.msk [vmem:[#allocation3 + $0xe0] sm:$0xff] %vm172, %v2729
      %2766 = vst.msk [vmem:[#allocation3 + $0xe8] sm:$0xff] %vm172, %v2730
      %2767 = vst.msk [vmem:[#allocation3 + $0xf0] sm:$0xff] %vm172, %v2731
      %2768 = vst.msk [vmem:[#allocation3 + $0xf8] sm:$0xff] %vm172, %v2732
      %2769 = vst.msk [vmem:[#allocation3 + $0x100] sm:$0xff] %vm172, %v2733
      %2770 = vst.msk [vmem:[#allocation3 + $0x108] sm:$0xff] %vm172, %v2734
      %2771 = vst.msk [vmem:[#allocation3 + $0x110] sm:$0xff] %vm172, %v2735
      %2772 = vst.msk [vmem:[#allocation3 + $0x118] sm:$0xff] %vm172, %v2736
      %v2773 = vld [vmem:[#allocation2 + $0x26] sm:$0xff]
      %v2774 = vld [vmem:[#allocation2 + $0x2e] sm:$0xff]
      %v2775 = vld [vmem:[#allocation2 + $0x36] sm:$0xff]
      %v2776 = vld [vmem:[#allocation2 + $0x3e] sm:$0xff]
      %v2777 = vld [vmem:[#allocation2 + $0x46] sm:$0xff]
      %v2778 = vld [vmem:[#allocation2 + $0x4e] sm:$0xff]
      %v2779 = vld [vmem:[#allocation2 + $0x56] sm:$0xff]
      %v2780 = vld [vmem:[#allocation2 + $0x5e] sm:$0xff]
      %v2781 = vld [vmem:[#allocation2 + $0x66] sm:$0xff]
      %v2782 = vld [vmem:[#allocation2 + $0x6e] sm:$0xff]
      %v2783 = vld [vmem:[#allocation2 + $0x76] sm:$0xff]
      %v2784 = vld [vmem:[#allocation2 + $0x7e] sm:$0xff]
      %v2785 = vld [vmem:[#allocation2 + $0x86] sm:$0xff]
      %v2786 = vld [vmem:[#allocation2 + $0x8e] sm:$0xff]
      %v2787 = vld [vmem:[#allocation2 + $0x96] sm:$0xff]
      %v2788 = vld [vmem:[#allocation2 + $0x9e] sm:$0xff]
      %v2789 = vld [vmem:[#allocation2 + $0xa6] sm:$0xff]
      %v2790 = vld [vmem:[#allocation2 + $0xae] sm:$0xff]
      %v2791 = vld [vmem:[#allocation2 + $0xb6] sm:$0xff]
      %v2792 = vld [vmem:[#allocation2 + $0xbe] sm:$0xff]
      %v2793 = vld [vmem:[#allocation2 + $0xc6] sm:$0xff]
      %v2794 = vld [vmem:[#allocation2 + $0xce] sm:$0xff]
      %v2795 = vld [vmem:[#allocation2 + $0xd6] sm:$0xff]
      %v2796 = vld [vmem:[#allocation2 + $0xde] sm:$0xff]
      %v2797 = vld [vmem:[#allocation2 + $0xe6] sm:$0xff]
      %v2798 = vld [vmem:[#allocation2 + $0xee] sm:$0xff]
      %v2799 = vld [vmem:[#allocation2 + $0xf6] sm:$0xff]
      %v2800 = vld [vmem:[#allocation2 + $0xfe] sm:$0xff]
      %v2801 = vld [vmem:[#allocation2 + $0x106] sm:$0xff]
      %v2802 = vld [vmem:[#allocation2 + $0x10e] sm:$0xff]
      %v2803 = vld [vmem:[#allocation2 + $0x116] sm:$0xff]
      %v2804 = vld [vmem:[#allocation2 + $0x11e] sm:$0xff]
      %v2805 = vld [vmem:[#allocation2 + $0x126] sm:$0xff]
      %v2806 = vld [vmem:[#allocation2 + $0x12e] sm:$0xff]
      %v2807 = vld [vmem:[#allocation2 + $0x136] sm:$0xff]
      %v2808 = vld [vmem:[#allocation2 + $0x13e] sm:$0xff]
      %v2809 = vpack.c.bf16 %v2774, %v2773
      %v2810 = vpack.c.bf16 %v2776, %v2775
      %v2811 = vpack.c.bf16 %v2778, %v2777
      %v2812 = vpack.c.bf16 %v2780, %v2779
      %v2813 = vpack.c.bf16 %v2782, %v2781
      %v2814 = vpack.c.bf16 %v2784, %v2783
      %v2815 = vpack.c.bf16 %v2786, %v2785
      %v2816 = vpack.c.bf16 %v2788, %v2787
      %v2817 = vpack.c.bf16 %v2790, %v2789
      %v2818 = vpack.c.bf16 %v2792, %v2791
      %v2819 = vpack.c.bf16 %v2794, %v2793
      %v2820 = vpack.c.bf16 %v2796, %v2795
      %v2821 = vpack.c.bf16 %v2798, %v2797
      %v2822 = vpack.c.bf16 %v2800, %v2799
      %v2823 = vpack.c.bf16 %v2802, %v2801
      %v2824 = vpack.c.bf16 %v2804, %v2803
      %v2825 = vpack.c.bf16 %v2806, %v2805
      %v2826 = vpack.c.bf16 %v2808, %v2807
      %s2827 = scalar_lea.vmem %s1, 16
      %v2828 = vld [vmem:[%s2827] sm:$0x3]
      %v2830 = vsel %vm172, %v2809, 0
      %v2833 = vsel %vm172, %v2810, 0
      %v2836 = vsel %vm172, %v2811, 0
      %v2839 = vsel %vm172, %v2812, 0
      %v2842 = vsel %vm172, %v2813, 0
      %v2845 = vsel %vm172, %v2814, 0
      %v2848 = vsel %vm172, %v2815, 0
      %v2851 = vsel %vm172, %v2816, 0
      %v2854 = vsel %vm172, %v2817, 0
      %v2857 = vsel %vm172, %v2818, 0
      %v2860 = vsel %vm172, %v2819, 0
      %v2863 = vsel %vm172, %v2820, 0
      %v2866 = vsel %vm172, %v2821, 0
      %v2869 = vsel %vm172, %v2822, 0
      %v2872 = vsel %vm172, %v2823, 0
      %v2875 = vsel %vm172, %v2824, 0
      %v2878 = vsel %vm172, %v2825, 0
      %v2881 = vsel %vm172, %v2826, 0
      %v2884 = vsel %vm394, %v2828, 0
      %2886 = vmatpush.bf16.msra.mxu0 0
      %2887 = vmatpush.bf16.msra.mxu0 0
      %2888 = vmatpush.bf16.msra.mxu0 0
      %2889 = vmatpush.bf16.msra.mxu0 0
      %2890 = vmatpush.bf16.msra.mxu0 0
      %2891 = vmatpush.bf16.msra.mxu0 0
      %2892 = vmatpush.bf16.msra.mxu0 0
      %2893 = vmatpush.bf16.msra.mxu0 %v2884
      %2894 = vmatmul.bf16.gmra.mxu0 %v2830
      %v2895 = vpop.f32.mrf.mxu0
      %v2896 = vadd.f32 0.0, %v2895
      %v2897 = vpop.f32.mrf.mxu0
      %v2898 = vadd.f32 0.0, %v2897
      %2899 = vmatmul.bf16.gmra.mxu0 %v2833
      %v2900 = vpop.f32.mrf.mxu0
      %v2901 = vadd.f32 0.0, %v2900
      %v2902 = vpop.f32.mrf.mxu0
      %v2903 = vadd.f32 0.0, %v2902
      %2904 = vmatmul.bf16.gmra.mxu0 %v2836
      %v2905 = vpop.f32.mrf.mxu0
      %v2906 = vadd.f32 0.0, %v2905
      %v2907 = vpop.f32.mrf.mxu0
      %v2908 = vadd.f32 0.0, %v2907
      %2909 = vmatmul.bf16.gmra.mxu0 %v2839
      %v2910 = vpop.f32.mrf.mxu0
      %v2911 = vadd.f32 0.0, %v2910
      %v2912 = vpop.f32.mrf.mxu0
      %v2913 = vadd.f32 0.0, %v2912
      %2914 = vmatmul.bf16.gmra.mxu0 %v2842
      %v2915 = vpop.f32.mrf.mxu0
      %v2916 = vadd.f32 0.0, %v2915
      %v2917 = vpop.f32.mrf.mxu0
      %v2918 = vadd.f32 0.0, %v2917
      %2919 = vmatmul.bf16.gmra.mxu0 %v2845
      %v2920 = vpop.f32.mrf.mxu0
      %v2921 = vadd.f32 0.0, %v2920
      %v2922 = vpop.f32.mrf.mxu0
      %v2923 = vadd.f32 0.0, %v2922
      %2924 = vmatmul.bf16.gmra.mxu0 %v2848
      %v2925 = vpop.f32.mrf.mxu0
      %v2926 = vadd.f32 0.0, %v2925
      %v2927 = vpop.f32.mrf.mxu0
      %v2928 = vadd.f32 0.0, %v2927
      %2929 = vmatmul.bf16.gmra.mxu0 %v2851
      %v2930 = vpop.f32.mrf.mxu0
      %v2931 = vadd.f32 0.0, %v2930
      %v2932 = vpop.f32.mrf.mxu0
      %v2933 = vadd.f32 0.0, %v2932
      %2934 = vmatmul.bf16.gmra.mxu0 %v2854
      %v2935 = vpop.f32.mrf.mxu0
      %v2936 = vadd.f32 0.0, %v2935
      %v2937 = vpop.f32.mrf.mxu0
      %v2938 = vadd.f32 0.0, %v2937
      %2939 = vmatmul.bf16.gmra.mxu0 %v2857
      %v2940 = vpop.f32.mrf.mxu0
      %v2941 = vadd.f32 0.0, %v2940
      %v2942 = vpop.f32.mrf.mxu0
      %v2943 = vadd.f32 0.0, %v2942
      %2944 = vmatmul.bf16.gmra.mxu0 %v2860
      %v2945 = vpop.f32.mrf.mxu0
      %v2946 = vadd.f32 0.0, %v2945
      %v2947 = vpop.f32.mrf.mxu0
      %v2948 = vadd.f32 0.0, %v2947
      %2949 = vmatmul.bf16.gmra.mxu0 %v2863
      %v2950 = vpop.f32.mrf.mxu0
      %v2951 = vadd.f32 0.0, %v2950
      %v2952 = vpop.f32.mrf.mxu0
      %v2953 = vadd.f32 0.0, %v2952
      %2954 = vmatmul.bf16.gmra.mxu0 %v2866
      %v2955 = vpop.f32.mrf.mxu0
      %v2956 = vadd.f32 0.0, %v2955
      %v2957 = vpop.f32.mrf.mxu0
      %v2958 = vadd.f32 0.0, %v2957
      %2959 = vmatmul.bf16.gmra.mxu0 %v2869
      %v2960 = vpop.f32.mrf.mxu0
      %v2961 = vadd.f32 0.0, %v2960
      %v2962 = vpop.f32.mrf.mxu0
      %v2963 = vadd.f32 0.0, %v2962
      %2964 = vmatmul.bf16.gmra.mxu0 %v2872
      %v2965 = vpop.f32.mrf.mxu0
      %v2966 = vadd.f32 0.0, %v2965
      %v2967 = vpop.f32.mrf.mxu0
      %v2968 = vadd.f32 0.0, %v2967
      %2969 = vmatmul.bf16.gmra.mxu0 %v2875
      %v2970 = vpop.f32.mrf.mxu0
      %v2971 = vadd.f32 0.0, %v2970
      %v2972 = vpop.f32.mrf.mxu0
      %v2973 = vadd.f32 0.0, %v2972
      %2974 = vmatmul.bf16.gmra.mxu0 %v2878
      %v2975 = vpop.f32.mrf.mxu0
      %v2976 = vadd.f32 0.0, %v2975
      %v2977 = vpop.f32.mrf.mxu0
      %v2978 = vadd.f32 0.0, %v2977
      %2979 = vmatmul.bf16.gmra.mxu0 %v2881
      %v2980 = vpop.f32.mrf.mxu0
      %v2981 = vadd.f32 0.0, %v2980
      %v2982 = vpop.f32.mrf.mxu0
      %v2983 = vadd.f32 0.0, %v2982
      %2984 = vdwg.mxu0
      %v2985 = vld [vmem:[#allocation3] sm:$0xff]
      %v2986 = vld [vmem:[#allocation3 + $0x8] sm:$0xff]
      %v2987 = vld [vmem:[#allocation3 + $0x10] sm:$0xff]
      %v2988 = vld [vmem:[#allocation3 + $0x18] sm:$0xff]
      %v2989 = vld [vmem:[#allocation3 + $0x20] sm:$0xff]
      %v2990 = vld [vmem:[#allocation3 + $0x28] sm:$0xff]
      %v2991 = vld [vmem:[#allocation3 + $0x30] sm:$0xff]
      %v2992 = vld [vmem:[#allocation3 + $0x38] sm:$0xff]
      %v2993 = vld [vmem:[#allocation3 + $0x40] sm:$0xff]
      %v2994 = vld [vmem:[#allocation3 + $0x48] sm:$0xff]
      %v2995 = vld [vmem:[#allocation3 + $0x50] sm:$0xff]
      %v2996 = vld [vmem:[#allocation3 + $0x58] sm:$0xff]
      %v2997 = vld [vmem:[#allocation3 + $0x60] sm:$0xff]
      %v2998 = vld [vmem:[#allocation3 + $0x68] sm:$0xff]
      %v2999 = vld [vmem:[#allocation3 + $0x70] sm:$0xff]
      %v3000 = vld [vmem:[#allocation3 + $0x78] sm:$0xff]
      %v3001 = vld [vmem:[#allocation3 + $0x80] sm:$0xff]
      %v3002 = vld [vmem:[#allocation3 + $0x88] sm:$0xff]
      %v3003 = vld [vmem:[#allocation3 + $0x90] sm:$0xff]
      %v3004 = vld [vmem:[#allocation3 + $0x98] sm:$0xff]
      %v3005 = vld [vmem:[#allocation3 + $0xa0] sm:$0xff]
      %v3006 = vld [vmem:[#allocation3 + $0xa8] sm:$0xff]
      %v3007 = vld [vmem:[#allocation3 + $0xb0] sm:$0xff]
      %v3008 = vld [vmem:[#allocation3 + $0xb8] sm:$0xff]
      %v3009 = vld [vmem:[#allocation3 + $0xc0] sm:$0xff]
      %v3010 = vld [vmem:[#allocation3 + $0xc8] sm:$0xff]
      %v3011 = vld [vmem:[#allocation3 + $0xd0] sm:$0xff]
      %v3012 = vld [vmem:[#allocation3 + $0xd8] sm:$0xff]
      %v3013 = vld [vmem:[#allocation3 + $0xe0] sm:$0xff]
      %v3014 = vld [vmem:[#allocation3 + $0xe8] sm:$0xff]
      %v3015 = vld [vmem:[#allocation3 + $0xf0] sm:$0xff]
      %v3016 = vld [vmem:[#allocation3 + $0xf8] sm:$0xff]
      %v3017 = vld [vmem:[#allocation3 + $0x100] sm:$0xff]
      %v3018 = vld [vmem:[#allocation3 + $0x108] sm:$0xff]
      %v3019 = vld [vmem:[#allocation3 + $0x110] sm:$0xff]
      %v3020 = vld [vmem:[#allocation3 + $0x118] sm:$0xff]
      %v3021 = vadd.f32 %v2985, %v2896
      %v3022 = vadd.f32 %v2986, %v2898
      %v3023 = vadd.f32 %v2987, %v2901
      %v3024 = vadd.f32 %v2988, %v2903
      %v3025 = vadd.f32 %v2989, %v2906
      %v3026 = vadd.f32 %v2990, %v2908
      %v3027 = vadd.f32 %v2991, %v2911
      %v3028 = vadd.f32 %v2992, %v2913
      %v3029 = vadd.f32 %v2993, %v2916
      %v3030 = vadd.f32 %v2994, %v2918
      %v3031 = vadd.f32 %v2995, %v2921
      %v3032 = vadd.f32 %v2996, %v2923
      %v3033 = vadd.f32 %v2997, %v2926
      %v3034 = vadd.f32 %v2998, %v2928
      %v3035 = vadd.f32 %v2999, %v2931
      %v3036 = vadd.f32 %v3000, %v2933
      %v3037 = vadd.f32 %v3001, %v2936
      %v3038 = vadd.f32 %v3002, %v2938
      %v3039 = vadd.f32 %v3003, %v2941
      %v3040 = vadd.f32 %v3004, %v2943
      %v3041 = vadd.f32 %v3005, %v2946
      %v3042 = vadd.f32 %v3006, %v2948
      %v3043 = vadd.f32 %v3007, %v2951
      %v3044 = vadd.f32 %v3008, %v2953
      %v3045 = vadd.f32 %v3009, %v2956
      %v3046 = vadd.f32 %v3010, %v2958
      %v3047 = vadd.f32 %v3011, %v2961
      %v3048 = vadd.f32 %v3012, %v2963
      %v3049 = vadd.f32 %v3013, %v2966
      %v3050 = vadd.f32 %v3014, %v2968
      %v3051 = vadd.f32 %v3015, %v2971
      %v3052 = vadd.f32 %v3016, %v2973
      %v3053 = vadd.f32 %v3017, %v2976
      %v3054 = vadd.f32 %v3018, %v2978
      %v3055 = vadd.f32 %v3019, %v2981
      %v3056 = vadd.f32 %v3020, %v2983
      %3057 = vst.msk [vmem:[#allocation3] sm:$0xff] %vm172, %v3021
      %3058 = vst.msk [vmem:[#allocation3 + $0x8] sm:$0xff] %vm172, %v3022
      %3059 = vst.msk [vmem:[#allocation3 + $0x10] sm:$0xff] %vm172, %v3023
      %3060 = vst.msk [vmem:[#allocation3 + $0x18] sm:$0xff] %vm172, %v3024
      %3061 = vst.msk [vmem:[#allocation3 + $0x20] sm:$0xff] %vm172, %v3025
      %3062 = vst.msk [vmem:[#allocation3 + $0x28] sm:$0xff] %vm172, %v3026
      %3063 = vst.msk [vmem:[#allocation3 + $0x30] sm:$0xff] %vm172, %v3027
      %3064 = vst.msk [vmem:[#allocation3 + $0x38] sm:$0xff] %vm172, %v3028
      %3065 = vst.msk [vmem:[#allocation3 + $0x40] sm:$0xff] %vm172, %v3029
      %3066 = vst.msk [vmem:[#allocation3 + $0x48] sm:$0xff] %vm172, %v3030
      %3067 = vst.msk [vmem:[#allocation3 + $0x50] sm:$0xff] %vm172, %v3031
      %3068 = vst.msk [vmem:[#allocation3 + $0x58] sm:$0xff] %vm172, %v3032
      %3069 = vst.msk [vmem:[#allocation3 + $0x60] sm:$0xff] %vm172, %v3033
      %3070 = vst.msk [vmem:[#allocation3 + $0x68] sm:$0xff] %vm172, %v3034
      %3071 = vst.msk [vmem:[#allocation3 + $0x70] sm:$0xff] %vm172, %v3035
      %3072 = vst.msk [vmem:[#allocation3 + $0x78] sm:$0xff] %vm172, %v3036
      %3073 = vst.msk [vmem:[#allocation3 + $0x80] sm:$0xff] %vm172, %v3037
      %3074 = vst.msk [vmem:[#allocation3 + $0x88] sm:$0xff] %vm172, %v3038
      %3075 = vst.msk [vmem:[#allocation3 + $0x90] sm:$0xff] %vm172, %v3039
      %3076 = vst.msk [vmem:[#allocation3 + $0x98] sm:$0xff] %vm172, %v3040
      %3077 = vst.msk [vmem:[#allocation3 + $0xa0] sm:$0xff] %vm172, %v3041
      %3078 = vst.msk [vmem:[#allocation3 + $0xa8] sm:$0xff] %vm172, %v3042
      %3079 = vst.msk [vmem:[#allocation3 + $0xb0] sm:$0xff] %vm172, %v3043
      %3080 = vst.msk [vmem:[#allocation3 + $0xb8] sm:$0xff] %vm172, %v3044
      %3081 = vst.msk [vmem:[#allocation3 + $0xc0] sm:$0xff] %vm172, %v3045
      %3082 = vst.msk [vmem:[#allocation3 + $0xc8] sm:$0xff] %vm172, %v3046
      %3083 = vst.msk [vmem:[#allocation3 + $0xd0] sm:$0xff] %vm172, %v3047
      %3084 = vst.msk [vmem:[#allocation3 + $0xd8] sm:$0xff] %vm172, %v3048
      %3085 = vst.msk [vmem:[#allocation3 + $0xe0] sm:$0xff] %vm172, %v3049
      %3086 = vst.msk [vmem:[#allocation3 + $0xe8] sm:$0xff] %vm172, %v3050
      %3087 = vst.msk [vmem:[#allocation3 + $0xf0] sm:$0xff] %vm172, %v3051
      %3088 = vst.msk [vmem:[#allocation3 + $0xf8] sm:$0xff] %vm172, %v3052
      %3089 = vst.msk [vmem:[#allocation3 + $0x100] sm:$0xff] %vm172, %v3053
      %3090 = vst.msk [vmem:[#allocation3 + $0x108] sm:$0xff] %vm172, %v3054
      %3091 = vst.msk [vmem:[#allocation3 + $0x110] sm:$0xff] %vm172, %v3055
      %3092 = vst.msk [vmem:[#allocation3 + $0x118] sm:$0xff] %vm172, %v3056
      %v3093 = vld [vmem:[#allocation3] sm:$0xff]
      %v3094 = vld [vmem:[#allocation3 + $0x8] sm:$0xff]
      %v3095 = vsel %vm172, %v3093, 0.0
      %v3096 = vsel %vm172, %v3094, 0.0
      %v3097 = vadd.f32 %v3095, %v3096
      %v3098 = vrot.slane %v3097, 4
      %v3099 = vadd.f32 %v3097, %v3098
      %v3100 = vrot.slane %v3099, 2
      %v3101 = vadd.f32 %v3099, %v3100
      %v3102 = vrot.slane %v3101, 1
      %v3103 = vadd.f32 %v3101, %v3102
      %v3104 = vadd.f32 %v3103, 0.0
      %v3105 = vmul.f32 %v3093, %v3093
      %v3106 = vmul.f32 %v3094, %v3094
      %v3107 = vsel %vm172, %v3105, 0.0
      %v3108 = vsel %vm172, %v3106, 0.0
      %v3109 = vadd.f32 %v3107, %v3108
      %v3110 = vrot.slane %v3109, 4
      %v3111 = vadd.f32 %v3109, %v3110
      %v3112 = vrot.slane %v3111, 2
      %v3113 = vadd.f32 %v3111, %v3112
      %v3114 = vrot.slane %v3113, 1
      %v3115 = vadd.f32 %v3113, %v3114
      %v3116 = vadd.f32 %v3115, 0.0
      %v3117 = vld [vmem:[#allocation3 + $0x12] sm:$0xff]
      %v3118 = vld [vmem:[#allocation3 + $0x1a] sm:$0xff]
      %v3119 = vsel %vm172, %v3117, 0.0
      %v3120 = vsel %vm172, %v3118, 0.0
      %v3121 = vadd.f32 %v3119, %v3120
      %v3122 = vrot.slane %v3121, 4
      %v3123 = vadd.f32 %v3121, %v3122
      %v3124 = vrot.slane %v3123, 2
      %v3125 = vadd.f32 %v3123, %v3124
      %v3126 = vrot.slane %v3125, 1
      %v3127 = vadd.f32 %v3125, %v3126
      %v3128 = vadd.f32 %v3104, %v3127
      %v3129 = vmul.f32 %v3117, %v3117
      %v3130 = vmul.f32 %v3118, %v3118
      %v3131 = vsel %vm172, %v3129, 0.0
      %v3132 = vsel %vm172, %v3130, 0.0
      %v3133 = vadd.f32 %v3131, %v3132
      %v3134 = vrot.slane %v3133, 4
      %v3135 = vadd.f32 %v3133, %v3134
      %v3136 = vrot.slane %v3135, 2
      %v3137 = vadd.f32 %v3135, %v3136
      %v3138 = vrot.slane %v3137, 1
      %v3139 = vadd.f32 %v3137, %v3138
      %v3140 = vadd.f32 %v3116, %v3139
      %v3141 = vld [vmem:[#allocation3 + $0x24] sm:$0xff]
      %v3142 = vld [vmem:[#allocation3 + $0x2c] sm:$0xff]
      %v3143 = vsel %vm172, %v3141, 0.0
      %v3144 = vsel %vm172, %v3142, 0.0
      %v3145 = vadd.f32 %v3143, %v3144
      %v3146 = vrot.slane %v3145, 4
      %v3147 = vadd.f32 %v3145, %v3146
      %v3148 = vrot.slane %v3147, 2
      %v3149 = vadd.f32 %v3147, %v3148
      %v3150 = vrot.slane %v3149, 1
      %v3151 = vadd.f32 %v3149, %v3150
      %v3152 = vadd.f32 %v3128, %v3151
      %v3153 = vmul.f32 %v3141, %v3141
      %v3154 = vmul.f32 %v3142, %v3142
      %v3155 = vsel %vm172, %v3153, 0.0
      %v3156 = vsel %vm172, %v3154, 0.0
      %v3157 = vadd.f32 %v3155, %v3156
      %v3158 = vrot.slane %v3157, 4
      %v3159 = vadd.f32 %v3157, %v3158
      %v3160 = vrot.slane %v3159, 2
      %v3161 = vadd.f32 %v3159, %v3160
      %v3162 = vrot.slane %v3161, 1
      %v3163 = vadd.f32 %v3161, %v3162
      %v3164 = vadd.f32 %v3140, %v3163
      %v3165 = vld [vmem:[#allocation3 + $0x36] sm:$0xff]
      %v3166 = vld [vmem:[#allocation3 + $0x3e] sm:$0xff]
      %v3167 = vsel %vm172, %v3165, 0.0
      %v3168 = vsel %vm172, %v3166, 0.0
      %v3169 = vadd.f32 %v3167, %v3168
      %v3170 = vrot.slane %v3169, 4
      %v3171 = vadd.f32 %v3169, %v3170
      %v3172 = vrot.slane %v3171, 2
      %v3173 = vadd.f32 %v3171, %v3172
      %v3174 = vrot.slane %v3173, 1
      %v3175 = vadd.f32 %v3173, %v3174
      %v3176 = vadd.f32 %v3152, %v3175
      %v3177 = vmul.f32 %v3165, %v3165
      %v3178 = vmul.f32 %v3166, %v3166
      %v3179 = vsel %vm172, %v3177, 0.0
      %v3180 = vsel %vm172, %v3178, 0.0
      %v3181 = vadd.f32 %v3179, %v3180
      %v3182 = vrot.slane %v3181, 4
      %v3183 = vadd.f32 %v3181, %v3182
      %v3184 = vrot.slane %v3183, 2
      %v3185 = vadd.f32 %v3183, %v3184
      %v3186 = vrot.slane %v3185, 1
      %v3187 = vadd.f32 %v3185, %v3186
      %v3188 = vadd.f32 %v3164, %v3187
      %v3189 = vld [vmem:[#allocation3 + $0x48] sm:$0xff]
      %v3190 = vld [vmem:[#allocation3 + $0x50] sm:$0xff]
      %v3191 = vsel %vm172, %v3189, 0.0
      %v3192 = vsel %vm172, %v3190, 0.0
      %v3193 = vadd.f32 %v3191, %v3192
      %v3194 = vrot.slane %v3193, 4
      %v3195 = vadd.f32 %v3193, %v3194
      %v3196 = vrot.slane %v3195, 2
      %v3197 = vadd.f32 %v3195, %v3196
      %v3198 = vrot.slane %v3197, 1
      %v3199 = vadd.f32 %v3197, %v3198
      %v3200 = vadd.f32 %v3176, %v3199
      %v3201 = vmul.f32 %v3189, %v3189
      %v3202 = vmul.f32 %v3190, %v3190
      %v3203 = vsel %vm172, %v3201, 0.0
      %v3204 = vsel %vm172, %v3202, 0.0
      %v3205 = vadd.f32 %v3203, %v3204
      %v3206 = vrot.slane %v3205, 4
      %v3207 = vadd.f32 %v3205, %v3206
      %v3208 = vrot.slane %v3207, 2
      %v3209 = vadd.f32 %v3207, %v3208
      %v3210 = vrot.slane %v3209, 1
      %v3211 = vadd.f32 %v3209, %v3210
      %v3212 = vadd.f32 %v3188, %v3211
      %v3213 = vld [vmem:[#allocation3 + $0x5a] sm:$0xff]
      %v3214 = vld [vmem:[#allocation3 + $0x62] sm:$0xff]
      %v3215 = vsel %vm172, %v3213, 0.0
      %v3216 = vsel %vm172, %v3214, 0.0
      %v3217 = vadd.f32 %v3215, %v3216
      %v3218 = vrot.slane %v3217, 4
      %v3219 = vadd.f32 %v3217, %v3218
      %v3220 = vrot.slane %v3219, 2
      %v3221 = vadd.f32 %v3219, %v3220
      %v3222 = vrot.slane %v3221, 1
      %v3223 = vadd.f32 %v3221, %v3222
      %v3224 = vadd.f32 %v3200, %v3223
      %v3225 = vmul.f32 %v3213, %v3213
      %v3226 = vmul.f32 %v3214, %v3214
      %v3227 = vsel %vm172, %v3225, 0.0
      %v3228 = vsel %vm172, %v3226, 0.0
      %v3229 = vadd.f32 %v3227, %v3228
      %v3230 = vrot.slane %v3229, 4
      %v3231 = vadd.f32 %v3229, %v3230
      %v3232 = vrot.slane %v3231, 2
      %v3233 = vadd.f32 %v3231, %v3232
      %v3234 = vrot.slane %v3233, 1
      %v3235 = vadd.f32 %v3233, %v3234
      %v3236 = vadd.f32 %v3212, %v3235
      %v3237 = vld [vmem:[#allocation3 + $0x6c] sm:$0xff]
      %v3238 = vld [vmem:[#allocation3 + $0x74] sm:$0xff]
      %v3239 = vsel %vm172, %v3237, 0.0
      %v3240 = vsel %vm172, %v3238, 0.0
      %v3241 = vadd.f32 %v3239, %v3240
      %v3242 = vrot.slane %v3241, 4
      %v3243 = vadd.f32 %v3241, %v3242
      %v3244 = vrot.slane %v3243, 2
      %v3245 = vadd.f32 %v3243, %v3244
      %v3246 = vrot.slane %v3245, 1
      %v3247 = vadd.f32 %v3245, %v3246
      %v3248 = vadd.f32 %v3224, %v3247
      %v3249 = vmul.f32 %v3237, %v3237
      %v3250 = vmul.f32 %v3238, %v3238
      %v3251 = vsel %vm172, %v3249, 0.0
      %v3252 = vsel %vm172, %v3250, 0.0
      %v3253 = vadd.f32 %v3251, %v3252
      %v3254 = vrot.slane %v3253, 4
      %v3255 = vadd.f32 %v3253, %v3254
      %v3256 = vrot.slane %v3255, 2
      %v3257 = vadd.f32 %v3255, %v3256
      %v3258 = vrot.slane %v3257, 1
      %v3259 = vadd.f32 %v3257, %v3258
      %v3260 = vadd.f32 %v3236, %v3259
      %v3261 = vld [vmem:[#allocation3 + $0x7e] sm:$0xff]
      %v3262 = vld [vmem:[#allocation3 + $0x86] sm:$0xff]
      %v3263 = vsel %vm172, %v3261, 0.0
      %v3264 = vsel %vm172, %v3262, 0.0
      %v3265 = vadd.f32 %v3263, %v3264
      %v3266 = vrot.slane %v3265, 4
      %v3267 = vadd.f32 %v3265, %v3266
      %v3268 = vrot.slane %v3267, 2
      %v3269 = vadd.f32 %v3267, %v3268
      %v3270 = vrot.slane %v3269, 1
      %v3271 = vadd.f32 %v3269, %v3270
      %v3272 = vadd.f32 %v3248, %v3271
      %v3273 = vmul.f32 %v3261, %v3261
      %v3274 = vmul.f32 %v3262, %v3262
      %v3275 = vsel %vm172, %v3273, 0.0
      %v3276 = vsel %vm172, %v3274, 0.0
      %v3277 = vadd.f32 %v3275, %v3276
      %v3278 = vrot.slane %v3277, 4
      %v3279 = vadd.f32 %v3277, %v3278
      %v3280 = vrot.slane %v3279, 2
      %v3281 = vadd.f32 %v3279, %v3280
      %v3282 = vrot.slane %v3281, 1
      %v3283 = vadd.f32 %v3281, %v3282
      %v3284 = vadd.f32 %v3260, %v3283
      %v3285 = vld [vmem:[#allocation3 + $0x90] sm:$0xff]
      %v3286 = vld [vmem:[#allocation3 + $0x98] sm:$0xff]
      %v3287 = vsel %vm172, %v3285, 0.0
      %v3288 = vsel %vm172, %v3286, 0.0
      %v3289 = vadd.f32 %v3287, %v3288
      %v3290 = vrot.slane %v3289, 4
      %v3291 = vadd.f32 %v3289, %v3290
      %v3292 = vrot.slane %v3291, 2
      %v3293 = vadd.f32 %v3291, %v3292
      %v3294 = vrot.slane %v3293, 1
      %v3295 = vadd.f32 %v3293, %v3294
      %v3296 = vadd.f32 %v3272, %v3295
      %v3297 = vmul.f32 %v3285, %v3285
      %v3298 = vmul.f32 %v3286, %v3286
      %v3299 = vsel %vm172, %v3297, 0.0
      %v3300 = vsel %vm172, %v3298, 0.0
      %v3301 = vadd.f32 %v3299, %v3300
      %v3302 = vrot.slane %v3301, 4
      %v3303 = vadd.f32 %v3301, %v3302
      %v3304 = vrot.slane %v3303, 2
      %v3305 = vadd.f32 %v3303, %v3304
      %v3306 = vrot.slane %v3305, 1
      %v3307 = vadd.f32 %v3305, %v3306
      %v3308 = vadd.f32 %v3284, %v3307
      %v3309 = vld [vmem:[#allocation3 + $0xa2] sm:$0xff]
      %v3310 = vld [vmem:[#allocation3 + $0xaa] sm:$0xff]
      %v3311 = vsel %vm172, %v3309, 0.0
      %v3312 = vsel %vm172, %v3310, 0.0
      %v3313 = vadd.f32 %v3311, %v3312
      %v3314 = vrot.slane %v3313, 4
      %v3315 = vadd.f32 %v3313, %v3314
      %v3316 = vrot.slane %v3315, 2
      %v3317 = vadd.f32 %v3315, %v3316
      %v3318 = vrot.slane %v3317, 1
      %v3319 = vadd.f32 %v3317, %v3318
      %v3320 = vadd.f32 %v3296, %v3319
      %v3321 = vmul.f32 %v3309, %v3309
      %v3322 = vmul.f32 %v3310, %v3310
      %v3323 = vsel %vm172, %v3321, 0.0
      %v3324 = vsel %vm172, %v3322, 0.0
      %v3325 = vadd.f32 %v3323, %v3324
      %v3326 = vrot.slane %v3325, 4
      %v3327 = vadd.f32 %v3325, %v3326
      %v3328 = vrot.slane %v3327, 2
      %v3329 = vadd.f32 %v3327, %v3328
      %v3330 = vrot.slane %v3329, 1
      %v3331 = vadd.f32 %v3329, %v3330
      %v3332 = vadd.f32 %v3308, %v3331
      %v3333 = vld [vmem:[#allocation3 + $0xb4] sm:$0xff]
      %v3334 = vld [vmem:[#allocation3 + $0xbc] sm:$0xff]
      %v3335 = vsel %vm172, %v3333, 0.0
      %v3336 = vsel %vm172, %v3334, 0.0
      %v3337 = vadd.f32 %v3335, %v3336
      %v3338 = vrot.slane %v3337, 4
      %v3339 = vadd.f32 %v3337, %v3338
      %v3340 = vrot.slane %v3339, 2
      %v3341 = vadd.f32 %v3339, %v3340
      %v3342 = vrot.slane %v3341, 1
      %v3343 = vadd.f32 %v3341, %v3342
      %v3344 = vadd.f32 %v3320, %v3343
      %v3345 = vmul.f32 %v3333, %v3333
      %v3346 = vmul.f32 %v3334, %v3334
      %v3347 = vsel %vm172, %v3345, 0.0
      %v3348 = vsel %vm172, %v3346, 0.0
      %v3349 = vadd.f32 %v3347, %v3348
      %v3350 = vrot.slane %v3349, 4
      %v3351 = vadd.f32 %v3349, %v3350
      %v3352 = vrot.slane %v3351, 2
      %v3353 = vadd.f32 %v3351, %v3352
      %v3354 = vrot.slane %v3353, 1
      %v3355 = vadd.f32 %v3353, %v3354
      %v3356 = vadd.f32 %v3332, %v3355
      %v3357 = vld [vmem:[#allocation3 + $0xc6] sm:$0xff]
      %v3358 = vld [vmem:[#allocation3 + $0xce] sm:$0xff]
      %v3359 = vsel %vm172, %v3357, 0.0
      %v3360 = vsel %vm172, %v3358, 0.0
      %v3361 = vadd.f32 %v3359, %v3360
      %v3362 = vrot.slane %v3361, 4
      %v3363 = vadd.f32 %v3361, %v3362
      %v3364 = vrot.slane %v3363, 2
      %v3365 = vadd.f32 %v3363, %v3364
      %v3366 = vrot.slane %v3365, 1
      %v3367 = vadd.f32 %v3365, %v3366
      %v3368 = vadd.f32 %v3344, %v3367
      %v3369 = vmul.f32 %v3357, %v3357
      %v3370 = vmul.f32 %v3358, %v3358
      %v3371 = vsel %vm172, %v3369, 0.0
      %v3372 = vsel %vm172, %v3370, 0.0
      %v3373 = vadd.f32 %v3371, %v3372
      %v3374 = vrot.slane %v3373, 4
      %v3375 = vadd.f32 %v3373, %v3374
      %v3376 = vrot.slane %v3375, 2
      %v3377 = vadd.f32 %v3375, %v3376
      %v3378 = vrot.slane %v3377, 1
      %v3379 = vadd.f32 %v3377, %v3378
      %v3380 = vadd.f32 %v3356, %v3379
      %v3381 = vld [vmem:[#allocation3 + $0xd8] sm:$0xff]
      %v3382 = vld [vmem:[#allocation3 + $0xe0] sm:$0xff]
      %v3383 = vsel %vm172, %v3381, 0.0
      %v3384 = vsel %vm172, %v3382, 0.0
      %v3385 = vadd.f32 %v3383, %v3384
      %v3386 = vrot.slane %v3385, 4
      %v3387 = vadd.f32 %v3385, %v3386
      %v3388 = vrot.slane %v3387, 2
      %v3389 = vadd.f32 %v3387, %v3388
      %v3390 = vrot.slane %v3389, 1
      %v3391 = vadd.f32 %v3389, %v3390
      %v3392 = vadd.f32 %v3368, %v3391
      %v3393 = vmul.f32 %v3381, %v3381
      %v3394 = vmul.f32 %v3382, %v3382
      %v3395 = vsel %vm172, %v3393, 0.0
      %v3396 = vsel %vm172, %v3394, 0.0
      %v3397 = vadd.f32 %v3395, %v3396
      %v3398 = vrot.slane %v3397, 4
      %v3399 = vadd.f32 %v3397, %v3398
      %v3400 = vrot.slane %v3399, 2
      %v3401 = vadd.f32 %v3399, %v3400
      %v3402 = vrot.slane %v3401, 1
      %v3403 = vadd.f32 %v3401, %v3402
      %v3404 = vadd.f32 %v3380, %v3403
      %v3405 = vld [vmem:[#allocation3 + $0xea] sm:$0xff]
      %v3406 = vld [vmem:[#allocation3 + $0xf2] sm:$0xff]
      %v3407 = vsel %vm172, %v3405, 0.0
      %v3408 = vsel %vm172, %v3406, 0.0
      %v3409 = vadd.f32 %v3407, %v3408
      %v3410 = vrot.slane %v3409, 4
      %v3411 = vadd.f32 %v3409, %v3410
      %v3412 = vrot.slane %v3411, 2
      %v3413 = vadd.f32 %v3411, %v3412
      %v3414 = vrot.slane %v3413, 1
      %v3415 = vadd.f32 %v3413, %v3414
      %v3416 = vadd.f32 %v3392, %v3415
      %v3417 = vmul.f32 %v3405, %v3405
      %v3418 = vmul.f32 %v3406, %v3406
      %v3419 = vsel %vm172, %v3417, 0.0
      %v3420 = vsel %vm172, %v3418, 0.0
      %v3421 = vadd.f32 %v3419, %v3420
      %v3422 = vrot.slane %v3421, 4
      %v3423 = vadd.f32 %v3421, %v3422
      %v3424 = vrot.slane %v3423, 2
      %v3425 = vadd.f32 %v3423, %v3424
      %v3426 = vrot.slane %v3425, 1
      %v3427 = vadd.f32 %v3425, %v3426
      %v3428 = vadd.f32 %v3404, %v3427
      %v3429 = vld [vmem:[#allocation3 + $0xfc] sm:$0xff]
      %v3430 = vld [vmem:[#allocation3 + $0x104] sm:$0xff]
      %v3431 = vsel %vm172, %v3429, 0.0
      %v3432 = vsel %vm172, %v3430, 0.0
      %v3433 = vadd.f32 %v3431, %v3432
      %v3434 = vrot.slane %v3433, 4
      %v3435 = vadd.f32 %v3433, %v3434
      %v3436 = vrot.slane %v3435, 2
      %v3437 = vadd.f32 %v3435, %v3436
      %v3438 = vrot.slane %v3437, 1
      %v3439 = vadd.f32 %v3437, %v3438
      %v3440 = vadd.f32 %v3416, %v3439
      %v3441 = vmul.f32 %v3429, %v3429
      %v3442 = vmul.f32 %v3430, %v3430
      %v3443 = vsel %vm172, %v3441, 0.0
      %v3444 = vsel %vm172, %v3442, 0.0
      %v3445 = vadd.f32 %v3443, %v3444
      %v3446 = vrot.slane %v3445, 4
      %v3447 = vadd.f32 %v3445, %v3446
      %v3448 = vrot.slane %v3447, 2
      %v3449 = vadd.f32 %v3447, %v3448
      %v3450 = vrot.slane %v3449, 1
      %v3451 = vadd.f32 %v3449, %v3450
      %v3452 = vadd.f32 %v3428, %v3451
      %v3453 = vld [vmem:[#allocation3 + $0x10e] sm:$0xff]
      %v3454 = vld [vmem:[#allocation3 + $0x116] sm:$0xff]
      %v3455 = vsel %vm172, %v3453, 0.0
      %v3456 = vsel %vm172, %v3454, 0.0
      %v3457 = vadd.f32 %v3455, %v3456
      %v3458 = vrot.slane %v3457, 4
      %v3459 = vadd.f32 %v3457, %v3458
      %v3460 = vrot.slane %v3459, 2
      %v3461 = vadd.f32 %v3459, %v3460
      %v3462 = vrot.slane %v3461, 1
      %v3463 = vadd.f32 %v3461, %v3462
      %v3464 = vadd.f32 %v3440, %v3463
      %v3465 = vmul.f32 %v3453, %v3453
      %v3466 = vmul.f32 %v3454, %v3454
      %v3467 = vsel %vm172, %v3465, 0.0
      %v3468 = vsel %vm172, %v3466, 0.0
      %v3469 = vadd.f32 %v3467, %v3468
      %v3470 = vrot.slane %v3469, 4
      %v3471 = vadd.f32 %v3469, %v3470
      %v3472 = vrot.slane %v3471, 2
      %v3473 = vadd.f32 %v3471, %v3472
      %v3474 = vrot.slane %v3473, 1
      %v3475 = vadd.f32 %v3473, %v3474
      %v3476 = vadd.f32 %v3452, %v3475
      %v3477 = vrcp.pop 256.0
      %v3478 = vmul.f32 256.0, %v3477
      %v3479 = vsub.f32 1.0, %v3478
      %v3480 = vmul.f32 %v3477, %v3479
      %v3481 = vadd.f32 %v3477, %v3480
      %vm3482 = vweird.f32 %v3477
      %v3483 = vsel %vm3482, %v3477, %v3481
      %v3484 = vmul.f32 %v3464, %v3483
      %v3485 = vmul.f32 %v3476, %v3483
      %v3486 = vmul.f32 %v3484, %v3484
      %v3487 = vsub.f32 %v3485, %v3486
      %v3488 = vmax.f32 %v3487, 0.0
      %v3489 = vadd.f32 %v3488, 1e-05
      %v3490 = vrsqrt.pop %v3489
      %v3491 = vmul.f32 %v3490, %v3489
      %v3492 = vmul.f32 %v3491, %v3490
      %v3493 = vmul.f32 0.5, %v3492
      %v3494 = vsub.f32 1.5, %v3493
      %v3495 = vmul.f32 %v3490, %v3494
      %vm3496 = vweird.f32 %v3489
      %vm3497 = vweird.f32 %v3490
      %vm3498 = vmor %vm3496, %vm3497
      %v3499 = vsel %vm3498, %v3490, %v3495
      %v3500 = vsub.f32 %v3093, %v3484
      %v3501 = vsub.f32 %v3094, %v3484
      %v3502 = vmul.f32 %v3500, %v3499
      %v3503 = vmul.f32 %v3501, %v3499
      %v3504 = vmax.f32 %v3502, 0.0
      %v3505 = vmax.f32 %v3503, 0.0
      %3506 = vst.msk [vmem:[#allocation2 + $0x13] sm:$0xff] %vm172, %v3504
      %3507 = vst.msk [vmem:[#allocation2 + $0x1b] sm:$0xff] %vm172, %v3505
      %3508 = vst.msk [vmem:[#allocation2 + $0x11] sm:$0x2] %vm178, %v3504
      %3509 = vst.msk [vmem:[#allocation2 + $0x1d] sm:$0x40] %vm180, %v3505
      %v3510 = vld [vmem:[#allocation3 + $0x12] sm:$0xff]
      %v3511 = vld [vmem:[#allocation3 + $0x1a] sm:$0xff]
      %v3512 = vsub.f32 %v3510, %v3484
      %v3513 = vsub.f32 %v3511, %v3484
      %v3514 = vmul.f32 %v3512, %v3499
      %v3515 = vmul.f32 %v3513, %v3499
      %v3516 = vmax.f32 %v3514, 0.0
      %v3517 = vmax.f32 %v3515, 0.0
      %3518 = vst.msk [vmem:[#allocation2 + $0x25] sm:$0xff] %vm172, %v3516
      %3519 = vst.msk [vmem:[#allocation2 + $0x2d] sm:$0xff] %vm172, %v3517
      %3520 = vst.msk [vmem:[#allocation2 + $0x23] sm:$0x2] %vm178, %v3516
      %3521 = vst.msk [vmem:[#allocation2 + $0x2f] sm:$0x40] %vm180, %v3517
      %v3522 = vld [vmem:[#allocation3 + $0x24] sm:$0xff]
      %v3523 = vld [vmem:[#allocation3 + $0x2c] sm:$0xff]
      %v3524 = vsub.f32 %v3522, %v3484
      %v3525 = vsub.f32 %v3523, %v3484
      %v3526 = vmul.f32 %v3524, %v3499
      %v3527 = vmul.f32 %v3525, %v3499
      %v3528 = vmax.f32 %v3526, 0.0
      %v3529 = vmax.f32 %v3527, 0.0
      %3530 = vst.msk [vmem:[#allocation2 + $0x37] sm:$0xff] %vm172, %v3528
      %3531 = vst.msk [vmem:[#allocation2 + $0x3f] sm:$0xff] %vm172, %v3529
      %3532 = vst.msk [vmem:[#allocation2 + $0x35] sm:$0x2] %vm178, %v3528
      %3533 = vst.msk [vmem:[#allocation2 + $0x41] sm:$0x40] %vm180, %v3529
      %v3534 = vld [vmem:[#allocation3 + $0x36] sm:$0xff]
      %v3535 = vld [vmem:[#allocation3 + $0x3e] sm:$0xff]
      %v3536 = vsub.f32 %v3534, %v3484
      %v3537 = vsub.f32 %v3535, %v3484
      %v3538 = vmul.f32 %v3536, %v3499
      %v3539 = vmul.f32 %v3537, %v3499
      %v3540 = vmax.f32 %v3538, 0.0
      %v3541 = vmax.f32 %v3539, 0.0
      %3542 = vst.msk [vmem:[#allocation2 + $0x49] sm:$0xff] %vm172, %v3540
      %3543 = vst.msk [vmem:[#allocation2 + $0x51] sm:$0xff] %vm172, %v3541
      %3544 = vst.msk [vmem:[#allocation2 + $0x47] sm:$0x2] %vm178, %v3540
      %3545 = vst.msk [vmem:[#allocation2 + $0x53] sm:$0x40] %vm180, %v3541
      %v3546 = vld [vmem:[#allocation3 + $0x48] sm:$0xff]
      %v3547 = vld [vmem:[#allocation3 + $0x50] sm:$0xff]
      %v3548 = vsub.f32 %v3546, %v3484
      %v3549 = vsub.f32 %v3547, %v3484
      %v3550 = vmul.f32 %v3548, %v3499
      %v3551 = vmul.f32 %v3549, %v3499
      %v3552 = vmax.f32 %v3550, 0.0
      %v3553 = vmax.f32 %v3551, 0.0
      %3554 = vst.msk [vmem:[#allocation2 + $0x5b] sm:$0xff] %vm172, %v3552
      %3555 = vst.msk [vmem:[#allocation2 + $0x63] sm:$0xff] %vm172, %v3553
      %3556 = vst.msk [vmem:[#allocation2 + $0x59] sm:$0x2] %vm178, %v3552
      %3557 = vst.msk [vmem:[#allocation2 + $0x65] sm:$0x40] %vm180, %v3553
      %v3558 = vld [vmem:[#allocation3 + $0x5a] sm:$0xff]
      %v3559 = vld [vmem:[#allocation3 + $0x62] sm:$0xff]
      %v3560 = vsub.f32 %v3558, %v3484
      %v3561 = vsub.f32 %v3559, %v3484
      %v3562 = vmul.f32 %v3560, %v3499
      %v3563 = vmul.f32 %v3561, %v3499
      %v3564 = vmax.f32 %v3562, 0.0
      %v3565 = vmax.f32 %v3563, 0.0
      %3566 = vst.msk [vmem:[#allocation2 + $0x6d] sm:$0xff] %vm172, %v3564
      %3567 = vst.msk [vmem:[#allocation2 + $0x75] sm:$0xff] %vm172, %v3565
      %3568 = vst.msk [vmem:[#allocation2 + $0x6b] sm:$0x2] %vm178, %v3564
      %3569 = vst.msk [vmem:[#allocation2 + $0x77] sm:$0x40] %vm180, %v3565
      %v3570 = vld [vmem:[#allocation3 + $0x6c] sm:$0xff]
      %v3571 = vld [vmem:[#allocation3 + $0x74] sm:$0xff]
      %v3572 = vsub.f32 %v3570, %v3484
      %v3573 = vsub.f32 %v3571, %v3484
      %v3574 = vmul.f32 %v3572, %v3499
      %v3575 = vmul.f32 %v3573, %v3499
      %v3576 = vmax.f32 %v3574, 0.0
      %v3577 = vmax.f32 %v3575, 0.0
      %3578 = vst.msk [vmem:[#allocation2 + $0x7f] sm:$0xff] %vm172, %v3576
      %3579 = vst.msk [vmem:[#allocation2 + $0x87] sm:$0xff] %vm172, %v3577
      %3580 = vst.msk [vmem:[#allocation2 + $0x7d] sm:$0x2] %vm178, %v3576
      %3581 = vst.msk [vmem:[#allocation2 + $0x89] sm:$0x40] %vm180, %v3577
      %v3582 = vld [vmem:[#allocation3 + $0x7e] sm:$0xff]
      %v3583 = vld [vmem:[#allocation3 + $0x86] sm:$0xff]
      %v3584 = vsub.f32 %v3582, %v3484
      %v3585 = vsub.f32 %v3583, %v3484
      %v3586 = vmul.f32 %v3584, %v3499
      %v3587 = vmul.f32 %v3585, %v3499
      %v3588 = vmax.f32 %v3586, 0.0
      %v3589 = vmax.f32 %v3587, 0.0
      %3590 = vst.msk [vmem:[#allocation2 + $0x91] sm:$0xff] %vm172, %v3588
      %3591 = vst.msk [vmem:[#allocation2 + $0x99] sm:$0xff] %vm172, %v3589
      %3592 = vst.msk [vmem:[#allocation2 + $0x8f] sm:$0x2] %vm178, %v3588
      %3593 = vst.msk [vmem:[#allocation2 + $0x9b] sm:$0x40] %vm180, %v3589
      %v3594 = vld [vmem:[#allocation3 + $0x90] sm:$0xff]
      %v3595 = vld [vmem:[#allocation3 + $0x98] sm:$0xff]
      %v3596 = vsub.f32 %v3594, %v3484
      %v3597 = vsub.f32 %v3595, %v3484
      %v3598 = vmul.f32 %v3596, %v3499
      %v3599 = vmul.f32 %v3597, %v3499
      %v3600 = vmax.f32 %v3598, 0.0
      %v3601 = vmax.f32 %v3599, 0.0
      %3602 = vst.msk [vmem:[#allocation2 + $0xa3] sm:$0xff] %vm172, %v3600
      %3603 = vst.msk [vmem:[#allocation2 + $0xab] sm:$0xff] %vm172, %v3601
      %3604 = vst.msk [vmem:[#allocation2 + $0xa1] sm:$0x2] %vm178, %v3600
      %3605 = vst.msk [vmem:[#allocation2 + $0xad] sm:$0x40] %vm180, %v3601
      %v3606 = vld [vmem:[#allocation3 + $0xa2] sm:$0xff]
      %v3607 = vld [vmem:[#allocation3 + $0xaa] sm:$0xff]
      %v3608 = vsub.f32 %v3606, %v3484
      %v3609 = vsub.f32 %v3607, %v3484
      %v3610 = vmul.f32 %v3608, %v3499
      %v3611 = vmul.f32 %v3609, %v3499
      %v3612 = vmax.f32 %v3610, 0.0
      %v3613 = vmax.f32 %v3611, 0.0
      %3614 = vst.msk [vmem:[#allocation2 + $0xb5] sm:$0xff] %vm172, %v3612
      %3615 = vst.msk [vmem:[#allocation2 + $0xbd] sm:$0xff] %vm172, %v3613
      %3616 = vst.msk [vmem:[#allocation2 + $0xb3] sm:$0x2] %vm178, %v3612
      %3617 = vst.msk [vmem:[#allocation2 + $0xbf] sm:$0x40] %vm180, %v3613
      %v3618 = vld [vmem:[#allocation3 + $0xb4] sm:$0xff]
      %v3619 = vld [vmem:[#allocation3 + $0xbc] sm:$0xff]
      %v3620 = vsub.f32 %v3618, %v3484
      %v3621 = vsub.f32 %v3619, %v3484
      %v3622 = vmul.f32 %v3620, %v3499
      %v3623 = vmul.f32 %v3621, %v3499
      %v3624 = vmax.f32 %v3622, 0.0
      %v3625 = vmax.f32 %v3623, 0.0
      %3626 = vst.msk [vmem:[#allocation2 + $0xc7] sm:$0xff] %vm172, %v3624
      %3627 = vst.msk [vmem:[#allocation2 + $0xcf] sm:$0xff] %vm172, %v3625
      %3628 = vst.msk [vmem:[#allocation2 + $0xc5] sm:$0x2] %vm178, %v3624
      %3629 = vst.msk [vmem:[#allocation2 + $0xd1] sm:$0x40] %vm180, %v3625
      %v3630 = vld [vmem:[#allocation3 + $0xc6] sm:$0xff]
      %v3631 = vld [vmem:[#allocation3 + $0xce] sm:$0xff]
      %v3632 = vsub.f32 %v3630, %v3484
      %v3633 = vsub.f32 %v3631, %v3484
      %v3634 = vmul.f32 %v3632, %v3499
      %v3635 = vmul.f32 %v3633, %v3499
      %v3636 = vmax.f32 %v3634, 0.0
      %v3637 = vmax.f32 %v3635, 0.0
      %3638 = vst.msk [vmem:[#allocation2 + $0xd9] sm:$0xff] %vm172, %v3636
      %3639 = vst.msk [vmem:[#allocation2 + $0xe1] sm:$0xff] %vm172, %v3637
      %3640 = vst.msk [vmem:[#allocation2 + $0xd7] sm:$0x2] %vm178, %v3636
      %3641 = vst.msk [vmem:[#allocation2 + $0xe3] sm:$0x40] %vm180, %v3637
      %v3642 = vld [vmem:[#allocation3 + $0xd8] sm:$0xff]
      %v3643 = vld [vmem:[#allocation3 + $0xe0] sm:$0xff]
      %v3644 = vsub.f32 %v3642, %v3484
      %v3645 = vsub.f32 %v3643, %v3484
      %v3646 = vmul.f32 %v3644, %v3499
      %v3647 = vmul.f32 %v3645, %v3499
      %v3648 = vmax.f32 %v3646, 0.0
      %v3649 = vmax.f32 %v3647, 0.0
      %3650 = vst.msk [vmem:[#allocation2 + $0xeb] sm:$0xff] %vm172, %v3648
      %3651 = vst.msk [vmem:[#allocation2 + $0xf3] sm:$0xff] %vm172, %v3649
      %3652 = vst.msk [vmem:[#allocation2 + $0xe9] sm:$0x2] %vm178, %v3648
      %3653 = vst.msk [vmem:[#allocation2 + $0xf5] sm:$0x40] %vm180, %v3649
      %v3654 = vld [vmem:[#allocation3 + $0xea] sm:$0xff]
      %v3655 = vld [vmem:[#allocation3 + $0xf2] sm:$0xff]
      %v3656 = vsub.f32 %v3654, %v3484
      %v3657 = vsub.f32 %v3655, %v3484
      %v3658 = vmul.f32 %v3656, %v3499
      %v3659 = vmul.f32 %v3657, %v3499
      %v3660 = vmax.f32 %v3658, 0.0
      %v3661 = vmax.f32 %v3659, 0.0
      %3662 = vst.msk [vmem:[#allocation2 + $0xfd] sm:$0xff] %vm172, %v3660
      %3663 = vst.msk [vmem:[#allocation2 + $0x105] sm:$0xff] %vm172, %v3661
      %3664 = vst.msk [vmem:[#allocation2 + $0xfb] sm:$0x2] %vm178, %v3660
      %3665 = vst.msk [vmem:[#allocation2 + $0x107] sm:$0x40] %vm180, %v3661
      %v3666 = vld [vmem:[#allocation3 + $0xfc] sm:$0xff]
      %v3667 = vld [vmem:[#allocation3 + $0x104] sm:$0xff]
      %v3668 = vsub.f32 %v3666, %v3484
      %v3669 = vsub.f32 %v3667, %v3484
      %v3670 = vmul.f32 %v3668, %v3499
      %v3671 = vmul.f32 %v3669, %v3499
      %v3672 = vmax.f32 %v3670, 0.0
      %v3673 = vmax.f32 %v3671, 0.0
      %3674 = vst.msk [vmem:[#allocation2 + $0x10f] sm:$0xff] %vm172, %v3672
      %3675 = vst.msk [vmem:[#allocation2 + $0x117] sm:$0xff] %vm172, %v3673
      %3676 = vst.msk [vmem:[#allocation2 + $0x10d] sm:$0x2] %vm178, %v3672
      %3677 = vst.msk [vmem:[#allocation2 + $0x119] sm:$0x40] %vm180, %v3673
      %v3678 = vld [vmem:[#allocation3 + $0x10e] sm:$0xff]
      %v3679 = vld [vmem:[#allocation3 + $0x116] sm:$0xff]
      %v3680 = vsub.f32 %v3678, %v3484
      %v3681 = vsub.f32 %v3679, %v3484
      %v3682 = vmul.f32 %v3680, %v3499
      %v3683 = vmul.f32 %v3681, %v3499
      %v3684 = vmax.f32 %v3682, 0.0
      %v3685 = vmax.f32 %v3683, 0.0
      %3686 = vst.msk [vmem:[#allocation2 + $0x121] sm:$0xff] %vm172, %v3684
      %3687 = vst.msk [vmem:[#allocation2 + $0x129] sm:$0xff] %vm172, %v3685
      %3688 = vst.msk [vmem:[#allocation2 + $0x11f] sm:$0x2] %vm178, %v3684
      %3689 = vst.msk [vmem:[#allocation2 + $0x12b] sm:$0x40] %vm180, %v3685
      %v3690 = vld [vmem:[#allocation2 + $0x24] sm:$0xff]
      %v3691 = vld [vmem:[#allocation2 + $0x2c] sm:$0xff]
      %v3692 = vld [vmem:[#allocation2 + $0x34] sm:$0x3]
      %3693 = vst.msk [vmem:[#allocation2] sm:$0xff] %vm172, %v3690
      %3694 = vst.msk [vmem:[#allocation2 + $0x8] sm:$0xff] %vm172, %v3691
      %3695 = vst.msk [vmem:[#allocation2 + $0x10] sm:$0x3] %vm277, %v3692
      %v3696 = vld [vmem:[#allocation2 + $0x10e] sm:$0xff]
      %v3697 = vld [vmem:[#allocation2 + $0x116] sm:$0xff]
      %v3698 = vld [vmem:[#allocation2 + $0x11e] sm:$0x3]
      %3699 = vst.msk [vmem:[#allocation2 + $0x132] sm:$0xff] %vm172, %v3696
      %3700 = vst.msk [vmem:[#allocation2 + $0x13a] sm:$0xff] %vm172, %v3697
      %3701 = vst.msk [vmem:[#allocation2 + $0x142] sm:$0x3] %vm277, %v3698
      %v3702 = vld [vmem:[#allocation2] sm:$0xff]
      %v3703 = vld [vmem:[#allocation2 + $0x8] sm:$0xff]
      %v3704 = vld [vmem:[#allocation2 + $0x10] sm:$0xff]
      %v3705 = vld [vmem:[#allocation2 + $0x18] sm:$0xff]
      %v3706 = vld [vmem:[#allocation2 + $0x20] sm:$0xff]
      %v3707 = vld [vmem:[#allocation2 + $0x28] sm:$0xff]
      %v3708 = vld [vmem:[#allocation2 + $0x30] sm:$0xff]
      %v3709 = vld [vmem:[#allocation2 + $0x38] sm:$0xff]
      %v3710 = vld [vmem:[#allocation2 + $0x40] sm:$0xff]
      %v3711 = vld [vmem:[#allocation2 + $0x48] sm:$0xff]
      %v3712 = vld [vmem:[#allocation2 + $0x50] sm:$0xff]
      %v3713 = vld [vmem:[#allocation2 + $0x58] sm:$0xff]
      %v3714 = vld [vmem:[#allocation2 + $0x60] sm:$0xff]
      %v3715 = vld [vmem:[#allocation2 + $0x68] sm:$0xff]
      %v3716 = vld [vmem:[#allocation2 + $0x70] sm:$0xff]
      %v3717 = vld [vmem:[#allocation2 + $0x78] sm:$0xff]
      %v3718 = vld [vmem:[#allocation2 + $0x80] sm:$0xff]
      %v3719 = vld [vmem:[#allocation2 + $0x88] sm:$0xff]
      %v3720 = vld [vmem:[#allocation2 + $0x90] sm:$0xff]
      %v3721 = vld [vmem:[#allocation2 + $0x98] sm:$0xff]
      %v3722 = vld [vmem:[#allocation2 + $0xa0] sm:$0xff]
      %v3723 = vld [vmem:[#allocation2 + $0xa8] sm:$0xff]
      %v3724 = vld [vmem:[#allocation2 + $0xb0] sm:$0xff]
      %v3725 = vld [vmem:[#allocation2 + $0xb8] sm:$0xff]
      %v3726 = vld [vmem:[#allocation2 + $0xc0] sm:$0xff]
      %v3727 = vld [vmem:[#allocation2 + $0xc8] sm:$0xff]
      %v3728 = vld [vmem:[#allocation2 + $0xd0] sm:$0xff]
      %v3729 = vld [vmem:[#allocation2 + $0xd8] sm:$0xff]
      %v3730 = vld [vmem:[#allocation2 + $0xe0] sm:$0xff]
      %v3731 = vld [vmem:[#allocation2 + $0xe8] sm:$0xff]
      %v3732 = vld [vmem:[#allocation2 + $0xf0] sm:$0xff]
      %v3733 = vld [vmem:[#allocation2 + $0xf8] sm:$0xff]
      %v3734 = vld [vmem:[#allocation2 + $0x100] sm:$0xff]
      %v3735 = vld [vmem:[#allocation2 + $0x108] sm:$0xff]
      %v3736 = vld [vmem:[#allocation2 + $0x110] sm:$0xff]
      %v3737 = vld [vmem:[#allocation2 + $0x118] sm:$0xff]
      %v3738 = vpack.c.bf16 %v3703, %v3702
      %v3739 = vpack.c.bf16 %v3705, %v3704
      %v3740 = vpack.c.bf16 %v3707, %v3706
      %v3741 = vpack.c.bf16 %v3709, %v3708
      %v3742 = vpack.c.bf16 %v3711, %v3710
      %v3743 = vpack.c.bf16 %v3713, %v3712
      %v3744 = vpack.c.bf16 %v3715, %v3714
      %v3745 = vpack.c.bf16 %v3717, %v3716
      %v3746 = vpack.c.bf16 %v3719, %v3718
      %v3747 = vpack.c.bf16 %v3721, %v3720
      %v3748 = vpack.c.bf16 %v3723, %v3722
      %v3749 = vpack.c.bf16 %v3725, %v3724
      %v3750 = vpack.c.bf16 %v3727, %v3726
      %v3751 = vpack.c.bf16 %v3729, %v3728
      %v3752 = vpack.c.bf16 %v3731, %v3730
      %v3753 = vpack.c.bf16 %v3733, %v3732
      %v3754 = vpack.c.bf16 %v3735, %v3734
      %v3755 = vpack.c.bf16 %v3737, %v3736
      %v3756 = vld [vmem:[%s2] sm:$0x3]
      %v3758 = vsel %vm172, %v3738, 0
      %v3761 = vsel %vm172, %v3739, 0
      %v3764 = vsel %vm172, %v3740, 0
      %v3767 = vsel %vm172, %v3741, 0
      %v3770 = vsel %vm172, %v3742, 0
      %v3773 = vsel %vm172, %v3743, 0
      %v3776 = vsel %vm172, %v3744, 0
      %v3779 = vsel %vm172, %v3745, 0
      %v3782 = vsel %vm172, %v3746, 0
      %v3785 = vsel %vm172, %v3747, 0
      %v3788 = vsel %vm172, %v3748, 0
      %v3791 = vsel %vm172, %v3749, 0
      %v3794 = vsel %vm172, %v3750, 0
      %v3797 = vsel %vm172, %v3751, 0
      %v3800 = vsel %vm172, %v3752, 0
      %v3803 = vsel %vm172, %v3753, 0
      %v3806 = vsel %vm172, %v3754, 0
      %v3809 = vsel %vm172, %v3755, 0
      %v3812 = vsel %vm394, %v3756, 0
      %3814 = vmatpush.bf16.msra.mxu0 0
      %3815 = vmatpush.bf16.msra.mxu0 0
      %3816 = vmatpush.bf16.msra.mxu0 0
      %3817 = vmatpush.bf16.msra.mxu0 0
      %3818 = vmatpush.bf16.msra.mxu0 0
      %3819 = vmatpush.bf16.msra.mxu0 0
      %3820 = vmatpush.bf16.msra.mxu0 0
      %3821 = vmatpush.bf16.msra.mxu0 %v3812
      %3822 = vmatmul.bf16.gmra.mxu0 %v3758
      %v3823 = vpop.f32.mrf.mxu0
      %v3824 = vadd.f32 0.0, %v3823
      %v3825 = vpop.f32.mrf.mxu0
      %v3826 = vadd.f32 0.0, %v3825
      %3827 = vmatmul.bf16.gmra.mxu0 %v3761
      %v3828 = vpop.f32.mrf.mxu0
      %v3829 = vadd.f32 0.0, %v3828
      %v3830 = vpop.f32.mrf.mxu0
      %v3831 = vadd.f32 0.0, %v3830
      %3832 = vmatmul.bf16.gmra.mxu0 %v3764
      %v3833 = vpop.f32.mrf.mxu0
      %v3834 = vadd.f32 0.0, %v3833
      %v3835 = vpop.f32.mrf.mxu0
      %v3836 = vadd.f32 0.0, %v3835
      %3837 = vmatmul.bf16.gmra.mxu0 %v3767
      %v3838 = vpop.f32.mrf.mxu0
      %v3839 = vadd.f32 0.0, %v3838
      %v3840 = vpop.f32.mrf.mxu0
      %v3841 = vadd.f32 0.0, %v3840
      %3842 = vmatmul.bf16.gmra.mxu0 %v3770
      %v3843 = vpop.f32.mrf.mxu0
      %v3844 = vadd.f32 0.0, %v3843
      %v3845 = vpop.f32.mrf.mxu0
      %v3846 = vadd.f32 0.0, %v3845
      %3847 = vmatmul.bf16.gmra.mxu0 %v3773
      %v3848 = vpop.f32.mrf.mxu0
      %v3849 = vadd.f32 0.0, %v3848
      %v3850 = vpop.f32.mrf.mxu0
      %v3851 = vadd.f32 0.0, %v3850
      %3852 = vmatmul.bf16.gmra.mxu0 %v3776
      %v3853 = vpop.f32.mrf.mxu0
      %v3854 = vadd.f32 0.0, %v3853
      %v3855 = vpop.f32.mrf.mxu0
      %v3856 = vadd.f32 0.0, %v3855
      %3857 = vmatmul.bf16.gmra.mxu0 %v3779
      %v3858 = vpop.f32.mrf.mxu0
      %v3859 = vadd.f32 0.0, %v3858
      %v3860 = vpop.f32.mrf.mxu0
      %v3861 = vadd.f32 0.0, %v3860
      %3862 = vmatmul.bf16.gmra.mxu0 %v3782
      %v3863 = vpop.f32.mrf.mxu0
      %v3864 = vadd.f32 0.0, %v3863
      %v3865 = vpop.f32.mrf.mxu0
      %v3866 = vadd.f32 0.0, %v3865
      %3867 = vmatmul.bf16.gmra.mxu0 %v3785
      %v3868 = vpop.f32.mrf.mxu0
      %v3869 = vadd.f32 0.0, %v3868
      %v3870 = vpop.f32.mrf.mxu0
      %v3871 = vadd.f32 0.0, %v3870
      %3872 = vmatmul.bf16.gmra.mxu0 %v3788
      %v3873 = vpop.f32.mrf.mxu0
      %v3874 = vadd.f32 0.0, %v3873
      %v3875 = vpop.f32.mrf.mxu0
      %v3876 = vadd.f32 0.0, %v3875
      %3877 = vmatmul.bf16.gmra.mxu0 %v3791
      %v3878 = vpop.f32.mrf.mxu0
      %v3879 = vadd.f32 0.0, %v3878
      %v3880 = vpop.f32.mrf.mxu0
      %v3881 = vadd.f32 0.0, %v3880
      %3882 = vmatmul.bf16.gmra.mxu0 %v3794
      %v3883 = vpop.f32.mrf.mxu0
      %v3884 = vadd.f32 0.0, %v3883
      %v3885 = vpop.f32.mrf.mxu0
      %v3886 = vadd.f32 0.0, %v3885
      %3887 = vmatmul.bf16.gmra.mxu0 %v3797
      %v3888 = vpop.f32.mrf.mxu0
      %v3889 = vadd.f32 0.0, %v3888
      %v3890 = vpop.f32.mrf.mxu0
      %v3891 = vadd.f32 0.0, %v3890
      %3892 = vmatmul.bf16.gmra.mxu0 %v3800
      %v3893 = vpop.f32.mrf.mxu0
      %v3894 = vadd.f32 0.0, %v3893
      %v3895 = vpop.f32.mrf.mxu0
      %v3896 = vadd.f32 0.0, %v3895
      %3897 = vmatmul.bf16.gmra.mxu0 %v3803
      %v3898 = vpop.f32.mrf.mxu0
      %v3899 = vadd.f32 0.0, %v3898
      %v3900 = vpop.f32.mrf.mxu0
      %v3901 = vadd.f32 0.0, %v3900
      %3902 = vmatmul.bf16.gmra.mxu0 %v3806
      %v3903 = vpop.f32.mrf.mxu0
      %v3904 = vadd.f32 0.0, %v3903
      %v3905 = vpop.f32.mrf.mxu0
      %v3906 = vadd.f32 0.0, %v3905
      %3907 = vmatmul.bf16.gmra.mxu0 %v3809
      %v3908 = vpop.f32.mrf.mxu0
      %v3909 = vadd.f32 0.0, %v3908
      %v3910 = vpop.f32.mrf.mxu0
      %v3911 = vadd.f32 0.0, %v3910
      %3912 = vdwg.mxu0
      %3913 = vst.msk [vmem:[#allocation3] sm:$0xff] %vm172, %v3824
      %3914 = vst.msk [vmem:[#allocation3 + $0x8] sm:$0xff] %vm172, %v3826
      %3915 = vst.msk [vmem:[#allocation3 + $0x10] sm:$0xff] %vm172, %v3829
      %3916 = vst.msk [vmem:[#allocation3 + $0x18] sm:$0xff] %vm172, %v3831
      %3917 = vst.msk [vmem:[#allocation3 + $0x20] sm:$0xff] %vm172, %v3834
      %3918 = vst.msk [vmem:[#allocation3 + $0x28] sm:$0xff] %vm172, %v3836
      %3919 = vst.msk [vmem:[#allocation3 + $0x30] sm:$0xff] %vm172, %v3839
      %3920 = vst.msk [vmem:[#allocation3 + $0x38] sm:$0xff] %vm172, %v3841
      %3921 = vst.msk [vmem:[#allocation3 + $0x40] sm:$0xff] %vm172, %v3844
      %3922 = vst.msk [vmem:[#allocation3 + $0x48] sm:$0xff] %vm172, %v3846
      %3923 = vst.msk [vmem:[#allocation3 + $0x50] sm:$0xff] %vm172, %v3849
      %3924 = vst.msk [vmem:[#allocation3 + $0x58] sm:$0xff] %vm172, %v3851
      %3925 = vst.msk [vmem:[#allocation3 + $0x60] sm:$0xff] %vm172, %v3854
      %3926 = vst.msk [vmem:[#allocation3 + $0x68] sm:$0xff] %vm172, %v3856
      %3927 = vst.msk [vmem:[#allocation3 + $0x70] sm:$0xff] %vm172, %v3859
      %3928 = vst.msk [vmem:[#allocation3 + $0x78] sm:$0xff] %vm172, %v3861
      %3929 = vst.msk [vmem:[#allocation3 + $0x80] sm:$0xff] %vm172, %v3864
      %3930 = vst.msk [vmem:[#allocation3 + $0x88] sm:$0xff] %vm172, %v3866
      %3931 = vst.msk [vmem:[#allocation3 + $0x90] sm:$0xff] %vm172, %v3869
      %3932 = vst.msk [vmem:[#allocation3 + $0x98] sm:$0xff] %vm172, %v3871
      %3933 = vst.msk [vmem:[#allocation3 + $0xa0] sm:$0xff] %vm172, %v3874
      %3934 = vst.msk [vmem:[#allocation3 + $0xa8] sm:$0xff] %vm172, %v3876
      %3935 = vst.msk [vmem:[#allocation3 + $0xb0] sm:$0xff] %vm172, %v3879
      %3936 = vst.msk [vmem:[#allocation3 + $0xb8] sm:$0xff] %vm172, %v3881
      %3937 = vst.msk [vmem:[#allocation3 + $0xc0] sm:$0xff] %vm172, %v3884
      %3938 = vst.msk [vmem:[#allocation3 + $0xc8] sm:$0xff] %vm172, %v3886
      %3939 = vst.msk [vmem:[#allocation3 + $0xd0] sm:$0xff] %vm172, %v3889
      %3940 = vst.msk [vmem:[#allocation3 + $0xd8] sm:$0xff] %vm172, %v3891
      %3941 = vst.msk [vmem:[#allocation3 + $0xe0] sm:$0xff] %vm172, %v3894
      %3942 = vst.msk [vmem:[#allocation3 + $0xe8] sm:$0xff] %vm172, %v3896
      %3943 = vst.msk [vmem:[#allocation3 + $0xf0] sm:$0xff] %vm172, %v3899
      %3944 = vst.msk [vmem:[#allocation3 + $0xf8] sm:$0xff] %vm172, %v3901
      %3945 = vst.msk [vmem:[#allocation3 + $0x100] sm:$0xff] %vm172, %v3904
      %3946 = vst.msk [vmem:[#allocation3 + $0x108] sm:$0xff] %vm172, %v3906
      %3947 = vst.msk [vmem:[#allocation3 + $0x110] sm:$0xff] %vm172, %v3909
      %3948 = vst.msk [vmem:[#allocation3 + $0x118] sm:$0xff] %vm172, %v3911
      %v3949 = vld [vmem:[#allocation2 + $0x1] sm:$0xff]
      %v3950 = vld [vmem:[#allocation2 + $0x9] sm:$0xff]
      %v3951 = vld [vmem:[#allocation2 + $0x11] sm:$0xff]
      %v3952 = vld [vmem:[#allocation2 + $0x19] sm:$0xff]
      %v3953 = vld [vmem:[#allocation2 + $0x21] sm:$0xff]
      %v3954 = vld [vmem:[#allocation2 + $0x29] sm:$0xff]
      %v3955 = vld [vmem:[#allocation2 + $0x31] sm:$0xff]
      %v3956 = vld [vmem:[#allocation2 + $0x39] sm:$0xff]
      %v3957 = vld [vmem:[#allocation2 + $0x41] sm:$0xff]
      %v3958 = vld [vmem:[#allocation2 + $0x49] sm:$0xff]
      %v3959 = vld [vmem:[#allocation2 + $0x51] sm:$0xff]
      %v3960 = vld [vmem:[#allocation2 + $0x59] sm:$0xff]
      %v3961 = vld [vmem:[#allocation2 + $0x61] sm:$0xff]
      %v3962 = vld [vmem:[#allocation2 + $0x69] sm:$0xff]
      %v3963 = vld [vmem:[#allocation2 + $0x71] sm:$0xff]
      %v3964 = vld [vmem:[#allocation2 + $0x79] sm:$0xff]
      %v3965 = vld [vmem:[#allocation2 + $0x81] sm:$0xff]
      %v3966 = vld [vmem:[#allocation2 + $0x89] sm:$0xff]
      %v3967 = vld [vmem:[#allocation2 + $0x91] sm:$0xff]
      %v3968 = vld [vmem:[#allocation2 + $0x99] sm:$0xff]
      %v3969 = vld [vmem:[#allocation2 + $0xa1] sm:$0xff]
      %v3970 = vld [vmem:[#allocation2 + $0xa9] sm:$0xff]
      %v3971 = vld [vmem:[#allocation2 + $0xb1] sm:$0xff]
      %v3972 = vld [vmem:[#allocation2 + $0xb9] sm:$0xff]
      %v3973 = vld [vmem:[#allocation2 + $0xc1] sm:$0xff]
      %v3974 = vld [vmem:[#allocation2 + $0xc9] sm:$0xff]
      %v3975 = vld [vmem:[#allocation2 + $0xd1] sm:$0xff]
      %v3976 = vld [vmem:[#allocation2 + $0xd9] sm:$0xff]
      %v3977 = vld [vmem:[#allocation2 + $0xe1] sm:$0xff]
      %v3978 = vld [vmem:[#allocation2 + $0xe9] sm:$0xff]
      %v3979 = vld [vmem:[#allocation2 + $0xf1] sm:$0xff]
      %v3980 = vld [vmem:[#allocation2 + $0xf9] sm:$0xff]
      %v3981 = vld [vmem:[#allocation2 + $0x101] sm:$0xff]
      %v3982 = vld [vmem:[#allocation2 + $0x109] sm:$0xff]
      %v3983 = vld [vmem:[#allocation2 + $0x111] sm:$0xff]
      %v3984 = vld [vmem:[#allocation2 + $0x119] sm:$0xff]
      %v3985 = vpack.c.bf16 %v3950, %v3949
      %v3986 = vpack.c.bf16 %v3952, %v3951
      %v3987 = vpack.c.bf16 %v3954, %v3953
      %v3988 = vpack.c.bf16 %v3956, %v3955
      %v3989 = vpack.c.bf16 %v3958, %v3957
      %v3990 = vpack.c.bf16 %v3960, %v3959
      %v3991 = vpack.c.bf16 %v3962, %v3961
      %v3992 = vpack.c.bf16 %v3964, %v3963
      %v3993 = vpack.c.bf16 %v3966, %v3965
      %v3994 = vpack.c.bf16 %v3968, %v3967
      %v3995 = vpack.c.bf16 %v3970, %v3969
      %v3996 = vpack.c.bf16 %v3972, %v3971
      %v3997 = vpack.c.bf16 %v3974, %v3973
      %v3998 = vpack.c.bf16 %v3976, %v3975
      %v3999 = vpack.c.bf16 %v3978, %v3977
      %v4000 = vpack.c.bf16 %v3980, %v3979
      %v4001 = vpack.c.bf16 %v3982, %v3981
      %v4002 = vpack.c.bf16 %v3984, %v3983
      %s4003 = scalar_lea.vmem %s2, 2
      %v4004 = vld [vmem:[%s4003] sm:$0x3]
      %v4006 = vsel %vm172, %v3985, 0
      %v4009 = vsel %vm172, %v3986, 0
      %v4012 = vsel %vm172, %v3987, 0
      %v4015 = vsel %vm172, %v3988, 0
      %v4018 = vsel %vm172, %v3989, 0
      %v4021 = vsel %vm172, %v3990, 0
      %v4024 = vsel %vm172, %v3991, 0
      %v4027 = vsel %vm172, %v3992, 0
      %v4030 = vsel %vm172, %v3993, 0
      %v4033 = vsel %vm172, %v3994, 0
      %v4036 = vsel %vm172, %v3995, 0
      %v4039 = vsel %vm172, %v3996, 0
      %v4042 = vsel %vm172, %v3997, 0
      %v4045 = vsel %vm172, %v3998, 0
      %v4048 = vsel %vm172, %v3999, 0
      %v4051 = vsel %vm172, %v4000, 0
      %v4054 = vsel %vm172, %v4001, 0
      %v4057 = vsel %vm172, %v4002, 0
      %v4060 = vsel %vm394, %v4004, 0
      %4062 = vmatpush.bf16.msra.mxu0 0
      %4063 = vmatpush.bf16.msra.mxu0 0
      %4064 = vmatpush.bf16.msra.mxu0 0
      %4065 = vmatpush.bf16.msra.mxu0 0
      %4066 = vmatpush.bf16.msra.mxu0 0
      %4067 = vmatpush.bf16.msra.mxu0 0
      %4068 = vmatpush.bf16.msra.mxu0 0
      %4069 = vmatpush.bf16.msra.mxu0 %v4060
      %4070 = vmatmul.bf16.gmra.mxu0 %v4006
      %v4071 = vpop.f32.mrf.mxu0
      %v4072 = vadd.f32 0.0, %v4071
      %v4073 = vpop.f32.mrf.mxu0
      %v4074 = vadd.f32 0.0, %v4073
      %4075 = vmatmul.bf16.gmra.mxu0 %v4009
      %v4076 = vpop.f32.mrf.mxu0
      %v4077 = vadd.f32 0.0, %v4076
      %v4078 = vpop.f32.mrf.mxu0
      %v4079 = vadd.f32 0.0, %v4078
      %4080 = vmatmul.bf16.gmra.mxu0 %v4012
      %v4081 = vpop.f32.mrf.mxu0
      %v4082 = vadd.f32 0.0, %v4081
      %v4083 = vpop.f32.mrf.mxu0
      %v4084 = vadd.f32 0.0, %v4083
      %4085 = vmatmul.bf16.gmra.mxu0 %v4015
      %v4086 = vpop.f32.mrf.mxu0
      %v4087 = vadd.f32 0.0, %v4086
      %v4088 = vpop.f32.mrf.mxu0
      %v4089 = vadd.f32 0.0, %v4088
      %4090 = vmatmul.bf16.gmra.mxu0 %v4018
      %v4091 = vpop.f32.mrf.mxu0
      %v4092 = vadd.f32 0.0, %v4091
      %v4093 = vpop.f32.mrf.mxu0
      %v4094 = vadd.f32 0.0, %v4093
      %4095 = vmatmul.bf16.gmra.mxu0 %v4021
      %v4096 = vpop.f32.mrf.mxu0
      %v4097 = vadd.f32 0.0, %v4096
      %v4098 = vpop.f32.mrf.mxu0
      %v4099 = vadd.f32 0.0, %v4098
      %4100 = vmatmul.bf16.gmra.mxu0 %v4024
      %v4101 = vpop.f32.mrf.mxu0
      %v4102 = vadd.f32 0.0, %v4101
      %v4103 = vpop.f32.mrf.mxu0
      %v4104 = vadd.f32 0.0, %v4103
      %4105 = vmatmul.bf16.gmra.mxu0 %v4027
      %v4106 = vpop.f32.mrf.mxu0
      %v4107 = vadd.f32 0.0, %v4106
      %v4108 = vpop.f32.mrf.mxu0
      %v4109 = vadd.f32 0.0, %v4108
      %4110 = vmatmul.bf16.gmra.mxu0 %v4030
      %v4111 = vpop.f32.mrf.mxu0
      %v4112 = vadd.f32 0.0, %v4111
      %v4113 = vpop.f32.mrf.mxu0
      %v4114 = vadd.f32 0.0, %v4113
      %4115 = vmatmul.bf16.gmra.mxu0 %v4033
      %v4116 = vpop.f32.mrf.mxu0
      %v4117 = vadd.f32 0.0, %v4116
      %v4118 = vpop.f32.mrf.mxu0
      %v4119 = vadd.f32 0.0, %v4118
      %4120 = vmatmul.bf16.gmra.mxu0 %v4036
      %v4121 = vpop.f32.mrf.mxu0
      %v4122 = vadd.f32 0.0, %v4121
      %v4123 = vpop.f32.mrf.mxu0
      %v4124 = vadd.f32 0.0, %v4123
      %4125 = vmatmul.bf16.gmra.mxu0 %v4039
      %v4126 = vpop.f32.mrf.mxu0
      %v4127 = vadd.f32 0.0, %v4126
      %v4128 = vpop.f32.mrf.mxu0
      %v4129 = vadd.f32 0.0, %v4128
      %4130 = vmatmul.bf16.gmra.mxu0 %v4042
      %v4131 = vpop.f32.mrf.mxu0
      %v4132 = vadd.f32 0.0, %v4131
      %v4133 = vpop.f32.mrf.mxu0
      %v4134 = vadd.f32 0.0, %v4133
      %4135 = vmatmul.bf16.gmra.mxu0 %v4045
      %v4136 = vpop.f32.mrf.mxu0
      %v4137 = vadd.f32 0.0, %v4136
      %v4138 = vpop.f32.mrf.mxu0
      %v4139 = vadd.f32 0.0, %v4138
      %4140 = vmatmul.bf16.gmra.mxu0 %v4048
      %v4141 = vpop.f32.mrf.mxu0
      %v4142 = vadd.f32 0.0, %v4141
      %v4143 = vpop.f32.mrf.mxu0
      %v4144 = vadd.f32 0.0, %v4143
      %4145 = vmatmul.bf16.gmra.mxu0 %v4051
      %v4146 = vpop.f32.mrf.mxu0
      %v4147 = vadd.f32 0.0, %v4146
      %v4148 = vpop.f32.mrf.mxu0
      %v4149 = vadd.f32 0.0, %v4148
      %4150 = vmatmul.bf16.gmra.mxu0 %v4054
      %v4151 = vpop.f32.mrf.mxu0
      %v4152 = vadd.f32 0.0, %v4151
      %v4153 = vpop.f32.mrf.mxu0
      %v4154 = vadd.f32 0.0, %v4153
      %4155 = vmatmul.bf16.gmra.mxu0 %v4057
      %v4156 = vpop.f32.mrf.mxu0
      %v4157 = vadd.f32 0.0, %v4156
      %v4158 = vpop.f32.mrf.mxu0
      %v4159 = vadd.f32 0.0, %v4158
      %4160 = vdwg.mxu0
      %v4161 = vld [vmem:[#allocation3] sm:$0xff]
      %v4162 = vld [vmem:[#allocation3 + $0x8] sm:$0xff]
      %v4163 = vld [vmem:[#allocation3 + $0x10] sm:$0xff]
      %v4164 = vld [vmem:[#allocation3 + $0x18] sm:$0xff]
      %v4165 = vld [vmem:[#allocation3 + $0x20] sm:$0xff]
      %v4166 = vld [vmem:[#allocation3 + $0x28] sm:$0xff]
      %v4167 = vld [vmem:[#allocation3 + $0x30] sm:$0xff]
      %v4168 = vld [vmem:[#allocation3 + $0x38] sm:$0xff]
      %v4169 = vld [vmem:[#allocation3 + $0x40] sm:$0xff]
      %v4170 = vld [vmem:[#allocation3 + $0x48] sm:$0xff]
      %v4171 = vld [vmem:[#allocation3 + $0x50] sm:$0xff]
      %v4172 = vld [vmem:[#allocation3 + $0x58] sm:$0xff]
      %v4173 = vld [vmem:[#allocation3 + $0x60] sm:$0xff]
      %v4174 = vld [vmem:[#allocation3 + $0x68] sm:$0xff]
      %v4175 = vld [vmem:[#allocation3 + $0x70] sm:$0xff]
      %v4176 = vld [vmem:[#allocation3 + $0x78] sm:$0xff]
      %v4177 = vld [vmem:[#allocation3 + $0x80] sm:$0xff]
      %v4178 = vld [vmem:[#allocation3 + $0x88] sm:$0xff]
      %v4179 = vld [vmem:[#allocation3 + $0x90] sm:$0xff]
      %v4180 = vld [vmem:[#allocation3 + $0x98] sm:$0xff]
      %v4181 = vld [vmem:[#allocation3 + $0xa0] sm:$0xff]
      %v4182 = vld [vmem:[#allocation3 + $0xa8] sm:$0xff]
      %v4183 = vld [vmem:[#allocation3 + $0xb0] sm:$0xff]
      %v4184 = vld [vmem:[#allocation3 + $0xb8] sm:$0xff]
      %v4185 = vld [vmem:[#allocation3 + $0xc0] sm:$0xff]
      %v4186 = vld [vmem:[#allocation3 + $0xc8] sm:$0xff]
      %v4187 = vld [vmem:[#allocation3 + $0xd0] sm:$0xff]
      %v4188 = vld [vmem:[#allocation3 + $0xd8] sm:$0xff]
      %v4189 = vld [vmem:[#allocation3 + $0xe0] sm:$0xff]
      %v4190 = vld [vmem:[#allocation3 + $0xe8] sm:$0xff]
      %v4191 = vld [vmem:[#allocation3 + $0xf0] sm:$0xff]
      %v4192 = vld [vmem:[#allocation3 + $0xf8] sm:$0xff]
      %v4193 = vld [vmem:[#allocation3 + $0x100] sm:$0xff]
      %v4194 = vld [vmem:[#allocation3 + $0x108] sm:$0xff]
      %v4195 = vld [vmem:[#allocation3 + $0x110] sm:$0xff]
      %v4196 = vld [vmem:[#allocation3 + $0x118] sm:$0xff]
      %v4197 = vadd.f32 %v4161, %v4072
      %v4198 = vadd.f32 %v4162, %v4074
      %v4199 = vadd.f32 %v4163, %v4077
      %v4200 = vadd.f32 %v4164, %v4079
      %v4201 = vadd.f32 %v4165, %v4082
      %v4202 = vadd.f32 %v4166, %v4084
      %v4203 = vadd.f32 %v4167, %v4087
      %v4204 = vadd.f32 %v4168, %v4089
      %v4205 = vadd.f32 %v4169, %v4092
      %v4206 = vadd.f32 %v4170, %v4094
      %v4207 = vadd.f32 %v4171, %v4097
      %v4208 = vadd.f32 %v4172, %v4099
      %v4209 = vadd.f32 %v4173, %v4102
      %v4210 = vadd.f32 %v4174, %v4104
      %v4211 = vadd.f32 %v4175, %v4107
      %v4212 = vadd.f32 %v4176, %v4109
      %v4213 = vadd.f32 %v4177, %v4112
      %v4214 = vadd.f32 %v4178, %v4114
      %v4215 = vadd.f32 %v4179, %v4117
      %v4216 = vadd.f32 %v4180, %v4119
      %v4217 = vadd.f32 %v4181, %v4122
      %v4218 = vadd.f32 %v4182, %v4124
      %v4219 = vadd.f32 %v4183, %v4127
      %v4220 = vadd.f32 %v4184, %v4129
      %v4221 = vadd.f32 %v4185, %v4132
      %v4222 = vadd.f32 %v4186, %v4134
      %v4223 = vadd.f32 %v4187, %v4137
      %v4224 = vadd.f32 %v4188, %v4139
      %v4225 = vadd.f32 %v4189, %v4142
      %v4226 = vadd.f32 %v4190, %v4144
      %v4227 = vadd.f32 %v4191, %v4147
      %v4228 = vadd.f32 %v4192, %v4149
      %v4229 = vadd.f32 %v4193, %v4152
      %v4230 = vadd.f32 %v4194, %v4154
      %v4231 = vadd.f32 %v4195, %v4157
      %v4232 = vadd.f32 %v4196, %v4159
      %4233 = vst.msk [vmem:[#allocation3] sm:$0xff] %vm172, %v4197
      %4234 = vst.msk [vmem:[#allocation3 + $0x8] sm:$0xff] %vm172, %v4198
      %4235 = vst.msk [vmem:[#allocation3 + $0x10] sm:$0xff] %vm172, %v4199
      %4236 = vst.msk [vmem:[#allocation3 + $0x18] sm:$0xff] %vm172, %v4200
      %4237 = vst.msk [vmem:[#allocation3 + $0x20] sm:$0xff] %vm172, %v4201
      %4238 = vst.msk [vmem:[#allocation3 + $0x28] sm:$0xff] %vm172, %v4202
      %4239 = vst.msk [vmem:[#allocation3 + $0x30] sm:$0xff] %vm172, %v4203
      %4240 = vst.msk [vmem:[#allocation3 + $0x38] sm:$0xff] %vm172, %v4204
      %4241 = vst.msk [vmem:[#allocation3 + $0x40] sm:$0xff] %vm172, %v4205
      %4242 = vst.msk [vmem:[#allocation3 + $0x48] sm:$0xff] %vm172, %v4206
      %4243 = vst.msk [vmem:[#allocation3 + $0x50] sm:$0xff] %vm172, %v4207
      %4244 = vst.msk [vmem:[#allocation3 + $0x58] sm:$0xff] %vm172, %v4208
      %4245 = vst.msk [vmem:[#allocation3 + $0x60] sm:$0xff] %vm172, %v4209
      %4246 = vst.msk [vmem:[#allocation3 + $0x68] sm:$0xff] %vm172, %v4210
      %4247 = vst.msk [vmem:[#allocation3 + $0x70] sm:$0xff] %vm172, %v4211
      %4248 = vst.msk [vmem:[#allocation3 + $0x78] sm:$0xff] %vm172, %v4212
      %4249 = vst.msk [vmem:[#allocation3 + $0x80] sm:$0xff] %vm172, %v4213
      %4250 = vst.msk [vmem:[#allocation3 + $0x88] sm:$0xff] %vm172, %v4214
      %4251 = vst.msk [vmem:[#allocation3 + $0x90] sm:$0xff] %vm172, %v4215
      %4252 = vst.msk [vmem:[#allocation3 + $0x98] sm:$0xff] %vm172, %v4216
      %4253 = vst.msk [vmem:[#allocation3 + $0xa0] sm:$0xff] %vm172, %v4217
      %4254 = vst.msk [vmem:[#allocation3 + $0xa8] sm:$0xff] %vm172, %v4218
      %4255 = vst.msk [vmem:[#allocation3 + $0xb0] sm:$0xff] %vm172, %v4219
      %4256 = vst.msk [vmem:[#allocation3 + $0xb8] sm:$0xff] %vm172, %v4220
      %4257 = vst.msk [vmem:[#allocation3 + $0xc0] sm:$0xff] %vm172, %v4221
      %4258 = vst.msk [vmem:[#allocation3 + $0xc8] sm:$0xff] %vm172, %v4222
      %4259 = vst.msk [vmem:[#allocation3 + $0xd0] sm:$0xff] %vm172, %v4223
      %4260 = vst.msk [vmem:[#allocation3 + $0xd8] sm:$0xff] %vm172, %v4224
      %4261 = vst.msk [vmem:[#allocation3 + $0xe0] sm:$0xff] %vm172, %v4225
      %4262 = vst.msk [vmem:[#allocation3 + $0xe8] sm:$0xff] %vm172, %v4226
      %4263 = vst.msk [vmem:[#allocation3 + $0xf0] sm:$0xff] %vm172, %v4227
      %4264 = vst.msk [vmem:[#allocation3 + $0xf8] sm:$0xff] %vm172, %v4228
      %4265 = vst.msk [vmem:[#allocation3 + $0x100] sm:$0xff] %vm172, %v4229
      %4266 = vst.msk [vmem:[#allocation3 + $0x108] sm:$0xff] %vm172, %v4230
      %4267 = vst.msk [vmem:[#allocation3 + $0x110] sm:$0xff] %vm172, %v4231
      %4268 = vst.msk [vmem:[#allocation3 + $0x118] sm:$0xff] %vm172, %v4232
      %v4269 = vld [vmem:[#allocation2 + $0x2] sm:$0xff]
      %v4270 = vld [vmem:[#allocation2 + $0xa] sm:$0xff]
      %v4271 = vld [vmem:[#allocation2 + $0x12] sm:$0xff]
      %v4272 = vld [vmem:[#allocation2 + $0x1a] sm:$0xff]
      %v4273 = vld [vmem:[#allocation2 + $0x22] sm:$0xff]
      %v4274 = vld [vmem:[#allocation2 + $0x2a] sm:$0xff]
      %v4275 = vld [vmem:[#allocation2 + $0x32] sm:$0xff]
      %v4276 = vld [vmem:[#allocation2 + $0x3a] sm:$0xff]
      %v4277 = vld [vmem:[#allocation2 + $0x42] sm:$0xff]
      %v4278 = vld [vmem:[#allocation2 + $0x4a] sm:$0xff]
      %v4279 = vld [vmem:[#allocation2 + $0x52] sm:$0xff]
      %v4280 = vld [vmem:[#allocation2 + $0x5a] sm:$0xff]
      %v4281 = vld [vmem:[#allocation2 + $0x62] sm:$0xff]
      %v4282 = vld [vmem:[#allocation2 + $0x6a] sm:$0xff]
      %v4283 = vld [vmem:[#allocation2 + $0x72] sm:$0xff]
      %v4284 = vld [vmem:[#allocation2 + $0x7a] sm:$0xff]
      %v4285 = vld [vmem:[#allocation2 + $0x82] sm:$0xff]
      %v4286 = vld [vmem:[#allocation2 + $0x8a] sm:$0xff]
      %v4287 = vld [vmem:[#allocation2 + $0x92] sm:$0xff]
      %v4288 = vld [vmem:[#allocation2 + $0x9a] sm:$0xff]
      %v4289 = vld [vmem:[#allocation2 + $0xa2] sm:$0xff]
      %v4290 = vld [vmem:[#allocation2 + $0xaa] sm:$0xff]
      %v4291 = vld [vmem:[#allocation2 + $0xb2] sm:$0xff]
      %v4292 = vld [vmem:[#allocation2 + $0xba] sm:$0xff]
      %v4293 = vld [vmem:[#allocation2 + $0xc2] sm:$0xff]
      %v4294 = vld [vmem:[#allocation2 + $0xca] sm:$0xff]
      %v4295 = vld [vmem:[#allocation2 + $0xd2] sm:$0xff]
      %v4296 = vld [vmem:[#allocation2 + $0xda] sm:$0xff]
      %v4297 = vld [vmem:[#allocation2 + $0xe2] sm:$0xff]
      %v4298 = vld [vmem:[#allocation2 + $0xea] sm:$0xff]
      %v4299 = vld [vmem:[#allocation2 + $0xf2] sm:$0xff]
      %v4300 = vld [vmem:[#allocation2 + $0xfa] sm:$0xff]
      %v4301 = vld [vmem:[#allocation2 + $0x102] sm:$0xff]
      %v4302 = vld [vmem:[#allocation2 + $0x10a] sm:$0xff]
      %v4303 = vld [vmem:[#allocation2 + $0x112] sm:$0xff]
      %v4304 = vld [vmem:[#allocation2 + $0x11a] sm:$0xff]
      %v4305 = vpack.c.bf16 %v4270, %v4269
      %v4306 = vpack.c.bf16 %v4272, %v4271
      %v4307 = vpack.c.bf16 %v4274, %v4273
      %v4308 = vpack.c.bf16 %v4276, %v4275
      %v4309 = vpack.c.bf16 %v4278, %v4277
      %v4310 = vpack.c.bf16 %v4280, %v4279
      %v4311 = vpack.c.bf16 %v4282, %v4281
      %v4312 = vpack.c.bf16 %v4284, %v4283
      %v4313 = vpack.c.bf16 %v4286, %v4285
      %v4314 = vpack.c.bf16 %v4288, %v4287
      %v4315 = vpack.c.bf16 %v4290, %v4289
      %v4316 = vpack.c.bf16 %v4292, %v4291
      %v4317 = vpack.c.bf16 %v4294, %v4293
      %v4318 = vpack.c.bf16 %v4296, %v4295
      %v4319 = vpack.c.bf16 %v4298, %v4297
      %v4320 = vpack.c.bf16 %v4300, %v4299
      %v4321 = vpack.c.bf16 %v4302, %v4301
      %v4322 = vpack.c.bf16 %v4304, %v4303
      %s4323 = scalar_lea.vmem %s2, 4
      %v4324 = vld [vmem:[%s4323] sm:$0x3]
      %v4326 = vsel %vm172, %v4305, 0
      %v4329 = vsel %vm172, %v4306, 0
      %v4332 = vsel %vm172, %v4307, 0
      %v4335 = vsel %vm172, %v4308, 0
      %v4338 = vsel %vm172, %v4309, 0
      %v4341 = vsel %vm172, %v4310, 0
      %v4344 = vsel %vm172, %v4311, 0
      %v4347 = vsel %vm172, %v4312, 0
      %v4350 = vsel %vm172, %v4313, 0
      %v4353 = vsel %vm172, %v4314, 0
      %v4356 = vsel %vm172, %v4315, 0
      %v4359 = vsel %vm172, %v4316, 0
      %v4362 = vsel %vm172, %v4317, 0
      %v4365 = vsel %vm172, %v4318, 0
      %v4368 = vsel %vm172, %v4319, 0
      %v4371 = vsel %vm172, %v4320, 0
      %v4374 = vsel %vm172, %v4321, 0
      %v4377 = vsel %vm172, %v4322, 0
      %v4380 = vsel %vm394, %v4324, 0
      %4382 = vmatpush.bf16.msra.mxu0 0
      %4383 = vmatpush.bf16.msra.mxu0 0
      %4384 = vmatpush.bf16.msra.mxu0 0
      %4385 = vmatpush.bf16.msra.mxu0 0
      %4386 = vmatpush.bf16.msra.mxu0 0
      %4387 = vmatpush.bf16.msra.mxu0 0
      %4388 = vmatpush.bf16.msra.mxu0 0
      %4389 = vmatpush.bf16.msra.mxu0 %v4380
      %4390 = vmatmul.bf16.gmra.mxu0 %v4326
      %v4391 = vpop.f32.mrf.mxu0
      %v4392 = vadd.f32 0.0, %v4391
      %v4393 = vpop.f32.mrf.mxu0
      %v4394 = vadd.f32 0.0, %v4393
      %4395 = vmatmul.bf16.gmra.mxu0 %v4329
      %v4396 = vpop.f32.mrf.mxu0
      %v4397 = vadd.f32 0.0, %v4396
      %v4398 = vpop.f32.mrf.mxu0
      %v4399 = vadd.f32 0.0, %v4398
      %4400 = vmatmul.bf16.gmra.mxu0 %v4332
      %v4401 = vpop.f32.mrf.mxu0
      %v4402 = vadd.f32 0.0, %v4401
      %v4403 = vpop.f32.mrf.mxu0
      %v4404 = vadd.f32 0.0, %v4403
      %4405 = vmatmul.bf16.gmra.mxu0 %v4335
      %v4406 = vpop.f32.mrf.mxu0
      %v4407 = vadd.f32 0.0, %v4406
      %v4408 = vpop.f32.mrf.mxu0
      %v4409 = vadd.f32 0.0, %v4408
      %4410 = vmatmul.bf16.gmra.mxu0 %v4338
      %v4411 = vpop.f32.mrf.mxu0
      %v4412 = vadd.f32 0.0, %v4411
      %v4413 = vpop.f32.mrf.mxu0
      %v4414 = vadd.f32 0.0, %v4413
      %4415 = vmatmul.bf16.gmra.mxu0 %v4341
      %v4416 = vpop.f32.mrf.mxu0
      %v4417 = vadd.f32 0.0, %v4416
      %v4418 = vpop.f32.mrf.mxu0
      %v4419 = vadd.f32 0.0, %v4418
      %4420 = vmatmul.bf16.gmra.mxu0 %v4344
      %v4421 = vpop.f32.mrf.mxu0
      %v4422 = vadd.f32 0.0, %v4421
      %v4423 = vpop.f32.mrf.mxu0
      %v4424 = vadd.f32 0.0, %v4423
      %4425 = vmatmul.bf16.gmra.mxu0 %v4347
      %v4426 = vpop.f32.mrf.mxu0
      %v4427 = vadd.f32 0.0, %v4426
      %v4428 = vpop.f32.mrf.mxu0
      %v4429 = vadd.f32 0.0, %v4428
      %4430 = vmatmul.bf16.gmra.mxu0 %v4350
      %v4431 = vpop.f32.mrf.mxu0
      %v4432 = vadd.f32 0.0, %v4431
      %v4433 = vpop.f32.mrf.mxu0
      %v4434 = vadd.f32 0.0, %v4433
      %4435 = vmatmul.bf16.gmra.mxu0 %v4353
      %v4436 = vpop.f32.mrf.mxu0
      %v4437 = vadd.f32 0.0, %v4436
      %v4438 = vpop.f32.mrf.mxu0
      %v4439 = vadd.f32 0.0, %v4438
      %4440 = vmatmul.bf16.gmra.mxu0 %v4356
      %v4441 = vpop.f32.mrf.mxu0
      %v4442 = vadd.f32 0.0, %v4441
      %v4443 = vpop.f32.mrf.mxu0
      %v4444 = vadd.f32 0.0, %v4443
      %4445 = vmatmul.bf16.gmra.mxu0 %v4359
      %v4446 = vpop.f32.mrf.mxu0
      %v4447 = vadd.f32 0.0, %v4446
      %v4448 = vpop.f32.mrf.mxu0
      %v4449 = vadd.f32 0.0, %v4448
      %4450 = vmatmul.bf16.gmra.mxu0 %v4362
      %v4451 = vpop.f32.mrf.mxu0
      %v4452 = vadd.f32 0.0, %v4451
      %v4453 = vpop.f32.mrf.mxu0
      %v4454 = vadd.f32 0.0, %v4453
      %4455 = vmatmul.bf16.gmra.mxu0 %v4365
      %v4456 = vpop.f32.mrf.mxu0
      %v4457 = vadd.f32 0.0, %v4456
      %v4458 = vpop.f32.mrf.mxu0
      %v4459 = vadd.f32 0.0, %v4458
      %4460 = vmatmul.bf16.gmra.mxu0 %v4368
      %v4461 = vpop.f32.mrf.mxu0
      %v4462 = vadd.f32 0.0, %v4461
      %v4463 = vpop.f32.mrf.mxu0
      %v4464 = vadd.f32 0.0, %v4463
      %4465 = vmatmul.bf16.gmra.mxu0 %v4371
      %v4466 = vpop.f32.mrf.mxu0
      %v4467 = vadd.f32 0.0, %v4466
      %v4468 = vpop.f32.mrf.mxu0
      %v4469 = vadd.f32 0.0, %v4468
      %4470 = vmatmul.bf16.gmra.mxu0 %v4374
      %v4471 = vpop.f32.mrf.mxu0
      %v4472 = vadd.f32 0.0, %v4471
      %v4473 = vpop.f32.mrf.mxu0
      %v4474 = vadd.f32 0.0, %v4473
      %4475 = vmatmul.bf16.gmra.mxu0 %v4377
      %v4476 = vpop.f32.mrf.mxu0
      %v4477 = vadd.f32 0.0, %v4476
      %v4478 = vpop.f32.mrf.mxu0
      %v4479 = vadd.f32 0.0, %v4478
      %4480 = vdwg.mxu0
      %v4481 = vld [vmem:[#allocation3] sm:$0xff]
      %v4482 = vld [vmem:[#allocation3 + $0x8] sm:$0xff]
      %v4483 = vld [vmem:[#allocation3 + $0x10] sm:$0xff]
      %v4484 = vld [vmem:[#allocation3 + $0x18] sm:$0xff]
      %v4485 = vld [vmem:[#allocation3 + $0x20] sm:$0xff]
      %v4486 = vld [vmem:[#allocation3 + $0x28] sm:$0xff]
      %v4487 = vld [vmem:[#allocation3 + $0x30] sm:$0xff]
      %v4488 = vld [vmem:[#allocation3 + $0x38] sm:$0xff]
      %v4489 = vld [vmem:[#allocation3 + $0x40] sm:$0xff]
      %v4490 = vld [vmem:[#allocation3 + $0x48] sm:$0xff]
      %v4491 = vld [vmem:[#allocation3 + $0x50] sm:$0xff]
      %v4492 = vld [vmem:[#allocation3 + $0x58] sm:$0xff]
      %v4493 = vld [vmem:[#allocation3 + $0x60] sm:$0xff]
      %v4494 = vld [vmem:[#allocation3 + $0x68] sm:$0xff]
      %v4495 = vld [vmem:[#allocation3 + $0x70] sm:$0xff]
      %v4496 = vld [vmem:[#allocation3 + $0x78] sm:$0xff]
      %v4497 = vld [vmem:[#allocation3 + $0x80] sm:$0xff]
      %v4498 = vld [vmem:[#allocation3 + $0x88] sm:$0xff]
      %v4499 = vld [vmem:[#allocation3 + $0x90] sm:$0xff]
      %v4500 = vld [vmem:[#allocation3 + $0x98] sm:$0xff]
      %v4501 = vld [vmem:[#allocation3 + $0xa0] sm:$0xff]
      %v4502 = vld [vmem:[#allocation3 + $0xa8] sm:$0xff]
      %v4503 = vld [vmem:[#allocation3 + $0xb0] sm:$0xff]
      %v4504 = vld [vmem:[#allocation3 + $0xb8] sm:$0xff]
      %v4505 = vld [vmem:[#allocation3 + $0xc0] sm:$0xff]
      %v4506 = vld [vmem:[#allocation3 + $0xc8] sm:$0xff]
      %v4507 = vld [vmem:[#allocation3 + $0xd0] sm:$0xff]
      %v4508 = vld [vmem:[#allocation3 + $0xd8] sm:$0xff]
      %v4509 = vld [vmem:[#allocation3 + $0xe0] sm:$0xff]
      %v4510 = vld [vmem:[#allocation3 + $0xe8] sm:$0xff]
      %v4511 = vld [vmem:[#allocation3 + $0xf0] sm:$0xff]
      %v4512 = vld [vmem:[#allocation3 + $0xf8] sm:$0xff]
      %v4513 = vld [vmem:[#allocation3 + $0x100] sm:$0xff]
      %v4514 = vld [vmem:[#allocation3 + $0x108] sm:$0xff]
      %v4515 = vld [vmem:[#allocation3 + $0x110] sm:$0xff]
      %v4516 = vld [vmem:[#allocation3 + $0x118] sm:$0xff]
      %v4517 = vadd.f32 %v4481, %v4392
      %v4518 = vadd.f32 %v4482, %v4394
      %v4519 = vadd.f32 %v4483, %v4397
      %v4520 = vadd.f32 %v4484, %v4399
      %v4521 = vadd.f32 %v4485, %v4402
      %v4522 = vadd.f32 %v4486, %v4404
      %v4523 = vadd.f32 %v4487, %v4407
      %v4524 = vadd.f32 %v4488, %v4409
      %v4525 = vadd.f32 %v4489, %v4412
      %v4526 = vadd.f32 %v4490, %v4414
      %v4527 = vadd.f32 %v4491, %v4417
      %v4528 = vadd.f32 %v4492, %v4419
      %v4529 = vadd.f32 %v4493, %v4422
      %v4530 = vadd.f32 %v4494, %v4424
      %v4531 = vadd.f32 %v4495, %v4427
      %v4532 = vadd.f32 %v4496, %v4429
      %v4533 = vadd.f32 %v4497, %v4432
      %v4534 = vadd.f32 %v4498, %v4434
      %v4535 = vadd.f32 %v4499, %v4437
      %v4536 = vadd.f32 %v4500, %v4439
      %v4537 = vadd.f32 %v4501, %v4442
      %v4538 = vadd.f32 %v4502, %v4444
      %v4539 = vadd.f32 %v4503, %v4447
      %v4540 = vadd.f32 %v4504, %v4449
      %v4541 = vadd.f32 %v4505, %v4452
      %v4542 = vadd.f32 %v4506, %v4454
      %v4543 = vadd.f32 %v4507, %v4457
      %v4544 = vadd.f32 %v4508, %v4459
      %v4545 = vadd.f32 %v4509, %v4462
      %v4546 = vadd.f32 %v4510, %v4464
      %v4547 = vadd.f32 %v4511, %v4467
      %v4548 = vadd.f32 %v4512, %v4469
      %v4549 = vadd.f32 %v4513, %v4472
      %v4550 = vadd.f32 %v4514, %v4474
      %v4551 = vadd.f32 %v4515, %v4477
      %v4552 = vadd.f32 %v4516, %v4479
      %4553 = vst.msk [vmem:[#allocation3] sm:$0xff] %vm172, %v4517
      %4554 = vst.msk [vmem:[#allocation3 + $0x8] sm:$0xff] %vm172, %v4518
      %4555 = vst.msk [vmem:[#allocation3 + $0x10] sm:$0xff] %vm172, %v4519
      %4556 = vst.msk [vmem:[#allocation3 + $0x18] sm:$0xff] %vm172, %v4520
      %4557 = vst.msk [vmem:[#allocation3 + $0x20] sm:$0xff] %vm172, %v4521
      %4558 = vst.msk [vmem:[#allocation3 + $0x28] sm:$0xff] %vm172, %v4522
      %4559 = vst.msk [vmem:[#allocation3 + $0x30] sm:$0xff] %vm172, %v4523
      %4560 = vst.msk [vmem:[#allocation3 + $0x38] sm:$0xff] %vm172, %v4524
      %4561 = vst.msk [vmem:[#allocation3 + $0x40] sm:$0xff] %vm172, %v4525
      %4562 = vst.msk [vmem:[#allocation3 + $0x48] sm:$0xff] %vm172, %v4526
      %4563 = vst.msk [vmem:[#allocation3 + $0x50] sm:$0xff] %vm172, %v4527
      %4564 = vst.msk [vmem:[#allocation3 + $0x58] sm:$0xff] %vm172, %v4528
      %4565 = vst.msk [vmem:[#allocation3 + $0x60] sm:$0xff] %vm172, %v4529
      %4566 = vst.msk [vmem:[#allocation3 + $0x68] sm:$0xff] %vm172, %v4530
      %4567 = vst.msk [vmem:[#allocation3 + $0x70] sm:$0xff] %vm172, %v4531
      %4568 = vst.msk [vmem:[#allocation3 + $0x78] sm:$0xff] %vm172, %v4532
      %4569 = vst.msk [vmem:[#allocation3 + $0x80] sm:$0xff] %vm172, %v4533
      %4570 = vst.msk [vmem:[#allocation3 + $0x88] sm:$0xff] %vm172, %v4534
      %4571 = vst.msk [vmem:[#allocation3 + $0x90] sm:$0xff] %vm172, %v4535
      %4572 = vst.msk [vmem:[#allocation3 + $0x98] sm:$0xff] %vm172, %v4536
      %4573 = vst.msk [vmem:[#allocation3 + $0xa0] sm:$0xff] %vm172, %v4537
      %4574 = vst.msk [vmem:[#allocation3 + $0xa8] sm:$0xff] %vm172, %v4538
      %4575 = vst.msk [vmem:[#allocation3 + $0xb0] sm:$0xff] %vm172, %v4539
      %4576 = vst.msk [vmem:[#allocation3 + $0xb8] sm:$0xff] %vm172, %v4540
      %4577 = vst.msk [vmem:[#allocation3 + $0xc0] sm:$0xff] %vm172, %v4541
      %4578 = vst.msk [vmem:[#allocation3 + $0xc8] sm:$0xff] %vm172, %v4542
      %4579 = vst.msk [vmem:[#allocation3 + $0xd0] sm:$0xff] %vm172, %v4543
      %4580 = vst.msk [vmem:[#allocation3 + $0xd8] sm:$0xff] %vm172, %v4544
      %4581 = vst.msk [vmem:[#allocation3 + $0xe0] sm:$0xff] %vm172, %v4545
      %4582 = vst.msk [vmem:[#allocation3 + $0xe8] sm:$0xff] %vm172, %v4546
      %4583 = vst.msk [vmem:[#allocation3 + $0xf0] sm:$0xff] %vm172, %v4547
      %4584 = vst.msk [vmem:[#allocation3 + $0xf8] sm:$0xff] %vm172, %v4548
      %4585 = vst.msk [vmem:[#allocation3 + $0x100] sm:$0xff] %vm172, %v4549
      %4586 = vst.msk [vmem:[#allocation3 + $0x108] sm:$0xff] %vm172, %v4550
      %4587 = vst.msk [vmem:[#allocation3 + $0x110] sm:$0xff] %vm172, %v4551
      %4588 = vst.msk [vmem:[#allocation3 + $0x118] sm:$0xff] %vm172, %v4552
      %v4589 = vld [vmem:[#allocation2 + $0x12] sm:$0xff]
      %v4590 = vld [vmem:[#allocation2 + $0x1a] sm:$0xff]
      %v4591 = vld [vmem:[#allocation2 + $0x22] sm:$0xff]
      %v4592 = vld [vmem:[#allocation2 + $0x2a] sm:$0xff]
      %v4593 = vld [vmem:[#allocation2 + $0x32] sm:$0xff]
      %v4594 = vld [vmem:[#allocation2 + $0x3a] sm:$0xff]
      %v4595 = vld [vmem:[#allocation2 + $0x42] sm:$0xff]
      %v4596 = vld [vmem:[#allocation2 + $0x4a] sm:$0xff]
      %v4597 = vld [vmem:[#allocation2 + $0x52] sm:$0xff]
      %v4598 = vld [vmem:[#allocation2 + $0x5a] sm:$0xff]
      %v4599 = vld [vmem:[#allocation2 + $0x62] sm:$0xff]
      %v4600 = vld [vmem:[#allocation2 + $0x6a] sm:$0xff]
      %v4601 = vld [vmem:[#allocation2 + $0x72] sm:$0xff]
      %v4602 = vld [vmem:[#allocation2 + $0x7a] sm:$0xff]
      %v4603 = vld [vmem:[#allocation2 + $0x82] sm:$0xff]
      %v4604 = vld [vmem:[#allocation2 + $0x8a] sm:$0xff]
      %v4605 = vld [vmem:[#allocation2 + $0x92] sm:$0xff]
      %v4606 = vld [vmem:[#allocation2 + $0x9a] sm:$0xff]
      %v4607 = vld [vmem:[#allocation2 + $0xa2] sm:$0xff]
      %v4608 = vld [vmem:[#allocation2 + $0xaa] sm:$0xff]
      %v4609 = vld [vmem:[#allocation2 + $0xb2] sm:$0xff]
      %v4610 = vld [vmem:[#allocation2 + $0xba] sm:$0xff]
      %v4611 = vld [vmem:[#allocation2 + $0xc2] sm:$0xff]
      %v4612 = vld [vmem:[#allocation2 + $0xca] sm:$0xff]
      %v4613 = vld [vmem:[#allocation2 + $0xd2] sm:$0xff]
      %v4614 = vld [vmem:[#allocation2 + $0xda] sm:$0xff]
      %v4615 = vld [vmem:[#allocation2 + $0xe2] sm:$0xff]
      %v4616 = vld [vmem:[#allocation2 + $0xea] sm:$0xff]
      %v4617 = vld [vmem:[#allocation2 + $0xf2] sm:$0xff]
      %v4618 = vld [vmem:[#allocation2 + $0xfa] sm:$0xff]
      %v4619 = vld [vmem:[#allocation2 + $0x102] sm:$0xff]
      %v4620 = vld [vmem:[#allocation2 + $0x10a] sm:$0xff]
      %v4621 = vld [vmem:[#allocation2 + $0x112] sm:$0xff]
      %v4622 = vld [vmem:[#allocation2 + $0x11a] sm:$0xff]
      %v4623 = vld [vmem:[#allocation2 + $0x122] sm:$0xff]
      %v4624 = vld [vmem:[#allocation2 + $0x12a] sm:$0xff]
      %v4625 = vpack.c.bf16 %v4590, %v4589
      %v4626 = vpack.c.bf16 %v4592, %v4591
      %v4627 = vpack.c.bf16 %v4594, %v4593
      %v4628 = vpack.c.bf16 %v4596, %v4595
      %v4629 = vpack.c.bf16 %v4598, %v4597
      %v4630 = vpack.c.bf16 %v4600, %v4599
      %v4631 = vpack.c.bf16 %v4602, %v4601
      %v4632 = vpack.c.bf16 %v4604, %v4603
      %v4633 = vpack.c.bf16 %v4606, %v4605
      %v4634 = vpack.c.bf16 %v4608, %v4607
      %v4635 = vpack.c.bf16 %v4610, %v4609
      %v4636 = vpack.c.bf16 %v4612, %v4611
      %v4637 = vpack.c.bf16 %v4614, %v4613
      %v4638 = vpack.c.bf16 %v4616, %v4615
      %v4639 = vpack.c.bf16 %v4618, %v4617
      %v4640 = vpack.c.bf16 %v4620, %v4619
      %v4641 = vpack.c.bf16 %v4622, %v4621
      %v4642 = vpack.c.bf16 %v4624, %v4623
      %s4643 = scalar_lea.vmem %s2, 6
      %v4644 = vld [vmem:[%s4643] sm:$0x3]
      %v4646 = vsel %vm172, %v4625, 0
      %v4649 = vsel %vm172, %v4626, 0
      %v4652 = vsel %vm172, %v4627, 0
      %v4655 = vsel %vm172, %v4628, 0
      %v4658 = vsel %vm172, %v4629, 0
      %v4661 = vsel %vm172, %v4630, 0
      %v4664 = vsel %vm172, %v4631, 0
      %v4667 = vsel %vm172, %v4632, 0
      %v4670 = vsel %vm172, %v4633, 0
      %v4673 = vsel %vm172, %v4634, 0
      %v4676 = vsel %vm172, %v4635, 0
      %v4679 = vsel %vm172, %v4636, 0
      %v4682 = vsel %vm172, %v4637, 0
      %v4685 = vsel %vm172, %v4638, 0
      %v4688 = vsel %vm172, %v4639, 0
      %v4691 = vsel %vm172, %v4640, 0
      %v4694 = vsel %vm172, %v4641, 0
      %v4697 = vsel %vm172, %v4642, 0
      %v4700 = vsel %vm394, %v4644, 0
      %4702 = vmatpush.bf16.msra.mxu0 0
      %4703 = vmatpush.bf16.msra.mxu0 0
      %4704 = vmatpush.bf16.msra.mxu0 0
      %4705 = vmatpush.bf16.msra.mxu0 0
      %4706 = vmatpush.bf16.msra.mxu0 0
      %4707 = vmatpush.bf16.msra.mxu0 0
      %4708 = vmatpush.bf16.msra.mxu0 0
      %4709 = vmatpush.bf16.msra.mxu0 %v4700
      %4710 = vmatmul.bf16.gmra.mxu0 %v4646
      %v4711 = vpop.f32.mrf.mxu0
      %v4712 = vadd.f32 0.0, %v4711
      %v4713 = vpop.f32.mrf.mxu0
      %v4714 = vadd.f32 0.0, %v4713
      %4715 = vmatmul.bf16.gmra.mxu0 %v4649
      %v4716 = vpop.f32.mrf.mxu0
      %v4717 = vadd.f32 0.0, %v4716
      %v4718 = vpop.f32.mrf.mxu0
      %v4719 = vadd.f32 0.0, %v4718
      %4720 = vmatmul.bf16.gmra.mxu0 %v4652
      %v4721 = vpop.f32.mrf.mxu0
      %v4722 = vadd.f32 0.0, %v4721
      %v4723 = vpop.f32.mrf.mxu0
      %v4724 = vadd.f32 0.0, %v4723
      %4725 = vmatmul.bf16.gmra.mxu0 %v4655
      %v4726 = vpop.f32.mrf.mxu0
      %v4727 = vadd.f32 0.0, %v4726
      %v4728 = vpop.f32.mrf.mxu0
      %v4729 = vadd.f32 0.0, %v4728
      %4730 = vmatmul.bf16.gmra.mxu0 %v4658
      %v4731 = vpop.f32.mrf.mxu0
      %v4732 = vadd.f32 0.0, %v4731
      %v4733 = vpop.f32.mrf.mxu0
      %v4734 = vadd.f32 0.0, %v4733
      %4735 = vmatmul.bf16.gmra.mxu0 %v4661
      %v4736 = vpop.f32.mrf.mxu0
      %v4737 = vadd.f32 0.0, %v4736
      %v4738 = vpop.f32.mrf.mxu0
      %v4739 = vadd.f32 0.0, %v4738
      %4740 = vmatmul.bf16.gmra.mxu0 %v4664
      %v4741 = vpop.f32.mrf.mxu0
      %v4742 = vadd.f32 0.0, %v4741
      %v4743 = vpop.f32.mrf.mxu0
      %v4744 = vadd.f32 0.0, %v4743
      %4745 = vmatmul.bf16.gmra.mxu0 %v4667
      %v4746 = vpop.f32.mrf.mxu0
      %v4747 = vadd.f32 0.0, %v4746
      %v4748 = vpop.f32.mrf.mxu0
      %v4749 = vadd.f32 0.0, %v4748
      %4750 = vmatmul.bf16.gmra.mxu0 %v4670
      %v4751 = vpop.f32.mrf.mxu0
      %v4752 = vadd.f32 0.0, %v4751
      %v4753 = vpop.f32.mrf.mxu0
      %v4754 = vadd.f32 0.0, %v4753
      %4755 = vmatmul.bf16.gmra.mxu0 %v4673
      %v4756 = vpop.f32.mrf.mxu0
      %v4757 = vadd.f32 0.0, %v4756
      %v4758 = vpop.f32.mrf.mxu0
      %v4759 = vadd.f32 0.0, %v4758
      %4760 = vmatmul.bf16.gmra.mxu0 %v4676
      %v4761 = vpop.f32.mrf.mxu0
      %v4762 = vadd.f32 0.0, %v4761
      %v4763 = vpop.f32.mrf.mxu0
      %v4764 = vadd.f32 0.0, %v4763
      %4765 = vmatmul.bf16.gmra.mxu0 %v4679
      %v4766 = vpop.f32.mrf.mxu0
      %v4767 = vadd.f32 0.0, %v4766
      %v4768 = vpop.f32.mrf.mxu0
      %v4769 = vadd.f32 0.0, %v4768
      %4770 = vmatmul.bf16.gmra.mxu0 %v4682
      %v4771 = vpop.f32.mrf.mxu0
      %v4772 = vadd.f32 0.0, %v4771
      %v4773 = vpop.f32.mrf.mxu0
      %v4774 = vadd.f32 0.0, %v4773
      %4775 = vmatmul.bf16.gmra.mxu0 %v4685
      %v4776 = vpop.f32.mrf.mxu0
      %v4777 = vadd.f32 0.0, %v4776
      %v4778 = vpop.f32.mrf.mxu0
      %v4779 = vadd.f32 0.0, %v4778
      %4780 = vmatmul.bf16.gmra.mxu0 %v4688
      %v4781 = vpop.f32.mrf.mxu0
      %v4782 = vadd.f32 0.0, %v4781
      %v4783 = vpop.f32.mrf.mxu0
      %v4784 = vadd.f32 0.0, %v4783
      %4785 = vmatmul.bf16.gmra.mxu0 %v4691
      %v4786 = vpop.f32.mrf.mxu0
      %v4787 = vadd.f32 0.0, %v4786
      %v4788 = vpop.f32.mrf.mxu0
      %v4789 = vadd.f32 0.0, %v4788
      %4790 = vmatmul.bf16.gmra.mxu0 %v4694
      %v4791 = vpop.f32.mrf.mxu0
      %v4792 = vadd.f32 0.0, %v4791
      %v4793 = vpop.f32.mrf.mxu0
      %v4794 = vadd.f32 0.0, %v4793
      %4795 = vmatmul.bf16.gmra.mxu0 %v4697
      %v4796 = vpop.f32.mrf.mxu0
      %v4797 = vadd.f32 0.0, %v4796
      %v4798 = vpop.f32.mrf.mxu0
      %v4799 = vadd.f32 0.0, %v4798
      %4800 = vdwg.mxu0
      %v4801 = vld [vmem:[#allocation3] sm:$0xff]
      %v4802 = vld [vmem:[#allocation3 + $0x8] sm:$0xff]
      %v4803 = vld [vmem:[#allocation3 + $0x10] sm:$0xff]
      %v4804 = vld [vmem:[#allocation3 + $0x18] sm:$0xff]
      %v4805 = vld [vmem:[#allocation3 + $0x20] sm:$0xff]
      %v4806 = vld [vmem:[#allocation3 + $0x28] sm:$0xff]
      %v4807 = vld [vmem:[#allocation3 + $0x30] sm:$0xff]
      %v4808 = vld [vmem:[#allocation3 + $0x38] sm:$0xff]
      %v4809 = vld [vmem:[#allocation3 + $0x40] sm:$0xff]
      %v4810 = vld [vmem:[#allocation3 + $0x48] sm:$0xff]
      %v4811 = vld [vmem:[#allocation3 + $0x50] sm:$0xff]
      %v4812 = vld [vmem:[#allocation3 + $0x58] sm:$0xff]
      %v4813 = vld [vmem:[#allocation3 + $0x60] sm:$0xff]
      %v4814 = vld [vmem:[#allocation3 + $0x68] sm:$0xff]
      %v4815 = vld [vmem:[#allocation3 + $0x70] sm:$0xff]
      %v4816 = vld [vmem:[#allocation3 + $0x78] sm:$0xff]
      %v4817 = vld [vmem:[#allocation3 + $0x80] sm:$0xff]
      %v4818 = vld [vmem:[#allocation3 + $0x88] sm:$0xff]
      %v4819 = vld [vmem:[#allocation3 + $0x90] sm:$0xff]
      %v4820 = vld [vmem:[#allocation3 + $0x98] sm:$0xff]
      %v4821 = vld [vmem:[#allocation3 + $0xa0] sm:$0xff]
      %v4822 = vld [vmem:[#allocation3 + $0xa8] sm:$0xff]
      %v4823 = vld [vmem:[#allocation3 + $0xb0] sm:$0xff]
      %v4824 = vld [vmem:[#allocation3 + $0xb8] sm:$0xff]
      %v4825 = vld [vmem:[#allocation3 + $0xc0] sm:$0xff]
      %v4826 = vld [vmem:[#allocation3 + $0xc8] sm:$0xff]
      %v4827 = vld [vmem:[#allocation3 + $0xd0] sm:$0xff]
      %v4828 = vld [vmem:[#allocation3 + $0xd8] sm:$0xff]
      %v4829 = vld [vmem:[#allocation3 + $0xe0] sm:$0xff]
      %v4830 = vld [vmem:[#allocation3 + $0xe8] sm:$0xff]
      %v4831 = vld [vmem:[#allocation3 + $0xf0] sm:$0xff]
      %v4832 = vld [vmem:[#allocation3 + $0xf8] sm:$0xff]
      %v4833 = vld [vmem:[#allocation3 + $0x100] sm:$0xff]
      %v4834 = vld [vmem:[#allocation3 + $0x108] sm:$0xff]
      %v4835 = vld [vmem:[#allocation3 + $0x110] sm:$0xff]
      %v4836 = vld [vmem:[#allocation3 + $0x118] sm:$0xff]
      %v4837 = vadd.f32 %v4801, %v4712
      %v4838 = vadd.f32 %v4802, %v4714
      %v4839 = vadd.f32 %v4803, %v4717
      %v4840 = vadd.f32 %v4804, %v4719
      %v4841 = vadd.f32 %v4805, %v4722
      %v4842 = vadd.f32 %v4806, %v4724
      %v4843 = vadd.f32 %v4807, %v4727
      %v4844 = vadd.f32 %v4808, %v4729
      %v4845 = vadd.f32 %v4809, %v4732
      %v4846 = vadd.f32 %v4810, %v4734
      %v4847 = vadd.f32 %v4811, %v4737
      %v4848 = vadd.f32 %v4812, %v4739
      %v4849 = vadd.f32 %v4813, %v4742
      %v4850 = vadd.f32 %v4814, %v4744
      %v4851 = vadd.f32 %v4815, %v4747
      %v4852 = vadd.f32 %v4816, %v4749
      %v4853 = vadd.f32 %v4817, %v4752
      %v4854 = vadd.f32 %v4818, %v4754
      %v4855 = vadd.f32 %v4819, %v4757
      %v4856 = vadd.f32 %v4820, %v4759
      %v4857 = vadd.f32 %v4821, %v4762
      %v4858 = vadd.f32 %v4822, %v4764
      %v4859 = vadd.f32 %v4823, %v4767
      %v4860 = vadd.f32 %v4824, %v4769
      %v4861 = vadd.f32 %v4825, %v4772
      %v4862 = vadd.f32 %v4826, %v4774
      %v4863 = vadd.f32 %v4827, %v4777
      %v4864 = vadd.f32 %v4828, %v4779
      %v4865 = vadd.f32 %v4829, %v4782
      %v4866 = vadd.f32 %v4830, %v4784
      %v4867 = vadd.f32 %v4831, %v4787
      %v4868 = vadd.f32 %v4832, %v4789
      %v4869 = vadd.f32 %v4833, %v4792
      %v4870 = vadd.f32 %v4834, %v4794
      %v4871 = vadd.f32 %v4835, %v4797
      %v4872 = vadd.f32 %v4836, %v4799
      %4873 = vst.msk [vmem:[#allocation3] sm:$0xff] %vm172, %v4837
      %4874 = vst.msk [vmem:[#allocation3 + $0x8] sm:$0xff] %vm172, %v4838
      %4875 = vst.msk [vmem:[#allocation3 + $0x10] sm:$0xff] %vm172, %v4839
      %4876 = vst.msk [vmem:[#allocation3 + $0x18] sm:$0xff] %vm172, %v4840
      %4877 = vst.msk [vmem:[#allocation3 + $0x20] sm:$0xff] %vm172, %v4841
      %4878 = vst.msk [vmem:[#allocation3 + $0x28] sm:$0xff] %vm172, %v4842
      %4879 = vst.msk [vmem:[#allocation3 + $0x30] sm:$0xff] %vm172, %v4843
      %4880 = vst.msk [vmem:[#allocation3 + $0x38] sm:$0xff] %vm172, %v4844
      %4881 = vst.msk [vmem:[#allocation3 + $0x40] sm:$0xff] %vm172, %v4845
      %4882 = vst.msk [vmem:[#allocation3 + $0x48] sm:$0xff] %vm172, %v4846
      %4883 = vst.msk [vmem:[#allocation3 + $0x50] sm:$0xff] %vm172, %v4847
      %4884 = vst.msk [vmem:[#allocation3 + $0x58] sm:$0xff] %vm172, %v4848
      %4885 = vst.msk [vmem:[#allocation3 + $0x60] sm:$0xff] %vm172, %v4849
      %4886 = vst.msk [vmem:[#allocation3 + $0x68] sm:$0xff] %vm172, %v4850
      %4887 = vst.msk [vmem:[#allocation3 + $0x70] sm:$0xff] %vm172, %v4851
      %4888 = vst.msk [vmem:[#allocation3 + $0x78] sm:$0xff] %vm172, %v4852
      %4889 = vst.msk [vmem:[#allocation3 + $0x80] sm:$0xff] %vm172, %v4853
      %4890 = vst.msk [vmem:[#allocation3 + $0x88] sm:$0xff] %vm172, %v4854
      %4891 = vst.msk [vmem:[#allocation3 + $0x90] sm:$0xff] %vm172, %v4855
      %4892 = vst.msk [vmem:[#allocation3 + $0x98] sm:$0xff] %vm172, %v4856
      %4893 = vst.msk [vmem:[#allocation3 + $0xa0] sm:$0xff] %vm172, %v4857
      %4894 = vst.msk [vmem:[#allocation3 + $0xa8] sm:$0xff] %vm172, %v4858
      %4895 = vst.msk [vmem:[#allocation3 + $0xb0] sm:$0xff] %vm172, %v4859
      %4896 = vst.msk [vmem:[#allocation3 + $0xb8] sm:$0xff] %vm172, %v4860
      %4897 = vst.msk [vmem:[#allocation3 + $0xc0] sm:$0xff] %vm172, %v4861
      %4898 = vst.msk [vmem:[#allocation3 + $0xc8] sm:$0xff] %vm172, %v4862
      %4899 = vst.msk [vmem:[#allocation3 + $0xd0] sm:$0xff] %vm172, %v4863
      %4900 = vst.msk [vmem:[#allocation3 + $0xd8] sm:$0xff] %vm172, %v4864
      %4901 = vst.msk [vmem:[#allocation3 + $0xe0] sm:$0xff] %vm172, %v4865
      %4902 = vst.msk [vmem:[#allocation3 + $0xe8] sm:$0xff] %vm172, %v4866
      %4903 = vst.msk [vmem:[#allocation3 + $0xf0] sm:$0xff] %vm172, %v4867
      %4904 = vst.msk [vmem:[#allocation3 + $0xf8] sm:$0xff] %vm172, %v4868
      %4905 = vst.msk [vmem:[#allocation3 + $0x100] sm:$0xff] %vm172, %v4869
      %4906 = vst.msk [vmem:[#allocation3 + $0x108] sm:$0xff] %vm172, %v4870
      %4907 = vst.msk [vmem:[#allocation3 + $0x110] sm:$0xff] %vm172, %v4871
      %4908 = vst.msk [vmem:[#allocation3 + $0x118] sm:$0xff] %vm172, %v4872
      %v4909 = vld [vmem:[#allocation2 + $0x13] sm:$0xff]
      %v4910 = vld [vmem:[#allocation2 + $0x1b] sm:$0xff]
      %v4911 = vld [vmem:[#allocation2 + $0x23] sm:$0xff]
      %v4912 = vld [vmem:[#allocation2 + $0x2b] sm:$0xff]
      %v4913 = vld [vmem:[#allocation2 + $0x33] sm:$0xff]
      %v4914 = vld [vmem:[#allocation2 + $0x3b] sm:$0xff]
      %v4915 = vld [vmem:[#allocation2 + $0x43] sm:$0xff]
      %v4916 = vld [vmem:[#allocation2 + $0x4b] sm:$0xff]
      %v4917 = vld [vmem:[#allocation2 + $0x53] sm:$0xff]
      %v4918 = vld [vmem:[#allocation2 + $0x5b] sm:$0xff]
      %v4919 = vld [vmem:[#allocation2 + $0x63] sm:$0xff]
      %v4920 = vld [vmem:[#allocation2 + $0x6b] sm:$0xff]
      %v4921 = vld [vmem:[#allocation2 + $0x73] sm:$0xff]
      %v4922 = vld [vmem:[#allocation2 + $0x7b] sm:$0xff]
      %v4923 = vld [vmem:[#allocation2 + $0x83] sm:$0xff]
      %v4924 = vld [vmem:[#allocation2 + $0x8b] sm:$0xff]
      %v4925 = vld [vmem:[#allocation2 + $0x93] sm:$0xff]
      %v4926 = vld [vmem:[#allocation2 + $0x9b] sm:$0xff]
      %v4927 = vld [vmem:[#allocation2 + $0xa3] sm:$0xff]
      %v4928 = vld [vmem:[#allocation2 + $0xab] sm:$0xff]
      %v4929 = vld [vmem:[#allocation2 + $0xb3] sm:$0xff]
      %v4930 = vld [vmem:[#allocation2 + $0xbb] sm:$0xff]
      %v4931 = vld [vmem:[#allocation2 + $0xc3] sm:$0xff]
      %v4932 = vld [vmem:[#allocation2 + $0xcb] sm:$0xff]
      %v4933 = vld [vmem:[#allocation2 + $0xd3] sm:$0xff]
      %v4934 = vld [vmem:[#allocation2 + $0xdb] sm:$0xff]
      %v4935 = vld [vmem:[#allocation2 + $0xe3] sm:$0xff]
      %v4936 = vld [vmem:[#allocation2 + $0xeb] sm:$0xff]
      %v4937 = vld [vmem:[#allocation2 + $0xf3] sm:$0xff]
      %v4938 = vld [vmem:[#allocation2 + $0xfb] sm:$0xff]
      %v4939 = vld [vmem:[#allocation2 + $0x103] sm:$0xff]
      %v4940 = vld [vmem:[#allocation2 + $0x10b] sm:$0xff]
      %v4941 = vld [vmem:[#allocation2 + $0x113] sm:$0xff]
      %v4942 = vld [vmem:[#allocation2 + $0x11b] sm:$0xff]
      %v4943 = vld [vmem:[#allocation2 + $0x123] sm:$0xff]
      %v4944 = vld [vmem:[#allocation2 + $0x12b] sm:$0xff]
      %v4945 = vpack.c.bf16 %v4910, %v4909
      %v4946 = vpack.c.bf16 %v4912, %v4911
      %v4947 = vpack.c.bf16 %v4914, %v4913
      %v4948 = vpack.c.bf16 %v4916, %v4915
      %v4949 = vpack.c.bf16 %v4918, %v4917
      %v4950 = vpack.c.bf16 %v4920, %v4919
      %v4951 = vpack.c.bf16 %v4922, %v4921
      %v4952 = vpack.c.bf16 %v4924, %v4923
      %v4953 = vpack.c.bf16 %v4926, %v4925
      %v4954 = vpack.c.bf16 %v4928, %v4927
      %v4955 = vpack.c.bf16 %v4930, %v4929
      %v4956 = vpack.c.bf16 %v4932, %v4931
      %v4957 = vpack.c.bf16 %v4934, %v4933
      %v4958 = vpack.c.bf16 %v4936, %v4935
      %v4959 = vpack.c.bf16 %v4938, %v4937
      %v4960 = vpack.c.bf16 %v4940, %v4939
      %v4961 = vpack.c.bf16 %v4942, %v4941
      %v4962 = vpack.c.bf16 %v4944, %v4943
      %s4963 = scalar_lea.vmem %s2, 8
      %v4964 = vld [vmem:[%s4963] sm:$0x3]
      %v4966 = vsel %vm172, %v4945, 0
      %v4969 = vsel %vm172, %v4946, 0
      %v4972 = vsel %vm172, %v4947, 0
      %v4975 = vsel %vm172, %v4948, 0
      %v4978 = vsel %vm172, %v4949, 0
      %v4981 = vsel %vm172, %v4950, 0
      %v4984 = vsel %vm172, %v4951, 0
      %v4987 = vsel %vm172, %v4952, 0
      %v4990 = vsel %vm172, %v4953, 0
      %v4993 = vsel %vm172, %v4954, 0
      %v4996 = vsel %vm172, %v4955, 0
      %v4999 = vsel %vm172, %v4956, 0
      %v5002 = vsel %vm172, %v4957, 0
      %v5005 = vsel %vm172, %v4958, 0
      %v5008 = vsel %vm172, %v4959, 0
      %v5011 = vsel %vm172, %v4960, 0
      %v5014 = vsel %vm172, %v4961, 0
      %v5017 = vsel %vm172, %v4962, 0
      %v5020 = vsel %vm394, %v4964, 0
      %5022 = vmatpush.bf16.msra.mxu0 0
      %5023 = vmatpush.bf16.msra.mxu0 0
      %5024 = vmatpush.bf16.msra.mxu0 0
      %5025 = vmatpush.bf16.msra.mxu0 0
      %5026 = vmatpush.bf16.msra.mxu0 0
      %5027 = vmatpush.bf16.msra.mxu0 0
      %5028 = vmatpush.bf16.msra.mxu0 0
      %5029 = vmatpush.bf16.msra.mxu0 %v5020
      %5030 = vmatmul.bf16.gmra.mxu0 %v4966
      %v5031 = vpop.f32.mrf.mxu0
      %v5032 = vadd.f32 0.0, %v5031
      %v5033 = vpop.f32.mrf.mxu0
      %v5034 = vadd.f32 0.0, %v5033
      %5035 = vmatmul.bf16.gmra.mxu0 %v4969
      %v5036 = vpop.f32.mrf.mxu0
      %v5037 = vadd.f32 0.0, %v5036
      %v5038 = vpop.f32.mrf.mxu0
      %v5039 = vadd.f32 0.0, %v5038
      %5040 = vmatmul.bf16.gmra.mxu0 %v4972
      %v5041 = vpop.f32.mrf.mxu0
      %v5042 = vadd.f32 0.0, %v5041
      %v5043 = vpop.f32.mrf.mxu0
      %v5044 = vadd.f32 0.0, %v5043
      %5045 = vmatmul.bf16.gmra.mxu0 %v4975
      %v5046 = vpop.f32.mrf.mxu0
      %v5047 = vadd.f32 0.0, %v5046
      %v5048 = vpop.f32.mrf.mxu0
      %v5049 = vadd.f32 0.0, %v5048
      %5050 = vmatmul.bf16.gmra.mxu0 %v4978
      %v5051 = vpop.f32.mrf.mxu0
      %v5052 = vadd.f32 0.0, %v5051
      %v5053 = vpop.f32.mrf.mxu0
      %v5054 = vadd.f32 0.0, %v5053
      %5055 = vmatmul.bf16.gmra.mxu0 %v4981
      %v5056 = vpop.f32.mrf.mxu0
      %v5057 = vadd.f32 0.0, %v5056
      %v5058 = vpop.f32.mrf.mxu0
      %v5059 = vadd.f32 0.0, %v5058
      %5060 = vmatmul.bf16.gmra.mxu0 %v4984
      %v5061 = vpop.f32.mrf.mxu0
      %v5062 = vadd.f32 0.0, %v5061
      %v5063 = vpop.f32.mrf.mxu0
      %v5064 = vadd.f32 0.0, %v5063
      %5065 = vmatmul.bf16.gmra.mxu0 %v4987
      %v5066 = vpop.f32.mrf.mxu0
      %v5067 = vadd.f32 0.0, %v5066
      %v5068 = vpop.f32.mrf.mxu0
      %v5069 = vadd.f32 0.0, %v5068
      %5070 = vmatmul.bf16.gmra.mxu0 %v4990
      %v5071 = vpop.f32.mrf.mxu0
      %v5072 = vadd.f32 0.0, %v5071
      %v5073 = vpop.f32.mrf.mxu0
      %v5074 = vadd.f32 0.0, %v5073
      %5075 = vmatmul.bf16.gmra.mxu0 %v4993
      %v5076 = vpop.f32.mrf.mxu0
      %v5077 = vadd.f32 0.0, %v5076
      %v5078 = vpop.f32.mrf.mxu0
      %v5079 = vadd.f32 0.0, %v5078
      %5080 = vmatmul.bf16.gmra.mxu0 %v4996
      %v5081 = vpop.f32.mrf.mxu0
      %v5082 = vadd.f32 0.0, %v5081
      %v5083 = vpop.f32.mrf.mxu0
      %v5084 = vadd.f32 0.0, %v5083
      %5085 = vmatmul.bf16.gmra.mxu0 %v4999
      %v5086 = vpop.f32.mrf.mxu0
      %v5087 = vadd.f32 0.0, %v5086
      %v5088 = vpop.f32.mrf.mxu0
      %v5089 = vadd.f32 0.0, %v5088
      %5090 = vmatmul.bf16.gmra.mxu0 %v5002
      %v5091 = vpop.f32.mrf.mxu0
      %v5092 = vadd.f32 0.0, %v5091
      %v5093 = vpop.f32.mrf.mxu0
      %v5094 = vadd.f32 0.0, %v5093
      %5095 = vmatmul.bf16.gmra.mxu0 %v5005
      %v5096 = vpop.f32.mrf.mxu0
      %v5097 = vadd.f32 0.0, %v5096
      %v5098 = vpop.f32.mrf.mxu0
      %v5099 = vadd.f32 0.0, %v5098
      %5100 = vmatmul.bf16.gmra.mxu0 %v5008
      %v5101 = vpop.f32.mrf.mxu0
      %v5102 = vadd.f32 0.0, %v5101
      %v5103 = vpop.f32.mrf.mxu0
      %v5104 = vadd.f32 0.0, %v5103
      %5105 = vmatmul.bf16.gmra.mxu0 %v5011
      %v5106 = vpop.f32.mrf.mxu0
      %v5107 = vadd.f32 0.0, %v5106
      %v5108 = vpop.f32.mrf.mxu0
      %v5109 = vadd.f32 0.0, %v5108
      %5110 = vmatmul.bf16.gmra.mxu0 %v5014
      %v5111 = vpop.f32.mrf.mxu0
      %v5112 = vadd.f32 0.0, %v5111
      %v5113 = vpop.f32.mrf.mxu0
      %v5114 = vadd.f32 0.0, %v5113
      %5115 = vmatmul.bf16.gmra.mxu0 %v5017
      %v5116 = vpop.f32.mrf.mxu0
      %v5117 = vadd.f32 0.0, %v5116
      %v5118 = vpop.f32.mrf.mxu0
      %v5119 = vadd.f32 0.0, %v5118
      %5120 = vdwg.mxu0
      %v5121 = vld [vmem:[#allocation3] sm:$0xff]
      %v5122 = vld [vmem:[#allocation3 + $0x8] sm:$0xff]
      %v5123 = vld [vmem:[#allocation3 + $0x10] sm:$0xff]
      %v5124 = vld [vmem:[#allocation3 + $0x18] sm:$0xff]
      %v5125 = vld [vmem:[#allocation3 + $0x20] sm:$0xff]
      %v5126 = vld [vmem:[#allocation3 + $0x28] sm:$0xff]
      %v5127 = vld [vmem:[#allocation3 + $0x30] sm:$0xff]
      %v5128 = vld [vmem:[#allocation3 + $0x38] sm:$0xff]
      %v5129 = vld [vmem:[#allocation3 + $0x40] sm:$0xff]
      %v5130 = vld [vmem:[#allocation3 + $0x48] sm:$0xff]
      %v5131 = vld [vmem:[#allocation3 + $0x50] sm:$0xff]
      %v5132 = vld [vmem:[#allocation3 + $0x58] sm:$0xff]
      %v5133 = vld [vmem:[#allocation3 + $0x60] sm:$0xff]
      %v5134 = vld [vmem:[#allocation3 + $0x68] sm:$0xff]
      %v5135 = vld [vmem:[#allocation3 + $0x70] sm:$0xff]
      %v5136 = vld [vmem:[#allocation3 + $0x78] sm:$0xff]
      %v5137 = vld [vmem:[#allocation3 + $0x80] sm:$0xff]
      %v5138 = vld [vmem:[#allocation3 + $0x88] sm:$0xff]
      %v5139 = vld [vmem:[#allocation3 + $0x90] sm:$0xff]
      %v5140 = vld [vmem:[#allocation3 + $0x98] sm:$0xff]
      %v5141 = vld [vmem:[#allocation3 + $0xa0] sm:$0xff]
      %v5142 = vld [vmem:[#allocation3 + $0xa8] sm:$0xff]
      %v5143 = vld [vmem:[#allocation3 + $0xb0] sm:$0xff]
      %v5144 = vld [vmem:[#allocation3 + $0xb8] sm:$0xff]
      %v5145 = vld [vmem:[#allocation3 + $0xc0] sm:$0xff]
      %v5146 = vld [vmem:[#allocation3 + $0xc8] sm:$0xff]
      %v5147 = vld [vmem:[#allocation3 + $0xd0] sm:$0xff]
      %v5148 = vld [vmem:[#allocation3 + $0xd8] sm:$0xff]
      %v5149 = vld [vmem:[#allocation3 + $0xe0] sm:$0xff]
      %v5150 = vld [vmem:[#allocation3 + $0xe8] sm:$0xff]
      %v5151 = vld [vmem:[#allocation3 + $0xf0] sm:$0xff]
      %v5152 = vld [vmem:[#allocation3 + $0xf8] sm:$0xff]
      %v5153 = vld [vmem:[#allocation3 + $0x100] sm:$0xff]
      %v5154 = vld [vmem:[#allocation3 + $0x108] sm:$0xff]
      %v5155 = vld [vmem:[#allocation3 + $0x110] sm:$0xff]
      %v5156 = vld [vmem:[#allocation3 + $0x118] sm:$0xff]
      %v5157 = vadd.f32 %v5121, %v5032
      %v5158 = vadd.f32 %v5122, %v5034
      %v5159 = vadd.f32 %v5123, %v5037
      %v5160 = vadd.f32 %v5124, %v5039
      %v5161 = vadd.f32 %v5125, %v5042
      %v5162 = vadd.f32 %v5126, %v5044
      %v5163 = vadd.f32 %v5127, %v5047
      %v5164 = vadd.f32 %v5128, %v5049
      %v5165 = vadd.f32 %v5129, %v5052
      %v5166 = vadd.f32 %v5130, %v5054
      %v5167 = vadd.f32 %v5131, %v5057
      %v5168 = vadd.f32 %v5132, %v5059
      %v5169 = vadd.f32 %v5133, %v5062
      %v5170 = vadd.f32 %v5134, %v5064
      %v5171 = vadd.f32 %v5135, %v5067
      %v5172 = vadd.f32 %v5136, %v5069
      %v5173 = vadd.f32 %v5137, %v5072
      %v5174 = vadd.f32 %v5138, %v5074
      %v5175 = vadd.f32 %v5139, %v5077
      %v5176 = vadd.f32 %v5140, %v5079
      %v5177 = vadd.f32 %v5141, %v5082
      %v5178 = vadd.f32 %v5142, %v5084
      %v5179 = vadd.f32 %v5143, %v5087
      %v5180 = vadd.f32 %v5144, %v5089
      %v5181 = vadd.f32 %v5145, %v5092
      %v5182 = vadd.f32 %v5146, %v5094
      %v5183 = vadd.f32 %v5147, %v5097
      %v5184 = vadd.f32 %v5148, %v5099
      %v5185 = vadd.f32 %v5149, %v5102
      %v5186 = vadd.f32 %v5150, %v5104
      %v5187 = vadd.f32 %v5151, %v5107
      %v5188 = vadd.f32 %v5152, %v5109
      %v5189 = vadd.f32 %v5153, %v5112
      %v5190 = vadd.f32 %v5154, %v5114
      %v5191 = vadd.f32 %v5155, %v5117
      %v5192 = vadd.f32 %v5156, %v5119
      %5193 = vst.msk [vmem:[#allocation3] sm:$0xff] %vm172, %v5157
      %5194 = vst.msk [vmem:[#allocation3 + $0x8] sm:$0xff] %vm172, %v5158
      %5195 = vst.msk [vmem:[#allocation3 + $0x10] sm:$0xff] %vm172, %v5159
      %5196 = vst.msk [vmem:[#allocation3 + $0x18] sm:$0xff] %vm172, %v5160
      %5197 = vst.msk [vmem:[#allocation3 + $0x20] sm:$0xff] %vm172, %v5161
      %5198 = vst.msk [vmem:[#allocation3 + $0x28] sm:$0xff] %vm172, %v5162
      %5199 = vst.msk [vmem:[#allocation3 + $0x30] sm:$0xff] %vm172, %v5163
      %5200 = vst.msk [vmem:[#allocation3 + $0x38] sm:$0xff] %vm172, %v5164
      %5201 = vst.msk [vmem:[#allocation3 + $0x40] sm:$0xff] %vm172, %v5165
      %5202 = vst.msk [vmem:[#allocation3 + $0x48] sm:$0xff] %vm172, %v5166
      %5203 = vst.msk [vmem:[#allocation3 + $0x50] sm:$0xff] %vm172, %v5167
      %5204 = vst.msk [vmem:[#allocation3 + $0x58] sm:$0xff] %vm172, %v5168
      %5205 = vst.msk [vmem:[#allocation3 + $0x60] sm:$0xff] %vm172, %v5169
      %5206 = vst.msk [vmem:[#allocation3 + $0x68] sm:$0xff] %vm172, %v5170
      %5207 = vst.msk [vmem:[#allocation3 + $0x70] sm:$0xff] %vm172, %v5171
      %5208 = vst.msk [vmem:[#allocation3 + $0x78] sm:$0xff] %vm172, %v5172
      %5209 = vst.msk [vmem:[#allocation3 + $0x80] sm:$0xff] %vm172, %v5173
      %5210 = vst.msk [vmem:[#allocation3 + $0x88] sm:$0xff] %vm172, %v5174
      %5211 = vst.msk [vmem:[#allocation3 + $0x90] sm:$0xff] %vm172, %v5175
      %5212 = vst.msk [vmem:[#allocation3 + $0x98] sm:$0xff] %vm172, %v5176
      %5213 = vst.msk [vmem:[#allocation3 + $0xa0] sm:$0xff] %vm172, %v5177
      %5214 = vst.msk [vmem:[#allocation3 + $0xa8] sm:$0xff] %vm172, %v5178
      %5215 = vst.msk [vmem:[#allocation3 + $0xb0] sm:$0xff] %vm172, %v5179
      %5216 = vst.msk [vmem:[#allocation3 + $0xb8] sm:$0xff] %vm172, %v5180
      %5217 = vst.msk [vmem:[#allocation3 + $0xc0] sm:$0xff] %vm172, %v5181
      %5218 = vst.msk [vmem:[#allocation3 + $0xc8] sm:$0xff] %vm172, %v5182
      %5219 = vst.msk [vmem:[#allocation3 + $0xd0] sm:$0xff] %vm172, %v5183
      %5220 = vst.msk [vmem:[#allocation3 + $0xd8] sm:$0xff] %vm172, %v5184
      %5221 = vst.msk [vmem:[#allocation3 + $0xe0] sm:$0xff] %vm172, %v5185
      %5222 = vst.msk [vmem:[#allocation3 + $0xe8] sm:$0xff] %vm172, %v5186
      %5223 = vst.msk [vmem:[#allocation3 + $0xf0] sm:$0xff] %vm172, %v5187
      %5224 = vst.msk [vmem:[#allocation3 + $0xf8] sm:$0xff] %vm172, %v5188
      %5225 = vst.msk [vmem:[#allocation3 + $0x100] sm:$0xff] %vm172, %v5189
      %5226 = vst.msk [vmem:[#allocation3 + $0x108] sm:$0xff] %vm172, %v5190
      %5227 = vst.msk [vmem:[#allocation3 + $0x110] sm:$0xff] %vm172, %v5191
      %5228 = vst.msk [vmem:[#allocation3 + $0x118] sm:$0xff] %vm172, %v5192
      %v5229 = vld [vmem:[#allocation2 + $0x14] sm:$0xff]
      %v5230 = vld [vmem:[#allocation2 + $0x1c] sm:$0xff]
      %v5231 = vld [vmem:[#allocation2 + $0x24] sm:$0xff]
      %v5232 = vld [vmem:[#allocation2 + $0x2c] sm:$0xff]
      %v5233 = vld [vmem:[#allocation2 + $0x34] sm:$0xff]
      %v5234 = vld [vmem:[#allocation2 + $0x3c] sm:$0xff]
      %v5235 = vld [vmem:[#allocation2 + $0x44] sm:$0xff]
      %v5236 = vld [vmem:[#allocation2 + $0x4c] sm:$0xff]
      %v5237 = vld [vmem:[#allocation2 + $0x54] sm:$0xff]
      %v5238 = vld [vmem:[#allocation2 + $0x5c] sm:$0xff]
      %v5239 = vld [vmem:[#allocation2 + $0x64] sm:$0xff]
      %v5240 = vld [vmem:[#allocation2 + $0x6c] sm:$0xff]
      %v5241 = vld [vmem:[#allocation2 + $0x74] sm:$0xff]
      %v5242 = vld [vmem:[#allocation2 + $0x7c] sm:$0xff]
      %v5243 = vld [vmem:[#allocation2 + $0x84] sm:$0xff]
      %v5244 = vld [vmem:[#allocation2 + $0x8c] sm:$0xff]
      %v5245 = vld [vmem:[#allocation2 + $0x94] sm:$0xff]
      %v5246 = vld [vmem:[#allocation2 + $0x9c] sm:$0xff]
      %v5247 = vld [vmem:[#allocation2 + $0xa4] sm:$0xff]
      %v5248 = vld [vmem:[#allocation2 + $0xac] sm:$0xff]
      %v5249 = vld [vmem:[#allocation2 + $0xb4] sm:$0xff]
      %v5250 = vld [vmem:[#allocation2 + $0xbc] sm:$0xff]
      %v5251 = vld [vmem:[#allocation2 + $0xc4] sm:$0xff]
      %v5252 = vld [vmem:[#allocation2 + $0xcc] sm:$0xff]
      %v5253 = vld [vmem:[#allocation2 + $0xd4] sm:$0xff]
      %v5254 = vld [vmem:[#allocation2 + $0xdc] sm:$0xff]
      %v5255 = vld [vmem:[#allocation2 + $0xe4] sm:$0xff]
      %v5256 = vld [vmem:[#allocation2 + $0xec] sm:$0xff]
      %v5257 = vld [vmem:[#allocation2 + $0xf4] sm:$0xff]
      %v5258 = vld [vmem:[#allocation2 + $0xfc] sm:$0xff]
      %v5259 = vld [vmem:[#allocation2 + $0x104] sm:$0xff]
      %v5260 = vld [vmem:[#allocation2 + $0x10c] sm:$0xff]
      %v5261 = vld [vmem:[#allocation2 + $0x114] sm:$0xff]
      %v5262 = vld [vmem:[#allocation2 + $0x11c] sm:$0xff]
      %v5263 = vld [vmem:[#allocation2 + $0x124] sm:$0xff]
      %v5264 = vld [vmem:[#allocation2 + $0x12c] sm:$0xff]
      %v5265 = vpack.c.bf16 %v5230, %v5229
      %v5266 = vpack.c.bf16 %v5232, %v5231
      %v5267 = vpack.c.bf16 %v5234, %v5233
      %v5268 = vpack.c.bf16 %v5236, %v5235
      %v5269 = vpack.c.bf16 %v5238, %v5237
      %v5270 = vpack.c.bf16 %v5240, %v5239
      %v5271 = vpack.c.bf16 %v5242, %v5241
      %v5272 = vpack.c.bf16 %v5244, %v5243
      %v5273 = vpack.c.bf16 %v5246, %v5245
      %v5274 = vpack.c.bf16 %v5248, %v5247
      %v5275 = vpack.c.bf16 %v5250, %v5249
      %v5276 = vpack.c.bf16 %v5252, %v5251
      %v5277 = vpack.c.bf16 %v5254, %v5253
      %v5278 = vpack.c.bf16 %v5256, %v5255
      %v5279 = vpack.c.bf16 %v5258, %v5257
      %v5280 = vpack.c.bf16 %v5260, %v5259
      %v5281 = vpack.c.bf16 %v5262, %v5261
      %v5282 = vpack.c.bf16 %v5264, %v5263
      %s5283 = scalar_lea.vmem %s2, 10
      %v5284 = vld [vmem:[%s5283] sm:$0x3]
      %v5286 = vsel %vm172, %v5265, 0
      %v5289 = vsel %vm172, %v5266, 0
      %v5292 = vsel %vm172, %v5267, 0
      %v5295 = vsel %vm172, %v5268, 0
      %v5298 = vsel %vm172, %v5269, 0
      %v5301 = vsel %vm172, %v5270, 0
      %v5304 = vsel %vm172, %v5271, 0
      %v5307 = vsel %vm172, %v5272, 0
      %v5310 = vsel %vm172, %v5273, 0
      %v5313 = vsel %vm172, %v5274, 0
      %v5316 = vsel %vm172, %v5275, 0
      %v5319 = vsel %vm172, %v5276, 0
      %v5322 = vsel %vm172, %v5277, 0
      %v5325 = vsel %vm172, %v5278, 0
      %v5328 = vsel %vm172, %v5279, 0
      %v5331 = vsel %vm172, %v5280, 0
      %v5334 = vsel %vm172, %v5281, 0
      %v5337 = vsel %vm172, %v5282, 0
      %v5340 = vsel %vm394, %v5284, 0
      %5342 = vmatpush.bf16.msra.mxu0 0
      %5343 = vmatpush.bf16.msra.mxu0 0
      %5344 = vmatpush.bf16.msra.mxu0 0
      %5345 = vmatpush.bf16.msra.mxu0 0
      %5346 = vmatpush.bf16.msra.mxu0 0
      %5347 = vmatpush.bf16.msra.mxu0 0
      %5348 = vmatpush.bf16.msra.mxu0 0
      %5349 = vmatpush.bf16.msra.mxu0 %v5340
      %5350 = vmatmul.bf16.gmra.mxu0 %v5286
      %v5351 = vpop.f32.mrf.mxu0
      %v5352 = vadd.f32 0.0, %v5351
      %v5353 = vpop.f32.mrf.mxu0
      %v5354 = vadd.f32 0.0, %v5353
      %5355 = vmatmul.bf16.gmra.mxu0 %v5289
      %v5356 = vpop.f32.mrf.mxu0
      %v5357 = vadd.f32 0.0, %v5356
      %v5358 = vpop.f32.mrf.mxu0
      %v5359 = vadd.f32 0.0, %v5358
      %5360 = vmatmul.bf16.gmra.mxu0 %v5292
      %v5361 = vpop.f32.mrf.mxu0
      %v5362 = vadd.f32 0.0, %v5361
      %v5363 = vpop.f32.mrf.mxu0
      %v5364 = vadd.f32 0.0, %v5363
      %5365 = vmatmul.bf16.gmra.mxu0 %v5295
      %v5366 = vpop.f32.mrf.mxu0
      %v5367 = vadd.f32 0.0, %v5366
      %v5368 = vpop.f32.mrf.mxu0
      %v5369 = vadd.f32 0.0, %v5368
      %5370 = vmatmul.bf16.gmra.mxu0 %v5298
      %v5371 = vpop.f32.mrf.mxu0
      %v5372 = vadd.f32 0.0, %v5371
      %v5373 = vpop.f32.mrf.mxu0
      %v5374 = vadd.f32 0.0, %v5373
      %5375 = vmatmul.bf16.gmra.mxu0 %v5301
      %v5376 = vpop.f32.mrf.mxu0
      %v5377 = vadd.f32 0.0, %v5376
      %v5378 = vpop.f32.mrf.mxu0
      %v5379 = vadd.f32 0.0, %v5378
      %5380 = vmatmul.bf16.gmra.mxu0 %v5304
      %v5381 = vpop.f32.mrf.mxu0
      %v5382 = vadd.f32 0.0, %v5381
      %v5383 = vpop.f32.mrf.mxu0
      %v5384 = vadd.f32 0.0, %v5383
      %5385 = vmatmul.bf16.gmra.mxu0 %v5307
      %v5386 = vpop.f32.mrf.mxu0
      %v5387 = vadd.f32 0.0, %v5386
      %v5388 = vpop.f32.mrf.mxu0
      %v5389 = vadd.f32 0.0, %v5388
      %5390 = vmatmul.bf16.gmra.mxu0 %v5310
      %v5391 = vpop.f32.mrf.mxu0
      %v5392 = vadd.f32 0.0, %v5391
      %v5393 = vpop.f32.mrf.mxu0
      %v5394 = vadd.f32 0.0, %v5393
      %5395 = vmatmul.bf16.gmra.mxu0 %v5313
      %v5396 = vpop.f32.mrf.mxu0
      %v5397 = vadd.f32 0.0, %v5396
      %v5398 = vpop.f32.mrf.mxu0
      %v5399 = vadd.f32 0.0, %v5398
      %5400 = vmatmul.bf16.gmra.mxu0 %v5316
      %v5401 = vpop.f32.mrf.mxu0
      %v5402 = vadd.f32 0.0, %v5401
      %v5403 = vpop.f32.mrf.mxu0
      %v5404 = vadd.f32 0.0, %v5403
      %5405 = vmatmul.bf16.gmra.mxu0 %v5319
      %v5406 = vpop.f32.mrf.mxu0
      %v5407 = vadd.f32 0.0, %v5406
      %v5408 = vpop.f32.mrf.mxu0
      %v5409 = vadd.f32 0.0, %v5408
      %5410 = vmatmul.bf16.gmra.mxu0 %v5322
      %v5411 = vpop.f32.mrf.mxu0
      %v5412 = vadd.f32 0.0, %v5411
      %v5413 = vpop.f32.mrf.mxu0
      %v5414 = vadd.f32 0.0, %v5413
      %5415 = vmatmul.bf16.gmra.mxu0 %v5325
      %v5416 = vpop.f32.mrf.mxu0
      %v5417 = vadd.f32 0.0, %v5416
      %v5418 = vpop.f32.mrf.mxu0
      %v5419 = vadd.f32 0.0, %v5418
      %5420 = vmatmul.bf16.gmra.mxu0 %v5328
      %v5421 = vpop.f32.mrf.mxu0
      %v5422 = vadd.f32 0.0, %v5421
      %v5423 = vpop.f32.mrf.mxu0
      %v5424 = vadd.f32 0.0, %v5423
      %5425 = vmatmul.bf16.gmra.mxu0 %v5331
      %v5426 = vpop.f32.mrf.mxu0
      %v5427 = vadd.f32 0.0, %v5426
      %v5428 = vpop.f32.mrf.mxu0
      %v5429 = vadd.f32 0.0, %v5428
      %5430 = vmatmul.bf16.gmra.mxu0 %v5334
      %v5431 = vpop.f32.mrf.mxu0
      %v5432 = vadd.f32 0.0, %v5431
      %v5433 = vpop.f32.mrf.mxu0
      %v5434 = vadd.f32 0.0, %v5433
      %5435 = vmatmul.bf16.gmra.mxu0 %v5337
      %v5436 = vpop.f32.mrf.mxu0
      %v5437 = vadd.f32 0.0, %v5436
      %v5438 = vpop.f32.mrf.mxu0
      %v5439 = vadd.f32 0.0, %v5438
      %5440 = vdwg.mxu0
      %v5441 = vld [vmem:[#allocation3] sm:$0xff]
      %v5442 = vld [vmem:[#allocation3 + $0x8] sm:$0xff]
      %v5443 = vld [vmem:[#allocation3 + $0x10] sm:$0xff]
      %v5444 = vld [vmem:[#allocation3 + $0x18] sm:$0xff]
      %v5445 = vld [vmem:[#allocation3 + $0x20] sm:$0xff]
      %v5446 = vld [vmem:[#allocation3 + $0x28] sm:$0xff]
      %v5447 = vld [vmem:[#allocation3 + $0x30] sm:$0xff]
      %v5448 = vld [vmem:[#allocation3 + $0x38] sm:$0xff]
      %v5449 = vld [vmem:[#allocation3 + $0x40] sm:$0xff]
      %v5450 = vld [vmem:[#allocation3 + $0x48] sm:$0xff]
      %v5451 = vld [vmem:[#allocation3 + $0x50] sm:$0xff]
      %v5452 = vld [vmem:[#allocation3 + $0x58] sm:$0xff]
      %v5453 = vld [vmem:[#allocation3 + $0x60] sm:$0xff]
      %v5454 = vld [vmem:[#allocation3 + $0x68] sm:$0xff]
      %v5455 = vld [vmem:[#allocation3 + $0x70] sm:$0xff]
      %v5456 = vld [vmem:[#allocation3 + $0x78] sm:$0xff]
      %v5457 = vld [vmem:[#allocation3 + $0x80] sm:$0xff]
      %v5458 = vld [vmem:[#allocation3 + $0x88] sm:$0xff]
      %v5459 = vld [vmem:[#allocation3 + $0x90] sm:$0xff]
      %v5460 = vld [vmem:[#allocation3 + $0x98] sm:$0xff]
      %v5461 = vld [vmem:[#allocation3 + $0xa0] sm:$0xff]
      %v5462 = vld [vmem:[#allocation3 + $0xa8] sm:$0xff]
      %v5463 = vld [vmem:[#allocation3 + $0xb0] sm:$0xff]
      %v5464 = vld [vmem:[#allocation3 + $0xb8] sm:$0xff]
      %v5465 = vld [vmem:[#allocation3 + $0xc0] sm:$0xff]
      %v5466 = vld [vmem:[#allocation3 + $0xc8] sm:$0xff]
      %v5467 = vld [vmem:[#allocation3 + $0xd0] sm:$0xff]
      %v5468 = vld [vmem:[#allocation3 + $0xd8] sm:$0xff]
      %v5469 = vld [vmem:[#allocation3 + $0xe0] sm:$0xff]
      %v5470 = vld [vmem:[#allocation3 + $0xe8] sm:$0xff]
      %v5471 = vld [vmem:[#allocation3 + $0xf0] sm:$0xff]
      %v5472 = vld [vmem:[#allocation3 + $0xf8] sm:$0xff]
      %v5473 = vld [vmem:[#allocation3 + $0x100] sm:$0xff]
      %v5474 = vld [vmem:[#allocation3 + $0x108] sm:$0xff]
      %v5475 = vld [vmem:[#allocation3 + $0x110] sm:$0xff]
      %v5476 = vld [vmem:[#allocation3 + $0x118] sm:$0xff]
      %v5477 = vadd.f32 %v5441, %v5352
      %v5478 = vadd.f32 %v5442, %v5354
      %v5479 = vadd.f32 %v5443, %v5357
      %v5480 = vadd.f32 %v5444, %v5359
      %v5481 = vadd.f32 %v5445, %v5362
      %v5482 = vadd.f32 %v5446, %v5364
      %v5483 = vadd.f32 %v5447, %v5367
      %v5484 = vadd.f32 %v5448, %v5369
      %v5485 = vadd.f32 %v5449, %v5372
      %v5486 = vadd.f32 %v5450, %v5374
      %v5487 = vadd.f32 %v5451, %v5377
      %v5488 = vadd.f32 %v5452, %v5379
      %v5489 = vadd.f32 %v5453, %v5382
      %v5490 = vadd.f32 %v5454, %v5384
      %v5491 = vadd.f32 %v5455, %v5387
      %v5492 = vadd.f32 %v5456, %v5389
      %v5493 = vadd.f32 %v5457, %v5392
      %v5494 = vadd.f32 %v5458, %v5394
      %v5495 = vadd.f32 %v5459, %v5397
      %v5496 = vadd.f32 %v5460, %v5399
      %v5497 = vadd.f32 %v5461, %v5402
      %v5498 = vadd.f32 %v5462, %v5404
      %v5499 = vadd.f32 %v5463, %v5407
      %v5500 = vadd.f32 %v5464, %v5409
      %v5501 = vadd.f32 %v5465, %v5412
      %v5502 = vadd.f32 %v5466, %v5414
      %v5503 = vadd.f32 %v5467, %v5417
      %v5504 = vadd.f32 %v5468, %v5419
      %v5505 = vadd.f32 %v5469, %v5422
      %v5506 = vadd.f32 %v5470, %v5424
      %v5507 = vadd.f32 %v5471, %v5427
      %v5508 = vadd.f32 %v5472, %v5429
      %v5509 = vadd.f32 %v5473, %v5432
      %v5510 = vadd.f32 %v5474, %v5434
      %v5511 = vadd.f32 %v5475, %v5437
      %v5512 = vadd.f32 %v5476, %v5439
      %5513 = vst.msk [vmem:[#allocation3] sm:$0xff] %vm172, %v5477
      %5514 = vst.msk [vmem:[#allocation3 + $0x8] sm:$0xff] %vm172, %v5478
      %5515 = vst.msk [vmem:[#allocation3 + $0x10] sm:$0xff] %vm172, %v5479
      %5516 = vst.msk [vmem:[#allocation3 + $0x18] sm:$0xff] %vm172, %v5480
      %5517 = vst.msk [vmem:[#allocation3 + $0x20] sm:$0xff] %vm172, %v5481
      %5518 = vst.msk [vmem:[#allocation3 + $0x28] sm:$0xff] %vm172, %v5482
      %5519 = vst.msk [vmem:[#allocation3 + $0x30] sm:$0xff] %vm172, %v5483
      %5520 = vst.msk [vmem:[#allocation3 + $0x38] sm:$0xff] %vm172, %v5484
      %5521 = vst.msk [vmem:[#allocation3 + $0x40] sm:$0xff] %vm172, %v5485
      %5522 = vst.msk [vmem:[#allocation3 + $0x48] sm:$0xff] %vm172, %v5486
      %5523 = vst.msk [vmem:[#allocation3 + $0x50] sm:$0xff] %vm172, %v5487
      %5524 = vst.msk [vmem:[#allocation3 + $0x58] sm:$0xff] %vm172, %v5488
      %5525 = vst.msk [vmem:[#allocation3 + $0x60] sm:$0xff] %vm172, %v5489
      %5526 = vst.msk [vmem:[#allocation3 + $0x68] sm:$0xff] %vm172, %v5490
      %5527 = vst.msk [vmem:[#allocation3 + $0x70] sm:$0xff] %vm172, %v5491
      %5528 = vst.msk [vmem:[#allocation3 + $0x78] sm:$0xff] %vm172, %v5492
      %5529 = vst.msk [vmem:[#allocation3 + $0x80] sm:$0xff] %vm172, %v5493
      %5530 = vst.msk [vmem:[#allocation3 + $0x88] sm:$0xff] %vm172, %v5494
      %5531 = vst.msk [vmem:[#allocation3 + $0x90] sm:$0xff] %vm172, %v5495
      %5532 = vst.msk [vmem:[#allocation3 + $0x98] sm:$0xff] %vm172, %v5496
      %5533 = vst.msk [vmem:[#allocation3 + $0xa0] sm:$0xff] %vm172, %v5497
      %5534 = vst.msk [vmem:[#allocation3 + $0xa8] sm:$0xff] %vm172, %v5498
      %5535 = vst.msk [vmem:[#allocation3 + $0xb0] sm:$0xff] %vm172, %v5499
      %5536 = vst.msk [vmem:[#allocation3 + $0xb8] sm:$0xff] %vm172, %v5500
      %5537 = vst.msk [vmem:[#allocation3 + $0xc0] sm:$0xff] %vm172, %v5501
      %5538 = vst.msk [vmem:[#allocation3 + $0xc8] sm:$0xff] %vm172, %v5502
      %5539 = vst.msk [vmem:[#allocation3 + $0xd0] sm:$0xff] %vm172, %v5503
      %5540 = vst.msk [vmem:[#allocation3 + $0xd8] sm:$0xff] %vm172, %v5504
      %5541 = vst.msk [vmem:[#allocation3 + $0xe0] sm:$0xff] %vm172, %v5505
      %5542 = vst.msk [vmem:[#allocation3 + $0xe8] sm:$0xff] %vm172, %v5506
      %5543 = vst.msk [vmem:[#allocation3 + $0xf0] sm:$0xff] %vm172, %v5507
      %5544 = vst.msk [vmem:[#allocation3 + $0xf8] sm:$0xff] %vm172, %v5508
      %5545 = vst.msk [vmem:[#allocation3 + $0x100] sm:$0xff] %vm172, %v5509
      %5546 = vst.msk [vmem:[#allocation3 + $0x108] sm:$0xff] %vm172, %v5510
      %5547 = vst.msk [vmem:[#allocation3 + $0x110] sm:$0xff] %vm172, %v5511
      %5548 = vst.msk [vmem:[#allocation3 + $0x118] sm:$0xff] %vm172, %v5512
      %v5549 = vld [vmem:[#allocation2 + $0x24] sm:$0xff]
      %v5550 = vld [vmem:[#allocation2 + $0x2c] sm:$0xff]
      %v5551 = vld [vmem:[#allocation2 + $0x34] sm:$0xff]
      %v5552 = vld [vmem:[#allocation2 + $0x3c] sm:$0xff]
      %v5553 = vld [vmem:[#allocation2 + $0x44] sm:$0xff]
      %v5554 = vld [vmem:[#allocation2 + $0x4c] sm:$0xff]
      %v5555 = vld [vmem:[#allocation2 + $0x54] sm:$0xff]
      %v5556 = vld [vmem:[#allocation2 + $0x5c] sm:$0xff]
      %v5557 = vld [vmem:[#allocation2 + $0x64] sm:$0xff]
      %v5558 = vld [vmem:[#allocation2 + $0x6c] sm:$0xff]
      %v5559 = vld [vmem:[#allocation2 + $0x74] sm:$0xff]
      %v5560 = vld [vmem:[#allocation2 + $0x7c] sm:$0xff]
      %v5561 = vld [vmem:[#allocation2 + $0x84] sm:$0xff]
      %v5562 = vld [vmem:[#allocation2 + $0x8c] sm:$0xff]
      %v5563 = vld [vmem:[#allocation2 + $0x94] sm:$0xff]
      %v5564 = vld [vmem:[#allocation2 + $0x9c] sm:$0xff]
      %v5565 = vld [vmem:[#allocation2 + $0xa4] sm:$0xff]
      %v5566 = vld [vmem:[#allocation2 + $0xac] sm:$0xff]
      %v5567 = vld [vmem:[#allocation2 + $0xb4] sm:$0xff]
      %v5568 = vld [vmem:[#allocation2 + $0xbc] sm:$0xff]
      %v5569 = vld [vmem:[#allocation2 + $0xc4] sm:$0xff]
      %v5570 = vld [vmem:[#allocation2 + $0xcc] sm:$0xff]
      %v5571 = vld [vmem:[#allocation2 + $0xd4] sm:$0xff]
      %v5572 = vld [vmem:[#allocation2 + $0xdc] sm:$0xff]
      %v5573 = vld [vmem:[#allocation2 + $0xe4] sm:$0xff]
      %v5574 = vld [vmem:[#allocation2 + $0xec] sm:$0xff]
      %v5575 = vld [vmem:[#allocation2 + $0xf4] sm:$0xff]
      %v5576 = vld [vmem:[#allocation2 + $0xfc] sm:$0xff]
      %v5577 = vld [vmem:[#allocation2 + $0x104] sm:$0xff]
      %v5578 = vld [vmem:[#allocation2 + $0x10c] sm:$0xff]
      %v5579 = vld [vmem:[#allocation2 + $0x114] sm:$0xff]
      %v5580 = vld [vmem:[#allocation2 + $0x11c] sm:$0xff]
      %v5581 = vld [vmem:[#allocation2 + $0x124] sm:$0xff]
      %v5582 = vld [vmem:[#allocation2 + $0x12c] sm:$0xff]
      %v5583 = vld [vmem:[#allocation2 + $0x134] sm:$0xff]
      %v5584 = vld [vmem:[#allocation2 + $0x13c] sm:$0xff]
      %v5585 = vpack.c.bf16 %v5550, %v5549
      %v5586 = vpack.c.bf16 %v5552, %v5551
      %v5587 = vpack.c.bf16 %v5554, %v5553
      %v5588 = vpack.c.bf16 %v5556, %v5555
      %v5589 = vpack.c.bf16 %v5558, %v5557
      %v5590 = vpack.c.bf16 %v5560, %v5559
      %v5591 = vpack.c.bf16 %v5562, %v5561
      %v5592 = vpack.c.bf16 %v5564, %v5563
      %v5593 = vpack.c.bf16 %v5566, %v5565
      %v5594 = vpack.c.bf16 %v5568, %v5567
      %v5595 = vpack.c.bf16 %v5570, %v5569
      %v5596 = vpack.c.bf16 %v5572, %v5571
      %v5597 = vpack.c.bf16 %v5574, %v5573
      %v5598 = vpack.c.bf16 %v5576, %v5575
      %v5599 = vpack.c.bf16 %v5578, %v5577
      %v5600 = vpack.c.bf16 %v5580, %v5579
      %v5601 = vpack.c.bf16 %v5582, %v5581
      %v5602 = vpack.c.bf16 %v5584, %v5583
      %s5603 = scalar_lea.vmem %s2, 12
      %v5604 = vld [vmem:[%s5603] sm:$0x3]
      %v5606 = vsel %vm172, %v5585, 0
      %v5609 = vsel %vm172, %v5586, 0
      %v5612 = vsel %vm172, %v5587, 0
      %v5615 = vsel %vm172, %v5588, 0
      %v5618 = vsel %vm172, %v5589, 0
      %v5621 = vsel %vm172, %v5590, 0
      %v5624 = vsel %vm172, %v5591, 0
      %v5627 = vsel %vm172, %v5592, 0
      %v5630 = vsel %vm172, %v5593, 0
      %v5633 = vsel %vm172, %v5594, 0
      %v5636 = vsel %vm172, %v5595, 0
      %v5639 = vsel %vm172, %v5596, 0
      %v5642 = vsel %vm172, %v5597, 0
      %v5645 = vsel %vm172, %v5598, 0
      %v5648 = vsel %vm172, %v5599, 0
      %v5651 = vsel %vm172, %v5600, 0
      %v5654 = vsel %vm172, %v5601, 0
      %v5657 = vsel %vm172, %v5602, 0
      %v5660 = vsel %vm394, %v5604, 0
      %5662 = vmatpush.bf16.msra.mxu0 0
      %5663 = vmatpush.bf16.msra.mxu0 0
      %5664 = vmatpush.bf16.msra.mxu0 0
      %5665 = vmatpush.bf16.msra.mxu0 0
      %5666 = vmatpush.bf16.msra.mxu0 0
      %5667 = vmatpush.bf16.msra.mxu0 0
      %5668 = vmatpush.bf16.msra.mxu0 0
      %5669 = vmatpush.bf16.msra.mxu0 %v5660
      %5670 = vmatmul.bf16.gmra.mxu0 %v5606
      %v5671 = vpop.f32.mrf.mxu0
      %v5672 = vadd.f32 0.0, %v5671
      %v5673 = vpop.f32.mrf.mxu0
      %v5674 = vadd.f32 0.0, %v5673
      %5675 = vmatmul.bf16.gmra.mxu0 %v5609
      %v5676 = vpop.f32.mrf.mxu0
      %v5677 = vadd.f32 0.0, %v5676
      %v5678 = vpop.f32.mrf.mxu0
      %v5679 = vadd.f32 0.0, %v5678
      %5680 = vmatmul.bf16.gmra.mxu0 %v5612
      %v5681 = vpop.f32.mrf.mxu0
      %v5682 = vadd.f32 0.0, %v5681
      %v5683 = vpop.f32.mrf.mxu0
      %v5684 = vadd.f32 0.0, %v5683
      %5685 = vmatmul.bf16.gmra.mxu0 %v5615
      %v5686 = vpop.f32.mrf.mxu0
      %v5687 = vadd.f32 0.0, %v5686
      %v5688 = vpop.f32.mrf.mxu0
      %v5689 = vadd.f32 0.0, %v5688
      %5690 = vmatmul.bf16.gmra.mxu0 %v5618
      %v5691 = vpop.f32.mrf.mxu0
      %v5692 = vadd.f32 0.0, %v5691
      %v5693 = vpop.f32.mrf.mxu0
      %v5694 = vadd.f32 0.0, %v5693
      %5695 = vmatmul.bf16.gmra.mxu0 %v5621
      %v5696 = vpop.f32.mrf.mxu0
      %v5697 = vadd.f32 0.0, %v5696
      %v5698 = vpop.f32.mrf.mxu0
      %v5699 = vadd.f32 0.0, %v5698
      %5700 = vmatmul.bf16.gmra.mxu0 %v5624
      %v5701 = vpop.f32.mrf.mxu0
      %v5702 = vadd.f32 0.0, %v5701
      %v5703 = vpop.f32.mrf.mxu0
      %v5704 = vadd.f32 0.0, %v5703
      %5705 = vmatmul.bf16.gmra.mxu0 %v5627
      %v5706 = vpop.f32.mrf.mxu0
      %v5707 = vadd.f32 0.0, %v5706
      %v5708 = vpop.f32.mrf.mxu0
      %v5709 = vadd.f32 0.0, %v5708
      %5710 = vmatmul.bf16.gmra.mxu0 %v5630
      %v5711 = vpop.f32.mrf.mxu0
      %v5712 = vadd.f32 0.0, %v5711
      %v5713 = vpop.f32.mrf.mxu0
      %v5714 = vadd.f32 0.0, %v5713
      %5715 = vmatmul.bf16.gmra.mxu0 %v5633
      %v5716 = vpop.f32.mrf.mxu0
      %v5717 = vadd.f32 0.0, %v5716
      %v5718 = vpop.f32.mrf.mxu0
      %v5719 = vadd.f32 0.0, %v5718
      %5720 = vmatmul.bf16.gmra.mxu0 %v5636
      %v5721 = vpop.f32.mrf.mxu0
      %v5722 = vadd.f32 0.0, %v5721
      %v5723 = vpop.f32.mrf.mxu0
      %v5724 = vadd.f32 0.0, %v5723
      %5725 = vmatmul.bf16.gmra.mxu0 %v5639
      %v5726 = vpop.f32.mrf.mxu0
      %v5727 = vadd.f32 0.0, %v5726
      %v5728 = vpop.f32.mrf.mxu0
      %v5729 = vadd.f32 0.0, %v5728
      %5730 = vmatmul.bf16.gmra.mxu0 %v5642
      %v5731 = vpop.f32.mrf.mxu0
      %v5732 = vadd.f32 0.0, %v5731
      %v5733 = vpop.f32.mrf.mxu0
      %v5734 = vadd.f32 0.0, %v5733
      %5735 = vmatmul.bf16.gmra.mxu0 %v5645
      %v5736 = vpop.f32.mrf.mxu0
      %v5737 = vadd.f32 0.0, %v5736
      %v5738 = vpop.f32.mrf.mxu0
      %v5739 = vadd.f32 0.0, %v5738
      %5740 = vmatmul.bf16.gmra.mxu0 %v5648
      %v5741 = vpop.f32.mrf.mxu0
      %v5742 = vadd.f32 0.0, %v5741
      %v5743 = vpop.f32.mrf.mxu0
      %v5744 = vadd.f32 0.0, %v5743
      %5745 = vmatmul.bf16.gmra.mxu0 %v5651
      %v5746 = vpop.f32.mrf.mxu0
      %v5747 = vadd.f32 0.0, %v5746
      %v5748 = vpop.f32.mrf.mxu0
      %v5749 = vadd.f32 0.0, %v5748
      %5750 = vmatmul.bf16.gmra.mxu0 %v5654
      %v5751 = vpop.f32.mrf.mxu0
      %v5752 = vadd.f32 0.0, %v5751
      %v5753 = vpop.f32.mrf.mxu0
      %v5754 = vadd.f32 0.0, %v5753
      %5755 = vmatmul.bf16.gmra.mxu0 %v5657
      %v5756 = vpop.f32.mrf.mxu0
      %v5757 = vadd.f32 0.0, %v5756
      %v5758 = vpop.f32.mrf.mxu0
      %v5759 = vadd.f32 0.0, %v5758
      %5760 = vdwg.mxu0
      %v5761 = vld [vmem:[#allocation3] sm:$0xff]
      %v5762 = vld [vmem:[#allocation3 + $0x8] sm:$0xff]
      %v5763 = vld [vmem:[#allocation3 + $0x10] sm:$0xff]
      %v5764 = vld [vmem:[#allocation3 + $0x18] sm:$0xff]
      %v5765 = vld [vmem:[#allocation3 + $0x20] sm:$0xff]
      %v5766 = vld [vmem:[#allocation3 + $0x28] sm:$0xff]
      %v5767 = vld [vmem:[#allocation3 + $0x30] sm:$0xff]
      %v5768 = vld [vmem:[#allocation3 + $0x38] sm:$0xff]
      %v5769 = vld [vmem:[#allocation3 + $0x40] sm:$0xff]
      %v5770 = vld [vmem:[#allocation3 + $0x48] sm:$0xff]
      %v5771 = vld [vmem:[#allocation3 + $0x50] sm:$0xff]
      %v5772 = vld [vmem:[#allocation3 + $0x58] sm:$0xff]
      %v5773 = vld [vmem:[#allocation3 + $0x60] sm:$0xff]
      %v5774 = vld [vmem:[#allocation3 + $0x68] sm:$0xff]
      %v5775 = vld [vmem:[#allocation3 + $0x70] sm:$0xff]
      %v5776 = vld [vmem:[#allocation3 + $0x78] sm:$0xff]
      %v5777 = vld [vmem:[#allocation3 + $0x80] sm:$0xff]
      %v5778 = vld [vmem:[#allocation3 + $0x88] sm:$0xff]
      %v5779 = vld [vmem:[#allocation3 + $0x90] sm:$0xff]
      %v5780 = vld [vmem:[#allocation3 + $0x98] sm:$0xff]
      %v5781 = vld [vmem:[#allocation3 + $0xa0] sm:$0xff]
      %v5782 = vld [vmem:[#allocation3 + $0xa8] sm:$0xff]
      %v5783 = vld [vmem:[#allocation3 + $0xb0] sm:$0xff]
      %v5784 = vld [vmem:[#allocation3 + $0xb8] sm:$0xff]
      %v5785 = vld [vmem:[#allocation3 + $0xc0] sm:$0xff]
      %v5786 = vld [vmem:[#allocation3 + $0xc8] sm:$0xff]
      %v5787 = vld [vmem:[#allocation3 + $0xd0] sm:$0xff]
      %v5788 = vld [vmem:[#allocation3 + $0xd8] sm:$0xff]
      %v5789 = vld [vmem:[#allocation3 + $0xe0] sm:$0xff]
      %v5790 = vld [vmem:[#allocation3 + $0xe8] sm:$0xff]
      %v5791 = vld [vmem:[#allocation3 + $0xf0] sm:$0xff]
      %v5792 = vld [vmem:[#allocation3 + $0xf8] sm:$0xff]
      %v5793 = vld [vmem:[#allocation3 + $0x100] sm:$0xff]
      %v5794 = vld [vmem:[#allocation3 + $0x108] sm:$0xff]
      %v5795 = vld [vmem:[#allocation3 + $0x110] sm:$0xff]
      %v5796 = vld [vmem:[#allocation3 + $0x118] sm:$0xff]
      %v5797 = vadd.f32 %v5761, %v5672
      %v5798 = vadd.f32 %v5762, %v5674
      %v5799 = vadd.f32 %v5763, %v5677
      %v5800 = vadd.f32 %v5764, %v5679
      %v5801 = vadd.f32 %v5765, %v5682
      %v5802 = vadd.f32 %v5766, %v5684
      %v5803 = vadd.f32 %v5767, %v5687
      %v5804 = vadd.f32 %v5768, %v5689
      %v5805 = vadd.f32 %v5769, %v5692
      %v5806 = vadd.f32 %v5770, %v5694
      %v5807 = vadd.f32 %v5771, %v5697
      %v5808 = vadd.f32 %v5772, %v5699
      %v5809 = vadd.f32 %v5773, %v5702
      %v5810 = vadd.f32 %v5774, %v5704
      %v5811 = vadd.f32 %v5775, %v5707
      %v5812 = vadd.f32 %v5776, %v5709
      %v5813 = vadd.f32 %v5777, %v5712
      %v5814 = vadd.f32 %v5778, %v5714
      %v5815 = vadd.f32 %v5779, %v5717
      %v5816 = vadd.f32 %v5780, %v5719
      %v5817 = vadd.f32 %v5781, %v5722
      %v5818 = vadd.f32 %v5782, %v5724
      %v5819 = vadd.f32 %v5783, %v5727
      %v5820 = vadd.f32 %v5784, %v5729
      %v5821 = vadd.f32 %v5785, %v5732
      %v5822 = vadd.f32 %v5786, %v5734
      %v5823 = vadd.f32 %v5787, %v5737
      %v5824 = vadd.f32 %v5788, %v5739
      %v5825 = vadd.f32 %v5789, %v5742
      %v5826 = vadd.f32 %v5790, %v5744
      %v5827 = vadd.f32 %v5791, %v5747
      %v5828 = vadd.f32 %v5792, %v5749
      %v5829 = vadd.f32 %v5793, %v5752
      %v5830 = vadd.f32 %v5794, %v5754
      %v5831 = vadd.f32 %v5795, %v5757
      %v5832 = vadd.f32 %v5796, %v5759
      %5833 = vst.msk [vmem:[#allocation3] sm:$0xff] %vm172, %v5797
      %5834 = vst.msk [vmem:[#allocation3 + $0x8] sm:$0xff] %vm172, %v5798
      %5835 = vst.msk [vmem:[#allocation3 + $0x10] sm:$0xff] %vm172, %v5799
      %5836 = vst.msk [vmem:[#allocation3 + $0x18] sm:$0xff] %vm172, %v5800
      %5837 = vst.msk [vmem:[#allocation3 + $0x20] sm:$0xff] %vm172, %v5801
      %5838 = vst.msk [vmem:[#allocation3 + $0x28] sm:$0xff] %vm172, %v5802
      %5839 = vst.msk [vmem:[#allocation3 + $0x30] sm:$0xff] %vm172, %v5803
      %5840 = vst.msk [vmem:[#allocation3 + $0x38] sm:$0xff] %vm172, %v5804
      %5841 = vst.msk [vmem:[#allocation3 + $0x40] sm:$0xff] %vm172, %v5805
      %5842 = vst.msk [vmem:[#allocation3 + $0x48] sm:$0xff] %vm172, %v5806
      %5843 = vst.msk [vmem:[#allocation3 + $0x50] sm:$0xff] %vm172, %v5807
      %5844 = vst.msk [vmem:[#allocation3 + $0x58] sm:$0xff] %vm172, %v5808
      %5845 = vst.msk [vmem:[#allocation3 + $0x60] sm:$0xff] %vm172, %v5809
      %5846 = vst.msk [vmem:[#allocation3 + $0x68] sm:$0xff] %vm172, %v5810
      %5847 = vst.msk [vmem:[#allocation3 + $0x70] sm:$0xff] %vm172, %v5811
      %5848 = vst.msk [vmem:[#allocation3 + $0x78] sm:$0xff] %vm172, %v5812
      %5849 = vst.msk [vmem:[#allocation3 + $0x80] sm:$0xff] %vm172, %v5813
      %5850 = vst.msk [vmem:[#allocation3 + $0x88] sm:$0xff] %vm172, %v5814
      %5851 = vst.msk [vmem:[#allocation3 + $0x90] sm:$0xff] %vm172, %v5815
      %5852 = vst.msk [vmem:[#allocation3 + $0x98] sm:$0xff] %vm172, %v5816
      %5853 = vst.msk [vmem:[#allocation3 + $0xa0] sm:$0xff] %vm172, %v5817
      %5854 = vst.msk [vmem:[#allocation3 + $0xa8] sm:$0xff] %vm172, %v5818
      %5855 = vst.msk [vmem:[#allocation3 + $0xb0] sm:$0xff] %vm172, %v5819
      %5856 = vst.msk [vmem:[#allocation3 + $0xb8] sm:$0xff] %vm172, %v5820
      %5857 = vst.msk [vmem:[#allocation3 + $0xc0] sm:$0xff] %vm172, %v5821
      %5858 = vst.msk [vmem:[#allocation3 + $0xc8] sm:$0xff] %vm172, %v5822
      %5859 = vst.msk [vmem:[#allocation3 + $0xd0] sm:$0xff] %vm172, %v5823
      %5860 = vst.msk [vmem:[#allocation3 + $0xd8] sm:$0xff] %vm172, %v5824
      %5861 = vst.msk [vmem:[#allocation3 + $0xe0] sm:$0xff] %vm172, %v5825
      %5862 = vst.msk [vmem:[#allocation3 + $0xe8] sm:$0xff] %vm172, %v5826
      %5863 = vst.msk [vmem:[#allocation3 + $0xf0] sm:$0xff] %vm172, %v5827
      %5864 = vst.msk [vmem:[#allocation3 + $0xf8] sm:$0xff] %vm172, %v5828
      %5865 = vst.msk [vmem:[#allocation3 + $0x100] sm:$0xff] %vm172, %v5829
      %5866 = vst.msk [vmem:[#allocation3 + $0x108] sm:$0xff] %vm172, %v5830
      %5867 = vst.msk [vmem:[#allocation3 + $0x110] sm:$0xff] %vm172, %v5831
      %5868 = vst.msk [vmem:[#allocation3 + $0x118] sm:$0xff] %vm172, %v5832
      %v5869 = vld [vmem:[#allocation2 + $0x25] sm:$0xff]
      %v5870 = vld [vmem:[#allocation2 + $0x2d] sm:$0xff]
      %v5871 = vld [vmem:[#allocation2 + $0x35] sm:$0xff]
      %v5872 = vld [vmem:[#allocation2 + $0x3d] sm:$0xff]
      %v5873 = vld [vmem:[#allocation2 + $0x45] sm:$0xff]
      %v5874 = vld [vmem:[#allocation2 + $0x4d] sm:$0xff]
      %v5875 = vld [vmem:[#allocation2 + $0x55] sm:$0xff]
      %v5876 = vld [vmem:[#allocation2 + $0x5d] sm:$0xff]
      %v5877 = vld [vmem:[#allocation2 + $0x65] sm:$0xff]
      %v5878 = vld [vmem:[#allocation2 + $0x6d] sm:$0xff]
      %v5879 = vld [vmem:[#allocation2 + $0x75] sm:$0xff]
      %v5880 = vld [vmem:[#allocation2 + $0x7d] sm:$0xff]
      %v5881 = vld [vmem:[#allocation2 + $0x85] sm:$0xff]
      %v5882 = vld [vmem:[#allocation2 + $0x8d] sm:$0xff]
      %v5883 = vld [vmem:[#allocation2 + $0x95] sm:$0xff]
      %v5884 = vld [vmem:[#allocation2 + $0x9d] sm:$0xff]
      %v5885 = vld [vmem:[#allocation2 + $0xa5] sm:$0xff]
      %v5886 = vld [vmem:[#allocation2 + $0xad] sm:$0xff]
      %v5887 = vld [vmem:[#allocation2 + $0xb5] sm:$0xff]
      %v5888 = vld [vmem:[#allocation2 + $0xbd] sm:$0xff]
      %v5889 = vld [vmem:[#allocation2 + $0xc5] sm:$0xff]
      %v5890 = vld [vmem:[#allocation2 + $0xcd] sm:$0xff]
      %v5891 = vld [vmem:[#allocation2 + $0xd5] sm:$0xff]
      %v5892 = vld [vmem:[#allocation2 + $0xdd] sm:$0xff]
      %v5893 = vld [vmem:[#allocation2 + $0xe5] sm:$0xff]
      %v5894 = vld [vmem:[#allocation2 + $0xed] sm:$0xff]
      %v5895 = vld [vmem:[#allocation2 + $0xf5] sm:$0xff]
      %v5896 = vld [vmem:[#allocation2 + $0xfd] sm:$0xff]
      %v5897 = vld [vmem:[#allocation2 + $0x105] sm:$0xff]
      %v5898 = vld [vmem:[#allocation2 + $0x10d] sm:$0xff]
      %v5899 = vld [vmem:[#allocation2 + $0x115] sm:$0xff]
      %v5900 = vld [vmem:[#allocation2 + $0x11d] sm:$0xff]
      %v5901 = vld [vmem:[#allocation2 + $0x125] sm:$0xff]
      %v5902 = vld [vmem:[#allocation2 + $0x12d] sm:$0xff]
      %v5903 = vld [vmem:[#allocation2 + $0x135] sm:$0xff]
      %v5904 = vld [vmem:[#allocation2 + $0x13d] sm:$0xff]
      %v5905 = vpack.c.bf16 %v5870, %v5869
      %v5906 = vpack.c.bf16 %v5872, %v5871
      %v5907 = vpack.c.bf16 %v5874, %v5873
      %v5908 = vpack.c.bf16 %v5876, %v5875
      %v5909 = vpack.c.bf16 %v5878, %v5877
      %v5910 = vpack.c.bf16 %v5880, %v5879
      %v5911 = vpack.c.bf16 %v5882, %v5881
      %v5912 = vpack.c.bf16 %v5884, %v5883
      %v5913 = vpack.c.bf16 %v5886, %v5885
      %v5914 = vpack.c.bf16 %v5888, %v5887
      %v5915 = vpack.c.bf16 %v5890, %v5889
      %v5916 = vpack.c.bf16 %v5892, %v5891
      %v5917 = vpack.c.bf16 %v5894, %v5893
      %v5918 = vpack.c.bf16 %v5896, %v5895
      %v5919 = vpack.c.bf16 %v5898, %v5897
      %v5920 = vpack.c.bf16 %v5900, %v5899
      %v5921 = vpack.c.bf16 %v5902, %v5901
      %v5922 = vpack.c.bf16 %v5904, %v5903
      %s5923 = scalar_lea.vmem %s2, 14
      %v5924 = vld [vmem:[%s5923] sm:$0x3]
      %v5926 = vsel %vm172, %v5905, 0
      %v5929 = vsel %vm172, %v5906, 0
      %v5932 = vsel %vm172, %v5907, 0
      %v5935 = vsel %vm172, %v5908, 0
      %v5938 = vsel %vm172, %v5909, 0
      %v5941 = vsel %vm172, %v5910, 0
      %v5944 = vsel %vm172, %v5911, 0
      %v5947 = vsel %vm172, %v5912, 0
      %v5950 = vsel %vm172, %v5913, 0
      %v5953 = vsel %vm172, %v5914, 0
      %v5956 = vsel %vm172, %v5915, 0
      %v5959 = vsel %vm172, %v5916, 0
      %v5962 = vsel %vm172, %v5917, 0
      %v5965 = vsel %vm172, %v5918, 0
      %v5968 = vsel %vm172, %v5919, 0
      %v5971 = vsel %vm172, %v5920, 0
      %v5974 = vsel %vm172, %v5921, 0
      %v5977 = vsel %vm172, %v5922, 0
      %v5980 = vsel %vm394, %v5924, 0
      %5982 = vmatpush.bf16.msra.mxu0 0
      %5983 = vmatpush.bf16.msra.mxu0 0
      %5984 = vmatpush.bf16.msra.mxu0 0
      %5985 = vmatpush.bf16.msra.mxu0 0
      %5986 = vmatpush.bf16.msra.mxu0 0
      %5987 = vmatpush.bf16.msra.mxu0 0
      %5988 = vmatpush.bf16.msra.mxu0 0
      %5989 = vmatpush.bf16.msra.mxu0 %v5980
      %5990 = vmatmul.bf16.gmra.mxu0 %v5926
      %v5991 = vpop.f32.mrf.mxu0
      %v5992 = vadd.f32 0.0, %v5991
      %v5993 = vpop.f32.mrf.mxu0
      %v5994 = vadd.f32 0.0, %v5993
      %5995 = vmatmul.bf16.gmra.mxu0 %v5929
      %v5996 = vpop.f32.mrf.mxu0
      %v5997 = vadd.f32 0.0, %v5996
      %v5998 = vpop.f32.mrf.mxu0
      %v5999 = vadd.f32 0.0, %v5998
      %6000 = vmatmul.bf16.gmra.mxu0 %v5932
      %v6001 = vpop.f32.mrf.mxu0
      %v6002 = vadd.f32 0.0, %v6001
      %v6003 = vpop.f32.mrf.mxu0
      %v6004 = vadd.f32 0.0, %v6003
      %6005 = vmatmul.bf16.gmra.mxu0 %v5935
      %v6006 = vpop.f32.mrf.mxu0
      %v6007 = vadd.f32 0.0, %v6006
      %v6008 = vpop.f32.mrf.mxu0
      %v6009 = vadd.f32 0.0, %v6008
      %6010 = vmatmul.bf16.gmra.mxu0 %v5938
      %v6011 = vpop.f32.mrf.mxu0
      %v6012 = vadd.f32 0.0, %v6011
      %v6013 = vpop.f32.mrf.mxu0
      %v6014 = vadd.f32 0.0, %v6013
      %6015 = vmatmul.bf16.gmra.mxu0 %v5941
      %v6016 = vpop.f32.mrf.mxu0
      %v6017 = vadd.f32 0.0, %v6016
      %v6018 = vpop.f32.mrf.mxu0
      %v6019 = vadd.f32 0.0, %v6018
      %6020 = vmatmul.bf16.gmra.mxu0 %v5944
      %v6021 = vpop.f32.mrf.mxu0
      %v6022 = vadd.f32 0.0, %v6021
      %v6023 = vpop.f32.mrf.mxu0
      %v6024 = vadd.f32 0.0, %v6023
      %6025 = vmatmul.bf16.gmra.mxu0 %v5947
      %v6026 = vpop.f32.mrf.mxu0
      %v6027 = vadd.f32 0.0, %v6026
      %v6028 = vpop.f32.mrf.mxu0
      %v6029 = vadd.f32 0.0, %v6028
      %6030 = vmatmul.bf16.gmra.mxu0 %v5950
      %v6031 = vpop.f32.mrf.mxu0
      %v6032 = vadd.f32 0.0, %v6031
      %v6033 = vpop.f32.mrf.mxu0
      %v6034 = vadd.f32 0.0, %v6033
      %6035 = vmatmul.bf16.gmra.mxu0 %v5953
      %v6036 = vpop.f32.mrf.mxu0
      %v6037 = vadd.f32 0.0, %v6036
      %v6038 = vpop.f32.mrf.mxu0
      %v6039 = vadd.f32 0.0, %v6038
      %6040 = vmatmul.bf16.gmra.mxu0 %v5956
      %v6041 = vpop.f32.mrf.mxu0
      %v6042 = vadd.f32 0.0, %v6041
      %v6043 = vpop.f32.mrf.mxu0
      %v6044 = vadd.f32 0.0, %v6043
      %6045 = vmatmul.bf16.gmra.mxu0 %v5959
      %v6046 = vpop.f32.mrf.mxu0
      %v6047 = vadd.f32 0.0, %v6046
      %v6048 = vpop.f32.mrf.mxu0
      %v6049 = vadd.f32 0.0, %v6048
      %6050 = vmatmul.bf16.gmra.mxu0 %v5962
      %v6051 = vpop.f32.mrf.mxu0
      %v6052 = vadd.f32 0.0, %v6051
      %v6053 = vpop.f32.mrf.mxu0
      %v6054 = vadd.f32 0.0, %v6053
      %6055 = vmatmul.bf16.gmra.mxu0 %v5965
      %v6056 = vpop.f32.mrf.mxu0
      %v6057 = vadd.f32 0.0, %v6056
      %v6058 = vpop.f32.mrf.mxu0
      %v6059 = vadd.f32 0.0, %v6058
      %6060 = vmatmul.bf16.gmra.mxu0 %v5968
      %v6061 = vpop.f32.mrf.mxu0
      %v6062 = vadd.f32 0.0, %v6061
      %v6063 = vpop.f32.mrf.mxu0
      %v6064 = vadd.f32 0.0, %v6063
      %6065 = vmatmul.bf16.gmra.mxu0 %v5971
      %v6066 = vpop.f32.mrf.mxu0
      %v6067 = vadd.f32 0.0, %v6066
      %v6068 = vpop.f32.mrf.mxu0
      %v6069 = vadd.f32 0.0, %v6068
      %6070 = vmatmul.bf16.gmra.mxu0 %v5974
      %v6071 = vpop.f32.mrf.mxu0
      %v6072 = vadd.f32 0.0, %v6071
      %v6073 = vpop.f32.mrf.mxu0
      %v6074 = vadd.f32 0.0, %v6073
      %6075 = vmatmul.bf16.gmra.mxu0 %v5977
      %v6076 = vpop.f32.mrf.mxu0
      %v6077 = vadd.f32 0.0, %v6076
      %v6078 = vpop.f32.mrf.mxu0
      %v6079 = vadd.f32 0.0, %v6078
      %6080 = vdwg.mxu0
      %v6081 = vld [vmem:[#allocation3] sm:$0xff]
      %v6082 = vld [vmem:[#allocation3 + $0x8] sm:$0xff]
      %v6083 = vld [vmem:[#allocation3 + $0x10] sm:$0xff]
      %v6084 = vld [vmem:[#allocation3 + $0x18] sm:$0xff]
      %v6085 = vld [vmem:[#allocation3 + $0x20] sm:$0xff]
      %v6086 = vld [vmem:[#allocation3 + $0x28] sm:$0xff]
      %v6087 = vld [vmem:[#allocation3 + $0x30] sm:$0xff]
      %v6088 = vld [vmem:[#allocation3 + $0x38] sm:$0xff]
      %v6089 = vld [vmem:[#allocation3 + $0x40] sm:$0xff]
      %v6090 = vld [vmem:[#allocation3 + $0x48] sm:$0xff]
      %v6091 = vld [vmem:[#allocation3 + $0x50] sm:$0xff]
      %v6092 = vld [vmem:[#allocation3 + $0x58] sm:$0xff]
      %v6093 = vld [vmem:[#allocation3 + $0x60] sm:$0xff]
      %v6094 = vld [vmem:[#allocation3 + $0x68] sm:$0xff]
      %v6095 = vld [vmem:[#allocation3 + $0x70] sm:$0xff]
      %v6096 = vld [vmem:[#allocation3 + $0x78] sm:$0xff]
      %v6097 = vld [vmem:[#allocation3 + $0x80] sm:$0xff]
      %v6098 = vld [vmem:[#allocation3 + $0x88] sm:$0xff]
      %v6099 = vld [vmem:[#allocation3 + $0x90] sm:$0xff]
      %v6100 = vld [vmem:[#allocation3 + $0x98] sm:$0xff]
      %v6101 = vld [vmem:[#allocation3 + $0xa0] sm:$0xff]
      %v6102 = vld [vmem:[#allocation3 + $0xa8] sm:$0xff]
      %v6103 = vld [vmem:[#allocation3 + $0xb0] sm:$0xff]
      %v6104 = vld [vmem:[#allocation3 + $0xb8] sm:$0xff]
      %v6105 = vld [vmem:[#allocation3 + $0xc0] sm:$0xff]
      %v6106 = vld [vmem:[#allocation3 + $0xc8] sm:$0xff]
      %v6107 = vld [vmem:[#allocation3 + $0xd0] sm:$0xff]
      %v6108 = vld [vmem:[#allocation3 + $0xd8] sm:$0xff]
      %v6109 = vld [vmem:[#allocation3 + $0xe0] sm:$0xff]
      %v6110 = vld [vmem:[#allocation3 + $0xe8] sm:$0xff]
      %v6111 = vld [vmem:[#allocation3 + $0xf0] sm:$0xff]
      %v6112 = vld [vmem:[#allocation3 + $0xf8] sm:$0xff]
      %v6113 = vld [vmem:[#allocation3 + $0x100] sm:$0xff]
      %v6114 = vld [vmem:[#allocation3 + $0x108] sm:$0xff]
      %v6115 = vld [vmem:[#allocation3 + $0x110] sm:$0xff]
      %v6116 = vld [vmem:[#allocation3 + $0x118] sm:$0xff]
      %v6117 = vadd.f32 %v6081, %v5992
      %v6118 = vadd.f32 %v6082, %v5994
      %v6119 = vadd.f32 %v6083, %v5997
      %v6120 = vadd.f32 %v6084, %v5999
      %v6121 = vadd.f32 %v6085, %v6002
      %v6122 = vadd.f32 %v6086, %v6004
      %v6123 = vadd.f32 %v6087, %v6007
      %v6124 = vadd.f32 %v6088, %v6009
      %v6125 = vadd.f32 %v6089, %v6012
      %v6126 = vadd.f32 %v6090, %v6014
      %v6127 = vadd.f32 %v6091, %v6017
      %v6128 = vadd.f32 %v6092, %v6019
      %v6129 = vadd.f32 %v6093, %v6022
      %v6130 = vadd.f32 %v6094, %v6024
      %v6131 = vadd.f32 %v6095, %v6027
      %v6132 = vadd.f32 %v6096, %v6029
      %v6133 = vadd.f32 %v6097, %v6032
      %v6134 = vadd.f32 %v6098, %v6034
      %v6135 = vadd.f32 %v6099, %v6037
      %v6136 = vadd.f32 %v6100, %v6039
      %v6137 = vadd.f32 %v6101, %v6042
      %v6138 = vadd.f32 %v6102, %v6044
      %v6139 = vadd.f32 %v6103, %v6047
      %v6140 = vadd.f32 %v6104, %v6049
      %v6141 = vadd.f32 %v6105, %v6052
      %v6142 = vadd.f32 %v6106, %v6054
      %v6143 = vadd.f32 %v6107, %v6057
      %v6144 = vadd.f32 %v6108, %v6059
      %v6145 = vadd.f32 %v6109, %v6062
      %v6146 = vadd.f32 %v6110, %v6064
      %v6147 = vadd.f32 %v6111, %v6067
      %v6148 = vadd.f32 %v6112, %v6069
      %v6149 = vadd.f32 %v6113, %v6072
      %v6150 = vadd.f32 %v6114, %v6074
      %v6151 = vadd.f32 %v6115, %v6077
      %v6152 = vadd.f32 %v6116, %v6079
      %6153 = vst.msk [vmem:[#allocation3] sm:$0xff] %vm172, %v6117
      %6154 = vst.msk [vmem:[#allocation3 + $0x8] sm:$0xff] %vm172, %v6118
      %6155 = vst.msk [vmem:[#allocation3 + $0x10] sm:$0xff] %vm172, %v6119
      %6156 = vst.msk [vmem:[#allocation3 + $0x18] sm:$0xff] %vm172, %v6120
      %6157 = vst.msk [vmem:[#allocation3 + $0x20] sm:$0xff] %vm172, %v6121
      %6158 = vst.msk [vmem:[#allocation3 + $0x28] sm:$0xff] %vm172, %v6122
      %6159 = vst.msk [vmem:[#allocation3 + $0x30] sm:$0xff] %vm172, %v6123
      %6160 = vst.msk [vmem:[#allocation3 + $0x38] sm:$0xff] %vm172, %v6124
      %6161 = vst.msk [vmem:[#allocation3 + $0x40] sm:$0xff] %vm172, %v6125
      %6162 = vst.msk [vmem:[#allocation3 + $0x48] sm:$0xff] %vm172, %v6126
      %6163 = vst.msk [vmem:[#allocation3 + $0x50] sm:$0xff] %vm172, %v6127
      %6164 = vst.msk [vmem:[#allocation3 + $0x58] sm:$0xff] %vm172, %v6128
      %6165 = vst.msk [vmem:[#allocation3 + $0x60] sm:$0xff] %vm172, %v6129
      %6166 = vst.msk [vmem:[#allocation3 + $0x68] sm:$0xff] %vm172, %v6130
      %6167 = vst.msk [vmem:[#allocation3 + $0x70] sm:$0xff] %vm172, %v6131
      %6168 = vst.msk [vmem:[#allocation3 + $0x78] sm:$0xff] %vm172, %v6132
      %6169 = vst.msk [vmem:[#allocation3 + $0x80] sm:$0xff] %vm172, %v6133
      %6170 = vst.msk [vmem:[#allocation3 + $0x88] sm:$0xff] %vm172, %v6134
      %6171 = vst.msk [vmem:[#allocation3 + $0x90] sm:$0xff] %vm172, %v6135
      %6172 = vst.msk [vmem:[#allocation3 + $0x98] sm:$0xff] %vm172, %v6136
      %6173 = vst.msk [vmem:[#allocation3 + $0xa0] sm:$0xff] %vm172, %v6137
      %6174 = vst.msk [vmem:[#allocation3 + $0xa8] sm:$0xff] %vm172, %v6138
      %6175 = vst.msk [vmem:[#allocation3 + $0xb0] sm:$0xff] %vm172, %v6139
      %6176 = vst.msk [vmem:[#allocation3 + $0xb8] sm:$0xff] %vm172, %v6140
      %6177 = vst.msk [vmem:[#allocation3 + $0xc0] sm:$0xff] %vm172, %v6141
      %6178 = vst.msk [vmem:[#allocation3 + $0xc8] sm:$0xff] %vm172, %v6142
      %6179 = vst.msk [vmem:[#allocation3 + $0xd0] sm:$0xff] %vm172, %v6143
      %6180 = vst.msk [vmem:[#allocation3 + $0xd8] sm:$0xff] %vm172, %v6144
      %6181 = vst.msk [vmem:[#allocation3 + $0xe0] sm:$0xff] %vm172, %v6145
      %6182 = vst.msk [vmem:[#allocation3 + $0xe8] sm:$0xff] %vm172, %v6146
      %6183 = vst.msk [vmem:[#allocation3 + $0xf0] sm:$0xff] %vm172, %v6147
      %6184 = vst.msk [vmem:[#allocation3 + $0xf8] sm:$0xff] %vm172, %v6148
      %6185 = vst.msk [vmem:[#allocation3 + $0x100] sm:$0xff] %vm172, %v6149
      %6186 = vst.msk [vmem:[#allocation3 + $0x108] sm:$0xff] %vm172, %v6150
      %6187 = vst.msk [vmem:[#allocation3 + $0x110] sm:$0xff] %vm172, %v6151
      %6188 = vst.msk [vmem:[#allocation3 + $0x118] sm:$0xff] %vm172, %v6152
      %v6189 = vld [vmem:[#allocation2 + $0x26] sm:$0xff]
      %v6190 = vld [vmem:[#allocation2 + $0x2e] sm:$0xff]
      %v6191 = vld [vmem:[#allocation2 + $0x36] sm:$0xff]
      %v6192 = vld [vmem:[#allocation2 + $0x3e] sm:$0xff]
      %v6193 = vld [vmem:[#allocation2 + $0x46] sm:$0xff]
      %v6194 = vld [vmem:[#allocation2 + $0x4e] sm:$0xff]
      %v6195 = vld [vmem:[#allocation2 + $0x56] sm:$0xff]
      %v6196 = vld [vmem:[#allocation2 + $0x5e] sm:$0xff]
      %v6197 = vld [vmem:[#allocation2 + $0x66] sm:$0xff]
      %v6198 = vld [vmem:[#allocation2 + $0x6e] sm:$0xff]
      %v6199 = vld [vmem:[#allocation2 + $0x76] sm:$0xff]
      %v6200 = vld [vmem:[#allocation2 + $0x7e] sm:$0xff]
      %v6201 = vld [vmem:[#allocation2 + $0x86] sm:$0xff]
      %v6202 = vld [vmem:[#allocation2 + $0x8e] sm:$0xff]
      %v6203 = vld [vmem:[#allocation2 + $0x96] sm:$0xff]
      %v6204 = vld [vmem:[#allocation2 + $0x9e] sm:$0xff]
      %v6205 = vld [vmem:[#allocation2 + $0xa6] sm:$0xff]
      %v6206 = vld [vmem:[#allocation2 + $0xae] sm:$0xff]
      %v6207 = vld [vmem:[#allocation2 + $0xb6] sm:$0xff]
      %v6208 = vld [vmem:[#allocation2 + $0xbe] sm:$0xff]
      %v6209 = vld [vmem:[#allocation2 + $0xc6] sm:$0xff]
      %v6210 = vld [vmem:[#allocation2 + $0xce] sm:$0xff]
      %v6211 = vld [vmem:[#allocation2 + $0xd6] sm:$0xff]
      %v6212 = vld [vmem:[#allocation2 + $0xde] sm:$0xff]
      %v6213 = vld [vmem:[#allocation2 + $0xe6] sm:$0xff]
      %v6214 = vld [vmem:[#allocation2 + $0xee] sm:$0xff]
      %v6215 = vld [vmem:[#allocation2 + $0xf6] sm:$0xff]
      %v6216 = vld [vmem:[#allocation2 + $0xfe] sm:$0xff]
      %v6217 = vld [vmem:[#allocation2 + $0x106] sm:$0xff]
      %v6218 = vld [vmem:[#allocation2 + $0x10e] sm:$0xff]
      %v6219 = vld [vmem:[#allocation2 + $0x116] sm:$0xff]
      %v6220 = vld [vmem:[#allocation2 + $0x11e] sm:$0xff]
      %v6221 = vld [vmem:[#allocation2 + $0x126] sm:$0xff]
      %v6222 = vld [vmem:[#allocation2 + $0x12e] sm:$0xff]
      %v6223 = vld [vmem:[#allocation2 + $0x136] sm:$0xff]
      %v6224 = vld [vmem:[#allocation2 + $0x13e] sm:$0xff]
      %v6225 = vpack.c.bf16 %v6190, %v6189
      %v6226 = vpack.c.bf16 %v6192, %v6191
      %v6227 = vpack.c.bf16 %v6194, %v6193
      %v6228 = vpack.c.bf16 %v6196, %v6195
      %v6229 = vpack.c.bf16 %v6198, %v6197
      %v6230 = vpack.c.bf16 %v6200, %v6199
      %v6231 = vpack.c.bf16 %v6202, %v6201
      %v6232 = vpack.c.bf16 %v6204, %v6203
      %v6233 = vpack.c.bf16 %v6206, %v6205
      %v6234 = vpack.c.bf16 %v6208, %v6207
      %v6235 = vpack.c.bf16 %v6210, %v6209
      %v6236 = vpack.c.bf16 %v6212, %v6211
      %v6237 = vpack.c.bf16 %v6214, %v6213
      %v6238 = vpack.c.bf16 %v6216, %v6215
      %v6239 = vpack.c.bf16 %v6218, %v6217
      %v6240 = vpack.c.bf16 %v6220, %v6219
      %v6241 = vpack.c.bf16 %v6222, %v6221
      %v6242 = vpack.c.bf16 %v6224, %v6223
      %s6243 = scalar_lea.vmem %s2, 16
      %v6244 = vld [vmem:[%s6243] sm:$0x3]
      %v6246 = vsel %vm172, %v6225, 0
      %v6249 = vsel %vm172, %v6226, 0
      %v6252 = vsel %vm172, %v6227, 0
      %v6255 = vsel %vm172, %v6228, 0
      %v6258 = vsel %vm172, %v6229, 0
      %v6261 = vsel %vm172, %v6230, 0
      %v6264 = vsel %vm172, %v6231, 0
      %v6267 = vsel %vm172, %v6232, 0
      %v6270 = vsel %vm172, %v6233, 0
      %v6273 = vsel %vm172, %v6234, 0
      %v6276 = vsel %vm172, %v6235, 0
      %v6279 = vsel %vm172, %v6236, 0
      %v6282 = vsel %vm172, %v6237, 0
      %v6285 = vsel %vm172, %v6238, 0
      %v6288 = vsel %vm172, %v6239, 0
      %v6291 = vsel %vm172, %v6240, 0
      %v6294 = vsel %vm172, %v6241, 0
      %v6297 = vsel %vm172, %v6242, 0
      %v6300 = vsel %vm394, %v6244, 0
      %6302 = vmatpush.bf16.msra.mxu0 0
      %6303 = vmatpush.bf16.msra.mxu0 0
      %6304 = vmatpush.bf16.msra.mxu0 0
      %6305 = vmatpush.bf16.msra.mxu0 0
      %6306 = vmatpush.bf16.msra.mxu0 0
      %6307 = vmatpush.bf16.msra.mxu0 0
      %6308 = vmatpush.bf16.msra.mxu0 0
      %6309 = vmatpush.bf16.msra.mxu0 %v6300
      %6310 = vmatmul.bf16.gmra.mxu0 %v6246
      %v6311 = vpop.f32.mrf.mxu0
      %v6312 = vadd.f32 0.0, %v6311
      %v6313 = vpop.f32.mrf.mxu0
      %v6314 = vadd.f32 0.0, %v6313
      %6315 = vmatmul.bf16.gmra.mxu0 %v6249
      %v6316 = vpop.f32.mrf.mxu0
      %v6317 = vadd.f32 0.0, %v6316
      %v6318 = vpop.f32.mrf.mxu0
      %v6319 = vadd.f32 0.0, %v6318
      %6320 = vmatmul.bf16.gmra.mxu0 %v6252
      %v6321 = vpop.f32.mrf.mxu0
      %v6322 = vadd.f32 0.0, %v6321
      %v6323 = vpop.f32.mrf.mxu0
      %v6324 = vadd.f32 0.0, %v6323
      %6325 = vmatmul.bf16.gmra.mxu0 %v6255
      %v6326 = vpop.f32.mrf.mxu0
      %v6327 = vadd.f32 0.0, %v6326
      %v6328 = vpop.f32.mrf.mxu0
      %v6329 = vadd.f32 0.0, %v6328
      %6330 = vmatmul.bf16.gmra.mxu0 %v6258
      %v6331 = vpop.f32.mrf.mxu0
      %v6332 = vadd.f32 0.0, %v6331
      %v6333 = vpop.f32.mrf.mxu0
      %v6334 = vadd.f32 0.0, %v6333
      %6335 = vmatmul.bf16.gmra.mxu0 %v6261
      %v6336 = vpop.f32.mrf.mxu0
      %v6337 = vadd.f32 0.0, %v6336
      %v6338 = vpop.f32.mrf.mxu0
      %v6339 = vadd.f32 0.0, %v6338
      %6340 = vmatmul.bf16.gmra.mxu0 %v6264
      %v6341 = vpop.f32.mrf.mxu0
      %v6342 = vadd.f32 0.0, %v6341
      %v6343 = vpop.f32.mrf.mxu0
      %v6344 = vadd.f32 0.0, %v6343
      %6345 = vmatmul.bf16.gmra.mxu0 %v6267
      %v6346 = vpop.f32.mrf.mxu0
      %v6347 = vadd.f32 0.0, %v6346
      %v6348 = vpop.f32.mrf.mxu0
      %v6349 = vadd.f32 0.0, %v6348
      %6350 = vmatmul.bf16.gmra.mxu0 %v6270
      %v6351 = vpop.f32.mrf.mxu0
      %v6352 = vadd.f32 0.0, %v6351
      %v6353 = vpop.f32.mrf.mxu0
      %v6354 = vadd.f32 0.0, %v6353
      %6355 = vmatmul.bf16.gmra.mxu0 %v6273
      %v6356 = vpop.f32.mrf.mxu0
      %v6357 = vadd.f32 0.0, %v6356
      %v6358 = vpop.f32.mrf.mxu0
      %v6359 = vadd.f32 0.0, %v6358
      %6360 = vmatmul.bf16.gmra.mxu0 %v6276
      %v6361 = vpop.f32.mrf.mxu0
      %v6362 = vadd.f32 0.0, %v6361
      %v6363 = vpop.f32.mrf.mxu0
      %v6364 = vadd.f32 0.0, %v6363
      %6365 = vmatmul.bf16.gmra.mxu0 %v6279
      %v6366 = vpop.f32.mrf.mxu0
      %v6367 = vadd.f32 0.0, %v6366
      %v6368 = vpop.f32.mrf.mxu0
      %v6369 = vadd.f32 0.0, %v6368
      %6370 = vmatmul.bf16.gmra.mxu0 %v6282
      %v6371 = vpop.f32.mrf.mxu0
      %v6372 = vadd.f32 0.0, %v6371
      %v6373 = vpop.f32.mrf.mxu0
      %v6374 = vadd.f32 0.0, %v6373
      %6375 = vmatmul.bf16.gmra.mxu0 %v6285
      %v6376 = vpop.f32.mrf.mxu0
      %v6377 = vadd.f32 0.0, %v6376
      %v6378 = vpop.f32.mrf.mxu0
      %v6379 = vadd.f32 0.0, %v6378
      %6380 = vmatmul.bf16.gmra.mxu0 %v6288
      %v6381 = vpop.f32.mrf.mxu0
      %v6382 = vadd.f32 0.0, %v6381
      %v6383 = vpop.f32.mrf.mxu0
      %v6384 = vadd.f32 0.0, %v6383
      %6385 = vmatmul.bf16.gmra.mxu0 %v6291
      %v6386 = vpop.f32.mrf.mxu0
      %v6387 = vadd.f32 0.0, %v6386
      %v6388 = vpop.f32.mrf.mxu0
      %v6389 = vadd.f32 0.0, %v6388
      %6390 = vmatmul.bf16.gmra.mxu0 %v6294
      %v6391 = vpop.f32.mrf.mxu0
      %v6392 = vadd.f32 0.0, %v6391
      %v6393 = vpop.f32.mrf.mxu0
      %v6394 = vadd.f32 0.0, %v6393
      %6395 = vmatmul.bf16.gmra.mxu0 %v6297
      %v6396 = vpop.f32.mrf.mxu0
      %v6397 = vadd.f32 0.0, %v6396
      %v6398 = vpop.f32.mrf.mxu0
      %v6399 = vadd.f32 0.0, %v6398
      %6400 = vdwg.mxu0
      %v6401 = vld [vmem:[#allocation3] sm:$0xff]
      %v6402 = vld [vmem:[#allocation3 + $0x8] sm:$0xff]
      %v6403 = vld [vmem:[#allocation3 + $0x10] sm:$0xff]
      %v6404 = vld [vmem:[#allocation3 + $0x18] sm:$0xff]
      %v6405 = vld [vmem:[#allocation3 + $0x20] sm:$0xff]
      %v6406 = vld [vmem:[#allocation3 + $0x28] sm:$0xff]
      %v6407 = vld [vmem:[#allocation3 + $0x30] sm:$0xff]
      %v6408 = vld [vmem:[#allocation3 + $0x38] sm:$0xff]
      %v6409 = vld [vmem:[#allocation3 + $0x40] sm:$0xff]
      %v6410 = vld [vmem:[#allocation3 + $0x48] sm:$0xff]
      %v6411 = vld [vmem:[#allocation3 + $0x50] sm:$0xff]
      %v6412 = vld [vmem:[#allocation3 + $0x58] sm:$0xff]
      %v6413 = vld [vmem:[#allocation3 + $0x60] sm:$0xff]
      %v6414 = vld [vmem:[#allocation3 + $0x68] sm:$0xff]
      %v6415 = vld [vmem:[#allocation3 + $0x70] sm:$0xff]
      %v6416 = vld [vmem:[#allocation3 + $0x78] sm:$0xff]
      %v6417 = vld [vmem:[#allocation3 + $0x80] sm:$0xff]
      %v6418 = vld [vmem:[#allocation3 + $0x88] sm:$0xff]
      %v6419 = vld [vmem:[#allocation3 + $0x90] sm:$0xff]
      %v6420 = vld [vmem:[#allocation3 + $0x98] sm:$0xff]
      %v6421 = vld [vmem:[#allocation3 + $0xa0] sm:$0xff]
      %v6422 = vld [vmem:[#allocation3 + $0xa8] sm:$0xff]
      %v6423 = vld [vmem:[#allocation3 + $0xb0] sm:$0xff]
      %v6424 = vld [vmem:[#allocation3 + $0xb8] sm:$0xff]
      %v6425 = vld [vmem:[#allocation3 + $0xc0] sm:$0xff]
      %v6426 = vld [vmem:[#allocation3 + $0xc8] sm:$0xff]
      %v6427 = vld [vmem:[#allocation3 + $0xd0] sm:$0xff]
      %v6428 = vld [vmem:[#allocation3 + $0xd8] sm:$0xff]
      %v6429 = vld [vmem:[#allocation3 + $0xe0] sm:$0xff]
      %v6430 = vld [vmem:[#allocation3 + $0xe8] sm:$0xff]
      %v6431 = vld [vmem:[#allocation3 + $0xf0] sm:$0xff]
      %v6432 = vld [vmem:[#allocation3 + $0xf8] sm:$0xff]
      %v6433 = vld [vmem:[#allocation3 + $0x100] sm:$0xff]
      %v6434 = vld [vmem:[#allocation3 + $0x108] sm:$0xff]
      %v6435 = vld [vmem:[#allocation3 + $0x110] sm:$0xff]
      %v6436 = vld [vmem:[#allocation3 + $0x118] sm:$0xff]
      %v6437 = vadd.f32 %v6401, %v6312
      %v6438 = vadd.f32 %v6402, %v6314
      %v6439 = vadd.f32 %v6403, %v6317
      %v6440 = vadd.f32 %v6404, %v6319
      %v6441 = vadd.f32 %v6405, %v6322
      %v6442 = vadd.f32 %v6406, %v6324
      %v6443 = vadd.f32 %v6407, %v6327
      %v6444 = vadd.f32 %v6408, %v6329
      %v6445 = vadd.f32 %v6409, %v6332
      %v6446 = vadd.f32 %v6410, %v6334
      %v6447 = vadd.f32 %v6411, %v6337
      %v6448 = vadd.f32 %v6412, %v6339
      %v6449 = vadd.f32 %v6413, %v6342
      %v6450 = vadd.f32 %v6414, %v6344
      %v6451 = vadd.f32 %v6415, %v6347
      %v6452 = vadd.f32 %v6416, %v6349
      %v6453 = vadd.f32 %v6417, %v6352
      %v6454 = vadd.f32 %v6418, %v6354
      %v6455 = vadd.f32 %v6419, %v6357
      %v6456 = vadd.f32 %v6420, %v6359
      %v6457 = vadd.f32 %v6421, %v6362
      %v6458 = vadd.f32 %v6422, %v6364
      %v6459 = vadd.f32 %v6423, %v6367
      %v6460 = vadd.f32 %v6424, %v6369
      %v6461 = vadd.f32 %v6425, %v6372
      %v6462 = vadd.f32 %v6426, %v6374
      %v6463 = vadd.f32 %v6427, %v6377
      %v6464 = vadd.f32 %v6428, %v6379
      %v6465 = vadd.f32 %v6429, %v6382
      %v6466 = vadd.f32 %v6430, %v6384
      %v6467 = vadd.f32 %v6431, %v6387
      %v6468 = vadd.f32 %v6432, %v6389
      %v6469 = vadd.f32 %v6433, %v6392
      %v6470 = vadd.f32 %v6434, %v6394
      %v6471 = vadd.f32 %v6435, %v6397
      %v6472 = vadd.f32 %v6436, %v6399
      %6473 = vst.msk [vmem:[#allocation3] sm:$0xff] %vm172, %v6437
      %6474 = vst.msk [vmem:[#allocation3 + $0x8] sm:$0xff] %vm172, %v6438
      %6475 = vst.msk [vmem:[#allocation3 + $0x10] sm:$0xff] %vm172, %v6439
      %6476 = vst.msk [vmem:[#allocation3 + $0x18] sm:$0xff] %vm172, %v6440
      %6477 = vst.msk [vmem:[#allocation3 + $0x20] sm:$0xff] %vm172, %v6441
      %6478 = vst.msk [vmem:[#allocation3 + $0x28] sm:$0xff] %vm172, %v6442
      %6479 = vst.msk [vmem:[#allocation3 + $0x30] sm:$0xff] %vm172, %v6443
      %6480 = vst.msk [vmem:[#allocation3 + $0x38] sm:$0xff] %vm172, %v6444
      %6481 = vst.msk [vmem:[#allocation3 + $0x40] sm:$0xff] %vm172, %v6445
      %6482 = vst.msk [vmem:[#allocation3 + $0x48] sm:$0xff] %vm172, %v6446
      %6483 = vst.msk [vmem:[#allocation3 + $0x50] sm:$0xff] %vm172, %v6447
      %6484 = vst.msk [vmem:[#allocation3 + $0x58] sm:$0xff] %vm172, %v6448
      %6485 = vst.msk [vmem:[#allocation3 + $0x60] sm:$0xff] %vm172, %v6449
      %6486 = vst.msk [vmem:[#allocation3 + $0x68] sm:$0xff] %vm172, %v6450
      %6487 = vst.msk [vmem:[#allocation3 + $0x70] sm:$0xff] %vm172, %v6451
      %6488 = vst.msk [vmem:[#allocation3 + $0x78] sm:$0xff] %vm172, %v6452
      %6489 = vst.msk [vmem:[#allocation3 + $0x80] sm:$0xff] %vm172, %v6453
      %6490 = vst.msk [vmem:[#allocation3 + $0x88] sm:$0xff] %vm172, %v6454
      %6491 = vst.msk [vmem:[#allocation3 + $0x90] sm:$0xff] %vm172, %v6455
      %6492 = vst.msk [vmem:[#allocation3 + $0x98] sm:$0xff] %vm172, %v6456
      %6493 = vst.msk [vmem:[#allocation3 + $0xa0] sm:$0xff] %vm172, %v6457
      %6494 = vst.msk [vmem:[#allocation3 + $0xa8] sm:$0xff] %vm172, %v6458
      %6495 = vst.msk [vmem:[#allocation3 + $0xb0] sm:$0xff] %vm172, %v6459
      %6496 = vst.msk [vmem:[#allocation3 + $0xb8] sm:$0xff] %vm172, %v6460
      %6497 = vst.msk [vmem:[#allocation3 + $0xc0] sm:$0xff] %vm172, %v6461
      %6498 = vst.msk [vmem:[#allocation3 + $0xc8] sm:$0xff] %vm172, %v6462
      %6499 = vst.msk [vmem:[#allocation3 + $0xd0] sm:$0xff] %vm172, %v6463
      %6500 = vst.msk [vmem:[#allocation3 + $0xd8] sm:$0xff] %vm172, %v6464
      %6501 = vst.msk [vmem:[#allocation3 + $0xe0] sm:$0xff] %vm172, %v6465
      %6502 = vst.msk [vmem:[#allocation3 + $0xe8] sm:$0xff] %vm172, %v6466
      %6503 = vst.msk [vmem:[#allocation3 + $0xf0] sm:$0xff] %vm172, %v6467
      %6504 = vst.msk [vmem:[#allocation3 + $0xf8] sm:$0xff] %vm172, %v6468
      %6505 = vst.msk [vmem:[#allocation3 + $0x100] sm:$0xff] %vm172, %v6469
      %6506 = vst.msk [vmem:[#allocation3 + $0x108] sm:$0xff] %vm172, %v6470
      %6507 = vst.msk [vmem:[#allocation3 + $0x110] sm:$0xff] %vm172, %v6471
      %6508 = vst.msk [vmem:[#allocation3 + $0x118] sm:$0xff] %vm172, %v6472
      %v6509 = vld [vmem:[#allocation3] sm:$0xff]
      %v6510 = vld [vmem:[#allocation3 + $0x8] sm:$0xff]
      %v6511 = vsel %vm172, %v6509, 0.0
      %v6512 = vsel %vm172, %v6510, 0.0
      %v6513 = vadd.f32 %v6511, %v6512
      %v6514 = vrot.slane %v6513, 4
      %v6515 = vadd.f32 %v6513, %v6514
      %v6516 = vrot.slane %v6515, 2
      %v6517 = vadd.f32 %v6515, %v6516
      %v6518 = vrot.slane %v6517, 1
      %v6519 = vadd.f32 %v6517, %v6518
      %v6520 = vadd.f32 %v6519, 0.0
      %v6521 = vmul.f32 %v6509, %v6509
      %v6522 = vmul.f32 %v6510, %v6510
      %v6523 = vsel %vm172, %v6521, 0.0
      %v6524 = vsel %vm172, %v6522, 0.0
      %v6525 = vadd.f32 %v6523, %v6524
      %v6526 = vrot.slane %v6525, 4
      %v6527 = vadd.f32 %v6525, %v6526
      %v6528 = vrot.slane %v6527, 2
      %v6529 = vadd.f32 %v6527, %v6528
      %v6530 = vrot.slane %v6529, 1
      %v6531 = vadd.f32 %v6529, %v6530
      %v6532 = vadd.f32 %v6531, 0.0
      %v6533 = vld [vmem:[#allocation3 + $0x12] sm:$0xff]
      %v6534 = vld [vmem:[#allocation3 + $0x1a] sm:$0xff]
      %v6535 = vsel %vm172, %v6533, 0.0
      %v6536 = vsel %vm172, %v6534, 0.0
      %v6537 = vadd.f32 %v6535, %v6536
      %v6538 = vrot.slane %v6537, 4
      %v6539 = vadd.f32 %v6537, %v6538
      %v6540 = vrot.slane %v6539, 2
      %v6541 = vadd.f32 %v6539, %v6540
      %v6542 = vrot.slane %v6541, 1
      %v6543 = vadd.f32 %v6541, %v6542
      %v6544 = vadd.f32 %v6520, %v6543
      %v6545 = vmul.f32 %v6533, %v6533
      %v6546 = vmul.f32 %v6534, %v6534
      %v6547 = vsel %vm172, %v6545, 0.0
      %v6548 = vsel %vm172, %v6546, 0.0
      %v6549 = vadd.f32 %v6547, %v6548
      %v6550 = vrot.slane %v6549, 4
      %v6551 = vadd.f32 %v6549, %v6550
      %v6552 = vrot.slane %v6551, 2
      %v6553 = vadd.f32 %v6551, %v6552
      %v6554 = vrot.slane %v6553, 1
      %v6555 = vadd.f32 %v6553, %v6554
      %v6556 = vadd.f32 %v6532, %v6555
      %v6557 = vld [vmem:[#allocation3 + $0x24] sm:$0xff]
      %v6558 = vld [vmem:[#allocation3 + $0x2c] sm:$0xff]
      %v6559 = vsel %vm172, %v6557, 0.0
      %v6560 = vsel %vm172, %v6558, 0.0
      %v6561 = vadd.f32 %v6559, %v6560
      %v6562 = vrot.slane %v6561, 4
      %v6563 = vadd.f32 %v6561, %v6562
      %v6564 = vrot.slane %v6563, 2
      %v6565 = vadd.f32 %v6563, %v6564
      %v6566 = vrot.slane %v6565, 1
      %v6567 = vadd.f32 %v6565, %v6566
      %v6568 = vadd.f32 %v6544, %v6567
      %v6569 = vmul.f32 %v6557, %v6557
      %v6570 = vmul.f32 %v6558, %v6558
      %v6571 = vsel %vm172, %v6569, 0.0
      %v6572 = vsel %vm172, %v6570, 0.0
      %v6573 = vadd.f32 %v6571, %v6572
      %v6574 = vrot.slane %v6573, 4
      %v6575 = vadd.f32 %v6573, %v6574
      %v6576 = vrot.slane %v6575, 2
      %v6577 = vadd.f32 %v6575, %v6576
      %v6578 = vrot.slane %v6577, 1
      %v6579 = vadd.f32 %v6577, %v6578
      %v6580 = vadd.f32 %v6556, %v6579
      %v6581 = vld [vmem:[#allocation3 + $0x36] sm:$0xff]
      %v6582 = vld [vmem:[#allocation3 + $0x3e] sm:$0xff]
      %v6583 = vsel %vm172, %v6581, 0.0
      %v6584 = vsel %vm172, %v6582, 0.0
      %v6585 = vadd.f32 %v6583, %v6584
      %v6586 = vrot.slane %v6585, 4
      %v6587 = vadd.f32 %v6585, %v6586
      %v6588 = vrot.slane %v6587, 2
      %v6589 = vadd.f32 %v6587, %v6588
      %v6590 = vrot.slane %v6589, 1
      %v6591 = vadd.f32 %v6589, %v6590
      %v6592 = vadd.f32 %v6568, %v6591
      %v6593 = vmul.f32 %v6581, %v6581
      %v6594 = vmul.f32 %v6582, %v6582
      %v6595 = vsel %vm172, %v6593, 0.0
      %v6596 = vsel %vm172, %v6594, 0.0
      %v6597 = vadd.f32 %v6595, %v6596
      %v6598 = vrot.slane %v6597, 4
      %v6599 = vadd.f32 %v6597, %v6598
      %v6600 = vrot.slane %v6599, 2
      %v6601 = vadd.f32 %v6599, %v6600
      %v6602 = vrot.slane %v6601, 1
      %v6603 = vadd.f32 %v6601, %v6602
      %v6604 = vadd.f32 %v6580, %v6603
      %v6605 = vld [vmem:[#allocation3 + $0x48] sm:$0xff]
      %v6606 = vld [vmem:[#allocation3 + $0x50] sm:$0xff]
      %v6607 = vsel %vm172, %v6605, 0.0
      %v6608 = vsel %vm172, %v6606, 0.0
      %v6609 = vadd.f32 %v6607, %v6608
      %v6610 = vrot.slane %v6609, 4
      %v6611 = vadd.f32 %v6609, %v6610
      %v6612 = vrot.slane %v6611, 2
      %v6613 = vadd.f32 %v6611, %v6612
      %v6614 = vrot.slane %v6613, 1
      %v6615 = vadd.f32 %v6613, %v6614
      %v6616 = vadd.f32 %v6592, %v6615
      %v6617 = vmul.f32 %v6605, %v6605
      %v6618 = vmul.f32 %v6606, %v6606
      %v6619 = vsel %vm172, %v6617, 0.0
      %v6620 = vsel %vm172, %v6618, 0.0
      %v6621 = vadd.f32 %v6619, %v6620
      %v6622 = vrot.slane %v6621, 4
      %v6623 = vadd.f32 %v6621, %v6622
      %v6624 = vrot.slane %v6623, 2
      %v6625 = vadd.f32 %v6623, %v6624
      %v6626 = vrot.slane %v6625, 1
      %v6627 = vadd.f32 %v6625, %v6626
      %v6628 = vadd.f32 %v6604, %v6627
      %v6629 = vld [vmem:[#allocation3 + $0x5a] sm:$0xff]
      %v6630 = vld [vmem:[#allocation3 + $0x62] sm:$0xff]
      %v6631 = vsel %vm172, %v6629, 0.0
      %v6632 = vsel %vm172, %v6630, 0.0
      %v6633 = vadd.f32 %v6631, %v6632
      %v6634 = vrot.slane %v6633, 4
      %v6635 = vadd.f32 %v6633, %v6634
      %v6636 = vrot.slane %v6635, 2
      %v6637 = vadd.f32 %v6635, %v6636
      %v6638 = vrot.slane %v6637, 1
      %v6639 = vadd.f32 %v6637, %v6638
      %v6640 = vadd.f32 %v6616, %v6639
      %v6641 = vmul.f32 %v6629, %v6629
      %v6642 = vmul.f32 %v6630, %v6630
      %v6643 = vsel %vm172, %v6641, 0.0
      %v6644 = vsel %vm172, %v6642, 0.0
      %v6645 = vadd.f32 %v6643, %v6644
      %v6646 = vrot.slane %v6645, 4
      %v6647 = vadd.f32 %v6645, %v6646
      %v6648 = vrot.slane %v6647, 2
      %v6649 = vadd.f32 %v6647, %v6648
      %v6650 = vrot.slane %v6649, 1
      %v6651 = vadd.f32 %v6649, %v6650
      %v6652 = vadd.f32 %v6628, %v6651
      %v6653 = vld [vmem:[#allocation3 + $0x6c] sm:$0xff]
      %v6654 = vld [vmem:[#allocation3 + $0x74] sm:$0xff]
      %v6655 = vsel %vm172, %v6653, 0.0
      %v6656 = vsel %vm172, %v6654, 0.0
      %v6657 = vadd.f32 %v6655, %v6656
      %v6658 = vrot.slane %v6657, 4
      %v6659 = vadd.f32 %v6657, %v6658
      %v6660 = vrot.slane %v6659, 2
      %v6661 = vadd.f32 %v6659, %v6660
      %v6662 = vrot.slane %v6661, 1
      %v6663 = vadd.f32 %v6661, %v6662
      %v6664 = vadd.f32 %v6640, %v6663
      %v6665 = vmul.f32 %v6653, %v6653
      %v6666 = vmul.f32 %v6654, %v6654
      %v6667 = vsel %vm172, %v6665, 0.0
      %v6668 = vsel %vm172, %v6666, 0.0
      %v6669 = vadd.f32 %v6667, %v6668
      %v6670 = vrot.slane %v6669, 4
      %v6671 = vadd.f32 %v6669, %v6670
      %v6672 = vrot.slane %v6671, 2
      %v6673 = vadd.f32 %v6671, %v6672
      %v6674 = vrot.slane %v6673, 1
      %v6675 = vadd.f32 %v6673, %v6674
      %v6676 = vadd.f32 %v6652, %v6675
      %v6677 = vld [vmem:[#allocation3 + $0x7e] sm:$0xff]
      %v6678 = vld [vmem:[#allocation3 + $0x86] sm:$0xff]
      %v6679 = vsel %vm172, %v6677, 0.0
      %v6680 = vsel %vm172, %v6678, 0.0
      %v6681 = vadd.f32 %v6679, %v6680
      %v6682 = vrot.slane %v6681, 4
      %v6683 = vadd.f32 %v6681, %v6682
      %v6684 = vrot.slane %v6683, 2
      %v6685 = vadd.f32 %v6683, %v6684
      %v6686 = vrot.slane %v6685, 1
      %v6687 = vadd.f32 %v6685, %v6686
      %v6688 = vadd.f32 %v6664, %v6687
      %v6689 = vmul.f32 %v6677, %v6677
      %v6690 = vmul.f32 %v6678, %v6678
      %v6691 = vsel %vm172, %v6689, 0.0
      %v6692 = vsel %vm172, %v6690, 0.0
      %v6693 = vadd.f32 %v6691, %v6692
      %v6694 = vrot.slane %v6693, 4
      %v6695 = vadd.f32 %v6693, %v6694
      %v6696 = vrot.slane %v6695, 2
      %v6697 = vadd.f32 %v6695, %v6696
      %v6698 = vrot.slane %v6697, 1
      %v6699 = vadd.f32 %v6697, %v6698
      %v6700 = vadd.f32 %v6676, %v6699
      %v6701 = vld [vmem:[#allocation3 + $0x90] sm:$0xff]
      %v6702 = vld [vmem:[#allocation3 + $0x98] sm:$0xff]
      %v6703 = vsel %vm172, %v6701, 0.0
      %v6704 = vsel %vm172, %v6702, 0.0
      %v6705 = vadd.f32 %v6703, %v6704
      %v6706 = vrot.slane %v6705, 4
      %v6707 = vadd.f32 %v6705, %v6706
      %v6708 = vrot.slane %v6707, 2
      %v6709 = vadd.f32 %v6707, %v6708
      %v6710 = vrot.slane %v6709, 1
      %v6711 = vadd.f32 %v6709, %v6710
      %v6712 = vadd.f32 %v6688, %v6711
      %v6713 = vmul.f32 %v6701, %v6701
      %v6714 = vmul.f32 %v6702, %v6702
      %v6715 = vsel %vm172, %v6713, 0.0
      %v6716 = vsel %vm172, %v6714, 0.0
      %v6717 = vadd.f32 %v6715, %v6716
      %v6718 = vrot.slane %v6717, 4
      %v6719 = vadd.f32 %v6717, %v6718
      %v6720 = vrot.slane %v6719, 2
      %v6721 = vadd.f32 %v6719, %v6720
      %v6722 = vrot.slane %v6721, 1
      %v6723 = vadd.f32 %v6721, %v6722
      %v6724 = vadd.f32 %v6700, %v6723
      %v6725 = vld [vmem:[#allocation3 + $0xa2] sm:$0xff]
      %v6726 = vld [vmem:[#allocation3 + $0xaa] sm:$0xff]
      %v6727 = vsel %vm172, %v6725, 0.0
      %v6728 = vsel %vm172, %v6726, 0.0
      %v6729 = vadd.f32 %v6727, %v6728
      %v6730 = vrot.slane %v6729, 4
      %v6731 = vadd.f32 %v6729, %v6730
      %v6732 = vrot.slane %v6731, 2
      %v6733 = vadd.f32 %v6731, %v6732
      %v6734 = vrot.slane %v6733, 1
      %v6735 = vadd.f32 %v6733, %v6734
      %v6736 = vadd.f32 %v6712, %v6735
      %v6737 = vmul.f32 %v6725, %v6725
      %v6738 = vmul.f32 %v6726, %v6726
      %v6739 = vsel %vm172, %v6737, 0.0
      %v6740 = vsel %vm172, %v6738, 0.0
      %v6741 = vadd.f32 %v6739, %v6740
      %v6742 = vrot.slane %v6741, 4
      %v6743 = vadd.f32 %v6741, %v6742
      %v6744 = vrot.slane %v6743, 2
      %v6745 = vadd.f32 %v6743, %v6744
      %v6746 = vrot.slane %v6745, 1
      %v6747 = vadd.f32 %v6745, %v6746
      %v6748 = vadd.f32 %v6724, %v6747
      %v6749 = vld [vmem:[#allocation3 + $0xb4] sm:$0xff]
      %v6750 = vld [vmem:[#allocation3 + $0xbc] sm:$0xff]
      %v6751 = vsel %vm172, %v6749, 0.0
      %v6752 = vsel %vm172, %v6750, 0.0
      %v6753 = vadd.f32 %v6751, %v6752
      %v6754 = vrot.slane %v6753, 4
      %v6755 = vadd.f32 %v6753, %v6754
      %v6756 = vrot.slane %v6755, 2
      %v6757 = vadd.f32 %v6755, %v6756
      %v6758 = vrot.slane %v6757, 1
      %v6759 = vadd.f32 %v6757, %v6758
      %v6760 = vadd.f32 %v6736, %v6759
      %v6761 = vmul.f32 %v6749, %v6749
      %v6762 = vmul.f32 %v6750, %v6750
      %v6763 = vsel %vm172, %v6761, 0.0
      %v6764 = vsel %vm172, %v6762, 0.0
      %v6765 = vadd.f32 %v6763, %v6764
      %v6766 = vrot.slane %v6765, 4
      %v6767 = vadd.f32 %v6765, %v6766
      %v6768 = vrot.slane %v6767, 2
      %v6769 = vadd.f32 %v6767, %v6768
      %v6770 = vrot.slane %v6769, 1
      %v6771 = vadd.f32 %v6769, %v6770
      %v6772 = vadd.f32 %v6748, %v6771
      %v6773 = vld [vmem:[#allocation3 + $0xc6] sm:$0xff]
      %v6774 = vld [vmem:[#allocation3 + $0xce] sm:$0xff]
      %v6775 = vsel %vm172, %v6773, 0.0
      %v6776 = vsel %vm172, %v6774, 0.0
      %v6777 = vadd.f32 %v6775, %v6776
      %v6778 = vrot.slane %v6777, 4
      %v6779 = vadd.f32 %v6777, %v6778
      %v6780 = vrot.slane %v6779, 2
      %v6781 = vadd.f32 %v6779, %v6780
      %v6782 = vrot.slane %v6781, 1
      %v6783 = vadd.f32 %v6781, %v6782
      %v6784 = vadd.f32 %v6760, %v6783
      %v6785 = vmul.f32 %v6773, %v6773
      %v6786 = vmul.f32 %v6774, %v6774
      %v6787 = vsel %vm172, %v6785, 0.0
      %v6788 = vsel %vm172, %v6786, 0.0
      %v6789 = vadd.f32 %v6787, %v6788
      %v6790 = vrot.slane %v6789, 4
      %v6791 = vadd.f32 %v6789, %v6790
      %v6792 = vrot.slane %v6791, 2
      %v6793 = vadd.f32 %v6791, %v6792
      %v6794 = vrot.slane %v6793, 1
      %v6795 = vadd.f32 %v6793, %v6794
      %v6796 = vadd.f32 %v6772, %v6795
      %v6797 = vld [vmem:[#allocation3 + $0xd8] sm:$0xff]
      %v6798 = vld [vmem:[#allocation3 + $0xe0] sm:$0xff]
      %v6799 = vsel %vm172, %v6797, 0.0
      %v6800 = vsel %vm172, %v6798, 0.0
      %v6801 = vadd.f32 %v6799, %v6800
      %v6802 = vrot.slane %v6801, 4
      %v6803 = vadd.f32 %v6801, %v6802
      %v6804 = vrot.slane %v6803, 2
      %v6805 = vadd.f32 %v6803, %v6804
      %v6806 = vrot.slane %v6805, 1
      %v6807 = vadd.f32 %v6805, %v6806
      %v6808 = vadd.f32 %v6784, %v6807
      %v6809 = vmul.f32 %v6797, %v6797
      %v6810 = vmul.f32 %v6798, %v6798
      %v6811 = vsel %vm172, %v6809, 0.0
      %v6812 = vsel %vm172, %v6810, 0.0
      %v6813 = vadd.f32 %v6811, %v6812
      %v6814 = vrot.slane %v6813, 4
      %v6815 = vadd.f32 %v6813, %v6814
      %v6816 = vrot.slane %v6815, 2
      %v6817 = vadd.f32 %v6815, %v6816
      %v6818 = vrot.slane %v6817, 1
      %v6819 = vadd.f32 %v6817, %v6818
      %v6820 = vadd.f32 %v6796, %v6819
      %v6821 = vld [vmem:[#allocation3 + $0xea] sm:$0xff]
      %v6822 = vld [vmem:[#allocation3 + $0xf2] sm:$0xff]
      %v6823 = vsel %vm172, %v6821, 0.0
      %v6824 = vsel %vm172, %v6822, 0.0
      %v6825 = vadd.f32 %v6823, %v6824
      %v6826 = vrot.slane %v6825, 4
      %v6827 = vadd.f32 %v6825, %v6826
      %v6828 = vrot.slane %v6827, 2
      %v6829 = vadd.f32 %v6827, %v6828
      %v6830 = vrot.slane %v6829, 1
      %v6831 = vadd.f32 %v6829, %v6830
      %v6832 = vadd.f32 %v6808, %v6831
      %v6833 = vmul.f32 %v6821, %v6821
      %v6834 = vmul.f32 %v6822, %v6822
      %v6835 = vsel %vm172, %v6833, 0.0
      %v6836 = vsel %vm172, %v6834, 0.0
      %v6837 = vadd.f32 %v6835, %v6836
      %v6838 = vrot.slane %v6837, 4
      %v6839 = vadd.f32 %v6837, %v6838
      %v6840 = vrot.slane %v6839, 2
      %v6841 = vadd.f32 %v6839, %v6840
      %v6842 = vrot.slane %v6841, 1
      %v6843 = vadd.f32 %v6841, %v6842
      %v6844 = vadd.f32 %v6820, %v6843
      %v6845 = vld [vmem:[#allocation3 + $0xfc] sm:$0xff]
      %v6846 = vld [vmem:[#allocation3 + $0x104] sm:$0xff]
      %v6847 = vsel %vm172, %v6845, 0.0
      %v6848 = vsel %vm172, %v6846, 0.0
      %v6849 = vadd.f32 %v6847, %v6848
      %v6850 = vrot.slane %v6849, 4
      %v6851 = vadd.f32 %v6849, %v6850
      %v6852 = vrot.slane %v6851, 2
      %v6853 = vadd.f32 %v6851, %v6852
      %v6854 = vrot.slane %v6853, 1
      %v6855 = vadd.f32 %v6853, %v6854
      %v6856 = vadd.f32 %v6832, %v6855
      %v6857 = vmul.f32 %v6845, %v6845
      %v6858 = vmul.f32 %v6846, %v6846
      %v6859 = vsel %vm172, %v6857, 0.0
      %v6860 = vsel %vm172, %v6858, 0.0
      %v6861 = vadd.f32 %v6859, %v6860
      %v6862 = vrot.slane %v6861, 4
      %v6863 = vadd.f32 %v6861, %v6862
      %v6864 = vrot.slane %v6863, 2
      %v6865 = vadd.f32 %v6863, %v6864
      %v6866 = vrot.slane %v6865, 1
      %v6867 = vadd.f32 %v6865, %v6866
      %v6868 = vadd.f32 %v6844, %v6867
      %v6869 = vld [vmem:[#allocation3 + $0x10e] sm:$0xff]
      %v6870 = vld [vmem:[#allocation3 + $0x116] sm:$0xff]
      %v6871 = vsel %vm172, %v6869, 0.0
      %v6872 = vsel %vm172, %v6870, 0.0
      %v6873 = vadd.f32 %v6871, %v6872
      %v6874 = vrot.slane %v6873, 4
      %v6875 = vadd.f32 %v6873, %v6874
      %v6876 = vrot.slane %v6875, 2
      %v6877 = vadd.f32 %v6875, %v6876
      %v6878 = vrot.slane %v6877, 1
      %v6879 = vadd.f32 %v6877, %v6878
      %v6880 = vadd.f32 %v6856, %v6879
      %v6881 = vmul.f32 %v6869, %v6869
      %v6882 = vmul.f32 %v6870, %v6870
      %v6883 = vsel %vm172, %v6881, 0.0
      %v6884 = vsel %vm172, %v6882, 0.0
      %v6885 = vadd.f32 %v6883, %v6884
      %v6886 = vrot.slane %v6885, 4
      %v6887 = vadd.f32 %v6885, %v6886
      %v6888 = vrot.slane %v6887, 2
      %v6889 = vadd.f32 %v6887, %v6888
      %v6890 = vrot.slane %v6889, 1
      %v6891 = vadd.f32 %v6889, %v6890
      %v6892 = vadd.f32 %v6868, %v6891
      %v6893 = vmul.f32 %v6880, %v3483
      %v6894 = vmul.f32 %v6892, %v3483
      %v6895 = vmul.f32 %v6893, %v6893
      %v6896 = vsub.f32 %v6894, %v6895
      %v6897 = vmax.f32 %v6896, 0.0
      %v6898 = vadd.f32 %v6897, 1e-05
      %v6899 = vrsqrt.pop %v6898
      %v6900 = vmul.f32 %v6899, %v6898
      %v6901 = vmul.f32 %v6900, %v6899
      %v6902 = vmul.f32 0.5, %v6901
      %v6903 = vsub.f32 1.5, %v6902
      %v6904 = vmul.f32 %v6899, %v6903
      %vm6905 = vweird.f32 %v6898
      %vm6906 = vweird.f32 %v6899
      %vm6907 = vmor %vm6905, %vm6906
      %v6908 = vsel %vm6907, %v6899, %v6904
      %v6909 = vsub.f32 %v6509, %v6893
      %v6910 = vsub.f32 %v6510, %v6893
      %v6911 = vmul.f32 %v6909, %v6908
      %v6912 = vmul.f32 %v6910, %v6908
      %v6913 = vld [vmem:[%s165] sm:$0xff]
      %v6914 = vld [vmem:[%s165 + $0x8] sm:$0xff]
      %v6915 = vadd.f32 %v6911, %v6913
      %v6916 = vadd.f32 %v6912, %v6914
      %6917 = vst.msk [vmem:[%s170] sm:$0xff] %vm172, %v6915
      %6918 = vst.msk [vmem:[%s170 + $0x8] sm:$0xff] %vm172, %v6916
      %v6919 = vld [vmem:[#allocation3 + $0x12] sm:$0xff]
      %v6920 = vld [vmem:[#allocation3 + $0x1a] sm:$0xff]
      %v6921 = vsub.f32 %v6919, %v6893
      %v6922 = vsub.f32 %v6920, %v6893
      %v6923 = vmul.f32 %v6921, %v6908
      %v6924 = vmul.f32 %v6922, %v6908
      %v6925 = vld [vmem:[%s165 + $0x10] sm:$0xff]
      %v6926 = vld [vmem:[%s165 + $0x18] sm:$0xff]
      %v6927 = vadd.f32 %v6923, %v6925
      %v6928 = vadd.f32 %v6924, %v6926
      %6929 = vst.msk [vmem:[%s170 + $0x10] sm:$0xff] %vm172, %v6927
      %6930 = vst.msk [vmem:[%s170 + $0x18] sm:$0xff] %vm172, %v6928
      %v6931 = vld [vmem:[#allocation3 + $0x24] sm:$0xff]
      %v6932 = vld [vmem:[#allocation3 + $0x2c] sm:$0xff]
      %v6933 = vsub.f32 %v6931, %v6893
      %v6934 = vsub.f32 %v6932, %v6893
      %v6935 = vmul.f32 %v6933, %v6908
      %v6936 = vmul.f32 %v6934, %v6908
      %v6937 = vld [vmem:[%s165 + $0x20] sm:$0xff]
      %v6938 = vld [vmem:[%s165 + $0x28] sm:$0xff]
      %v6939 = vadd.f32 %v6935, %v6937
      %v6940 = vadd.f32 %v6936, %v6938
      %6941 = vst.msk [vmem:[%s170 + $0x20] sm:$0xff] %vm172, %v6939
      %6942 = vst.msk [vmem:[%s170 + $0x28] sm:$0xff] %vm172, %v6940
      %v6943 = vld [vmem:[#allocation3 + $0x36] sm:$0xff]
      %v6944 = vld [vmem:[#allocation3 + $0x3e] sm:$0xff]
      %v6945 = vsub.f32 %v6943, %v6893
      %v6946 = vsub.f32 %v6944, %v6893
      %v6947 = vmul.f32 %v6945, %v6908
      %v6948 = vmul.f32 %v6946, %v6908
      %v6949 = vld [vmem:[%s165 + $0x30] sm:$0xff]
      %v6950 = vld [vmem:[%s165 + $0x38] sm:$0xff]
      %v6951 = vadd.f32 %v6947, %v6949
      %v6952 = vadd.f32 %v6948, %v6950
      %6953 = vst.msk [vmem:[%s170 + $0x30] sm:$0xff] %vm172, %v6951
      %6954 = vst.msk [vmem:[%s170 + $0x38] sm:$0xff] %vm172, %v6952
      %v6955 = vld [vmem:[#allocation3 + $0x48] sm:$0xff]
      %v6956 = vld [vmem:[#allocation3 + $0x50] sm:$0xff]
      %v6957 = vsub.f32 %v6955, %v6893
      %v6958 = vsub.f32 %v6956, %v6893
      %v6959 = vmul.f32 %v6957, %v6908
      %v6960 = vmul.f32 %v6958, %v6908
      %v6961 = vld [vmem:[%s165 + $0x40] sm:$0xff]
      %v6962 = vld [vmem:[%s165 + $0x48] sm:$0xff]
      %v6963 = vadd.f32 %v6959, %v6961
      %v6964 = vadd.f32 %v6960, %v6962
      %6965 = vst.msk [vmem:[%s170 + $0x40] sm:$0xff] %vm172, %v6963
      %6966 = vst.msk [vmem:[%s170 + $0x48] sm:$0xff] %vm172, %v6964
      %v6967 = vld [vmem:[#allocation3 + $0x5a] sm:$0xff]
      %v6968 = vld [vmem:[#allocation3 + $0x62] sm:$0xff]
      %v6969 = vsub.f32 %v6967, %v6893
      %v6970 = vsub.f32 %v6968, %v6893
      %v6971 = vmul.f32 %v6969, %v6908
      %v6972 = vmul.f32 %v6970, %v6908
      %v6973 = vld [vmem:[%s165 + $0x50] sm:$0xff]
      %v6974 = vld [vmem:[%s165 + $0x58] sm:$0xff]
      %v6975 = vadd.f32 %v6971, %v6973
      %v6976 = vadd.f32 %v6972, %v6974
      %6977 = vst.msk [vmem:[%s170 + $0x50] sm:$0xff] %vm172, %v6975
      %6978 = vst.msk [vmem:[%s170 + $0x58] sm:$0xff] %vm172, %v6976
      %v6979 = vld [vmem:[#allocation3 + $0x6c] sm:$0xff]
      %v6980 = vld [vmem:[#allocation3 + $0x74] sm:$0xff]
      %v6981 = vsub.f32 %v6979, %v6893
      %v6982 = vsub.f32 %v6980, %v6893
      %v6983 = vmul.f32 %v6981, %v6908
      %v6984 = vmul.f32 %v6982, %v6908
      %v6985 = vld [vmem:[%s165 + $0x60] sm:$0xff]
      %v6986 = vld [vmem:[%s165 + $0x68] sm:$0xff]
      %v6987 = vadd.f32 %v6983, %v6985
      %v6988 = vadd.f32 %v6984, %v6986
      %6989 = vst.msk [vmem:[%s170 + $0x60] sm:$0xff] %vm172, %v6987
      %6990 = vst.msk [vmem:[%s170 + $0x68] sm:$0xff] %vm172, %v6988
      %v6991 = vld [vmem:[#allocation3 + $0x7e] sm:$0xff]
      %v6992 = vld [vmem:[#allocation3 + $0x86] sm:$0xff]
      %v6993 = vsub.f32 %v6991, %v6893
      %v6994 = vsub.f32 %v6992, %v6893
      %v6995 = vmul.f32 %v6993, %v6908
      %v6996 = vmul.f32 %v6994, %v6908
      %v6997 = vld [vmem:[%s165 + $0x70] sm:$0xff]
      %v6998 = vld [vmem:[%s165 + $0x78] sm:$0xff]
      %v6999 = vadd.f32 %v6995, %v6997
      %v7000 = vadd.f32 %v6996, %v6998
      %7001 = vst.msk [vmem:[%s170 + $0x70] sm:$0xff] %vm172, %v6999
      %7002 = vst.msk [vmem:[%s170 + $0x78] sm:$0xff] %vm172, %v7000
      %v7003 = vld [vmem:[#allocation3 + $0x90] sm:$0xff]
      %v7004 = vld [vmem:[#allocation3 + $0x98] sm:$0xff]
      %v7005 = vsub.f32 %v7003, %v6893
      %v7006 = vsub.f32 %v7004, %v6893
      %v7007 = vmul.f32 %v7005, %v6908
      %v7008 = vmul.f32 %v7006, %v6908
      %v7009 = vld [vmem:[%s165 + $0x80] sm:$0xff]
      %v7010 = vld [vmem:[%s165 + $0x88] sm:$0xff]
      %v7011 = vadd.f32 %v7007, %v7009
      %v7012 = vadd.f32 %v7008, %v7010
      %7013 = vst.msk [vmem:[%s170 + $0x80] sm:$0xff] %vm172, %v7011
      %7014 = vst.msk [vmem:[%s170 + $0x88] sm:$0xff] %vm172, %v7012
      %v7015 = vld [vmem:[#allocation3 + $0xa2] sm:$0xff]
      %v7016 = vld [vmem:[#allocation3 + $0xaa] sm:$0xff]
      %v7017 = vsub.f32 %v7015, %v6893
      %v7018 = vsub.f32 %v7016, %v6893
      %v7019 = vmul.f32 %v7017, %v6908
      %v7020 = vmul.f32 %v7018, %v6908
      %v7021 = vld [vmem:[%s165 + $0x90] sm:$0xff]
      %v7022 = vld [vmem:[%s165 + $0x98] sm:$0xff]
      %v7023 = vadd.f32 %v7019, %v7021
      %v7024 = vadd.f32 %v7020, %v7022
      %7025 = vst.msk [vmem:[%s170 + $0x90] sm:$0xff] %vm172, %v7023
      %7026 = vst.msk [vmem:[%s170 + $0x98] sm:$0xff] %vm172, %v7024
      %v7027 = vld [vmem:[#allocation3 + $0xb4] sm:$0xff]
      %v7028 = vld [vmem:[#allocation3 + $0xbc] sm:$0xff]
      %v7029 = vsub.f32 %v7027, %v6893
      %v7030 = vsub.f32 %v7028, %v6893
      %v7031 = vmul.f32 %v7029, %v6908
      %v7032 = vmul.f32 %v7030, %v6908
      %v7033 = vld [vmem:[%s165 + $0xa0] sm:$0xff]
      %v7034 = vld [vmem:[%s165 + $0xa8] sm:$0xff]
      %v7035 = vadd.f32 %v7031, %v7033
      %v7036 = vadd.f32 %v7032, %v7034
      %7037 = vst.msk [vmem:[%s170 + $0xa0] sm:$0xff] %vm172, %v7035
      %7038 = vst.msk [vmem:[%s170 + $0xa8] sm:$0xff] %vm172, %v7036
      %v7039 = vld [vmem:[#allocation3 + $0xc6] sm:$0xff]
      %v7040 = vld [vmem:[#allocation3 + $0xce] sm:$0xff]
      %v7041 = vsub.f32 %v7039, %v6893
      %v7042 = vsub.f32 %v7040, %v6893
      %v7043 = vmul.f32 %v7041, %v6908
      %v7044 = vmul.f32 %v7042, %v6908
      %v7045 = vld [vmem:[%s165 + $0xb0] sm:$0xff]
      %v7046 = vld [vmem:[%s165 + $0xb8] sm:$0xff]
      %v7047 = vadd.f32 %v7043, %v7045
      %v7048 = vadd.f32 %v7044, %v7046
      %7049 = vst.msk [vmem:[%s170 + $0xb0] sm:$0xff] %vm172, %v7047
      %7050 = vst.msk [vmem:[%s170 + $0xb8] sm:$0xff] %vm172, %v7048
      %v7051 = vld [vmem:[#allocation3 + $0xd8] sm:$0xff]
      %v7052 = vld [vmem:[#allocation3 + $0xe0] sm:$0xff]
      %v7053 = vsub.f32 %v7051, %v6893
      %v7054 = vsub.f32 %v7052, %v6893
      %v7055 = vmul.f32 %v7053, %v6908
      %v7056 = vmul.f32 %v7054, %v6908
      %v7057 = vld [vmem:[%s165 + $0xc0] sm:$0xff]
      %v7058 = vld [vmem:[%s165 + $0xc8] sm:$0xff]
      %v7059 = vadd.f32 %v7055, %v7057
      %v7060 = vadd.f32 %v7056, %v7058
      %7061 = vst.msk [vmem:[%s170 + $0xc0] sm:$0xff] %vm172, %v7059
      %7062 = vst.msk [vmem:[%s170 + $0xc8] sm:$0xff] %vm172, %v7060
      %v7063 = vld [vmem:[#allocation3 + $0xea] sm:$0xff]
      %v7064 = vld [vmem:[#allocation3 + $0xf2] sm:$0xff]
      %v7065 = vsub.f32 %v7063, %v6893
      %v7066 = vsub.f32 %v7064, %v6893
      %v7067 = vmul.f32 %v7065, %v6908
      %v7068 = vmul.f32 %v7066, %v6908
      %v7069 = vld [vmem:[%s165 + $0xd0] sm:$0xff]
      %v7070 = vld [vmem:[%s165 + $0xd8] sm:$0xff]
      %v7071 = vadd.f32 %v7067, %v7069
      %v7072 = vadd.f32 %v7068, %v7070
      %7073 = vst.msk [vmem:[%s170 + $0xd0] sm:$0xff] %vm172, %v7071
      %7074 = vst.msk [vmem:[%s170 + $0xd8] sm:$0xff] %vm172, %v7072
      %v7075 = vld [vmem:[#allocation3 + $0xfc] sm:$0xff]
      %v7076 = vld [vmem:[#allocation3 + $0x104] sm:$0xff]
      %v7077 = vsub.f32 %v7075, %v6893
      %v7078 = vsub.f32 %v7076, %v6893
      %v7079 = vmul.f32 %v7077, %v6908
      %v7080 = vmul.f32 %v7078, %v6908
      %v7081 = vld [vmem:[%s165 + $0xe0] sm:$0xff]
      %v7082 = vld [vmem:[%s165 + $0xe8] sm:$0xff]
      %v7083 = vadd.f32 %v7079, %v7081
      %v7084 = vadd.f32 %v7080, %v7082
      %7085 = vst.msk [vmem:[%s170 + $0xe0] sm:$0xff] %vm172, %v7083
      %7086 = vst.msk [vmem:[%s170 + $0xe8] sm:$0xff] %vm172, %v7084
      %v7087 = vld [vmem:[#allocation3 + $0x10e] sm:$0xff]
      %v7088 = vld [vmem:[#allocation3 + $0x116] sm:$0xff]
      %v7089 = vsub.f32 %v7087, %v6893
      %v7090 = vsub.f32 %v7088, %v6893
      %v7091 = vmul.f32 %v7089, %v6908
      %v7092 = vmul.f32 %v7090, %v6908
      %v7093 = vld [vmem:[%s165 + $0xf0] sm:$0xff]
      %v7094 = vld [vmem:[%s165 + $0xf8] sm:$0xff]
      %v7095 = vadd.f32 %v7091, %v7093
      %v7096 = vadd.f32 %v7092, %v7094
      %7097 = vst.msk [vmem:[%s170 + $0xf0] sm:$0xff] %vm172, %v7095
      %7098 = vst.msk [vmem:[%s170 + $0xf8] sm:$0xff] %vm172, %v7096
      %p7099 = scmp.lt.s32.totalorder %s14, 1
      %s7100 = scalar_select %p7099, %s14, 1
      %s7101 = smul.addr %s7100, 32
      %s7102 = smul.addr %s7101, 8
      %s7103 = scalar_lea.vmem %s3, %s7102
      // Predicated region
      $region33: #{resnet_block_forward.1} parent=31 // pred_check
        %p7104 = pneg %p100
      $region34: #{resnet_block_forward.1} parent=31 // pred_check_branch
        %7106 = sbr.rel (%p7104) target = $region36
      $region35: #{resnet_block_forward.1} parent=31 // pred_region
        _
      $region36: #{resnet_block_forward.1} parent=31 // pred_fallthru
        _
    $region32: #{resnet_block_forward.1} parent=5 // pred_fallthru
      _
    %p7107 = scmp.le.s32.totalorder 2, %s9
    // Predicated region
    $region37: #{resnet_block_forward.1} parent=5 // pred_check
      %p7108 = pneg %p7107
    $region38: #{resnet_block_forward.1} parent=5 // pred_check_branch
      %7110 = sbr.rel (%p7108) target = $region40
    $region39: #{resnet_block_forward.1} parent=5 // pred_region
      %s7111 = ssub.s32 %s9, 2
      // Predicated region
      $region41: #{resnet_block_forward.1} parent=39 // pred_check
        %p7112 = pneg %p106
      $region42: #{resnet_block_forward.1} parent=39 // pred_check_branch
        %7114 = sbr.rel (%p7112) target = $region44
      $region43: #{resnet_block_forward.1} parent=39 // pred_region
        %p7115 = scmp.lt.s32.totalorder %s15, 1
        %s7116 = scalar_select %p7115, %s15, 1
        %s7117 = smul.addr %s7116, 32
        %s7118 = smul.addr %s7117, 8
        %s7119 = scalar_lea.vmem %s3, %s7118
      $region44: #{resnet_block_forward.1} parent=39 // pred_fallthru
        _
    $region40: #{resnet_block_forward.1} parent=5 // pred_fallthru
      _
  $region6: #{resnet_block_forward.1} parent=0 // loop_footer
    %s13 = sadd.s32 1, %s9
  $region7: #{resnet_block_forward.1} parent=0 // loop_footer_branch
    %8 = sbr.rel target = $region3
  $region8: #{resnet_block_forward.1} parent=0 // loop_exit
    _

</llo_original>
